<compile_context>
chip_gen: v7x
topology: tpu7x:2x2x1
jax: 0.10.0
libtpu: 0.0.40
codegen_flags: <defaults>
</compile_context>

<pallas_src>
import functools
import math

import jax
import jax.numpy as jnp
from jax.experimental import pallas as pl
from jax.experimental.pallas import tpu as pltpu

LANE = 128


def _round_up(x, m):
    return ((x + m - 1) // m) * m


@functools.lru_cache(maxsize=None)
def _k_pack_target():
    # 256-deep K on 2x256x256-MXU generations (v6e/v7x); 128 elsewhere.
    try:
        kind = jax.devices()[0].device_kind.lower()
    except Exception:
        return 128
    if any(v in kind for v in ("v2", "v3", "v4", "v5")):
        return 128
    return 256


# ----------------------------------------------------------------------------
# Tap/K packing: neighbouring pixels -> lane axis, weights -> (Kp, Np) slabs.
# Output row m of the wide-flat layout accumulates
#     sum_t  packed[m + taps[t], :] @ w_slabs[t]
# ----------------------------------------------------------------------------
def _pack_and_taps(xp, kh, kw, stride, weight, k_target):
    B, Hp, Wp, C = xp.shape
    _, _, cin, cout = weight.shape
    assert cin == C
    s = stride
    Ho = (Hp - kh) // s + 1
    Wo = (Wp - kw) // s + 1
    Wrow = _round_up(Wp, 8)                 # wide flat row width (sublane aligned)
    Np = _round_up(cout, LANE)

    ppix = max(1, k_target // C)            # pixels packed per lane slab
    cols_pp = min(kw, ppix)
    rows_pp = min(kh, max(1, ppix // kw)) if s == 1 else 1
    Kp = _round_up(rows_pp * cols_pp * C, LANE)
    n_cg = -(-kw // cols_pp)
    n_rg = -(-kh // rows_pp) if s == 1 else kh

    # --- output-row tiling: TM <= 256, multiple of 16, no useless padding ---
    M_full = Ho * Wrow
    n_tiles = -(-M_full // 256)
    if B == 1 and M_full > 32:
        n_tiles = max(n_tiles, 2)           # keep both v7x cores busy at B == 1
    TM = max(16, _round_up(-(-M_full // n_tiles), 16))
    n_m = -(-M_full // TM)
    M_alloc = n_m * TM

    # --- rows each phase must expose so every (also junk-row) read is bound ---
    max_row_off = (n_rg - 1) * rows_pp if s == 1 else (kh - 1) // s
    need = M_alloc + max_row_off * Wrow + (n_cg - 1) * cols_pp + Wrow + 2
    real_rows = Hp if s == 1 else -(-Hp // s)
    phase_rows = max(-(-need // Wrow), real_rows)

    # --- packed activation ---------------------------------------------------
    if s == 1:
        xpe = jnp.pad(xp, ((0, 0), (0, rows_pp - 1), (0, cols_pp - 1), (0, 0)))
        phases = [xpe]
    else:
        xpe = jnp.pad(xp, ((0, 0), (0, 0), (0, cols_pp - 1), (0, 0)))
        phases = [xpe[:, p::s] for p in range(s)]

    packed_phases = []
    for ph in phases:
        hrows = ph.shape[1] - (rows_pp - 1)
        slabs = [ph[:, r:r + hrows, j:j + Wp, :]
                 for r in range(rows_pp) for j in range(cols_pp)]
        pk = jnp.concatenate(slabs, axis=-1) if len(slabs) > 1 else slabs[0]
        pk = jnp.pad(pk, ((0, 0), (0, phase_rows - hrows),
                          (0, Wrow - Wp), (0, Kp - pk.shape[-1])))
        packed_phases.append(pk.reshape(B, phase_rows * Wrow, Kp))
    packed = (jnp.concatenate(packed_phases, axis=1)
              if len(packed_phases) > 1 else packed_phases[0])
    Lp = packed.shape[1]

    # --- weight slabs + flat tap offsets --------------------------------------
    taps, slabs_w = [], []
    if s == 1:
        for gr in range(n_rg):
            for gc in range(n_cg):
                taps.append(gr * rows_pp * Wrow + gc * cols_pp)
                slab = jnp.zeros((Kp, Np), jnp.float32)
                for di in range(gr * rows_pp, min((gr + 1) * rows_pp, kh)):
                    for dj in range(gc * cols_pp, min((gc + 1) * cols_pp, kw)):
                        lane0 = ((di - gr * rows_pp) * cols_pp
                                 + (dj - gc * cols_pp)) * C
                        slab = slab.at[lane0:lane0 + C, :cout].set(weight[di, dj])
                slabs_w.append(slab)
    else:
        for di in range(kh):
            p = di % s
            for gc in range(n_cg):
                taps.append(p * phase_rows * Wrow + (di // s) * Wrow
                            + gc * cols_pp)
                slab = jnp.zeros((Kp, Np), jnp.float32)
                for dj in range(gc * cols_pp, min((gc + 1) * cols_pp, kw)):
                    lane0 = (dj - gc * cols_pp) * C
                    slab = slab.at[lane0:lane0 + C, :cout].set(weight[di, dj])
                slabs_w.append(slab)
    w_slabs = jnp.stack(slabs_w).astype(jnp.bfloat16)

    geom = dict(Ho=Ho, Wo=Wo, Wrow=Wrow, TM=TM, n_m=n_m, M_alloc=M_alloc,
                Np=Np, Kp=Kp, Lp=Lp)
    return packed, w_slabs, tuple(taps), geom


# ----------------------------------------------------------------------------
# Fused conv kernel: tap-packed matmuls + bias + PixelNorm + ReLU, bf16 out.
# ----------------------------------------------------------------------------
def _conv_kernel(x_ref, w_ref, b_ref, o_ref, *, taps, tm, n_m, align,
                 pixel_norm, relu, inv_cout):
    if n_m == 1:
        base = 0
    else:
        base = pl.multiple_of(pl.program_id(1) * tm, align)

    acc = jnp.dot(x_ref[0, pl.ds(base + taps[0], tm), :], w_ref[0],
                  preferred_element_type=jnp.float32)
    for t in range(1, len(taps)):
        acc = acc + jnp.dot(x_ref[0, pl.ds(base + taps[t], tm), :], w_ref[t],
                            preferred_element_type=jnp.float32)
    acc = acc + b_ref[...]
    if pixel_norm:
        # PixelNorm over the REAL channel count (padded output lanes are 0).
        ms = jnp.sum(acc * acc, axis=-1, keepdims=True) * inv_cout
        acc = acc * jax.lax.rsqrt(ms + 1e-5)
    if relu:
        acc = jnp.maximum(acc, 0.0)
    o_ref[0] = acc.astype(o_ref.dtype)


def conv2d_pallas(x, weight, bias, *, stride=1, pad=0, pixel_norm=True,
                  relu=True):
    """x: (B, H, W, C) real channels (any float dtype).  weight: (kh, kw, C, cout).
    Returns (B, Ho, Wo, cout) bf16.  ReflectionPad2d(pad) -> Conv2d(stride)
    [-> PixelNorm -> ReLU]."""
    B, H, W, C = x.shape
    kh, kw, cin, cout = weight.shape
    assert cin == C
    xb = x.astype(jnp.bfloat16)
    if pad > 0:
        xb = jnp.pad(xb, ((0, 0), (pad, pad), (pad, pad), (0, 0)),
                     mode="reflect")

    packed, wst, taps, g = _pack_and_taps(xb, kh, kw, stride, weight,
                                          _k_pack_target())
    Np, Kp, Lp, Wrow = g["Np"], g["Kp"], g["Lp"], g["Wrow"]
    TM, n_m, M_alloc, Ho, Wo = g["TM"], g["n_m"], g["M_alloc"], g["Ho"], g["Wo"]

    b2 = jnp.zeros((1, Np), jnp.float32).at[0, :cout].set(bias)

    est = (2 * Lp * Kp + 2 * wst.size + 4 * TM * Np) * 2 + 2 * Np * 4
    vmem = int(min(max(32 * 2 ** 20, 2 * est), 64 * 2 ** 20))

    kernel = functools.partial(
        _conv_kernel, taps=taps, tm=TM, n_m=n_m, align=math.gcd(TM, 128),
        pixel_norm=pixel_norm, relu=relu, inv_cout=1.0 / float(cout))

    out = pl.pallas_call(
        kernel,
        out_shape=jax.ShapeDtypeStruct((B, M_alloc, Np), jnp.bfloat16),
        grid=(B, n_m),
        in_specs=[pl.BlockSpec((1, Lp, Kp), lambda b, r: (b, 0, 0)),
                  pl.BlockSpec(wst.shape, lambda b, r: (0, 0, 0)),
                  pl.BlockSpec((1, Np), lambda b, r: (0, 0))],
        out_specs=pl.BlockSpec((1, TM, Np), lambda b, r: (b, r, 0)),
        compiler_params=pltpu.CompilerParams(
            dimension_semantics=("parallel", "parallel"),
            vmem_limit_bytes=vmem),
    )(packed, wst, b2)

    out = out[:, :Ho * Wrow, :].reshape(B, Ho, Wrow, Np)
    out = out[:, :, ::stride, :][:, :, :Wo, :cout]
    return out


# ----------------------------------------------------------------------------
# Fully fused ResnetBlock: conv1+PN+ReLU -> in-VMEM reflect pad -> conv2+PN
# -> +x residual, one pallas_call, intermediate never leaves VMEM.
# ----------------------------------------------------------------------------
def _resnet_kernel(x_ref, w1_ref, b1_ref, w2_ref, b2_ref, o_ref, mid_ref, *,
                   taps1, taps2, tm, n_chunks, H, W, Wrow, cdim, np_, inv_dim):
    # Zero the scratch so junk output rows only ever read finite data.
    mid_ref[...] = jnp.zeros(mid_ref.shape, mid_ref.dtype)

    # ---- conv1 + PixelNorm + ReLU; store shifted to the padded interior ----
    for c in range(n_chunks):
        b0 = c * tm
        acc = jnp.dot(x_ref[0, pl.ds(b0 + taps1[0], tm), :], w1_ref[0],
                      preferred_element_type=jnp.float32)
        for t in range(1, len(taps1)):
            acc = acc + jnp.dot(x_ref[0, pl.ds(b0 + taps1[t], tm), :],
                                w1_ref[t], preferred_element_type=jnp.float32)
        acc = acc + b1_ref[...]
        ms = jnp.sum(acc * acc, axis=-1, keepdims=True) * inv_dim
        acc = acc * jax.lax.rsqrt(ms + 1e-5)
        acc = jnp.maximum(acc, 0.0)
        mid_ref[pl.ds(Wrow + 1 + b0, tm), :] = acc.astype(mid_ref.dtype)

    # ---- ReflectionPad2d(1) of the intermediate, built in place in VMEM ----
    mid_ref[pl.ds(1, W), :] = mid_ref[pl.ds(2 * Wrow + 1, W), :]             # top
    mid_ref[pl.ds((H + 1) * Wrow + 1, W), :] = \
        mid_ref[pl.ds((H - 1) * Wrow + 1, W), :]                              # bottom
    for r in range(H + 2):                                                    # left/right
        mid_ref[pl.ds(r * Wrow, 1), :] = mid_ref[pl.ds(r * Wrow + 2, 1), :]
        mid_ref[pl.ds(r * Wrow + W + 1, 1), :] = \
            mid_ref[pl.ds(r * Wrow + W - 1, 1), :]

    # ---- conv2 + PixelNorm + residual (residual re-read from packed input) --
    lane = jax.lax.broadcasted_iota(jnp.int32, (tm, np_), 1)
    for c in range(n_chunks):
        b0 = c * tm
        acc = jnp.dot(mid_ref[pl.ds(b0 + taps2[0], tm), :], w2_ref[0],
                      preferred_element_type=jnp.float32)
        for t in range(1, len(taps2)):
            acc = acc + jnp.dot(mid_ref[pl.ds(b0 + taps2[t], tm), :],
                                w2_ref[t], preferred_element_type=jnp.float32)
        acc = acc + b2_ref[...]
        ms = jnp.sum(acc * acc, axis=-1, keepdims=True) * inv_dim
        acc = acc * jax.lax.rsqrt(ms + 1e-5)
        # residual x[ho, wo] == packed[(ho+1)*Wrow + (wo+1), 0:cdim]
        res = x_ref[0, pl.ds(b0 + Wrow + 1, tm), pl.ds(0, np_)].astype(jnp.float32)
        res = jnp.where(lane < cdim, res, 0.0)
        acc = acc + res
        o_ref[0, pl.ds(b0, tm), :] = acc.astype(o_ref.dtype)


def resnet_block(x, p):
    """x: (B, H, W, dim) -> x + PixelNorm(conv(ReLU(PixelNorm(conv(x)))))."""
    B, H, W, C = x.shape
    dim = p["c1"]["w"].shape[3]
    xb = x.astype(jnp.bfloat16)
    xp1 = jnp.pad(xb, ((0, 0), (1, 1), (1, 1), (0, 0)), mode="reflect")

    packed, w1, taps1, g = _pack_and_taps(xp1, 3, 3, 1, p["c1"]["w"],
                                          _k_pack_target())
    Np, Kp, Lp, Wrow = g["Np"], g["Kp"], g["Lp"], g["Wrow"]
    TM, n_m, M_alloc = g["TM"], g["n_m"], g["M_alloc"]
    Cp = Np                                    # intermediate lane width

    mid_rows = _round_up(max(Wrow + M_alloc + 1,
                             M_alloc + 2 * Wrow + 3,
                             (H + 2) * Wrow), 8)
    est = (2 * Lp * Kp + 2 * w1.size + 2 * 9 * Cp * Np + 4 * M_alloc * Np
           + mid_rows * Cp) * 2
    if est > 24 * 2 ** 20 or n_m > 8:
        # TODO(synk): too large for a whole-image fused block; unfused fallback.
        h = conv2d_pallas(x, p["c1"]["w"], p["c1"]["b"], stride=1, pad=1,
                          pixel_norm=True, relu=True)
        h = conv2d_pallas(h, p["c2"]["w"], p["c2"]["b"], stride=1, pad=1,
                          pixel_norm=True, relu=False)
        return (x.astype(jnp.float32) + h.astype(jnp.float32)).astype(jnp.bfloat16)

    taps2 = tuple(di * Wrow + dj for di in range(3) for dj in range(3))
    w2 = jnp.zeros((9, Cp, Np), jnp.float32)
    for t, (di, dj) in enumerate([(i, j) for i in range(3) for j in range(3)]):
        w2 = w2.at[t, :dim, :dim].set(p["c2"]["w"][di, dj])
    w2 = w2.astype(jnp.bfloat16)
    b1 = jnp.zeros((1, Cp), jnp.float32).at[0, :dim].set(p["c1"]["b"])
    b2 = jnp.zeros((1, Np), jnp.float32).at[0, :dim].set(p["c2"]["b"])

    vmem = int(min(max(32 * 2 ** 20, 2 * est), 64 * 2 ** 20))
    kernel = functools.partial(
        _resnet_kernel, taps1=taps1, taps2=taps2, tm=TM, n_chunks=n_m,
        H=H, W=W, Wrow=Wrow, cdim=dim, np_=Np, inv_dim=1.0 / float(dim))

    out = pl.pallas_call(
        kernel,
        out_shape=jax.ShapeDtypeStruct((B, M_alloc, Np), jnp.bfloat16),
        grid=(B,),
        in_specs=[pl.BlockSpec((1, Lp, Kp), lambda b: (b, 0, 0)),
                  pl.BlockSpec(w1.shape, lambda b: (0, 0, 0)),
                  pl.BlockSpec((1, Cp), lambda b: (0, 0)),
                  pl.BlockSpec((9, Cp, Np), lambda b: (0, 0, 0)),
                  pl.BlockSpec((1, Np), lambda b: (0, 0))],
        out_specs=pl.BlockSpec((1, M_alloc, Np), lambda b: (b, 0, 0)),
        scratch_shapes=[pltpu.VMEM((mid_rows, Cp), jnp.bfloat16)],
        compiler_params=pltpu.CompilerParams(
            dimension_semantics=("parallel",),
            vmem_limit_bytes=vmem),
    )(packed, w1, b1, w2, b2)

    out = out[:, :H * Wrow, :].reshape(B, H, Wrow, Np)[:, :, :W, :dim]
    return out


# ----------------------------------------------------------------------------
# Module building blocks matching the PyTorch graph
# ----------------------------------------------------------------------------
def pooled_head(x, p_d1, p_d2, p_pt):
    h = conv2d_pallas(x, p_d1["w"], p_d1["b"], stride=2, pad=1)
    h = conv2d_pallas(h, p_d2["w"], p_d2["b"], stride=2, pad=1)
    # AdaptiveAvgPool2d(1) + 1x1 conv with M == batch: plain JAX glue.
    hm = jnp.mean(h.astype(jnp.float32), axis=(1, 2))            # (B, 4*dim)
    _, _, cin, cout = p_pt["w"].shape
    y = hm @ p_pt["w"].reshape(cin, cout) + p_pt["b"]
    return y.reshape(x.shape[0], 1, 1, cout)


def gddc_encoder_forward(params, x_nchw, *, n_downsampling, n_blocks):
    x = jnp.transpose(x_nchw, (0, 2, 3, 1)).astype(jnp.bfloat16)  # NCHW -> NHWC

    # encoder1
    h = conv2d_pallas(x, params["enc1_c0"]["w"], params["enc1_c0"]["b"],
                      stride=1, pad=3)
    for i in range(n_downsampling):
        pi = params[f"enc1_d{i}"]
        h = conv2d_pallas(h, pi["w"], pi["b"], stride=2, pad=1)
    feat1 = h

    # encoder2
    h = feat1
    for rp in params["enc2"]:
        h = resnet_block(h, rp)
    feat2 = h

    # shape branch
    shape_feature = resnet_block(feat2, params["shape_block"])
    _shape = pooled_head(shape_feature, params["shape_d1"],
                         params["shape_d2"], params["shape_p"])

    # texture branch (from feat1)
    t = resnet_block(feat1, params["text_block"])
    texture_feature = pooled_head(t, params["text_d1"],
                                  params["text_d2"], params["text_p"])

    to_nchw = lambda a: jnp.transpose(a.astype(jnp.float32), (0, 3, 1, 2))
    return to_nchw(shape_feature), to_nchw(texture_feature), to_nchw(_shape)


# ----------------------------------------------------------------------------
# Deterministic synthetic parameters
# ----------------------------------------------------------------------------
def _init_conv(key, kh, kw, cin, cout):
    wkey, bkey = jax.random.split(key)
    fan_in = kh * kw * cin
    w = jax.random.normal(wkey, (kh, kw, cin, cout), jnp.float32) / math.sqrt(fan_in)
    b = 0.01 * jax.random.normal(bkey, (cout,), jnp.float32)
    return {"w": w, "b": b}


def init_gddc_params(key, input_nc, ngf, n_downsampling, n_blocks):
    keys = iter(jax.random.split(key, 64))
    P = {}
    P["enc1_c0"] = _init_conv(next(keys), 7, 7, input_nc, ngf)
    for i in range(n_downsampling):
        mult = 2 ** i
        P[f"enc1_d{i}"] = _init_conv(next(keys), 3, 3, ngf * mult, ngf * mult * 2)
    dim = ngf * (2 ** n_downsampling)

    def res(k):
        k1, k2 = jax.random.split(k)
        return {"c1": _init_conv(k1, 3, 3, dim, dim),
                "c2": _init_conv(k2, 3, 3, dim, dim)}

    P["enc2"] = [res(next(keys)) for _ in range(n_blocks - 1)]
    P["shape_block"] = res(next(keys))
    P["text_block"] = res(next(keys))
    P["text_d1"] = _init_conv(next(keys), 3, 3, dim, dim * 2)
    P["text_d2"] = _init_conv(next(keys), 3, 3, dim * 2, dim * 4)
    P["text_p"] = _init_conv(next(keys), 1, 1, dim * 4, dim)
    P["shape_d1"] = _init_conv(next(keys), 3, 3, dim, dim * 2)
    P["shape_d2"] = _init_conv(next(keys), 3, 3, dim * 2, dim * 4)
    P["shape_p"] = _init_conv(next(keys), 1, 1, dim * 4, dim)
    return P


# ----------------------------------------------------------------------------
if __name__ == "__main__":
    input_nc, ngf, n_downsampling, n_blocks = 4, 8, 2, 2
    B, H, W = 2, 16, 16

    key = jax.random.PRNGKey(0)
    pkey, xkey = jax.random.split(key)
    params = init_gddc_params(pkey, input_nc, ngf, n_downsampling, n_blocks)
    x = jax.random.normal(xkey, (B, input_nc, H, W), jnp.float32)   # NCHW

    fwd = jax.jit(functools.partial(gddc_encoder_forward,
                                    n_downsampling=n_downsampling,
                                    n_blocks=n_blocks))
    shape_feature, texture_feature, _shape = fwd(params, x)
    jax.block_until_ready((shape_feature, texture_feature, _shape))

    dim = ngf * (2 ** n_downsampling)
    hs, ws = H // (2 ** n_downsampling), W // (2 ** n_downsampling)
    assert shape_feature.shape == (B, dim, hs, ws), shape_feature.shape
    assert texture_feature.shape == (B, dim, 1, 1), texture_feature.shape
    assert _shape.shape == (B, dim, 1, 1), _shape.shape
    assert jnp.all(jnp.isfinite(shape_feature))
    assert jnp.all(jnp.isfinite(texture_feature))
    assert jnp.all(jnp.isfinite(_shape))

    print("KERNEL_OK")
</pallas_src>

<mosaic_0001>
module attributes {stable_mosaic.version = 11 : i64} {
  func.func @_conv_kernel(%arg0: i32, %arg1: i32, %arg2: memref<1x528x256xbf16, #tpu.memory_space<vmem>>, %arg3: memref<1x256x128xbf16, #tpu.memory_space<vmem>>, %arg4: memref<1x128xf32, #tpu.memory_space<vmem>>, %arg5: memref<1x192x128xbf16, #tpu.memory_space<vmem>>) attributes {dimension_semantics = [#tpu.dimension_semantics<parallel>, #tpu.dimension_semantics<parallel>], iteration_bounds = array<i64: 2, 2>, scalar_prefetch = 0 : i64, scratch_operands = 0 : i64, tpu.core_type = #tpu.core_type<tc>, window_params = [{transform_indices = @transform_0, window_bounds = array<i64: 1, 528, 256>}, {pipeline_mode = #tpu.pipeline_mode<synchronous>, transform_indices = @transform_1, window_bounds = array<i64: 1, 256, 128>}, {pipeline_mode = #tpu.pipeline_mode<synchronous>, transform_indices = @transform_2, window_bounds = array<i64: 1, 128>}, {transform_indices = @transform_3, window_bounds = array<i64: 1, 192, 128>}]} {
    %c192_i32 = arith.constant 192 : i32
    %0 = arith.muli %arg1, %c192_i32 : i32
    %1 = tpu.assume_multiple %0, 64 : i32
    %c0_i32 = arith.constant 0 : i32
    %2 = arith.addi %1, %c0_i32 : i32
    %c0 = arith.constant 0 : index
    %3 = arith.index_cast %2 : i32 to index
    %c0_0 = arith.constant 0 : index
    %4 = vector.load %arg2[%c0, %3, %c0_0] : memref<1x528x256xbf16, #tpu.memory_space<vmem>>, vector<1x192x256xbf16>
    %5 = vector.shape_cast %4 : vector<1x192x256xbf16> to vector<192x256xbf16>
    %c0_1 = arith.constant 0 : index
    %c0_2 = arith.constant 0 : index
    %c0_3 = arith.constant 0 : index
    %6 = vector.load %arg3[%c0_1, %c0_2, %c0_3] : memref<1x256x128xbf16, #tpu.memory_space<vmem>>, vector<1x256x128xbf16>
    %7 = vector.shape_cast %6 : vector<1x256x128xbf16> to vector<256x128xbf16>
    %cst = arith.constant dense<0.000000e+00> : vector<192x128xf32>
    %8 = tpu.matmul %5, %7, %cst {dimension_numbers = #tpu.dot_dimension_numbers<[1], [0], [0], [1], [0, 0, 1, 1], [], []>} : vector<192x256xbf16>, vector<256x128xbf16>, vector<192x128xf32> -> vector<192x128xf32>
    %c0_4 = arith.constant 0 : index
    %c0_5 = arith.constant 0 : index
    %9 = vector.load %arg4[%c0_4, %c0_5] : memref<1x128xf32, #tpu.memory_space<vmem>>, vector<1x128xf32>
    %10 = vector.broadcast %9 : vector<1x128xf32> to vector<192x128xf32>
    %11 = arith.addf %8, %10 : vector<192x128xf32>
    %12 = arith.mulf %11, %11 : vector<192x128xf32>
    %cst_6 = arith.constant dense<0.000000e+00> : vector<192xf32>
    %13 = vector.multi_reduction <add>, %12, %cst_6 [1] : vector<192x128xf32> to vector<192xf32>
    %14 = vector.shape_cast %13 : vector<192xf32> to vector<192x1xf32>
    %cst_7 = arith.constant 1.250000e-01 : f32
    %15 = vector.broadcast %cst_7 : f32 to vector<192x1xf32>
    %16 = arith.mulf %14, %15 : vector<192x1xf32>
    %cst_8 = arith.constant 9.99999974E-6 : f32
    %17 = vector.broadcast %cst_8 : f32 to vector<192x1xf32>
    %18 = arith.addf %16, %17 : vector<192x1xf32>
    %19 = math.rsqrt %18 : vector<192x1xf32>
    %20 = vector.broadcast %19 : vector<192x1xf32> to vector<192x128xf32>
    %21 = arith.mulf %11, %20 : vector<192x128xf32>
    %cst_9 = arith.constant 0.000000e+00 : f32
    %22 = vector.broadcast %cst_9 : f32 to vector<192x128xf32>
    %23 = arith.maximumf %21, %22 : vector<192x128xf32>
    %24 = arith.truncf %23 : vector<192x128xf32> to vector<192x128xbf16>
    %c0_10 = arith.constant 0 : index
    %c0_11 = arith.constant 0 : index
    %c0_12 = arith.constant 0 : index
    %25 = vector.load %arg5[%c0_10, %c0_11, %c0_12] : memref<1x192x128xbf16, #tpu.memory_space<vmem>>, vector<1x192x128xbf16>
    %26 = vector.shape_cast %25 : vector<1x192x128xbf16> to vector<192x128xbf16>
    %27 = vector.shape_cast %24 : vector<192x128xbf16> to vector<1x192x128xbf16>
    tpu.vector_store %arg5[%c0_10, %c0_11, %c0_12], %27 {strides = array<i32>} : memref<1x192x128xbf16, #tpu.memory_space<vmem>>, vector<1x192x128xbf16>,
    return
  }
  func.func @transform_0(%arg0: i32, %arg1: i32) -> (i32, i32, i32) {
    %c0_i32 = arith.constant 0 : i32
    %c0_i32_0 = arith.constant 0 : i32
    %c0_i32_1 = arith.constant 0 : i32
    return %arg0, %c0_i32, %c0_i32_0 : i32, i32, i32
  }
  func.func @transform_1(%arg0: i32, %arg1: i32) -> (i32, i32, i32) {
    %c0_i32 = arith.constant 0 : i32
    %c0_i32_0 = arith.constant 0 : i32
    %c0_i32_1 = arith.constant 0 : i32
    %c0_i32_2 = arith.constant 0 : i32
    return %c0_i32, %c0_i32_0, %c0_i32_1 : i32, i32, i32
  }
  func.func @transform_2(%arg0: i32, %arg1: i32) -> (i32, i32) {
    %c0_i32 = arith.constant 0 : i32
    %c0_i32_0 = arith.constant 0 : i32
    %c0_i32_1 = arith.constant 0 : i32
    return %c0_i32, %c0_i32_0 : i32, i32
  }
  func.func @transform_3(%arg0: i32, %arg1: i32) -> (i32, i32, i32) {
    %c0_i32 = arith.constant 0 : i32
    %c0_i32_0 = arith.constant 0 : i32
    return %arg0, %arg1, %c0_i32 : i32, i32, i32
  }
}

module attributes {stable_mosaic.version = 11 : i64} {
  func.func @_conv_kernel(%arg0: i32, %arg1: i32, %arg2: memref<1x528x128xbf16, #tpu.memory_space<vmem>>, %arg3: memref<3x128x128xbf16, #tpu.memory_space<vmem>>, %arg4: memref<1x128xf32, #tpu.memory_space<vmem>>, %arg5: memref<1x192x128xbf16, #tpu.memory_space<vmem>>) attributes {dimension_semantics = [#tpu.dimension_semantics<parallel>, #tpu.dimension_semantics<parallel>], iteration_bounds = array<i64: 2, 1>, scalar_prefetch = 0 : i64, scratch_operands = 0 : i64, tpu.core_type = #tpu.core_type<tc>, window_params = [{transform_indices = @transform_0, window_bounds = array<i64: 1, 528, 128>}, {pipeline_mode = #tpu.pipeline_mode<synchronous>, transform_indices = @transform_1, window_bounds = array<i64: 3, 128, 128>}, {pipeline_mode = #tpu.pipeline_mode<synchronous>, transform_indices = @transform_2, window_bounds = array<i64: 1, 128>}, {transform_indices = @transform_3, window_bounds = array<i64: 1, 192, 128>}]} {
    %c0 = arith.constant 0 : index
    %c0_0 = arith.constant 0 : index
    %c0_1 = arith.constant 0 : index
    %0 = vector.load %arg2[%c0, %c0_0, %c0_1] : memref<1x528x128xbf16, #tpu.memory_space<vmem>>, vector<1x192x128xbf16>
    %1 = vector.shape_cast %0 : vector<1x192x128xbf16> to vector<192x128xbf16>
    %c0_2 = arith.constant 0 : index
    %c0_3 = arith.constant 0 : index
    %c0_4 = arith.constant 0 : index
    %2 = vector.load %arg3[%c0_2, %c0_3, %c0_4] : memref<3x128x128xbf16, #tpu.memory_space<vmem>>, vector<1x128x128xbf16>
    %3 = vector.shape_cast %2 : vector<1x128x128xbf16> to vector<128x128xbf16>
    %cst = arith.constant dense<0.000000e+00> : vector<192x128xf32>
    %4 = tpu.matmul %1, %3, %cst {dimension_numbers = #tpu.dot_dimension_numbers<[1], [0], [0], [1], [0, 0, 1, 1], [], []>} : vector<192x128xbf16>, vector<128x128xbf16>, vector<192x128xf32> -> vector<192x128xf32>
    %c0_5 = arith.constant 0 : index
    %c264 = arith.constant 264 : index
    %c0_6 = arith.constant 0 : index
    %5 = vector.load %arg2[%c0_5, %c264, %c0_6] : memref<1x528x128xbf16, #tpu.memory_space<vmem>>, vector<1x192x128xbf16>
    %6 = vector.shape_cast %5 : vector<1x192x128xbf16> to vector<192x128xbf16>
    %c1 = arith.constant 1 : index
    %c0_7 = arith.constant 0 : index
    %c0_8 = arith.constant 0 : index
    %7 = vector.load %arg3[%c1, %c0_7, %c0_8] : memref<3x128x128xbf16, #tpu.memory_space<vmem>>, vector<1x128x128xbf16>
    %8 = vector.shape_cast %7 : vector<1x128x128xbf16> to vector<128x128xbf16>
    %cst_9 = arith.constant dense<0.000000e+00> : vector<192x128xf32>
    %9 = tpu.matmul %6, %8, %cst_9 {dimension_numbers = #tpu.dot_dimension_numbers<[1], [0], [0], [1], [0, 0, 1, 1], [], []>} : vector<192x128xbf16>, vector<128x128xbf16>, vector<192x128xf32> -> vector<192x128xf32>
    %10 = arith.addf %4, %9 : vector<192x128xf32>
    %c0_10 = arith.constant 0 : index
    %c24 = arith.constant 24 : index
    %c0_11 = arith.constant 0 : index
    %11 = vector.load %arg2[%c0_10, %c24, %c0_11] : memref<1x528x128xbf16, #tpu.memory_space<vmem>>, vector<1x192x128xbf16>
    %12 = vector.shape_cast %11 : vector<1x192x128xbf16> to vector<192x128xbf16>
    %c2 = arith.constant 2 : index
    %c0_12 = arith.constant 0 : index
    %c0_13 = arith.constant 0 : index
    %13 = vector.load %arg3[%c2, %c0_12, %c0_13] : memref<3x128x128xbf16, #tpu.memory_space<vmem>>, vector<1x128x128xbf16>
    %14 = vector.shape_cast %13 : vector<1x128x128xbf16> to vector<128x128xbf16>
    %cst_14 = arith.constant dense<0.000000e+00> : vector<192x128xf32>
    %15 = tpu.matmul %12, %14, %cst_14 {dimension_numbers = #tpu.dot_dimension_numbers<[1], [0], [0], [1], [0, 0, 1, 1], [], []>} : vector<192x128xbf16>, vector<128x128xbf16>, vector<192x128xf32> -> vector<192x128xf32>
    %16 = arith.addf %10, %15 : vector<192x128xf32>
    %c0_15 = arith.constant 0 : index
    %c0_16 = arith.constant 0 : index
    %17 = vector.load %arg4[%c0_15, %c0_16] : memref<1x128xf32, #tpu.memory_space<vmem>>, vector<1x128xf32>
    %18 = vector.broadcast %17 : vector<1x128xf32> to vector<192x128xf32>
    %19 = arith.addf %16, %18 : vector<192x128xf32>
    %20 = arith.mulf %19, %19 : vector<192x128xf32>
    %cst_17 = arith.constant dense<0.000000e+00> : vector<192xf32>
    %21 = vector.multi_reduction <add>, %20, %cst_17 [1] : vector<192x128xf32> to vector<192xf32>
    %22 = vector.shape_cast %21 : vector<192xf32> to vector<192x1xf32>
    %cst_18 = arith.constant 6.250000e-02 : f32
    %23 = vector.broadcast %cst_18 : f32 to vector<192x1xf32>
    %24 = arith.mulf %22, %23 : vector<192x1xf32>
    %cst_19 = arith.constant 9.99999974E-6 : f32
    %25 = vector.broadcast %cst_19 : f32 to vector<192x1xf32>
    %26 = arith.addf %24, %25 : vector<192x1xf32>
    %27 = math.rsqrt %26 : vector<192x1xf32>
    %28 = vector.broadcast %27 : vector<192x1xf32> to vector<192x128xf32>
    %29 = arith.mulf %19, %28 : vector<192x128xf32>
    %cst_20 = arith.constant 0.000000e+00 : f32
    %30 = vector.broadcast %cst_20 : f32 to vector<192x128xf32>
    %31 = arith.maximumf %29, %30 : vector<192x128xf32>
    %32 = arith.truncf %31 : vector<192x128xf32> to vector<192x128xbf16>
    %c0_21 = arith.constant 0 : index
    %c0_22 = arith.constant 0 : index
    %c0_23 = arith.constant 0 : index
    %33 = vector.load %arg5[%c0_21, %c0_22, %c0_23] : memref<1x192x128xbf16, #tpu.memory_space<vmem>>, vector<1x192x128xbf16>
    %34 = vector.shape_cast %33 : vector<1x192x128xbf16> to vector<192x128xbf16>
    %35 = vector.shape_cast %32 : vector<192x128xbf16> to vector<1x192x128xbf16>
    tpu.vector_store %arg5[%c0_21, %c0_22, %c0_23], %35 {strides = array<i32>} : memref<1x192x128xbf16, #tpu.memory_space<vmem>>, vector<1x192x128xbf16>,
    return
  }
  func.func @transform_0(%arg0: i32, %arg1: i32) -> (i32, i32, i32) {
    %c0_i32 = arith.constant 0 : i32
    %c0_i32_0 = arith.constant 0 : i32
    %c0_i32_1 = arith.constant 0 : i32
    return %arg0, %c0_i32, %c0_i32_0 : i32, i32, i32
  }
  func.func @transform_1(%arg0: i32, %arg1: i32) -> (i32, i32, i32) {
    %c0_i32 = arith.constant 0 : i32
    %c0_i32_0 = arith.constant 0 : i32
    %c0_i32_1 = arith.constant 0 : i32
    %c0_i32_2 = arith.constant 0 : i32
    return %c0_i32, %c0_i32_0, %c0_i32_1 : i32, i32, i32
  }
  func.func @transform_2(%arg0: i32, %arg1: i32) -> (i32, i32) {
    %c0_i32 = arith.constant 0 : i32
    %c0_i32_0 = arith.constant 0 : i32
    %c0_i32_1 = arith.constant 0 : i32
    return %c0_i32, %c0_i32_0 : i32, i32
  }
  func.func @transform_3(%arg0: i32, %arg1: i32) -> (i32, i32, i32) {
    %c0_i32 = arith.constant 0 : i32
    %c0_i32_0 = arith.constant 0 : i32
    return %arg0, %arg1, %c0_i32 : i32, i32, i32
  }
}

module attributes {stable_mosaic.version = 11 : i64} {
  func.func @_conv_kernel(%arg0: i32, %arg1: i32, %arg2: memref<1x224x128xbf16, #tpu.memory_space<vmem>>, %arg3: memref<3x128x128xbf16, #tpu.memory_space<vmem>>, %arg4: memref<1x128xf32, #tpu.memory_space<vmem>>, %arg5: memref<1x64x128xbf16, #tpu.memory_space<vmem>>) attributes {dimension_semantics = [#tpu.dimension_semantics<parallel>, #tpu.dimension_semantics<parallel>], iteration_bounds = array<i64: 2, 1>, scalar_prefetch = 0 : i64, scratch_operands = 0 : i64, tpu.core_type = #tpu.core_type<tc>, window_params = [{transform_indices = @transform_0, window_bounds = array<i64: 1, 224, 128>}, {pipeline_mode = #tpu.pipeline_mode<synchronous>, transform_indices = @transform_1, window_bounds = array<i64: 3, 128, 128>}, {pipeline_mode = #tpu.pipeline_mode<synchronous>, transform_indices = @transform_2, window_bounds = array<i64: 1, 128>}, {transform_indices = @transform_3, window_bounds = array<i64: 1, 64, 128>}]} {
    %c0 = arith.constant 0 : index
    %c0_0 = arith.constant 0 : index
    %c0_1 = arith.constant 0 : index
    %0 = vector.load %arg2[%c0, %c0_0, %c0_1] : memref<1x224x128xbf16, #tpu.memory_space<vmem>>, vector<1x64x128xbf16>
    %1 = vector.shape_cast %0 : vector<1x64x128xbf16> to vector<64x128xbf16>
    %c0_2 = arith.constant 0 : index
    %c0_3 = arith.constant 0 : index
    %c0_4 = arith.constant 0 : index
    %2 = vector.load %arg3[%c0_2, %c0_3, %c0_4] : memref<3x128x128xbf16, #tpu.memory_space<vmem>>, vector<1x128x128xbf16>
    %3 = vector.shape_cast %2 : vector<1x128x128xbf16> to vector<128x128xbf16>
    %cst = arith.constant dense<0.000000e+00> : vector<64x128xf32>
    %4 = tpu.matmul %1, %3, %cst {dimension_numbers = #tpu.dot_dimension_numbers<[1], [0], [0], [1], [0, 0, 1, 1], [], []>} : vector<64x128xbf16>, vector<128x128xbf16>, vector<64x128xf32> -> vector<64x128xf32>
    %c0_5 = arith.constant 0 : index
    %c112 = arith.constant 112 : index
    %c0_6 = arith.constant 0 : index
    %5 = vector.load %arg2[%c0_5, %c112, %c0_6] : memref<1x224x128xbf16, #tpu.memory_space<vmem>>, vector<1x64x128xbf16>
    %6 = vector.shape_cast %5 : vector<1x64x128xbf16> to vector<64x128xbf16>
    %c1 = arith.constant 1 : index
    %c0_7 = arith.constant 0 : index
    %c0_8 = arith.constant 0 : index
    %7 = vector.load %arg3[%c1, %c0_7, %c0_8] : memref<3x128x128xbf16, #tpu.memory_space<vmem>>, vector<1x128x128xbf16>
    %8 = vector.shape_cast %7 : vector<1x128x128xbf16> to vector<128x128xbf16>
    %cst_9 = arith.constant dense<0.000000e+00> : vector<64x128xf32>
    %9 = tpu.matmul %6, %8, %cst_9 {dimension_numbers = #tpu.dot_dimension_numbers<[1], [0], [0], [1], [0, 0, 1, 1], [], []>} : vector<64x128xbf16>, vector<128x128xbf16>, vector<64x128xf32> -> vector<64x128xf32>
    %10 = arith.addf %4, %9 : vector<64x128xf32>
    %c0_10 = arith.constant 0 : index
    %c16 = arith.constant 16 : index
    %c0_11 = arith.constant 0 : index
    %11 = vector.load %arg2[%c0_10, %c16, %c0_11] : memref<1x224x128xbf16, #tpu.memory_space<vmem>>, vector<1x64x128xbf16>
    %12 = vector.shape_cast %11 : vector<1x64x128xbf16> to vector<64x128xbf16>
    %c2 = arith.constant 2 : index
    %c0_12 = arith.constant 0 : index
    %c0_13 = arith.constant 0 : index
    %13 = vector.load %arg3[%c2, %c0_12, %c0_13] : memref<3x128x128xbf16, #tpu.memory_space<vmem>>, vector<1x128x128xbf16>
    %14 = vector.shape_cast %13 : vector<1x128x128xbf16> to vector<128x128xbf16>
    %cst_14 = arith.constant dense<0.000000e+00> : vector<64x128xf32>
    %15 = tpu.matmul %12, %14, %cst_14 {dimension_numbers = #tpu.dot_dimension_numbers<[1], [0], [0], [1], [0, 0, 1, 1], [], []>} : vector<64x128xbf16>, vector<128x128xbf16>, vector<64x128xf32> -> vector<64x128xf32>
    %16 = arith.addf %10, %15 : vector<64x128xf32>
    %c0_15 = arith.constant 0 : index
    %c0_16 = arith.constant 0 : index
    %17 = vector.load %arg4[%c0_15, %c0_16] : memref<1x128xf32, #tpu.memory_space<vmem>>, vector<1x128xf32>
    %18 = vector.broadcast %17 : vector<1x128xf32> to vector<64x128xf32>
    %19 = arith.addf %16, %18 : vector<64x128xf32>
    %20 = arith.mulf %19, %19 : vector<64x128xf32>
    %cst_17 = arith.constant dense<0.000000e+00> : vector<64xf32>
    %21 = vector.multi_reduction <add>, %20, %cst_17 [1] : vector<64x128xf32> to vector<64xf32>
    %22 = vector.shape_cast %21 : vector<64xf32> to vector<64x1xf32>
    %cst_18 = arith.constant 3.125000e-02 : f32
    %23 = vector.broadcast %cst_18 : f32 to vector<64x1xf32>
    %24 = arith.mulf %22, %23 : vector<64x1xf32>
    %cst_19 = arith.constant 9.99999974E-6 : f32
    %25 = vector.broadcast %cst_19 : f32 to vector<64x1xf32>
    %26 = arith.addf %24, %25 : vector<64x1xf32>
    %27 = math.rsqrt %26 : vector<64x1xf32>
    %28 = vector.broadcast %27 : vector<64x1xf32> to vector<64x128xf32>
    %29 = arith.mulf %19, %28 : vector<64x128xf32>
    %cst_20 = arith.constant 0.000000e+00 : f32
    %30 = vector.broadcast %cst_20 : f32 to vector<64x128xf32>
    %31 = arith.maximumf %29, %30 : vector<64x128xf32>
    %32 = arith.truncf %31 : vector<64x128xf32> to vector<64x128xbf16>
    %c0_21 = arith.constant 0 : index
    %c0_22 = arith.constant 0 : index
    %c0_23 = arith.constant 0 : index
    %33 = vector.load %arg5[%c0_21, %c0_22, %c0_23] : memref<1x64x128xbf16, #tpu.memory_space<vmem>>, vector<1x64x128xbf16>
    %34 = vector.shape_cast %33 : vector<1x64x128xbf16> to vector<64x128xbf16>
    %35 = vector.shape_cast %32 : vector<64x128xbf16> to vector<1x64x128xbf16>
    tpu.vector_store %arg5[%c0_21, %c0_22, %c0_23], %35 {strides = array<i32>} : memref<1x64x128xbf16, #tpu.memory_space<vmem>>, vector<1x64x128xbf16>,
    return
  }
  func.func @transform_0(%arg0: i32, %arg1: i32) -> (i32, i32, i32) {
    %c0_i32 = arith.constant 0 : i32
    %c0_i32_0 = arith.constant 0 : i32
    %c0_i32_1 = arith.constant 0 : i32
    return %arg0, %c0_i32, %c0_i32_0 : i32, i32, i32
  }
  func.func @transform_1(%arg0: i32, %arg1: i32) -> (i32, i32, i32) {
    %c0_i32 = arith.constant 0 : i32
    %c0_i32_0 = arith.constant 0 : i32
    %c0_i32_1 = arith.constant 0 : i32
    %c0_i32_2 = arith.constant 0 : i32
    return %c0_i32, %c0_i32_0, %c0_i32_1 : i32, i32, i32
  }
  func.func @transform_2(%arg0: i32, %arg1: i32) -> (i32, i32) {
    %c0_i32 = arith.constant 0 : i32
    %c0_i32_0 = arith.constant 0 : i32
    %c0_i32_1 = arith.constant 0 : i32
    return %c0_i32, %c0_i32_0 : i32, i32
  }
  func.func @transform_3(%arg0: i32, %arg1: i32) -> (i32, i32, i32) {
    %c0_i32 = arith.constant 0 : i32
    %c0_i32_0 = arith.constant 0 : i32
    return %arg0, %arg1, %c0_i32 : i32, i32, i32
  }
}

module attributes {stable_mosaic.version = 11 : i64} {
  func.func @_resnet_kernel(%arg0: i32, %arg1: memref<1x64x256xbf16, #tpu.memory_space<vmem>>, %arg2: memref<2x256x128xbf16, #tpu.memory_space<vmem>>, %arg3: memref<1x128xf32, #tpu.memory_space<vmem>>, %arg4: memref<9x128x128xbf16, #tpu.memory_space<vmem>>, %arg5: memref<1x128xf32, #tpu.memory_space<vmem>>, %arg6: memref<1x32x128xbf16, #tpu.memory_space<vmem>>, %arg7: memref<56x128xbf16, #tpu.memory_space<vmem>>) attributes {dimension_semantics = [#tpu.dimension_semantics<parallel>], iteration_bounds = array<i64: 2>, scalar_prefetch = 0 : i64, scratch_operands = 1 : i64, tpu.core_type = #tpu.core_type<tc>, window_params = [{transform_indices = @transform_0, window_bounds = array<i64: 1, 64, 256>}, {pipeline_mode = #tpu.pipeline_mode<synchronous>, transform_indices = @transform_1, window_bounds = array<i64: 2, 256, 128>}, {pipeline_mode = #tpu.pipeline_mode<synchronous>, transform_indices = @transform_2, window_bounds = array<i64: 1, 128>}, {pipeline_mode = #tpu.pipeline_mode<synchronous>, transform_indices = @transform_3, window_bounds = array<i64: 9, 128, 128>}, {pipeline_mode = #tpu.pipeline_mode<synchronous>, transform_indices = @transform_4, window_bounds = array<i64: 1, 128>}, {transform_indices = @transform_5, window_bounds = array<i64: 1, 32, 128>}]} {
    %cst = arith.constant 0.000000e+00 : bf16
    %0 = vector.broadcast %cst : bf16 to vector<56x128xbf16>
    %c0 = arith.constant 0 : index
    %c0_0 = arith.constant 0 : index
    %1 = vector.load %arg7[%c0, %c0_0] : memref<56x128xbf16, #tpu.memory_space<vmem>>, vector<56x128xbf16>
    tpu.vector_store %arg7[%c0, %c0_0], %0 {strides = array<i32>} : memref<56x128xbf16, #tpu.memory_space<vmem>>, vector<56x128xbf16>,
    %c0_1 = arith.constant 0 : index
    %c0_2 = arith.constant 0 : index
    %c0_3 = arith.constant 0 : index
    %2 = vector.load %arg1[%c0_1, %c0_2, %c0_3] : memref<1x64x256xbf16, #tpu.memory_space<vmem>>, vector<1x32x256xbf16>
    %3 = vector.shape_cast %2 : vector<1x32x256xbf16> to vector<32x256xbf16>
    %c0_4 = arith.constant 0 : index
    %c0_5 = arith.constant 0 : index
    %c0_6 = arith.constant 0 : index
    %4 = vector.load %arg2[%c0_4, %c0_5, %c0_6] : memref<2x256x128xbf16, #tpu.memory_space<vmem>>, vector<1x256x128xbf16>
    %5 = vector.shape_cast %4 : vector<1x256x128xbf16> to vector<256x128xbf16>
    %cst_7 = arith.constant dense<0.000000e+00> : vector<32x128xf32>
    %6 = tpu.matmul %3, %5, %cst_7 {dimension_numbers = #tpu.dot_dimension_numbers<[1], [0], [0], [1], [0, 0, 1, 1], [], []>} : vector<32x256xbf16>, vector<256x128xbf16>, vector<32x128xf32> -> vector<32x128xf32>
    %c0_8 = arith.constant 0 : index
    %c16 = arith.constant 16 : index
    %c0_9 = arith.constant 0 : index
    %7 = vector.load %arg1[%c0_8, %c16, %c0_9] : memref<1x64x256xbf16, #tpu.memory_space<vmem>>, vector<1x32x256xbf16>
    %8 = vector.shape_cast %7 : vector<1x32x256xbf16> to vector<32x256xbf16>
    %c1 = arith.constant 1 : index
    %c0_10 = arith.constant 0 : index
    %c0_11 = arith.constant 0 : index
    %9 = vector.load %arg2[%c1, %c0_10, %c0_11] : memref<2x256x128xbf16, #tpu.memory_space<vmem>>, vector<1x256x128xbf16>
    %10 = vector.shape_cast %9 : vector<1x256x128xbf16> to vector<256x128xbf16>
    %cst_12 = arith.constant dense<0.000000e+00> : vector<32x128xf32>
    %11 = tpu.matmul %8, %10, %cst_12 {dimension_numbers = #tpu.dot_dimension_numbers<[1], [0], [0], [1], [0, 0, 1, 1], [], []>} : vector<32x256xbf16>, vector<256x128xbf16>, vector<32x128xf32> -> vector<32x128xf32>
    %12 = arith.addf %6, %11 : vector<32x128xf32>
    %c0_13 = arith.constant 0 : index
    %c0_14 = arith.constant 0 : index
    %13 = vector.load %arg3[%c0_13, %c0_14] : memref<1x128xf32, #tpu.memory_space<vmem>>, vector<1x128xf32>
    %14 = vector.broadcast %13 : vector<1x128xf32> to vector<32x128xf32>
    %15 = arith.addf %12, %14 : vector<32x128xf32>
    %16 = arith.mulf %15, %15 : vector<32x128xf32>
    %cst_15 = arith.constant dense<0.000000e+00> : vector<32xf32>
    %17 = vector.multi_reduction <add>, %16, %cst_15 [1] : vector<32x128xf32> to vector<32xf32>
    %18 = vector.shape_cast %17 : vector<32xf32> to vector<32x1xf32>
    %cst_16 = arith.constant 3.125000e-02 : f32
    %19 = vector.broadcast %cst_16 : f32 to vector<32x1xf32>
    %20 = arith.mulf %18, %19 : vector<32x1xf32>
    %cst_17 = arith.constant 9.99999974E-6 : f32
    %21 = vector.broadcast %cst_17 : f32 to vector<32x1xf32>
    %22 = arith.addf %20, %21 : vector<32x1xf32>
    %23 = math.rsqrt %22 : vector<32x1xf32>
    %24 = vector.broadcast %23 : vector<32x1xf32> to vector<32x128xf32>
    %25 = arith.mulf %15, %24 : vector<32x128xf32>
    %cst_18 = arith.constant 0.000000e+00 : f32
    %26 = vector.broadcast %cst_18 : f32 to vector<32x128xf32>
    %27 = arith.maximumf %25, %26 : vector<32x128xf32>
    %28 = arith.truncf %27 : vector<32x128xf32> to vector<32x128xbf16>
    %c9 = arith.constant 9 : index
    %c0_19 = arith.constant 0 : index
    %29 = vector.load %arg7[%c9, %c0_19] : memref<56x128xbf16, #tpu.memory_space<vmem>>, vector<32x128xbf16>
    tpu.vector_store %arg7[%c9, %c0_19], %28 {strides = array<i32>} : memref<56x128xbf16, #tpu.memory_space<vmem>>, vector<32x128xbf16>,
    %c17 = arith.constant 17 : index
    %c0_20 = arith.constant 0 : index
    %30 = vector.load %arg7[%c17, %c0_20] : memref<56x128xbf16, #tpu.memory_space<vmem>>, vector<4x128xbf16>
    %c1_21 = arith.constant 1 : index
    %c0_22 = arith.constant 0 : index
    %31 = vector.load %arg7[%c1_21, %c0_22] : memref<56x128xbf16, #tpu.memory_space<vmem>>, vector<4x128xbf16>
    tpu.vector_store %arg7[%c1_21, %c0_22], %30 {strides = array<i32>} : memref<56x128xbf16, #tpu.memory_space<vmem>>, vector<4x128xbf16>,
    %c25 = arith.constant 25 : index
    %c0_23 = arith.constant 0 : index
    %32 = vector.load %arg7[%c25, %c0_23] : memref<56x128xbf16, #tpu.memory_space<vmem>>, vector<4x128xbf16>
    %c41 = arith.constant 41 : index
    %c0_24 = arith.constant 0 : index
    %33 = vector.load %arg7[%c41, %c0_24] : memref<56x128xbf16, #tpu.memory_space<vmem>>, vector<4x128xbf16>
    tpu.vector_store %arg7[%c41, %c0_24], %32 {strides = array<i32>} : memref<56x128xbf16, #tpu.memory_space<vmem>>, vector<4x128xbf16>,
    %c2 = arith.constant 2 : index
    %c0_25 = arith.constant 0 : index
    %34 = vector.load %arg7[%c2, %c0_25] : memref<56x128xbf16, #tpu.memory_space<vmem>>, vector<1x128xbf16>
    %c0_26 = arith.constant 0 : index
    %c0_27 = arith.constant 0 : index
    %35 = vector.load %arg7[%c0_26, %c0_27] : memref<56x128xbf16, #tpu.memory_space<vmem>>, vector<1x128xbf16>
    tpu.vector_store %arg7[%c0_26, %c0_27], %34 {strides = array<i32>} : memref<56x128xbf16, #tpu.memory_space<vmem>>, vector<1x128xbf16>,
    %c3 = arith.constant 3 : index
    %c0_28 = arith.constant 0 : index
    %36 = vector.load %arg7[%c3, %c0_28] : memref<56x128xbf16, #tpu.memory_space<vmem>>, vector<1x128xbf16>
    %c5 = arith.constant 5 : index
    %c0_29 = arith.constant 0 : index
    %37 = vector.load %arg7[%c5, %c0_29] : memref<56x128xbf16, #tpu.memory_space<vmem>>, vector<1x128xbf16>
    tpu.vector_store %arg7[%c5, %c0_29], %36 {strides = array<i32>} : memref<56x128xbf16, #tpu.memory_space<vmem>>, vector<1x128xbf16>,
    %c10 = arith.constant 10 : index
    %c0_30 = arith.constant 0 : index
    %38 = vector.load %arg7[%c10, %c0_30] : memref<56x128xbf16, #tpu.memory_space<vmem>>, vector<1x128xbf16>
    %c8 = arith.constant 8 : index
    %c0_31 = arith.constant 0 : index
    %39 = vector.load %arg7[%c8, %c0_31] : memref<56x128xbf16, #tpu.memory_space<vmem>>, vector<1x128xbf16>
    tpu.vector_store %arg7[%c8, %c0_31], %38 {strides = array<i32>} : memref<56x128xbf16, #tpu.memory_space<vmem>>, vector<1x128xbf16>,
    %c11 = arith.constant 11 : index
    %c0_32 = arith.constant 0 : index
    %40 = vector.load %arg7[%c11, %c0_32] : memref<56x128xbf16, #tpu.memory_space<vmem>>, vector<1x128xbf16>
    %c13 = arith.constant 13 : index
    %c0_33 = arith.constant 0 : index
    %41 = vector.load %arg7[%c13, %c0_33] : memref<56x128xbf16, #tpu.memory_space<vmem>>, vector<1x128xbf16>
    tpu.vector_store %arg7[%c13, %c0_33], %40 {strides = array<i32>} : memref<56x128xbf16, #tpu.memory_space<vmem>>, vector<1x128xbf16>,
    %c18 = arith.constant 18 : index
    %c0_34 = arith.constant 0 : index
    %42 = vector.load %arg7[%c18, %c0_34] : memref<56x128xbf16, #tpu.memory_space<vmem>>, vector<1x128xbf16>
    %c16_35 = arith.constant 16 : index
    %c0_36 = arith.constant 0 : index
    %43 = vector.load %arg7[%c16_35, %c0_36] : memref<56x128xbf16, #tpu.memory_space<vmem>>, vector<1x128xbf16>
    tpu.vector_store %arg7[%c16_35, %c0_36], %42 {strides = array<i32>} : memref<56x128xbf16, #tpu.memory_space<vmem>>, vector<1x128xbf16>,
    %c19 = arith.constant 19 : index
    %c0_37 = arith.constant 0 : index
    %44 = vector.load %arg7[%c19, %c0_37] : memref<56x128xbf16, #tpu.memory_space<vmem>>, vector<1x128xbf16>
    %c21 = arith.constant 21 : index
    %c0_38 = arith.constant 0 : index
    %45 = vector.load %arg7[%c21, %c0_38] : memref<56x128xbf16, #tpu.memory_space<vmem>>, vector<1x128xbf16>
    tpu.vector_store %arg7[%c21, %c0_38], %44 {strides = array<i32>} : memref<56x128xbf16, #tpu.memory_space<vmem>>, vector<1x128xbf16>,
    %c26 = arith.constant 26 : index
    %c0_39 = arith.constant 0 : index
    %46 = vector.load %arg7[%c26, %c0_39] : memref<56x128xbf16, #tpu.memory_space<vmem>>, vector<1x128xbf16>
    %c24 = arith.constant 24 : index
    %c0_40 = arith.constant 0 : index
    %47 = vector.load %arg7[%c24, %c0_40] : memref<56x128xbf16, #tpu.memory_space<vmem>>, vector<1x128xbf16>
    tpu.vector_store %arg7[%c24, %c0_40], %46 {strides = array<i32>} : memref<56x128xbf16, #tpu.memory_space<vmem>>, vector<1x128xbf16>,
    %c27 = arith.constant 27 : index
    %c0_41 = arith.constant 0 : index
    %48 = vector.load %arg7[%c27, %c0_41] : memref<56x128xbf16, #tpu.memory_space<vmem>>, vector<1x128xbf16>
    %c29 = arith.constant 29 : index
    %c0_42 = arith.constant 0 : index
    %49 = vector.load %arg7[%c29, %c0_42] : memref<56x128xbf16, #tpu.memory_space<vmem>>, vector<1x128xbf16>
    tpu.vector_store %arg7[%c29, %c0_42], %48 {strides = array<i32>} : memref<56x128xbf16, #tpu.memory_space<vmem>>, vector<1x128xbf16>,
    %c34 = arith.constant 34 : index
    %c0_43 = arith.constant 0 : index
    %50 = vector.load %arg7[%c34, %c0_43] : memref<56x128xbf16, #tpu.memory_space<vmem>>, vector<1x128xbf16>
    %c32 = arith.constant 32 : index
    %c0_44 = arith.constant 0 : index
    %51 = vector.load %arg7[%c32, %c0_44] : memref<56x128xbf16, #tpu.memory_space<vmem>>, vector<1x128xbf16>
    tpu.vector_store %arg7[%c32, %c0_44], %50 {strides = array<i32>} : memref<56x128xbf16, #tpu.memory_space<vmem>>, vector<1x128xbf16>,
    %c35 = arith.constant 35 : index
    %c0_45 = arith.constant 0 : index
    %52 = vector.load %arg7[%c35, %c0_45] : memref<56x128xbf16, #tpu.memory_space<vmem>>, vector<1x128xbf16>
    %c37 = arith.constant 37 : index
    %c0_46 = arith.constant 0 : index
    %53 = vector.load %arg7[%c37, %c0_46] : memref<56x128xbf16, #tpu.memory_space<vmem>>, vector<1x128xbf16>
    tpu.vector_store %arg7[%c37, %c0_46], %52 {strides = array<i32>} : memref<56x128xbf16, #tpu.memory_space<vmem>>, vector<1x128xbf16>,
    %c42 = arith.constant 42 : index
    %c0_47 = arith.constant 0 : index
    %54 = vector.load %arg7[%c42, %c0_47] : memref<56x128xbf16, #tpu.memory_space<vmem>>, vector<1x128xbf16>
    %c40 = arith.constant 40 : index
    %c0_48 = arith.constant 0 : index
    %55 = vector.load %arg7[%c40, %c0_48] : memref<56x128xbf16, #tpu.memory_space<vmem>>, vector<1x128xbf16>
    tpu.vector_store %arg7[%c40, %c0_48], %54 {strides = array<i32>} : memref<56x128xbf16, #tpu.memory_space<vmem>>, vector<1x128xbf16>,
    %c43 = arith.constant 43 : index
    %c0_49 = arith.constant 0 : index
    %56 = vector.load %arg7[%c43, %c0_49] : memref<56x128xbf16, #tpu.memory_space<vmem>>, vector<1x128xbf16>
    %c45 = arith.constant 45 : index
    %c0_50 = arith.constant 0 : index
    %57 = vector.load %arg7[%c45, %c0_50] : memref<56x128xbf16, #tpu.memory_space<vmem>>, vector<1x128xbf16>
    tpu.vector_store %arg7[%c45, %c0_50], %56 {strides = array<i32>} : memref<56x128xbf16, #tpu.memory_space<vmem>>, vector<1x128xbf16>,
    %58 = tpu.iota {dimensions = array<i32: 1>} : vector<32x128xi32>
    %c0_51 = arith.constant 0 : index
    %c0_52 = arith.constant 0 : index
    %59 = vector.load %arg7[%c0_51, %c0_52] : memref<56x128xbf16, #tpu.memory_space<vmem>>, vector<32x128xbf16>
    %c0_53 = arith.constant 0 : index
    %c0_54 = arith.constant 0 : index
    %c0_55 = arith.constant 0 : index
    %60 = vector.load %arg4[%c0_53, %c0_54, %c0_55] : memref<9x128x128xbf16, #tpu.memory_space<vmem>>, vector<1x128x128xbf16>
    %61 = vector.shape_cast %60 : vector<1x128x128xbf16> to vector<128x128xbf16>
    %cst_56 = arith.constant dense<0.000000e+00> : vector<32x128xf32>
    %62 = tpu.matmul %59, %61, %cst_56 {dimension_numbers = #tpu.dot_dimension_numbers<[1], [0], [0], [1], [0, 0, 1, 1], [], []>} : vector<32x128xbf16>, vector<128x128xbf16>, vector<32x128xf32> -> vector<32x128xf32>
    %c1_57 = arith.constant 1 : index
    %c0_58 = arith.constant 0 : index
    %63 = vector.load %arg7[%c1_57, %c0_58] : memref<56x128xbf16, #tpu.memory_space<vmem>>, vector<32x128xbf16>
    %c1_59 = arith.constant 1 : index
    %c0_60 = arith.constant 0 : index
    %c0_61 = arith.constant 0 : index
    %64 = vector.load %arg4[%c1_59, %c0_60, %c0_61] : memref<9x128x128xbf16, #tpu.memory_space<vmem>>, vector<1x128x128xbf16>
    %65 = vector.shape_cast %64 : vector<1x128x128xbf16> to vector<128x128xbf16>
    %cst_62 = arith.constant dense<0.000000e+00> : vector<32x128xf32>
    %66 = tpu.matmul %63, %65, %cst_62 {dimension_numbers = #tpu.dot_dimension_numbers<[1], [0], [0], [1], [0, 0, 1, 1], [], []>} : vector<32x128xbf16>, vector<128x128xbf16>, vector<32x128xf32> -> vector<32x128xf32>
    %67 = arith.addf %62, %66 : vector<32x128xf32>
    %c2_63 = arith.constant 2 : index
    %c0_64 = arith.constant 0 : index
    %68 = vector.load %arg7[%c2_63, %c0_64] : memref<56x128xbf16, #tpu.memory_space<vmem>>, vector<32x128xbf16>
    %c2_65 = arith.constant 2 : index
    %c0_66 = arith.constant 0 : index
    %c0_67 = arith.constant 0 : index
    %69 = vector.load %arg4[%c2_65, %c0_66, %c0_67] : memref<9x128x128xbf16, #tpu.memory_space<vmem>>, vector<1x128x128xbf16>
    %70 = vector.shape_cast %69 : vector<1x128x128xbf16> to vector<128x128xbf16>
    %cst_68 = arith.constant dense<0.000000e+00> : vector<32x128xf32>
    %71 = tpu.matmul %68, %70, %cst_68 {dimension_numbers = #tpu.dot_dimension_numbers<[1], [0], [0], [1], [0, 0, 1, 1], [], []>} : vector<32x128xbf16>, vector<128x128xbf16>, vector<32x128xf32> -> vector<32x128xf32>
    %72 = arith.addf %67, %71 : vector<32x128xf32>
    %c8_69 = arith.constant 8 : index
    %c0_70 = arith.constant 0 : index
    %73 = vector.load %arg7[%c8_69, %c0_70] : memref<56x128xbf16, #tpu.memory_space<vmem>>, vector<32x128xbf16>
    %c3_71 = arith.constant 3 : index
    %c0_72 = arith.constant 0 : index
    %c0_73 = arith.constant 0 : index
    %74 = vector.load %arg4[%c3_71, %c0_72, %c0_73] : memref<9x128x128xbf16, #tpu.memory_space<vmem>>, vector<1x128x128xbf16>
    %75 = vector.shape_cast %74 : vector<1x128x128xbf16> to vector<128x128xbf16>
    %cst_74 = arith.constant dense<0.000000e+00> : vector<32x128xf32>
    %76 = tpu.matmul %73, %75, %cst_74 {dimension_numbers = #tpu.dot_dimension_numbers<[1], [0], [0], [1], [0, 0, 1, 1], [], []>} : vector<32x128xbf16>, vector<128x128xbf16>, vector<32x128xf32> -> vector<32x128xf32>
    %77 = arith.addf %72, %76 : vector<32x128xf32>
    %c9_75 = arith.constant 9 : index
    %c0_76 = arith.constant 0 : index
    %78 = vector.load %arg7[%c9_75, %c0_76] : memref<56x128xbf16, #tpu.memory_space<vmem>>, vector<32x128xbf16>
    %c4 = arith.constant 4 : index
    %c0_77 = arith.constant 0 : index
    %c0_78 = arith.constant 0 : index
    %79 = vector.load %arg4[%c4, %c0_77, %c0_78] : memref<9x128x128xbf16, #tpu.memory_space<vmem>>, vector<1x128x128xbf16>
    %80 = vector.shape_cast %79 : vector<1x128x128xbf16> to vector<128x128xbf16>
    %cst_79 = arith.constant dense<0.000000e+00> : vector<32x128xf32>
    %81 = tpu.matmul %78, %80, %cst_79 {dimension_numbers = #tpu.dot_dimension_numbers<[1], [0], [0], [1], [0, 0, 1, 1], [], []>} : vector<32x128xbf16>, vector<128x128xbf16>, vector<32x128xf32> -> vector<32x128xf32>
    %82 = arith.addf %77, %81 : vector<32x128xf32>
    %c10_80 = arith.constant 10 : index
    %c0_81 = arith.constant 0 : index
    %83 = vector.load %arg7[%c10_80, %c0_81] : memref<56x128xbf16, #tpu.memory_space<vmem>>, vector<32x128xbf16>
    %c5_82 = arith.constant 5 : index
    %c0_83 = arith.constant 0 : index
    %c0_84 = arith.constant 0 : index
    %84 = vector.load %arg4[%c5_82, %c0_83, %c0_84] : memref<9x128x128xbf16, #tpu.memory_space<vmem>>, vector<1x128x128xbf16>
    %85 = vector.shape_cast %84 : vector<1x128x128xbf16> to vector<128x128xbf16>
    %cst_85 = arith.constant dense<0.000000e+00> : vector<32x128xf32>
    %86 = tpu.matmul %83, %85, %cst_85 {dimension_numbers = #tpu.dot_dimension_numbers<[1], [0], [0], [1], [0, 0, 1, 1], [], []>} : vector<32x128xbf16>, vector<128x128xbf16>, vector<32x128xf32> -> vector<32x128xf32>
    %87 = arith.addf %82, %86 : vector<32x128xf32>
    %c16_86 = arith.constant 16 : index
    %c0_87 = arith.constant 0 : index
    %88 = vector.load %arg7[%c16_86, %c0_87] : memref<56x128xbf16, #tpu.memory_space<vmem>>, vector<32x128xbf16>
    %c6 = arith.constant 6 : index
    %c0_88 = arith.constant 0 : index
    %c0_89 = arith.constant 0 : index
    %89 = vector.load %arg4[%c6, %c0_88, %c0_89] : memref<9x128x128xbf16, #tpu.memory_space<vmem>>, vector<1x128x128xbf16>
    %90 = vector.shape_cast %89 : vector<1x128x128xbf16> to vector<128x128xbf16>
    %cst_90 = arith.constant dense<0.000000e+00> : vector<32x128xf32>
    %91 = tpu.matmul %88, %90, %cst_90 {dimension_numbers = #tpu.dot_dimension_numbers<[1], [0], [0], [1], [0, 0, 1, 1], [], []>} : vector<32x128xbf16>, vector<128x128xbf16>, vector<32x128xf32> -> vector<32x128xf32>
    %92 = arith.addf %87, %91 : vector<32x128xf32>
    %c17_91 = arith.constant 17 : index
    %c0_92 = arith.constant 0 : index
    %93 = vector.load %arg7[%c17_91, %c0_92] : memref<56x128xbf16, #tpu.memory_space<vmem>>, vector<32x128xbf16>
    %c7 = arith.constant 7 : index
    %c0_93 = arith.constant 0 : index
    %c0_94 = arith.constant 0 : index
    %94 = vector.load %arg4[%c7, %c0_93, %c0_94] : memref<9x128x128xbf16, #tpu.memory_space<vmem>>, vector<1x128x128xbf16>
    %95 = vector.shape_cast %94 : vector<1x128x128xbf16> to vector<128x128xbf16>
    %cst_95 = arith.constant dense<0.000000e+00> : vector<32x128xf32>
    %96 = tpu.matmul %93, %95, %cst_95 {dimension_numbers = #tpu.dot_dimension_numbers<[1], [0], [0], [1], [0, 0, 1, 1], [], []>} : vector<32x128xbf16>, vector<128x128xbf16>, vector<32x128xf32> -> vector<32x128xf32>
    %97 = arith.addf %92, %96 : vector<32x128xf32>
    %c18_96 = arith.constant 18 : index
    %c0_97 = arith.constant 0 : index
    %98 = vector.load %arg7[%c18_96, %c0_97] : memref<56x128xbf16, #tpu.memory_space<vmem>>, vector<32x128xbf16>
    %c8_98 = arith.constant 8 : index
    %c0_99 = arith.constant 0 : index
    %c0_100 = arith.constant 0 : index
    %99 = vector.load %arg4[%c8_98, %c0_99, %c0_100] : memref<9x128x128xbf16, #tpu.memory_space<vmem>>, vector<1x128x128xbf16>
    %100 = vector.shape_cast %99 : vector<1x128x128xbf16> to vector<128x128xbf16>
    %cst_101 = arith.constant dense<0.000000e+00> : vector<32x128xf32>
    %101 = tpu.matmul %98, %100, %cst_101 {dimension_numbers = #tpu.dot_dimension_numbers<[1], [0], [0], [1], [0, 0, 1, 1], [], []>} : vector<32x128xbf16>, vector<128x128xbf16>, vector<32x128xf32> -> vector<32x128xf32>
    %102 = arith.addf %97, %101 : vector<32x128xf32>
    %c0_102 = arith.constant 0 : index
    %c0_103 = arith.constant 0 : index
    %103 = vector.load %arg5[%c0_102, %c0_103] : memref<1x128xf32, #tpu.memory_space<vmem>>, vector<1x128xf32>
    %104 = vector.broadcast %103 : vector<1x128xf32> to vector<32x128xf32>
    %105 = arith.addf %102, %104 : vector<32x128xf32>
    %106 = arith.mulf %105, %105 : vector<32x128xf32>
    %cst_104 = arith.constant dense<0.000000e+00> : vector<32xf32>
    %107 = vector.multi_reduction <add>, %106, %cst_104 [1] : vector<32x128xf32> to vector<32xf32>
    %108 = vector.shape_cast %107 : vector<32xf32> to vector<32x1xf32>
    %cst_105 = arith.constant 3.125000e-02 : f32
    %109 = vector.broadcast %cst_105 : f32 to vector<32x1xf32>
    %110 = arith.mulf %108, %109 : vector<32x1xf32>
    %cst_106 = arith.constant 9.99999974E-6 : f32
    %111 = vector.broadcast %cst_106 : f32 to vector<32x1xf32>
    %112 = arith.addf %110, %111 : vector<32x1xf32>
    %113 = math.rsqrt %112 : vector<32x1xf32>
    %114 = vector.broadcast %113 : vector<32x1xf32> to vector<32x128xf32>
    %115 = arith.mulf %105, %114 : vector<32x128xf32>
    %c0_107 = arith.constant 0 : index
    %c9_108 = arith.constant 9 : index
    %c0_109 = arith.constant 0 : index
    %116 = vector.load %arg1[%c0_107, %c9_108, %c0_109] : memref<1x64x256xbf16, #tpu.memory_space<vmem>>, vector<1x32x128xbf16>
    %117 = vector.shape_cast %116 : vector<1x32x128xbf16> to vector<32x128xbf16>
    %118 = arith.extf %117 : vector<32x128xbf16> to vector<32x128xf32>
    %c32_i32 = arith.constant 32 : i32
    %119 = vector.broadcast %c32_i32 : i32 to vector<32x128xi32>
    %120 = arith.cmpi slt, %58, %119 : vector<32x128xi32>
    %cst_110 = arith.constant 0.000000e+00 : f32
    %121 = vector.broadcast %cst_110 : f32 to vector<32x128xf32>
    %122 = arith.select %120, %118, %121 : vector<32x128xi1>, vector<32x128xf32>
    %123 = arith.addf %115, %122 : vector<32x128xf32>
    %124 = arith.truncf %123 : vector<32x128xf32> to vector<32x128xbf16>
    %c0_111 = arith.constant 0 : index
    %c0_112 = arith.constant 0 : index
    %c0_113 = arith.constant 0 : index
    %125 = vector.load %arg6[%c0_111, %c0_112, %c0_113] : memref<1x32x128xbf16, #tpu.memory_space<vmem>>, vector<1x32x128xbf16>
    %126 = vector.shape_cast %125 : vector<1x32x128xbf16> to vector<32x128xbf16>
    %127 = vector.shape_cast %124 : vector<32x128xbf16> to vector<1x32x128xbf16>
    tpu.vector_store %arg6[%c0_111, %c0_112, %c0_113], %127 {strides = array<i32>} : memref<1x32x128xbf16, #tpu.memory_space<vmem>>, vector<1x32x128xbf16>,
    return
  }
  func.func @transform_0(%arg0: i32) -> (i32, i32, i32) {
    %c0_i32 = arith.constant 0 : i32
    %c0_i32_0 = arith.constant 0 : i32
    %c0_i32_1 = arith.constant 0 : i32
    return %arg0, %c0_i32, %c0_i32_0 : i32, i32, i32
  }
  func.func @transform_1(%arg0: i32) -> (i32, i32, i32) {
    %c0_i32 = arith.constant 0 : i32
    %c0_i32_0 = arith.constant 0 : i32
    %c0_i32_1 = arith.constant 0 : i32
    %c0_i32_2 = arith.constant 0 : i32
    return %c0_i32, %c0_i32_0, %c0_i32_1 : i32, i32, i32
  }
  func.func @transform_2(%arg0: i32) -> (i32, i32) {
    %c0_i32 = arith.constant 0 : i32
    %c0_i32_0 = arith.constant 0 : i32
    %c0_i32_1 = arith.constant 0 : i32
    return %c0_i32, %c0_i32_0 : i32, i32
  }
  func.func @transform_3(%arg0: i32) -> (i32, i32, i32) {
    %c0_i32 = arith.constant 0 : i32
    %c0_i32_0 = arith.constant 0 : i32
    %c0_i32_1 = arith.constant 0 : i32
    %c0_i32_2 = arith.constant 0 : i32
    return %c0_i32, %c0_i32_0, %c0_i32_1 : i32, i32, i32
  }
  func.func @transform_4(%arg0: i32) -> (i32, i32) {
    %c0_i32 = arith.constant 0 : i32
    %c0_i32_0 = arith.constant 0 : i32
    %c0_i32_1 = arith.constant 0 : i32
    return %c0_i32, %c0_i32_0 : i32, i32
  }
  func.func @transform_5(%arg0: i32) -> (i32, i32, i32) {
    %c0_i32 = arith.constant 0 : i32
    %c0_i32_0 = arith.constant 0 : i32
    %c0_i32_1 = arith.constant 0 : i32
    return %arg0, %c0_i32, %c0_i32_0 : i32, i32, i32
  }
}

module attributes {stable_mosaic.version = 11 : i64} {
  func.func @_conv_kernel(%arg0: i32, %arg1: i32, %arg2: memref<1x80x128xbf16, #tpu.memory_space<vmem>>, %arg3: memref<3x128x128xbf16, #tpu.memory_space<vmem>>, %arg4: memref<1x128xf32, #tpu.memory_space<vmem>>, %arg5: memref<1x16x128xbf16, #tpu.memory_space<vmem>>) attributes {dimension_semantics = [#tpu.dimension_semantics<parallel>, #tpu.dimension_semantics<parallel>], iteration_bounds = array<i64: 2, 1>, scalar_prefetch = 0 : i64, scratch_operands = 0 : i64, tpu.core_type = #tpu.core_type<tc>, window_params = [{transform_indices = @transform_0, window_bounds = array<i64: 1, 80, 128>}, {pipeline_mode = #tpu.pipeline_mode<synchronous>, transform_indices = @transform_1, window_bounds = array<i64: 3, 128, 128>}, {pipeline_mode = #tpu.pipeline_mode<synchronous>, transform_indices = @transform_2, window_bounds = array<i64: 1, 128>}, {transform_indices = @transform_3, window_bounds = array<i64: 1, 16, 128>}]} {
    %c0 = arith.constant 0 : index
    %c0_0 = arith.constant 0 : index
    %c0_1 = arith.constant 0 : index
    %0 = vector.load %arg2[%c0, %c0_0, %c0_1] : memref<1x80x128xbf16, #tpu.memory_space<vmem>>, vector<1x16x128xbf16>
    %1 = vector.shape_cast %0 : vector<1x16x128xbf16> to vector<16x128xbf16>
    %c0_2 = arith.constant 0 : index
    %c0_3 = arith.constant 0 : index
    %c0_4 = arith.constant 0 : index
    %2 = vector.load %arg3[%c0_2, %c0_3, %c0_4] : memref<3x128x128xbf16, #tpu.memory_space<vmem>>, vector<1x128x128xbf16>
    %3 = vector.shape_cast %2 : vector<1x128x128xbf16> to vector<128x128xbf16>
    %cst = arith.constant dense<0.000000e+00> : vector<16x128xf32>
    %4 = tpu.matmul %1, %3, %cst {dimension_numbers = #tpu.dot_dimension_numbers<[1], [0], [0], [1], [0, 0, 1, 1], [], []>} : vector<16x128xbf16>, vector<128x128xbf16>, vector<16x128xf32> -> vector<16x128xf32>
    %c0_5 = arith.constant 0 : index
    %c40 = arith.constant 40 : index
    %c0_6 = arith.constant 0 : index
    %5 = vector.load %arg2[%c0_5, %c40, %c0_6] : memref<1x80x128xbf16, #tpu.memory_space<vmem>>, vector<1x16x128xbf16>
    %6 = vector.shape_cast %5 : vector<1x16x128xbf16> to vector<16x128xbf16>
    %c1 = arith.constant 1 : index
    %c0_7 = arith.constant 0 : index
    %c0_8 = arith.constant 0 : index
    %7 = vector.load %arg3[%c1, %c0_7, %c0_8] : memref<3x128x128xbf16, #tpu.memory_space<vmem>>, vector<1x128x128xbf16>
    %8 = vector.shape_cast %7 : vector<1x128x128xbf16> to vector<128x128xbf16>
    %cst_9 = arith.constant dense<0.000000e+00> : vector<16x128xf32>
    %9 = tpu.matmul %6, %8, %cst_9 {dimension_numbers = #tpu.dot_dimension_numbers<[1], [0], [0], [1], [0, 0, 1, 1], [], []>} : vector<16x128xbf16>, vector<128x128xbf16>, vector<16x128xf32> -> vector<16x128xf32>
    %10 = arith.addf %4, %9 : vector<16x128xf32>
    %c0_10 = arith.constant 0 : index
    %c8 = arith.constant 8 : index
    %c0_11 = arith.constant 0 : index
    %11 = vector.load %arg2[%c0_10, %c8, %c0_11] : memref<1x80x128xbf16, #tpu.memory_space<vmem>>, vector<1x16x128xbf16>
    %12 = vector.shape_cast %11 : vector<1x16x128xbf16> to vector<16x128xbf16>
    %c2 = arith.constant 2 : index
    %c0_12 = arith.constant 0 : index
    %c0_13 = arith.constant 0 : index
    %13 = vector.load %arg3[%c2, %c0_12, %c0_13] : memref<3x128x128xbf16, #tpu.memory_space<vmem>>, vector<1x128x128xbf16>
    %14 = vector.shape_cast %13 : vector<1x128x128xbf16> to vector<128x128xbf16>
    %cst_14 = arith.constant dense<0.000000e+00> : vector<16x128xf32>
    %15 = tpu.matmul %12, %14, %cst_14 {dimension_numbers = #tpu.dot_dimension_numbers<[1], [0], [0], [1], [0, 0, 1, 1], [], []>} : vector<16x128xbf16>, vector<128x128xbf16>, vector<16x128xf32> -> vector<16x128xf32>
    %16 = arith.addf %10, %15 : vector<16x128xf32>
    %c0_15 = arith.constant 0 : index
    %c0_16 = arith.constant 0 : index
    %17 = vector.load %arg4[%c0_15, %c0_16] : memref<1x128xf32, #tpu.memory_space<vmem>>, vector<1x128xf32>
    %18 = vector.broadcast %17 : vector<1x128xf32> to vector<16x128xf32>
    %19 = arith.addf %16, %18 : vector<16x128xf32>
    %20 = arith.mulf %19, %19 : vector<16x128xf32>
    %cst_17 = arith.constant dense<0.000000e+00> : vector<16xf32>
    %21 = vector.multi_reduction <add>, %20, %cst_17 [1] : vector<16x128xf32> to vector<16xf32>
    %22 = vector.shape_cast %21 : vector<16xf32> to vector<16x1xf32>
    %cst_18 = arith.constant 1.562500e-02 : f32
    %23 = vector.broadcast %cst_18 : f32 to vector<16x1xf32>
    %24 = arith.mulf %22, %23 : vector<16x1xf32>
    %cst_19 = arith.constant 9.99999974E-6 : f32
    %25 = vector.broadcast %cst_19 : f32 to vector<16x1xf32>
    %26 = arith.addf %24, %25 : vector<16x1xf32>
    %27 = math.rsqrt %26 : vector<16x1xf32>
    %28 = vector.broadcast %27 : vector<16x1xf32> to vector<16x128xf32>
    %29 = arith.mulf %19, %28 : vector<16x128xf32>
    %cst_20 = arith.constant 0.000000e+00 : f32
    %30 = vector.broadcast %cst_20 : f32 to vector<16x128xf32>
    %31 = arith.maximumf %29, %30 : vector<16x128xf32>
    %32 = arith.truncf %31 : vector<16x128xf32> to vector<16x128xbf16>
    %c0_21 = arith.constant 0 : index
    %c0_22 = arith.constant 0 : index
    %c0_23 = arith.constant 0 : index
    %33 = vector.load %arg5[%c0_21, %c0_22, %c0_23] : memref<1x16x128xbf16, #tpu.memory_space<vmem>>, vector<1x16x128xbf16>
    %34 = vector.shape_cast %33 : vector<1x16x128xbf16> to vector<16x128xbf16>
    %35 = vector.shape_cast %32 : vector<16x128xbf16> to vector<1x16x128xbf16>
    tpu.vector_store %arg5[%c0_21, %c0_22, %c0_23], %35 {strides = array<i32>} : memref<1x16x128xbf16, #tpu.memory_space<vmem>>, vector<1x16x128xbf16>,
    return
  }
  func.func @transform_0(%arg0: i32, %arg1: i32) -> (i32, i32, i32) {
    %c0_i32 = arith.constant 0 : i32
    %c0_i32_0 = arith.constant 0 : i32
    %c0_i32_1 = arith.constant 0 : i32
    return %arg0, %c0_i32, %c0_i32_0 : i32, i32, i32
  }
  func.func @transform_1(%arg0: i32, %arg1: i32) -> (i32, i32, i32) {
    %c0_i32 = arith.constant 0 : i32
    %c0_i32_0 = arith.constant 0 : i32
    %c0_i32_1 = arith.constant 0 : i32
    %c0_i32_2 = arith.constant 0 : i32
    return %c0_i32, %c0_i32_0, %c0_i32_1 : i32, i32, i32
  }
  func.func @transform_2(%arg0: i32, %arg1: i32) -> (i32, i32) {
    %c0_i32 = arith.constant 0 : i32
    %c0_i32_0 = arith.constant 0 : i32
    %c0_i32_1 = arith.constant 0 : i32
    return %c0_i32, %c0_i32_0 : i32, i32
  }
  func.func @transform_3(%arg0: i32, %arg1: i32) -> (i32, i32, i32) {
    %c0_i32 = arith.constant 0 : i32
    %c0_i32_0 = arith.constant 0 : i32
    return %arg0, %arg1, %c0_i32 : i32, i32, i32
  }
}

module attributes {stable_mosaic.version = 11 : i64} {
  func.func @_conv_kernel(%arg0: i32, %arg1: i32, %arg2: memref<1x80x256xbf16, #tpu.memory_space<vmem>>, %arg3: memref<3x256x128xbf16, #tpu.memory_space<vmem>>, %arg4: memref<1x128xf32, #tpu.memory_space<vmem>>, %arg5: memref<1x16x128xbf16, #tpu.memory_space<vmem>>) attributes {dimension_semantics = [#tpu.dimension_semantics<parallel>, #tpu.dimension_semantics<parallel>], iteration_bounds = array<i64: 2, 1>, scalar_prefetch = 0 : i64, scratch_operands = 0 : i64, tpu.core_type = #tpu.core_type<tc>, window_params = [{transform_indices = @transform_0, window_bounds = array<i64: 1, 80, 256>}, {pipeline_mode = #tpu.pipeline_mode<synchronous>, transform_indices = @transform_1, window_bounds = array<i64: 3, 256, 128>}, {pipeline_mode = #tpu.pipeline_mode<synchronous>, transform_indices = @transform_2, window_bounds = array<i64: 1, 128>}, {transform_indices = @transform_3, window_bounds = array<i64: 1, 16, 128>}]} {
    %c0 = arith.constant 0 : index
    %c0_0 = arith.constant 0 : index
    %c0_1 = arith.constant 0 : index
    %0 = vector.load %arg2[%c0, %c0_0, %c0_1] : memref<1x80x256xbf16, #tpu.memory_space<vmem>>, vector<1x16x256xbf16>
    %1 = vector.shape_cast %0 : vector<1x16x256xbf16> to vector<16x256xbf16>
    %c0_2 = arith.constant 0 : index
    %c0_3 = arith.constant 0 : index
    %c0_4 = arith.constant 0 : index
    %2 = vector.load %arg3[%c0_2, %c0_3, %c0_4] : memref<3x256x128xbf16, #tpu.memory_space<vmem>>, vector<1x256x128xbf16>
    %3 = vector.shape_cast %2 : vector<1x256x128xbf16> to vector<256x128xbf16>
    %cst = arith.constant dense<0.000000e+00> : vector<16x128xf32>
    %4 = tpu.matmul %1, %3, %cst {dimension_numbers = #tpu.dot_dimension_numbers<[1], [0], [0], [1], [0, 0, 1, 1], [], []>} : vector<16x256xbf16>, vector<256x128xbf16>, vector<16x128xf32> -> vector<16x128xf32>
    %c0_5 = arith.constant 0 : index
    %c40 = arith.constant 40 : index
    %c0_6 = arith.constant 0 : index
    %5 = vector.load %arg2[%c0_5, %c40, %c0_6] : memref<1x80x256xbf16, #tpu.memory_space<vmem>>, vector<1x16x256xbf16>
    %6 = vector.shape_cast %5 : vector<1x16x256xbf16> to vector<16x256xbf16>
    %c1 = arith.constant 1 : index
    %c0_7 = arith.constant 0 : index
    %c0_8 = arith.constant 0 : index
    %7 = vector.load %arg3[%c1, %c0_7, %c0_8] : memref<3x256x128xbf16, #tpu.memory_space<vmem>>, vector<1x256x128xbf16>
    %8 = vector.shape_cast %7 : vector<1x256x128xbf16> to vector<256x128xbf16>
    %cst_9 = arith.constant dense<0.000000e+00> : vector<16x128xf32>
    %9 = tpu.matmul %6, %8, %cst_9 {dimension_numbers = #tpu.dot_dimension_numbers<[1], [0], [0], [1], [0, 0, 1, 1], [], []>} : vector<16x256xbf16>, vector<256x128xbf16>, vector<16x128xf32> -> vector<16x128xf32>
    %10 = arith.addf %4, %9 : vector<16x128xf32>
    %c0_10 = arith.constant 0 : index
    %c8 = arith.constant 8 : index
    %c0_11 = arith.constant 0 : index
    %11 = vector.load %arg2[%c0_10, %c8, %c0_11] : memref<1x80x256xbf16, #tpu.memory_space<vmem>>, vector<1x16x256xbf16>
    %12 = vector.shape_cast %11 : vector<1x16x256xbf16> to vector<16x256xbf16>
    %c2 = arith.constant 2 : index
    %c0_12 = arith.constant 0 : index
    %c0_13 = arith.constant 0 : index
    %13 = vector.load %arg3[%c2, %c0_12, %c0_13] : memref<3x256x128xbf16, #tpu.memory_space<vmem>>, vector<1x256x128xbf16>
    %14 = vector.shape_cast %13 : vector<1x256x128xbf16> to vector<256x128xbf16>
    %cst_14 = arith.constant dense<0.000000e+00> : vector<16x128xf32>
    %15 = tpu.matmul %12, %14, %cst_14 {dimension_numbers = #tpu.dot_dimension_numbers<[1], [0], [0], [1], [0, 0, 1, 1], [], []>} : vector<16x256xbf16>, vector<256x128xbf16>, vector<16x128xf32> -> vector<16x128xf32>
    %16 = arith.addf %10, %15 : vector<16x128xf32>
    %c0_15 = arith.constant 0 : index
    %c0_16 = arith.constant 0 : index
    %17 = vector.load %arg4[%c0_15, %c0_16] : memref<1x128xf32, #tpu.memory_space<vmem>>, vector<1x128xf32>
    %18 = vector.broadcast %17 : vector<1x128xf32> to vector<16x128xf32>
    %19 = arith.addf %16, %18 : vector<16x128xf32>
    %20 = arith.mulf %19, %19 : vector<16x128xf32>
    %cst_17 = arith.constant dense<0.000000e+00> : vector<16xf32>
    %21 = vector.multi_reduction <add>, %20, %cst_17 [1] : vector<16x128xf32> to vector<16xf32>
    %22 = vector.shape_cast %21 : vector<16xf32> to vector<16x1xf32>
    %cst_18 = arith.constant 7.812500e-03 : f32
    %23 = vector.broadcast %cst_18 : f32 to vector<16x1xf32>
    %24 = arith.mulf %22, %23 : vector<16x1xf32>
    %cst_19 = arith.constant 9.99999974E-6 : f32
    %25 = vector.broadcast %cst_19 : f32 to vector<16x1xf32>
    %26 = arith.addf %24, %25 : vector<16x1xf32>
    %27 = math.rsqrt %26 : vector<16x1xf32>
    %28 = vector.broadcast %27 : vector<16x1xf32> to vector<16x128xf32>
    %29 = arith.mulf %19, %28 : vector<16x128xf32>
    %cst_20 = arith.constant 0.000000e+00 : f32
    %30 = vector.broadcast %cst_20 : f32 to vector<16x128xf32>
    %31 = arith.maximumf %29, %30 : vector<16x128xf32>
    %32 = arith.truncf %31 : vector<16x128xf32> to vector<16x128xbf16>
    %c0_21 = arith.constant 0 : index
    %c0_22 = arith.constant 0 : index
    %c0_23 = arith.constant 0 : index
    %33 = vector.load %arg5[%c0_21, %c0_22, %c0_23] : memref<1x16x128xbf16, #tpu.memory_space<vmem>>, vector<1x16x128xbf16>
    %34 = vector.shape_cast %33 : vector<1x16x128xbf16> to vector<16x128xbf16>
    %35 = vector.shape_cast %32 : vector<16x128xbf16> to vector<1x16x128xbf16>
    tpu.vector_store %arg5[%c0_21, %c0_22, %c0_23], %35 {strides = array<i32>} : memref<1x16x128xbf16, #tpu.memory_space<vmem>>, vector<1x16x128xbf16>,
    return
  }
  func.func @transform_0(%arg0: i32, %arg1: i32) -> (i32, i32, i32) {
    %c0_i32 = arith.constant 0 : i32
    %c0_i32_0 = arith.constant 0 : i32
    %c0_i32_1 = arith.constant 0 : i32
    return %arg0, %c0_i32, %c0_i32_0 : i32, i32, i32
  }
  func.func @transform_1(%arg0: i32, %arg1: i32) -> (i32, i32, i32) {
    %c0_i32 = arith.constant 0 : i32
    %c0_i32_0 = arith.constant 0 : i32
    %c0_i32_1 = arith.constant 0 : i32
    %c0_i32_2 = arith.constant 0 : i32
    return %c0_i32, %c0_i32_0, %c0_i32_1 : i32, i32, i32
  }
  func.func @transform_2(%arg0: i32, %arg1: i32) -> (i32, i32) {
    %c0_i32 = arith.constant 0 : i32
    %c0_i32_0 = arith.constant 0 : i32
    %c0_i32_1 = arith.constant 0 : i32
    return %c0_i32, %c0_i32_0 : i32, i32
  }
  func.func @transform_3(%arg0: i32, %arg1: i32) -> (i32, i32, i32) {
    %c0_i32 = arith.constant 0 : i32
    %c0_i32_0 = arith.constant 0 : i32
    return %arg0, %arg1, %c0_i32 : i32, i32, i32
  }
}

</mosaic_0001>

<llo_original>
// kernel: gddc_encoder_forward.10
$region0: #{gddc_encoder_forward.10}
  #allocation0 [shape = 'u32[]', space=smem, size = 0x4, offset = 0x4, fixed_abs, tag = 'smem constant byte address 0x4 - core index']
  #allocation1 [shape = 'u32[144,128]{1,0:T(1,128)}', space=vmem, size = 0x12000, scoped, tag = 'internal scratch']
  %s0 = inlined_call_operand.vmem [shape: bf16[2,528,256], index: 0, kind: input, shape index: {}]
  %s1 = inlined_call_operand.vmem [shape: bf16[1,256,128], index: 1, kind: input, shape index: {}]
  %s2 = inlined_call_operand.vmem [shape: f32[1,128], index: 2, kind: input, shape index: {}]
  %s3 = inlined_call_operand.vmem [shape: bf16[2,384,128], index: 3, kind: output, shape index: {}]
  %s4 = sld [smem:[#allocation0]]
  $region45: #{gddc_encoder_forward.10} parent=0
    _
  %s6 = ssub.s32 1, %s4
  %s7 = scalar_select 0, %s6, %s4
  loop: start=0, step=1, limit=6
  $region2: #{gddc_encoder_forward.10} parent=0 // loop_pre_header
    _
  $region3: #{gddc_encoder_forward.10} parent=0 // loop_header
    %s9 = sphi 0, %s13
    %p10 = scmp.ge.s32.totalorder %s9, 6
    %s16 = sphi 0, %s28
    %s17 = sphi 0, %s24
    %s18 = sphi 0, %s16
    %s19 = sphi 0, %s17
    %s20 = sphi 0, %s18
    %s21 = sphi 0, %s19
    %s31 = sphi 0, %s33
    %s34 = sphi 0, %s31
    %s35 = sphi 0, %s34
    %s51 = sphi 0, %s35
    %s55 = sphi 0, %s55
    %s57 = sphi 0, %s55
    %s58 = sphi 0, %s57
    %s72 = sphi 0, %s58
    %s76 = sphi 0, %s76
    %s78 = sphi 0, %s76
    %s79 = sphi 0, %s78
    %s93 = sphi 0, %s79
    %s101 = sphi 0, %s103
    %s104 = sphi 0, %s101
    %s105 = sphi 0, %s104
    %s121 = sphi 0, %s105
  $region4: #{gddc_encoder_forward.10} parent=0 // loop_header_branch
    %12 = sbr.rel (%p10) target = $region8
  $region5: #{gddc_encoder_forward.10} parent=0 // loop_body
    %s14 = ssub.s32 %s9, 1
    %s15 = ssub.s32 %s9, 2
    %s22 = sadd.s32 1, %s17
    %p23 = scmp.ge.s32.totalorder %s22, 2
    %s24 = scalar_select %p23, 0, %s22
    %s25 = sadd.s32 1, %s16
    %s26 = scalar_select %p23, %s25, %s16
    %p27 = scmp.ge.s32.totalorder %s26, 2
    %s28 = scalar_select %p27, 0, %s26
    %s29 = ssub.s32 %s16, %s28
    %p30 = scmp.eq.s32.totalorder %s29, 0
    %s32 = sadd.s32 %s31, 1
    %s33 = scalar_select %p30, %s31, %s32
    %p36 = pneg %p30
    %p37 = scmp.eq.s32.totalorder %s9, 3
    %p38 = por %p36, %p37
    %p39 = scmp.ne.s32.totalorder %s31, %s34
    %p40 = scmp.eq.s32.totalorder %s9, 0
    %p41 = por %p39, %p40
    %p42 = scmp.ne.s32.totalorder %s31, %s34
    %p43 = scmp.eq.s32.totalorder %s14, 3
    %p44 = por %p42, %p43
    %p45 = scmp.ne.s32.totalorder %s34, %s35
    %p46 = scmp.eq.s32.totalorder %s14, 0
    %p47 = por %p45, %p46
    %p48 = scmp.ne.s32.totalorder %s34, %s35
    %p49 = scmp.eq.s32.totalorder %s15, 3
    %p50 = por %p48, %p49
    %p52 = scmp.ne.s32.totalorder %s35, %s51
    %p53 = scmp.eq.s32.totalorder %s15, 0
    %p54 = por %p52, %p53
    %s56 = sadd.s32 %s55, 1
    %p59 = scmp.eq.s32.totalorder %s9, 3
    %p60 = scmp.ne.s32.totalorder %s55, %s57
    %p61 = scmp.eq.s32.totalorder %s9, 0
    %p62 = por %p60, %p61
    %p63 = scmp.ne.s32.totalorder %s55, %s57
    %p64 = scmp.eq.s32.totalorder %s14, 3
    %p65 = por %p63, %p64
    %p66 = scmp.ne.s32.totalorder %s57, %s58
    %p67 = scmp.eq.s32.totalorder %s14, 0
    %p68 = por %p66, %p67
    %p69 = scmp.ne.s32.totalorder %s57, %s58
    %p70 = scmp.eq.s32.totalorder %s15, 3
    %p71 = por %p69, %p70
    %p73 = scmp.ne.s32.totalorder %s58, %s72
    %p74 = scmp.eq.s32.totalorder %s15, 0
    %p75 = por %p73, %p74
    %s77 = sadd.s32 %s76, 1
    %p80 = scmp.eq.s32.totalorder %s9, 3
    %p81 = scmp.ne.s32.totalorder %s76, %s78
    %p82 = scmp.eq.s32.totalorder %s9, 0
    %p83 = por %p81, %p82
    %p84 = scmp.ne.s32.totalorder %s76, %s78
    %p85 = scmp.eq.s32.totalorder %s14, 3
    %p86 = por %p84, %p85
    %p87 = scmp.ne.s32.totalorder %s78, %s79
    %p88 = scmp.eq.s32.totalorder %s14, 0
    %p89 = por %p87, %p88
    %p90 = scmp.ne.s32.totalorder %s78, %s79
    %p91 = scmp.eq.s32.totalorder %s15, 3
    %p92 = por %p90, %p91
    %p94 = scmp.ne.s32.totalorder %s79, %s93
    %p95 = scmp.eq.s32.totalorder %s15, 0
    %p96 = por %p94, %p95
    %s97 = ssub.s32 %s16, %s28
    %s98 = ssub.s32 %s17, %s24
    %s99 = sor.u32 %s97, %s98
    %p100 = scmp.eq.s32.totalorder %s99, 0
    %s102 = sadd.s32 %s101, 1
    %s103 = scalar_select %p100, %s101, %s102
    %p106 = pneg %p100
    %p107 = scmp.eq.s32.totalorder %s9, 3
    %p108 = por %p106, %p107
    %p109 = scmp.ne.s32.totalorder %s101, %s104
    %p110 = scmp.eq.s32.totalorder %s9, 0
    %p111 = por %p109, %p110
    %p112 = scmp.ne.s32.totalorder %s101, %s104
    %p113 = scmp.eq.s32.totalorder %s14, 3
    %p114 = por %p112, %p113
    %p115 = scmp.ne.s32.totalorder %s104, %s105
    %p116 = scmp.eq.s32.totalorder %s14, 0
    %p117 = por %p115, %p116
    %p118 = scmp.ne.s32.totalorder %s104, %s105
    %p119 = scmp.eq.s32.totalorder %s15, 3
    %p120 = por %p118, %p119
    %p122 = scmp.ne.s32.totalorder %s105, %s121
    %p123 = scmp.eq.s32.totalorder %s15, 0
    %p124 = por %p122, %p123
    %p125 = scmp.le.s32.totalorder 1, %s9
    %p126 = scmp.lt.s32.totalorder %s9, 5
    %p127 = pnand %p125, %p126
    %p128 = pneg %p127
    // Predicated region
    $region9: #{gddc_encoder_forward.10} parent=5 // pred_check
      _
    $region10: #{gddc_encoder_forward.10} parent=5 // pred_check_branch
      %130 = sbr.rel (%p127) target = $region12
    $region11: #{gddc_encoder_forward.10} parent=5 // pred_region
      %s131 = ssub.s32 %s9, 1
      // Predicated region
      $region13: #{gddc_encoder_forward.10} parent=11 // pred_check
        %p132 = pneg %p68
      $region14: #{gddc_encoder_forward.10} parent=11 // pred_check_branch
        %134 = sbr.rel (%p132) target = $region16
      $region15: #{gddc_encoder_forward.10} parent=11 // pred_region
        _
      $region16: #{gddc_encoder_forward.10} parent=11 // pred_fallthru
        _
      // Predicated region
      $region17: #{gddc_encoder_forward.10} parent=11 // pred_check
        %p135 = pneg %p89
      $region18: #{gddc_encoder_forward.10} parent=11 // pred_check_branch
        %137 = sbr.rel (%p135) target = $region20
      $region19: #{gddc_encoder_forward.10} parent=11 // pred_region
        _
      $region20: #{gddc_encoder_forward.10} parent=11 // pred_fallthru
        _
    $region12: #{gddc_encoder_forward.10} parent=5 // pred_fallthru
      _
    %p138 = scmp.lt.s32.totalorder %s9, 4
    // Predicated region
    $region21: #{gddc_encoder_forward.10} parent=5 // pred_check
      %p139 = pneg %p138
    $region22: #{gddc_encoder_forward.10} parent=5 // pred_check_branch
      %141 = sbr.rel (%p139) target = $region24
    $region23: #{gddc_encoder_forward.10} parent=5 // pred_region
      // Predicated region
      $region25: #{gddc_encoder_forward.10} parent=23 // pred_check
        %p142 = pneg %p41
      $region26: #{gddc_encoder_forward.10} parent=23 // pred_check_branch
        %144 = sbr.rel (%p142) target = $region28
      $region27: #{gddc_encoder_forward.10} parent=23 // pred_region
        %p145 = scmp.lt.s32.totalorder %s16, 1
        %s146 = scalar_select %p145, %s16, 1
        %s147 = smul.addr %s146, 132
        %s148 = smul.addr %s147, 4
        %s149 = scalar_lea.vmem %s0, %s148
      $region28: #{gddc_encoder_forward.10} parent=23 // pred_fallthru
        _
    $region24: #{gddc_encoder_forward.10} parent=5 // pred_fallthru
      _
    %p150 = scmp.le.s32.totalorder 1, %s9
    %p151 = scmp.lt.s32.totalorder %s9, 5
    %p152 = pnand %p150, %p151
    %p153 = pneg %p152
    // Predicated region
    $region29: #{gddc_encoder_forward.10} parent=5 // pred_check
      _
    $region30: #{gddc_encoder_forward.10} parent=5 // pred_check_branch
      %155 = sbr.rel (%p152) target = $region32
    $region31: #{gddc_encoder_forward.10} parent=5 // pred_region
      %s156 = ssub.s32 %s9, 1
      %p157 = scmp.lt.s32.totalorder %s18, 1
      %s158 = scalar_select %p157, %s18, 1
      %s159 = smul.addr %s158, 132
      %s160 = smul.addr %s159, 4
      %s161 = scalar_lea.vmem %s0, %s160
      %p162 = pneg %p47
      %p163 = pneg %p44
      %p164 = pneg %p68
      %p165 = pneg %p65
      %p166 = pneg %p89
      %p167 = pneg %p86
      %p168 = pneg %p117
      %p169 = pneg %p114
      %s170 = smul.u32 24, %s19
      %p171 = scmp.lt.s32.totalorder %s18, 1
      %s172 = scalar_select %p171, %s18, 1
      %p173 = scmp.lt.s32.totalorder %s170, 47
      %s174 = scalar_select %p173, %s170, 47
      %s175 = smul.addr %s172, 48
      %s176 = sadd.s32 %s174, %s175
      %s177 = smul.addr %s176, 4
      %s178 = scalar_lea.vmem %s3, %s177
      %p179 = scmp.lt.s32.totalorder %s18, 1
      %s180 = scalar_select %p179, %s18, 1
      %s181 = smul.addr %s180, 132
      %s182 = smul.addr %s181, 4
      %s183 = scalar_lea.vmem %s0, %s182
      %s184 = smul.u32 24, %s19
      %p185 = scmp.lt.s32.totalorder %s18, 1
      %s186 = scalar_select %p185, %s18, 1
      %p187 = scmp.lt.s32.totalorder %s184, 47
      %s188 = scalar_select %p187, %s184, 47
      %s189 = smul.addr %s186, 48
      %s190 = sadd.s32 %s188, %s189
      %s191 = smul.addr %s190, 4
      %s192 = scalar_lea.vmem %s3, %s191
      %s193 = smul.u32 24, %s19
      %s195 = smul.u32 %s19, 192
      %s196 = sshra.s32 %s195, 3
      %s197 = sand.u32 %s195, 7
      %s198 = smul.u32 %s196, 2
      %s199 = smul.addr %s198, 4
      %s200 = scalar_lea.vmem %s183, %s199
      %v201 = vld [vmem:[%s200] sm:$0xff]
      %v202 = vld [vmem:[%s200 + $0x8] sm:$0xff]
      %v203 = vld [vmem:[%s200 + $0x10] sm:$0xff]
      %v204 = vld [vmem:[%s200 + $0x18] sm:$0xff]
      %v205 = vld [vmem:[%s200 + $0x20] sm:$0xff]
      %v206 = vld [vmem:[%s200 + $0x28] sm:$0xff]
      %v207 = vld [vmem:[%s200 + $0x30] sm:$0xff]
      %v208 = vld [vmem:[%s200 + $0x38] sm:$0xff]
      %v209 = vld [vmem:[%s200 + $0x40] sm:$0xff]
      %v210 = vld [vmem:[%s200 + $0x48] sm:$0xff]
      %v211 = vld [vmem:[%s200 + $0x50] sm:$0xff]
      %v212 = vld [vmem:[%s200 + $0x58] sm:$0xff]
      %v213 = vld [vmem:[%s200 + $0x60] sm:$0xff]
      %v214 = vld [vmem:[%s200 + $0x68] sm:$0xff]
      %v215 = vld [vmem:[%s200 + $0x70] sm:$0xff]
      %v216 = vld [vmem:[%s200 + $0x78] sm:$0xff]
      %v217 = vld [vmem:[%s200 + $0x80] sm:$0xff]
      %v218 = vld [vmem:[%s200 + $0x88] sm:$0xff]
      %v219 = vld [vmem:[%s200 + $0x90] sm:$0xff]
      %v220 = vld [vmem:[%s200 + $0x98] sm:$0xff]
      %v221 = vld [vmem:[%s200 + $0xa0] sm:$0xff]
      %v222 = vld [vmem:[%s200 + $0xa8] sm:$0xff]
      %v223 = vld [vmem:[%s200 + $0xb0] sm:$0xff]
      %v224 = vld [vmem:[%s200 + $0xb8] sm:$0xff]
      %v225 = vld [vmem:[%s1] sm:$0xf]
      %v226 = vld [vmem:[%s1 + $0x4] sm:$0xf]
      %v227 = vld [vmem:[%s1 + $0x8] sm:$0xf]
      %v228 = vld [vmem:[%s1 + $0xc] sm:$0xf]
      %v229 = vld [vmem:[%s1 + $0x10] sm:$0xf]
      %v230 = vld [vmem:[%s1 + $0x14] sm:$0xf]
      %v231 = vld [vmem:[%s1 + $0x18] sm:$0xf]
      %v232 = vld [vmem:[%s1 + $0x1c] sm:$0xf]
      %v233 = vld [vmem:[%s1 + $0x20] sm:$0xf]
      %v234 = vld [vmem:[%s1 + $0x24] sm:$0xf]
      %v235 = vld [vmem:[%s1 + $0x28] sm:$0xf]
      %v236 = vld [vmem:[%s1 + $0x2c] sm:$0xf]
      %v237 = vld [vmem:[%s1 + $0x30] sm:$0xf]
      %v238 = vld [vmem:[%s1 + $0x34] sm:$0xf]
      %v239 = vld [vmem:[%s1 + $0x38] sm:$0xf]
      %v240 = vld [vmem:[%s1 + $0x3c] sm:$0xf]
      %v241 = vld [vmem:[%s1 + $0x40] sm:$0xf]
      %v242 = vld [vmem:[%s1 + $0x44] sm:$0xf]
      %v243 = vld [vmem:[%s1 + $0x48] sm:$0xf]
      %v244 = vld [vmem:[%s1 + $0x4c] sm:$0xf]
      %v245 = vld [vmem:[%s1 + $0x50] sm:$0xf]
      %v246 = vld [vmem:[%s1 + $0x54] sm:$0xf]
      %v247 = vld [vmem:[%s1 + $0x58] sm:$0xf]
      %v248 = vld [vmem:[%s1 + $0x5c] sm:$0xf]
      %v249 = vld [vmem:[%s1 + $0x60] sm:$0xf]
      %v250 = vld [vmem:[%s1 + $0x64] sm:$0xf]
      %v251 = vld [vmem:[%s1 + $0x68] sm:$0xf]
      %v252 = vld [vmem:[%s1 + $0x6c] sm:$0xf]
      %v253 = vld [vmem:[%s1 + $0x70] sm:$0xf]
      %v254 = vld [vmem:[%s1 + $0x74] sm:$0xf]
      %v255 = vld [vmem:[%s1 + $0x78] sm:$0xf]
      %v256 = vld [vmem:[%s1 + $0x7c] sm:$0xf]
      %v257 = vld [vmem:[%s2] sm:$0x1]
      %v259 = vlaneseq
      %v260 = vshrl.u32 %v259, 7
      %v261 = vsub.s32 0, %v260
      %v262 = vrot.slane %v257, %v261
      %v288 = vunpack.c.l.b16 %v201
      %v289 = vunpack.c.h.b16 %v201
      %v290 = vunpack.c.l.b16 %v202
      %v291 = vunpack.c.h.b16 %v202
      %v292 = vunpack.c.l.b16 %v203
      %v293 = vunpack.c.h.b16 %v203
      %v294 = vunpack.c.l.b16 %v204
      %v295 = vunpack.c.h.b16 %v204
      %v296 = vunpack.c.l.b16 %v205
      %v297 = vunpack.c.h.b16 %v205
      %v298 = vunpack.c.l.b16 %v206
      %v299 = vunpack.c.h.b16 %v206
      %v300 = vunpack.c.l.b16 %v207
      %v301 = vunpack.c.h.b16 %v207
      %v302 = vunpack.c.l.b16 %v208
      %v303 = vunpack.c.h.b16 %v208
      %v304 = vunpack.c.l.b16 %v209
      %v305 = vunpack.c.h.b16 %v209
      %v306 = vunpack.c.l.b16 %v210
      %v307 = vunpack.c.h.b16 %v210
      %v308 = vunpack.c.l.b16 %v211
      %v309 = vunpack.c.h.b16 %v211
      %v310 = vunpack.c.l.b16 %v212
      %v311 = vunpack.c.h.b16 %v212
      %v312 = vunpack.c.l.b16 %v213
      %v313 = vunpack.c.h.b16 %v213
      %v314 = vunpack.c.l.b16 %v214
      %v315 = vunpack.c.h.b16 %v214
      %v316 = vunpack.c.l.b16 %v215
      %v317 = vunpack.c.h.b16 %v215
      %v318 = vunpack.c.l.b16 %v216
      %v319 = vunpack.c.h.b16 %v216
      %v320 = vunpack.c.l.b16 %v217
      %v321 = vunpack.c.h.b16 %v217
      %v322 = vunpack.c.l.b16 %v218
      %v323 = vunpack.c.h.b16 %v218
      %v324 = vunpack.c.l.b16 %v219
      %v325 = vunpack.c.h.b16 %v219
      %v326 = vunpack.c.l.b16 %v220
      %v327 = vunpack.c.h.b16 %v220
      %v328 = vunpack.c.l.b16 %v221
      %v329 = vunpack.c.h.b16 %v221
      %v330 = vunpack.c.l.b16 %v222
      %v331 = vunpack.c.h.b16 %v222
      %v332 = vunpack.c.l.b16 %v223
      %v333 = vunpack.c.h.b16 %v223
      %v334 = vunpack.c.l.b16 %v224
      %v335 = vunpack.c.h.b16 %v224
      %v336 = vpack.c.b16 %v290, %v288
      %v337 = vpack.c.b16 %v291, %v289
      %v338 = vpack.c.b16 %v294, %v292
      %v339 = vpack.c.b16 %v295, %v293
      %v340 = vpack.c.b16 %v298, %v296
      %v341 = vpack.c.b16 %v299, %v297
      %v342 = vpack.c.b16 %v302, %v300
      %v343 = vpack.c.b16 %v303, %v301
      %v344 = vpack.c.b16 %v306, %v304
      %v345 = vpack.c.b16 %v307, %v305
      %v346 = vpack.c.b16 %v310, %v308
      %v347 = vpack.c.b16 %v311, %v309
      %v348 = vpack.c.b16 %v314, %v312
      %v349 = vpack.c.b16 %v315, %v313
      %v350 = vpack.c.b16 %v318, %v316
      %v351 = vpack.c.b16 %v319, %v317
      %v352 = vpack.c.b16 %v322, %v320
      %v353 = vpack.c.b16 %v323, %v321
      %v354 = vpack.c.b16 %v326, %v324
      %v355 = vpack.c.b16 %v327, %v325
      %v356 = vpack.c.b16 %v330, %v328
      %v357 = vpack.c.b16 %v331, %v329
      %v358 = vpack.c.b16 %v334, %v332
      %v359 = vpack.c.b16 %v335, %v333
      %v416 = vunpack.c.l.b16 %v225
      %v417 = vunpack.c.l.b16 %v226
      %v418 = vunpack.c.l.b16 %v227
      %v419 = vunpack.c.l.b16 %v228
      %v420 = vunpack.c.l.b16 %v229
      %v421 = vunpack.c.l.b16 %v230
      %v422 = vunpack.c.l.b16 %v231
      %v423 = vunpack.c.l.b16 %v232
      %v424 = vunpack.c.l.b16 %v233
      %v425 = vunpack.c.l.b16 %v234
      %v426 = vunpack.c.l.b16 %v235
      %v427 = vunpack.c.l.b16 %v236
      %v428 = vunpack.c.l.b16 %v237
      %v429 = vunpack.c.l.b16 %v238
      %v430 = vunpack.c.l.b16 %v239
      %v431 = vunpack.c.l.b16 %v240
      %v432 = vunpack.c.l.b16 %v241
      %v433 = vunpack.c.l.b16 %v242
      %v434 = vunpack.c.l.b16 %v243
      %v435 = vunpack.c.l.b16 %v244
      %v436 = vunpack.c.l.b16 %v245
      %v437 = vunpack.c.l.b16 %v246
      %v438 = vunpack.c.l.b16 %v247
      %v439 = vunpack.c.l.b16 %v248
      %v440 = vunpack.c.l.b16 %v249
      %v441 = vunpack.c.l.b16 %v250
      %v442 = vunpack.c.l.b16 %v251
      %v443 = vunpack.c.l.b16 %v252
      %v444 = vunpack.c.l.b16 %v253
      %v445 = vunpack.c.l.b16 %v254
      %v446 = vunpack.c.l.b16 %v255
      %v447 = vunpack.c.l.b16 %v256
      %v448 = vpack.c.b16 %v417, %v416
      %v449 = vpack.c.b16 %v419, %v418
      %v450 = vpack.c.b16 %v421, %v420
      %v451 = vpack.c.b16 %v423, %v422
      %v452 = vpack.c.b16 %v425, %v424
      %v453 = vpack.c.b16 %v427, %v426
      %v454 = vpack.c.b16 %v429, %v428
      %v455 = vpack.c.b16 %v431, %v430
      %v456 = vpack.c.b16 %v433, %v432
      %v457 = vpack.c.b16 %v435, %v434
      %v458 = vpack.c.b16 %v437, %v436
      %v459 = vpack.c.b16 %v439, %v438
      %v460 = vpack.c.b16 %v441, %v440
      %v461 = vpack.c.b16 %v443, %v442
      %v462 = vpack.c.b16 %v445, %v444
      %v463 = vpack.c.b16 %v447, %v446
      %480 = vmatprep.subr.bf16.mxu0 0
      %481 = vmatpush1.bf16.msra.mxu0 %v448
      %482 = vmatprep.subr.bf16.mxu0 0
      %483 = vmatpush1.bf16.msra.mxu0 %v449
      %484 = vmatprep.subr.bf16.mxu0 0
      %485 = vmatpush1.bf16.msra.mxu0 %v450
      %486 = vmatprep.subr.bf16.mxu0 0
      %487 = vmatpush1.bf16.msra.mxu0 %v451
      %488 = vmatprep.subr.bf16.mxu0 0
      %489 = vmatpush1.bf16.msra.mxu0 %v452
      %490 = vmatprep.subr.bf16.mxu0 0
      %491 = vmatpush1.bf16.msra.mxu0 %v453
      %492 = vmatprep.subr.bf16.mxu0 0
      %493 = vmatpush1.bf16.msra.mxu0 %v454
      %494 = vmatprep.subr.bf16.mxu0 0
      %495 = vmatpush1.bf16.msra.mxu0 %v455
      %496 = vmatprep.subr.bf16.mxu0 0
      %497 = vmatpush1.bf16.msra.mxu0 %v456
      %498 = vmatprep.subr.bf16.mxu0 0
      %499 = vmatpush1.bf16.msra.mxu0 %v457
      %500 = vmatprep.subr.bf16.mxu0 0
      %501 = vmatpush1.bf16.msra.mxu0 %v458
      %502 = vmatprep.subr.bf16.mxu0 0
      %503 = vmatpush1.bf16.msra.mxu0 %v459
      %504 = vmatprep.subr.bf16.mxu0 0
      %505 = vmatpush1.bf16.msra.mxu0 %v460
      %506 = vmatprep.subr.bf16.mxu0 0
      %507 = vmatpush1.bf16.msra.mxu0 %v461
      %508 = vmatprep.subr.bf16.mxu0 0
      %509 = vmatpush1.bf16.msra.mxu0 %v462
      %510 = vmatprep.subr.bf16.mxu0 0
      %511 = vmatpush1.bf16.msra.mxu0 %v463
      %512 = vmatprep.mubr.bf16.mxu0 %v337
      %513 = vmatmul.mubr.bf16.gmra.mrb[0].mxu0 %v336
      %v514 = vpop.f32.mrb[0].mxu0
      %v515 = vadd.f32 %v262, %v514
      %v516 = vpop.f32.mrb[0].mxu0
      %v517 = vpop.f32.mrb[0].mxu0
      %v518 = vadd.f32 %v262, %v517
      %v519 = vpop.f32.mrb[0].mxu0
      %520 = vmatprep.mubr.bf16.mxu0 %v339
      %521 = vmatmul.mubr.bf16.gmra.mrb[0].mxu0 %v338
      %v522 = vpop.f32.mrb[0].mxu0
      %v523 = vadd.f32 %v262, %v522
      %v524 = vpop.f32.mrb[0].mxu0
      %v525 = vpop.f32.mrb[0].mxu0
      %v526 = vadd.f32 %v262, %v525
      %v527 = vpop.f32.mrb[0].mxu0
      %528 = vmatprep.mubr.bf16.mxu0 %v341
      %529 = vmatmul.mubr.bf16.gmra.mrb[0].mxu0 %v340
      %v530 = vpop.f32.mrb[0].mxu0
      %v531 = vadd.f32 %v262, %v530
      %v532 = vpop.f32.mrb[0].mxu0
      %v533 = vpop.f32.mrb[0].mxu0
      %v534 = vadd.f32 %v262, %v533
      %v535 = vpop.f32.mrb[0].mxu0
      %536 = vmatprep.mubr.bf16.mxu0 %v343
      %537 = vmatmul.mubr.bf16.gmra.mrb[0].mxu0 %v342
      %v538 = vpop.f32.mrb[0].mxu0
      %v539 = vadd.f32 %v262, %v538
      %v540 = vpop.f32.mrb[0].mxu0
      %v541 = vpop.f32.mrb[0].mxu0
      %v542 = vadd.f32 %v262, %v541
      %v543 = vpop.f32.mrb[0].mxu0
      %544 = vmatprep.mubr.bf16.mxu0 %v345
      %545 = vmatmul.mubr.bf16.gmra.mrb[0].mxu0 %v344
      %v546 = vpop.f32.mrb[0].mxu0
      %v547 = vadd.f32 %v262, %v546
      %v548 = vpop.f32.mrb[0].mxu0
      %v549 = vpop.f32.mrb[0].mxu0
      %v550 = vadd.f32 %v262, %v549
      %v551 = vpop.f32.mrb[0].mxu0
      %552 = vmatprep.mubr.bf16.mxu0 %v347
      %553 = vmatmul.mubr.bf16.gmra.mrb[0].mxu0 %v346
      %v554 = vpop.f32.mrb[0].mxu0
      %v555 = vadd.f32 %v262, %v554
      %v556 = vpop.f32.mrb[0].mxu0
      %v557 = vpop.f32.mrb[0].mxu0
      %v558 = vadd.f32 %v262, %v557
      %v559 = vpop.f32.mrb[0].mxu0
      %560 = vmatprep.mubr.bf16.mxu0 %v349
      %561 = vmatmul.mubr.bf16.gmra.mrb[0].mxu0 %v348
      %v562 = vpop.f32.mrb[0].mxu0
      %v563 = vadd.f32 %v262, %v562
      %v564 = vpop.f32.mrb[0].mxu0
      %v565 = vpop.f32.mrb[0].mxu0
      %v566 = vadd.f32 %v262, %v565
      %v567 = vpop.f32.mrb[0].mxu0
      %568 = vmatprep.mubr.bf16.mxu0 %v351
      %569 = vmatmul.mubr.bf16.gmra.mrb[0].mxu0 %v350
      %v570 = vpop.f32.mrb[0].mxu0
      %v571 = vadd.f32 %v262, %v570
      %v572 = vpop.f32.mrb[0].mxu0
      %v573 = vpop.f32.mrb[0].mxu0
      %v574 = vadd.f32 %v262, %v573
      %v575 = vpop.f32.mrb[0].mxu0
      %576 = vmatprep.mubr.bf16.mxu0 %v353
      %577 = vmatmul.mubr.bf16.gmra.mrb[0].mxu0 %v352
      %v578 = vpop.f32.mrb[0].mxu0
      %v579 = vadd.f32 %v262, %v578
      %v580 = vpop.f32.mrb[0].mxu0
      %v581 = vpop.f32.mrb[0].mxu0
      %v582 = vadd.f32 %v262, %v581
      %v583 = vpop.f32.mrb[0].mxu0
      %584 = vmatprep.mubr.bf16.mxu0 %v355
      %585 = vmatmul.mubr.bf16.gmra.mrb[0].mxu0 %v354
      %v586 = vpop.f32.mrb[0].mxu0
      %v587 = vadd.f32 %v262, %v586
      %v588 = vpop.f32.mrb[0].mxu0
      %v589 = vpop.f32.mrb[0].mxu0
      %v590 = vadd.f32 %v262, %v589
      %v591 = vpop.f32.mrb[0].mxu0
      %592 = vmatprep.mubr.bf16.mxu0 %v357
      %593 = vmatmul.mubr.bf16.gmra.mrb[0].mxu0 %v356
      %v594 = vpop.f32.mrb[0].mxu0
      %v595 = vadd.f32 %v262, %v594
      %v596 = vpop.f32.mrb[0].mxu0
      %v597 = vpop.f32.mrb[0].mxu0
      %v598 = vadd.f32 %v262, %v597
      %v599 = vpop.f32.mrb[0].mxu0
      %600 = vmatprep.mubr.bf16.mxu0 %v359
      %601 = vmatmul.mubr.bf16.gmra.mrb[0].mxu0 %v358
      %v602 = vpop.f32.mrb[0].mxu0
      %v603 = vadd.f32 %v262, %v602
      %v604 = vpop.f32.mrb[0].mxu0
      %v605 = vpop.f32.mrb[0].mxu0
      %v606 = vadd.f32 %v262, %v605
      %v607 = vpop.f32.mrb[0].mxu0
      %608 = vdwg.mxu0
      %v609 = vmul.f32 %v515, %v515
      %v610 = vmul.f32 %v518, %v518
      %v611 = vmul.f32 %v523, %v523
      %v612 = vmul.f32 %v526, %v526
      %v613 = vmul.f32 %v531, %v531
      %v614 = vmul.f32 %v534, %v534
      %v615 = vmul.f32 %v539, %v539
      %v616 = vmul.f32 %v542, %v542
      %v617 = vmul.f32 %v547, %v547
      %v618 = vmul.f32 %v550, %v550
      %v619 = vmul.f32 %v555, %v555
      %v620 = vmul.f32 %v558, %v558
      %v621 = vmul.f32 %v563, %v563
      %v622 = vmul.f32 %v566, %v566
      %v623 = vmul.f32 %v571, %v571
      %v624 = vmul.f32 %v574, %v574
      %v625 = vmul.f32 %v579, %v579
      %v626 = vmul.f32 %v582, %v582
      %v627 = vmul.f32 %v587, %v587
      %v628 = vmul.f32 %v590, %v590
      %v629 = vmul.f32 %v595, %v595
      %v630 = vmul.f32 %v598, %v598
      %v631 = vmul.f32 %v603, %v603
      %v632 = vmul.f32 %v606, %v606
      %633 = vadd.xlane.f32.xlu0 %v609
      %v634 = vpop.xlane.xlu0 %633
      %635 = vadd.xlane.f32.xlu0 %v610
      %v636 = vpop.xlane.xlu0 %635
      %637 = vadd.xlane.f32.xlu0 %v611
      %v638 = vpop.xlane.xlu0 %637
      %639 = vadd.xlane.f32.xlu0 %v612
      %v640 = vpop.xlane.xlu0 %639
      %641 = vadd.xlane.f32.xlu0 %v613
      %v642 = vpop.xlane.xlu0 %641
      %643 = vadd.xlane.f32.xlu0 %v614
      %v644 = vpop.xlane.xlu0 %643
      %645 = vadd.xlane.f32.xlu0 %v615
      %v646 = vpop.xlane.xlu0 %645
      %647 = vadd.xlane.f32.xlu0 %v616
      %v648 = vpop.xlane.xlu0 %647
      %649 = vadd.xlane.f32.xlu0 %v617
      %v650 = vpop.xlane.xlu0 %649
      %651 = vadd.xlane.f32.xlu0 %v618
      %v652 = vpop.xlane.xlu0 %651
      %653 = vadd.xlane.f32.xlu0 %v619
      %v654 = vpop.xlane.xlu0 %653
      %655 = vadd.xlane.f32.xlu0 %v620
      %v656 = vpop.xlane.xlu0 %655
      %657 = vadd.xlane.f32.xlu0 %v621
      %v658 = vpop.xlane.xlu0 %657
      %659 = vadd.xlane.f32.xlu0 %v622
      %v660 = vpop.xlane.xlu0 %659
      %661 = vadd.xlane.f32.xlu0 %v623
      %v662 = vpop.xlane.xlu0 %661
      %663 = vadd.xlane.f32.xlu0 %v624
      %v664 = vpop.xlane.xlu0 %663
      %665 = vadd.xlane.f32.xlu0 %v625
      %v666 = vpop.xlane.xlu0 %665
      %667 = vadd.xlane.f32.xlu0 %v626
      %v668 = vpop.xlane.xlu0 %667
      %669 = vadd.xlane.f32.xlu0 %v627
      %v670 = vpop.xlane.xlu0 %669
      %671 = vadd.xlane.f32.xlu0 %v628
      %v672 = vpop.xlane.xlu0 %671
      %673 = vadd.xlane.f32.xlu0 %v629
      %v674 = vpop.xlane.xlu0 %673
      %675 = vadd.xlane.f32.xlu0 %v630
      %v676 = vpop.xlane.xlu0 %675
      %677 = vadd.xlane.f32.xlu0 %v631
      %v678 = vpop.xlane.xlu0 %677
      %679 = vadd.xlane.f32.xlu0 %v632
      %v680 = vpop.xlane.xlu0 %679
      %v681 = vmul.f32 %v634, 0.125
      %v682 = vmul.f32 %v636, 0.125
      %v683 = vmul.f32 %v638, 0.125
      %v684 = vmul.f32 %v640, 0.125
      %v685 = vmul.f32 %v642, 0.125
      %v686 = vmul.f32 %v644, 0.125
      %v687 = vmul.f32 %v646, 0.125
      %v688 = vmul.f32 %v648, 0.125
      %v689 = vmul.f32 %v650, 0.125
      %v690 = vmul.f32 %v652, 0.125
      %v691 = vmul.f32 %v654, 0.125
      %v692 = vmul.f32 %v656, 0.125
      %v693 = vmul.f32 %v658, 0.125
      %v694 = vmul.f32 %v660, 0.125
      %v695 = vmul.f32 %v662, 0.125
      %v696 = vmul.f32 %v664, 0.125
      %v697 = vmul.f32 %v666, 0.125
      %v698 = vmul.f32 %v668, 0.125
      %v699 = vmul.f32 %v670, 0.125
      %v700 = vmul.f32 %v672, 0.125
      %v701 = vmul.f32 %v674, 0.125
      %v702 = vmul.f32 %v676, 0.125
      %v703 = vmul.f32 %v678, 0.125
      %v704 = vmul.f32 %v680, 0.125
      %v705 = vadd.f32 %v681, 1e-05
      %v706 = vadd.f32 %v682, 1e-05
      %v707 = vadd.f32 %v683, 1e-05
      %v708 = vadd.f32 %v684, 1e-05
      %v709 = vadd.f32 %v685, 1e-05
      %v710 = vadd.f32 %v686, 1e-05
      %v711 = vadd.f32 %v687, 1e-05
      %v712 = vadd.f32 %v688, 1e-05
      %v713 = vadd.f32 %v689, 1e-05
      %v714 = vadd.f32 %v690, 1e-05
      %v715 = vadd.f32 %v691, 1e-05
      %v716 = vadd.f32 %v692, 1e-05
      %v717 = vadd.f32 %v693, 1e-05
      %v718 = vadd.f32 %v694, 1e-05
      %v719 = vadd.f32 %v695, 1e-05
      %v720 = vadd.f32 %v696, 1e-05
      %v721 = vadd.f32 %v697, 1e-05
      %v722 = vadd.f32 %v698, 1e-05
      %v723 = vadd.f32 %v699, 1e-05
      %v724 = vadd.f32 %v700, 1e-05
      %v725 = vadd.f32 %v701, 1e-05
      %v726 = vadd.f32 %v702, 1e-05
      %v727 = vadd.f32 %v703, 1e-05
      %v728 = vadd.f32 %v704, 1e-05
      %v729 = vrsqrt.pop %v705
      %v730 = vrsqrt.pop %v706
      %v731 = vrsqrt.pop %v707
      %v732 = vrsqrt.pop %v708
      %v733 = vrsqrt.pop %v709
      %v734 = vrsqrt.pop %v710
      %v735 = vrsqrt.pop %v711
      %v736 = vrsqrt.pop %v712
      %v737 = vrsqrt.pop %v713
      %v738 = vrsqrt.pop %v714
      %v739 = vrsqrt.pop %v715
      %v740 = vrsqrt.pop %v716
      %v741 = vrsqrt.pop %v717
      %v742 = vrsqrt.pop %v718
      %v743 = vrsqrt.pop %v719
      %v744 = vrsqrt.pop %v720
      %v745 = vrsqrt.pop %v721
      %v746 = vrsqrt.pop %v722
      %v747 = vrsqrt.pop %v723
      %v748 = vrsqrt.pop %v724
      %v749 = vrsqrt.pop %v725
      %v750 = vrsqrt.pop %v726
      %v751 = vrsqrt.pop %v727
      %v752 = vrsqrt.pop %v728
      %v753 = vmul.f32 %v515, %v729
      %v754 = vmul.f32 %v518, %v730
      %v755 = vmul.f32 %v523, %v731
      %v756 = vmul.f32 %v526, %v732
      %v757 = vmul.f32 %v531, %v733
      %v758 = vmul.f32 %v534, %v734
      %v759 = vmul.f32 %v539, %v735
      %v760 = vmul.f32 %v542, %v736
      %v761 = vmul.f32 %v547, %v737
      %v762 = vmul.f32 %v550, %v738
      %v763 = vmul.f32 %v555, %v739
      %v764 = vmul.f32 %v558, %v740
      %v765 = vmul.f32 %v563, %v741
      %v766 = vmul.f32 %v566, %v742
      %v767 = vmul.f32 %v571, %v743
      %v768 = vmul.f32 %v574, %v744
      %v769 = vmul.f32 %v579, %v745
      %v770 = vmul.f32 %v582, %v746
      %v771 = vmul.f32 %v587, %v747
      %v772 = vmul.f32 %v590, %v748
      %v773 = vmul.f32 %v595, %v749
      %v774 = vmul.f32 %v598, %v750
      %v775 = vmul.f32 %v603, %v751
      %v776 = vmul.f32 %v606, %v752
      %v777 = vmax.f32 %v753, 0.0
      %v778 = vmax.f32 %v754, 0.0
      %v779 = vmax.f32 %v755, 0.0
      %v780 = vmax.f32 %v756, 0.0
      %v781 = vmax.f32 %v757, 0.0
      %v782 = vmax.f32 %v758, 0.0
      %v783 = vmax.f32 %v759, 0.0
      %v784 = vmax.f32 %v760, 0.0
      %v785 = vmax.f32 %v761, 0.0
      %v786 = vmax.f32 %v762, 0.0
      %v787 = vmax.f32 %v763, 0.0
      %v788 = vmax.f32 %v764, 0.0
      %v789 = vmax.f32 %v765, 0.0
      %v790 = vmax.f32 %v766, 0.0
      %v791 = vmax.f32 %v767, 0.0
      %v792 = vmax.f32 %v768, 0.0
      %v793 = vmax.f32 %v769, 0.0
      %v794 = vmax.f32 %v770, 0.0
      %v795 = vmax.f32 %v771, 0.0
      %v796 = vmax.f32 %v772, 0.0
      %v797 = vmax.f32 %v773, 0.0
      %v798 = vmax.f32 %v774, 0.0
      %v799 = vmax.f32 %v775, 0.0
      %v800 = vmax.f32 %v776, 0.0
      %v801 = vpack.c.bf16 %v778, %v777
      %v802 = vpack.c.bf16 %v780, %v779
      %v803 = vpack.c.bf16 %v782, %v781
      %v804 = vpack.c.bf16 %v784, %v783
      %v805 = vpack.c.bf16 %v786, %v785
      %v806 = vpack.c.bf16 %v788, %v787
      %v807 = vpack.c.bf16 %v790, %v789
      %v808 = vpack.c.bf16 %v792, %v791
      %v809 = vpack.c.bf16 %v794, %v793
      %v810 = vpack.c.bf16 %v796, %v795
      %v811 = vpack.c.bf16 %v798, %v797
      %v812 = vpack.c.bf16 %v800, %v799
      %v825 = vunpack.c.l.b16 %v801
      %v826 = vunpack.c.h.b16 %v801
      %v827 = vunpack.c.l.b16 %v802
      %v828 = vunpack.c.h.b16 %v802
      %v829 = vunpack.c.l.b16 %v803
      %v830 = vunpack.c.h.b16 %v803
      %v831 = vunpack.c.l.b16 %v804
      %v832 = vunpack.c.h.b16 %v804
      %v833 = vunpack.c.l.b16 %v805
      %v834 = vunpack.c.h.b16 %v805
      %v835 = vunpack.c.l.b16 %v806
      %v836 = vunpack.c.h.b16 %v806
      %v837 = vunpack.c.l.b16 %v807
      %v838 = vunpack.c.h.b16 %v807
      %v839 = vunpack.c.l.b16 %v808
      %v840 = vunpack.c.h.b16 %v808
      %v841 = vunpack.c.l.b16 %v809
      %v842 = vunpack.c.h.b16 %v809
      %v843 = vunpack.c.l.b16 %v810
      %v844 = vunpack.c.h.b16 %v810
      %v845 = vunpack.c.l.b16 %v811
      %v846 = vunpack.c.h.b16 %v811
      %v847 = vunpack.c.l.b16 %v812
      %v848 = vunpack.c.h.b16 %v812
      %v849 = vpack.c.b16 %v825, %v825
      %v850 = vpack.c.b16 %v826, %v826
      %v851 = vpack.c.b16 %v827, %v827
      %v852 = vpack.c.b16 %v828, %v828
      %v853 = vpack.c.b16 %v829, %v829
      %v854 = vpack.c.b16 %v830, %v830
      %v855 = vpack.c.b16 %v831, %v831
      %v856 = vpack.c.b16 %v832, %v832
      %v857 = vpack.c.b16 %v833, %v833
      %v858 = vpack.c.b16 %v834, %v834
      %v859 = vpack.c.b16 %v835, %v835
      %v860 = vpack.c.b16 %v836, %v836
      %v861 = vpack.c.b16 %v837, %v837
      %v862 = vpack.c.b16 %v838, %v838
      %v863 = vpack.c.b16 %v839, %v839
      %v864 = vpack.c.b16 %v840, %v840
      %v865 = vpack.c.b16 %v841, %v841
      %v866 = vpack.c.b16 %v842, %v842
      %v867 = vpack.c.b16 %v843, %v843
      %v868 = vpack.c.b16 %v844, %v844
      %v869 = vpack.c.b16 %v845, %v845
      %v870 = vpack.c.b16 %v846, %v846
      %v871 = vpack.c.b16 %v847, %v847
      %v872 = vpack.c.b16 %v848, %v848
      %897 = vst [vmem:[%s192] sm:$0xf] %v849
      %898 = vst [vmem:[%s192 + $0x4] sm:$0xf] %v850
      %899 = vst [vmem:[%s192 + $0x8] sm:$0xf] %v851
      %900 = vst [vmem:[%s192 + $0xc] sm:$0xf] %v852
      %901 = vst [vmem:[%s192 + $0x10] sm:$0xf] %v853
      %902 = vst [vmem:[%s192 + $0x14] sm:$0xf] %v854
      %903 = vst [vmem:[%s192 + $0x18] sm:$0xf] %v855
      %904 = vst [vmem:[%s192 + $0x1c] sm:$0xf] %v856
      %905 = vst [vmem:[%s192 + $0x20] sm:$0xf] %v857
      %906 = vst [vmem:[%s192 + $0x24] sm:$0xf] %v858
      %907 = vst [vmem:[%s192 + $0x28] sm:$0xf] %v859
      %908 = vst [vmem:[%s192 + $0x2c] sm:$0xf] %v860
      %909 = vst [vmem:[%s192 + $0x30] sm:$0xf] %v861
      %910 = vst [vmem:[%s192 + $0x34] sm:$0xf] %v862
      %911 = vst [vmem:[%s192 + $0x38] sm:$0xf] %v863
      %912 = vst [vmem:[%s192 + $0x3c] sm:$0xf] %v864
      %913 = vst [vmem:[%s192 + $0x40] sm:$0xf] %v865
      %914 = vst [vmem:[%s192 + $0x44] sm:$0xf] %v866
      %915 = vst [vmem:[%s192 + $0x48] sm:$0xf] %v867
      %916 = vst [vmem:[%s192 + $0x4c] sm:$0xf] %v868
      %917 = vst [vmem:[%s192 + $0x50] sm:$0xf] %v869
      %918 = vst [vmem:[%s192 + $0x54] sm:$0xf] %v870
      %919 = vst [vmem:[%s192 + $0x58] sm:$0xf] %v871
      %920 = vst [vmem:[%s192 + $0x5c] sm:$0xf] %v872
      %s921 = smul.u32 24, %s19
      %p922 = scmp.lt.s32.totalorder %s18, 1
      %s923 = scalar_select %p922, %s18, 1
      %p924 = scmp.lt.s32.totalorder %s921, 47
      %s925 = scalar_select %p924, %s921, 47
      %s926 = smul.addr %s923, 48
      %s927 = sadd.s32 %s925, %s926
      %s928 = smul.addr %s927, 4
      %s929 = scalar_lea.vmem %s3, %s928
      // Predicated region
      $region33: #{gddc_encoder_forward.10} parent=31 // pred_check
        %p930 = pneg %p114
      $region34: #{gddc_encoder_forward.10} parent=31 // pred_check_branch
        %932 = sbr.rel (%p930) target = $region36
      $region35: #{gddc_encoder_forward.10} parent=31 // pred_region
        %s933 = smul.u32 24, %s19
      $region36: #{gddc_encoder_forward.10} parent=31 // pred_fallthru
        _
    $region32: #{gddc_encoder_forward.10} parent=5 // pred_fallthru
      _
    %p934 = scmp.le.s32.totalorder 2, %s9
    // Predicated region
    $region37: #{gddc_encoder_forward.10} parent=5 // pred_check
      %p935 = pneg %p934
    $region38: #{gddc_encoder_forward.10} parent=5 // pred_check_branch
      %937 = sbr.rel (%p935) target = $region40
    $region39: #{gddc_encoder_forward.10} parent=5 // pred_region
      %s938 = ssub.s32 %s9, 2
      // Predicated region
      $region41: #{gddc_encoder_forward.10} parent=39 // pred_check
        %p939 = pneg %p120
      $region42: #{gddc_encoder_forward.10} parent=39 // pred_check_branch
        %941 = sbr.rel (%p939) target = $region44
      $region43: #{gddc_encoder_forward.10} parent=39 // pred_region
        %s942 = smul.u32 24, %s21
        %p943 = scmp.lt.s32.totalorder %s20, 1
        %s944 = scalar_select %p943, %s20, 1
        %p945 = scmp.lt.s32.totalorder %s942, 47
        %s946 = scalar_select %p945, %s942, 47
        %s947 = smul.addr %s944, 48
        %s948 = sadd.s32 %s946, %s947
        %s949 = smul.addr %s948, 4
        %s950 = scalar_lea.vmem %s3, %s949
      $region44: #{gddc_encoder_forward.10} parent=39 // pred_fallthru
        _
    $region40: #{gddc_encoder_forward.10} parent=5 // pred_fallthru
      _
  $region6: #{gddc_encoder_forward.10} parent=0 // loop_footer
    %s13 = sadd.s32 1, %s9
  $region7: #{gddc_encoder_forward.10} parent=0 // loop_footer_branch
    %8 = sbr.rel target = $region3
  $region8: #{gddc_encoder_forward.10} parent=0 // loop_exit
    _

// kernel: gddc_encoder_forward.11
$region0: #{gddc_encoder_forward.11}
  #allocation0 [shape = 'u32[]', space=smem, size = 0x4, offset = 0x4, fixed_abs, tag = 'smem constant byte address 0x4 - core index']
  #allocation1 [shape = 'u32[144,128]{1,0:T(1,128)}', space=vmem, size = 0x12000, scoped, tag = 'internal scratch']
  %s0 = inlined_call_operand.vmem [shape: bf16[2,528,128], index: 0, kind: input, shape index: {}]
  %s1 = inlined_call_operand.vmem [shape: bf16[3,128,128], index: 1, kind: input, shape index: {}]
  %s2 = inlined_call_operand.vmem [shape: f32[1,128], index: 2, kind: input, shape index: {}]
  %s3 = inlined_call_operand.vmem [shape: bf16[2,192,128], index: 3, kind: output, shape index: {}]
  %s4 = sld [smem:[#allocation0]]
  $region45: #{gddc_encoder_forward.11} parent=0
    _
  %s6 = ssub.s32 1, %s4
  %s7 = scalar_select 0, %s6, %s4
  loop: start=0, step=1, limit=4
  $region2: #{gddc_encoder_forward.11} parent=0 // loop_pre_header
    _
  $region3: #{gddc_encoder_forward.11} parent=0 // loop_header
    %s9 = sphi 0, %s13
    %p10 = scmp.ge.s32.totalorder %s9, 4
    %s16 = sphi 0, %s28
    %s17 = sphi 0, %s24
    %s18 = sphi 0, %s16
    %s19 = sphi 0, %s17
    %s20 = sphi 0, %s18
    %s21 = sphi 0, %s19
    %s31 = sphi 0, %s33
    %s34 = sphi 0, %s31
    %s35 = sphi 0, %s34
    %s51 = sphi 0, %s35
    %s55 = sphi 0, %s55
    %s57 = sphi 0, %s55
    %s58 = sphi 0, %s57
    %s72 = sphi 0, %s58
    %s76 = sphi 0, %s76
    %s78 = sphi 0, %s76
    %s79 = sphi 0, %s78
    %s93 = sphi 0, %s79
    %s101 = sphi 0, %s103
    %s104 = sphi 0, %s101
    %s105 = sphi 0, %s104
    %s121 = sphi 0, %s105
  $region4: #{gddc_encoder_forward.11} parent=0 // loop_header_branch
    %12 = sbr.rel (%p10) target = $region8
  $region5: #{gddc_encoder_forward.11} parent=0 // loop_body
    %s14 = ssub.s32 %s9, 1
    %s15 = ssub.s32 %s9, 2
    %s22 = sadd.s32 1, %s17
    %p23 = scmp.ge.s32.totalorder %s22, 1
    %s24 = scalar_select %p23, 0, %s22
    %s25 = sadd.s32 1, %s16
    %s26 = scalar_select %p23, %s25, %s16
    %p27 = scmp.ge.s32.totalorder %s26, 2
    %s28 = scalar_select %p27, 0, %s26
    %s29 = ssub.s32 %s16, %s28
    %p30 = scmp.eq.s32.totalorder %s29, 0
    %s32 = sadd.s32 %s31, 1
    %s33 = scalar_select %p30, %s31, %s32
    %p36 = pneg %p30
    %p37 = scmp.eq.s32.totalorder %s9, 1
    %p38 = por %p36, %p37
    %p39 = scmp.ne.s32.totalorder %s31, %s34
    %p40 = scmp.eq.s32.totalorder %s9, 0
    %p41 = por %p39, %p40
    %p42 = scmp.ne.s32.totalorder %s31, %s34
    %p43 = scmp.eq.s32.totalorder %s14, 1
    %p44 = por %p42, %p43
    %p45 = scmp.ne.s32.totalorder %s34, %s35
    %p46 = scmp.eq.s32.totalorder %s14, 0
    %p47 = por %p45, %p46
    %p48 = scmp.ne.s32.totalorder %s34, %s35
    %p49 = scmp.eq.s32.totalorder %s15, 1
    %p50 = por %p48, %p49
    %p52 = scmp.ne.s32.totalorder %s35, %s51
    %p53 = scmp.eq.s32.totalorder %s15, 0
    %p54 = por %p52, %p53
    %s56 = sadd.s32 %s55, 1
    %p59 = scmp.eq.s32.totalorder %s9, 1
    %p60 = scmp.ne.s32.totalorder %s55, %s57
    %p61 = scmp.eq.s32.totalorder %s9, 0
    %p62 = por %p60, %p61
    %p63 = scmp.ne.s32.totalorder %s55, %s57
    %p64 = scmp.eq.s32.totalorder %s14, 1
    %p65 = por %p63, %p64
    %p66 = scmp.ne.s32.totalorder %s57, %s58
    %p67 = scmp.eq.s32.totalorder %s14, 0
    %p68 = por %p66, %p67
    %p69 = scmp.ne.s32.totalorder %s57, %s58
    %p70 = scmp.eq.s32.totalorder %s15, 1
    %p71 = por %p69, %p70
    %p73 = scmp.ne.s32.totalorder %s58, %s72
    %p74 = scmp.eq.s32.totalorder %s15, 0
    %p75 = por %p73, %p74
    %s77 = sadd.s32 %s76, 1
    %p80 = scmp.eq.s32.totalorder %s9, 1
    %p81 = scmp.ne.s32.totalorder %s76, %s78
    %p82 = scmp.eq.s32.totalorder %s9, 0
    %p83 = por %p81, %p82
    %p84 = scmp.ne.s32.totalorder %s76, %s78
    %p85 = scmp.eq.s32.totalorder %s14, 1
    %p86 = por %p84, %p85
    %p87 = scmp.ne.s32.totalorder %s78, %s79
    %p88 = scmp.eq.s32.totalorder %s14, 0
    %p89 = por %p87, %p88
    %p90 = scmp.ne.s32.totalorder %s78, %s79
    %p91 = scmp.eq.s32.totalorder %s15, 1
    %p92 = por %p90, %p91
    %p94 = scmp.ne.s32.totalorder %s79, %s93
    %p95 = scmp.eq.s32.totalorder %s15, 0
    %p96 = por %p94, %p95
    %s97 = ssub.s32 %s16, %s28
    %s98 = ssub.s32 %s17, %s24
    %s99 = sor.u32 %s97, %s98
    %p100 = scmp.eq.s32.totalorder %s99, 0
    %s102 = sadd.s32 %s101, 1
    %s103 = scalar_select %p100, %s101, %s102
    %p106 = pneg %p100
    %p107 = scmp.eq.s32.totalorder %s9, 1
    %p108 = por %p106, %p107
    %p109 = scmp.ne.s32.totalorder %s101, %s104
    %p110 = scmp.eq.s32.totalorder %s9, 0
    %p111 = por %p109, %p110
    %p112 = scmp.ne.s32.totalorder %s101, %s104
    %p113 = scmp.eq.s32.totalorder %s14, 1
    %p114 = por %p112, %p113
    %p115 = scmp.ne.s32.totalorder %s104, %s105
    %p116 = scmp.eq.s32.totalorder %s14, 0
    %p117 = por %p115, %p116
    %p118 = scmp.ne.s32.totalorder %s104, %s105
    %p119 = scmp.eq.s32.totalorder %s15, 1
    %p120 = por %p118, %p119
    %p122 = scmp.ne.s32.totalorder %s105, %s121
    %p123 = scmp.eq.s32.totalorder %s15, 0
    %p124 = por %p122, %p123
    %p125 = scmp.le.s32.totalorder 1, %s9
    %p126 = scmp.lt.s32.totalorder %s9, 3
    %p127 = pnand %p125, %p126
    %p128 = pneg %p127
    // Predicated region
    $region9: #{gddc_encoder_forward.11} parent=5 // pred_check
      _
    $region10: #{gddc_encoder_forward.11} parent=5 // pred_check_branch
      %130 = sbr.rel (%p127) target = $region12
    $region11: #{gddc_encoder_forward.11} parent=5 // pred_region
      %s131 = ssub.s32 %s9, 1
      // Predicated region
      $region13: #{gddc_encoder_forward.11} parent=11 // pred_check
        %p132 = pneg %p68
      $region14: #{gddc_encoder_forward.11} parent=11 // pred_check_branch
        %134 = sbr.rel (%p132) target = $region16
      $region15: #{gddc_encoder_forward.11} parent=11 // pred_region
        _
      $region16: #{gddc_encoder_forward.11} parent=11 // pred_fallthru
        _
      // Predicated region
      $region17: #{gddc_encoder_forward.11} parent=11 // pred_check
        %p135 = pneg %p89
      $region18: #{gddc_encoder_forward.11} parent=11 // pred_check_branch
        %137 = sbr.rel (%p135) target = $region20
      $region19: #{gddc_encoder_forward.11} parent=11 // pred_region
        _
      $region20: #{gddc_encoder_forward.11} parent=11 // pred_fallthru
        _
    $region12: #{gddc_encoder_forward.11} parent=5 // pred_fallthru
      _
    %p138 = scmp.lt.s32.totalorder %s9, 2
    // Predicated region
    $region21: #{gddc_encoder_forward.11} parent=5 // pred_check
      %p139 = pneg %p138
    $region22: #{gddc_encoder_forward.11} parent=5 // pred_check_branch
      %141 = sbr.rel (%p139) target = $region24
    $region23: #{gddc_encoder_forward.11} parent=5 // pred_region
      // Predicated region
      $region25: #{gddc_encoder_forward.11} parent=23 // pred_check
        %p142 = pneg %p41
      $region26: #{gddc_encoder_forward.11} parent=23 // pred_check_branch
        %144 = sbr.rel (%p142) target = $region28
      $region27: #{gddc_encoder_forward.11} parent=23 // pred_region
        %p145 = scmp.lt.s32.totalorder %s16, 1
        %s146 = scalar_select %p145, %s16, 1
        %s147 = smul.addr %s146, 66
        %s148 = smul.addr %s147, 4
        %s149 = scalar_lea.vmem %s0, %s148
      $region28: #{gddc_encoder_forward.11} parent=23 // pred_fallthru
        _
    $region24: #{gddc_encoder_forward.11} parent=5 // pred_fallthru
      _
    %p150 = scmp.le.s32.totalorder 1, %s9
    %p151 = scmp.lt.s32.totalorder %s9, 3
    %p152 = pnand %p150, %p151
    %p153 = pneg %p152
    // Predicated region
    $region29: #{gddc_encoder_forward.11} parent=5 // pred_check
      _
    $region30: #{gddc_encoder_forward.11} parent=5 // pred_check_branch
      %155 = sbr.rel (%p152) target = $region32
    $region31: #{gddc_encoder_forward.11} parent=5 // pred_region
      %s156 = ssub.s32 %s9, 1
      %p157 = scmp.lt.s32.totalorder %s18, 1
      %s158 = scalar_select %p157, %s18, 1
      %s159 = smul.addr %s158, 66
      %s160 = smul.addr %s159, 4
      %s161 = scalar_lea.vmem %s0, %s160
      %p162 = pneg %p47
      %p163 = pneg %p44
      %p164 = pneg %p68
      %p165 = pneg %p65
      %p166 = pneg %p89
      %p167 = pneg %p86
      %p168 = pneg %p117
      %p169 = pneg %p114
      %s170 = smul.u32 24, %s19
      %p171 = scmp.lt.s32.totalorder %s18, 1
      %s172 = scalar_select %p171, %s18, 1
      %p173 = scmp.lt.s32.totalorder %s170, 23
      %s174 = scalar_select %p173, %s170, 23
      %s175 = smul.addr %s172, 24
      %s176 = sadd.s32 %s174, %s175
      %s177 = smul.addr %s176, 4
      %s178 = scalar_lea.vmem %s3, %s177
      %p179 = scmp.lt.s32.totalorder %s18, 1
      %s180 = scalar_select %p179, %s18, 1
      %s181 = smul.addr %s180, 66
      %s182 = smul.addr %s181, 4
      %s183 = scalar_lea.vmem %s0, %s182
      %s184 = smul.u32 24, %s19
      %p185 = scmp.lt.s32.totalorder %s18, 1
      %s186 = scalar_select %p185, %s18, 1
      %p187 = scmp.lt.s32.totalorder %s184, 23
      %s188 = scalar_select %p187, %s184, 23
      %s189 = smul.addr %s186, 24
      %s190 = sadd.s32 %s188, %s189
      %s191 = smul.addr %s190, 4
      %s192 = scalar_lea.vmem %s3, %s191
      %s193 = smul.u32 24, %s19
      %v195 = vld [vmem:[%s183] sm:$0xf]
      %v196 = vld [vmem:[%s183 + $0x4] sm:$0xf]
      %v197 = vld [vmem:[%s183 + $0x8] sm:$0xf]
      %v198 = vld [vmem:[%s183 + $0xc] sm:$0xf]
      %v199 = vld [vmem:[%s183 + $0x10] sm:$0xf]
      %v200 = vld [vmem:[%s183 + $0x14] sm:$0xf]
      %v201 = vld [vmem:[%s183 + $0x18] sm:$0xf]
      %v202 = vld [vmem:[%s183 + $0x1c] sm:$0xf]
      %v203 = vld [vmem:[%s183 + $0x20] sm:$0xf]
      %v204 = vld [vmem:[%s183 + $0x24] sm:$0xf]
      %v205 = vld [vmem:[%s183 + $0x28] sm:$0xf]
      %v206 = vld [vmem:[%s183 + $0x2c] sm:$0xf]
      %v207 = vld [vmem:[%s183 + $0x30] sm:$0xf]
      %v208 = vld [vmem:[%s183 + $0x34] sm:$0xf]
      %v209 = vld [vmem:[%s183 + $0x38] sm:$0xf]
      %v210 = vld [vmem:[%s183 + $0x3c] sm:$0xf]
      %v211 = vld [vmem:[%s183 + $0x40] sm:$0xf]
      %v212 = vld [vmem:[%s183 + $0x44] sm:$0xf]
      %v213 = vld [vmem:[%s183 + $0x48] sm:$0xf]
      %v214 = vld [vmem:[%s183 + $0x4c] sm:$0xf]
      %v215 = vld [vmem:[%s183 + $0x50] sm:$0xf]
      %v216 = vld [vmem:[%s183 + $0x54] sm:$0xf]
      %v217 = vld [vmem:[%s183 + $0x58] sm:$0xf]
      %v218 = vld [vmem:[%s183 + $0x5c] sm:$0xf]
      %v219 = vld [vmem:[%s1] sm:$0xf]
      %v220 = vld [vmem:[%s1 + $0x4] sm:$0xf]
      %v221 = vld [vmem:[%s1 + $0x8] sm:$0xf]
      %v222 = vld [vmem:[%s1 + $0xc] sm:$0xf]
      %v223 = vld [vmem:[%s1 + $0x10] sm:$0xf]
      %v224 = vld [vmem:[%s1 + $0x14] sm:$0xf]
      %v225 = vld [vmem:[%s1 + $0x18] sm:$0xf]
      %v226 = vld [vmem:[%s1 + $0x1c] sm:$0xf]
      %v227 = vld [vmem:[%s1 + $0x20] sm:$0xf]
      %v228 = vld [vmem:[%s1 + $0x24] sm:$0xf]
      %v229 = vld [vmem:[%s1 + $0x28] sm:$0xf]
      %v230 = vld [vmem:[%s1 + $0x2c] sm:$0xf]
      %v231 = vld [vmem:[%s1 + $0x30] sm:$0xf]
      %v232 = vld [vmem:[%s1 + $0x34] sm:$0xf]
      %v233 = vld [vmem:[%s1 + $0x38] sm:$0xf]
      %v234 = vld [vmem:[%s1 + $0x3c] sm:$0xf]
      %v235 = vld [vmem:[%s183 + $0x84] sm:$0xf]
      %v236 = vld [vmem:[%s183 + $0x88] sm:$0xf]
      %v237 = vld [vmem:[%s183 + $0x8c] sm:$0xf]
      %v238 = vld [vmem:[%s183 + $0x90] sm:$0xf]
      %v239 = vld [vmem:[%s183 + $0x94] sm:$0xf]
      %v240 = vld [vmem:[%s183 + $0x98] sm:$0xf]
      %v241 = vld [vmem:[%s183 + $0x9c] sm:$0xf]
      %v242 = vld [vmem:[%s183 + $0xa0] sm:$0xf]
      %v243 = vld [vmem:[%s183 + $0xa4] sm:$0xf]
      %v244 = vld [vmem:[%s183 + $0xa8] sm:$0xf]
      %v245 = vld [vmem:[%s183 + $0xac] sm:$0xf]
      %v246 = vld [vmem:[%s183 + $0xb0] sm:$0xf]
      %v247 = vld [vmem:[%s183 + $0xb4] sm:$0xf]
      %v248 = vld [vmem:[%s183 + $0xb8] sm:$0xf]
      %v249 = vld [vmem:[%s183 + $0xbc] sm:$0xf]
      %v250 = vld [vmem:[%s183 + $0xc0] sm:$0xf]
      %v251 = vld [vmem:[%s183 + $0xc4] sm:$0xf]
      %v252 = vld [vmem:[%s183 + $0xc8] sm:$0xf]
      %v253 = vld [vmem:[%s183 + $0xcc] sm:$0xf]
      %v254 = vld [vmem:[%s183 + $0xd0] sm:$0xf]
      %v255 = vld [vmem:[%s183 + $0xd4] sm:$0xf]
      %v256 = vld [vmem:[%s183 + $0xd8] sm:$0xf]
      %v257 = vld [vmem:[%s183 + $0xdc] sm:$0xf]
      %v258 = vld [vmem:[%s183 + $0xe0] sm:$0xf]
      %s259 = scalar_lea.vmem %s1, 64
      %v260 = vld [vmem:[%s259] sm:$0xf]
      %v261 = vld [vmem:[%s259 + $0x4] sm:$0xf]
      %v262 = vld [vmem:[%s259 + $0x8] sm:$0xf]
      %v263 = vld [vmem:[%s259 + $0xc] sm:$0xf]
      %v264 = vld [vmem:[%s259 + $0x10] sm:$0xf]
      %v265 = vld [vmem:[%s259 + $0x14] sm:$0xf]
      %v266 = vld [vmem:[%s259 + $0x18] sm:$0xf]
      %v267 = vld [vmem:[%s259 + $0x1c] sm:$0xf]
      %v268 = vld [vmem:[%s259 + $0x20] sm:$0xf]
      %v269 = vld [vmem:[%s259 + $0x24] sm:$0xf]
      %v270 = vld [vmem:[%s259 + $0x28] sm:$0xf]
      %v271 = vld [vmem:[%s259 + $0x2c] sm:$0xf]
      %v272 = vld [vmem:[%s259 + $0x30] sm:$0xf]
      %v273 = vld [vmem:[%s259 + $0x34] sm:$0xf]
      %v274 = vld [vmem:[%s259 + $0x38] sm:$0xf]
      %v275 = vld [vmem:[%s259 + $0x3c] sm:$0xf]
      %v300 = vunpack.c.l.b16 %v235
      %v301 = vunpack.c.l.b16 %v236
      %v302 = vunpack.c.l.b16 %v237
      %v303 = vunpack.c.l.b16 %v238
      %v304 = vunpack.c.l.b16 %v239
      %v305 = vunpack.c.l.b16 %v240
      %v306 = vunpack.c.l.b16 %v241
      %v307 = vunpack.c.l.b16 %v242
      %v308 = vunpack.c.l.b16 %v243
      %v309 = vunpack.c.l.b16 %v244
      %v310 = vunpack.c.l.b16 %v245
      %v311 = vunpack.c.l.b16 %v246
      %v312 = vunpack.c.l.b16 %v247
      %v313 = vunpack.c.l.b16 %v248
      %v314 = vunpack.c.l.b16 %v249
      %v315 = vunpack.c.l.b16 %v250
      %v316 = vunpack.c.l.b16 %v251
      %v317 = vunpack.c.l.b16 %v252
      %v318 = vunpack.c.l.b16 %v253
      %v319 = vunpack.c.l.b16 %v254
      %v320 = vunpack.c.l.b16 %v255
      %v321 = vunpack.c.l.b16 %v256
      %v322 = vunpack.c.l.b16 %v257
      %v323 = vunpack.c.l.b16 %v258
      %v324 = vpack.c.b16 %v301, %v300
      %v325 = vpack.c.b16 %v303, %v302
      %v326 = vpack.c.b16 %v305, %v304
      %v327 = vpack.c.b16 %v307, %v306
      %v328 = vpack.c.b16 %v309, %v308
      %v329 = vpack.c.b16 %v311, %v310
      %v330 = vpack.c.b16 %v313, %v312
      %v331 = vpack.c.b16 %v315, %v314
      %v332 = vpack.c.b16 %v317, %v316
      %v333 = vpack.c.b16 %v319, %v318
      %v334 = vpack.c.b16 %v321, %v320
      %v335 = vpack.c.b16 %v323, %v322
      %v364 = vunpack.c.l.b16 %v260
      %v365 = vunpack.c.l.b16 %v261
      %v366 = vunpack.c.l.b16 %v262
      %v367 = vunpack.c.l.b16 %v263
      %v368 = vunpack.c.l.b16 %v264
      %v369 = vunpack.c.l.b16 %v265
      %v370 = vunpack.c.l.b16 %v266
      %v371 = vunpack.c.l.b16 %v267
      %v372 = vunpack.c.l.b16 %v268
      %v373 = vunpack.c.l.b16 %v269
      %v374 = vunpack.c.l.b16 %v270
      %v375 = vunpack.c.l.b16 %v271
      %v376 = vunpack.c.l.b16 %v272
      %v377 = vunpack.c.l.b16 %v273
      %v378 = vunpack.c.l.b16 %v274
      %v379 = vunpack.c.l.b16 %v275
      %v380 = vpack.c.b16 %v365, %v364
      %v381 = vpack.c.b16 %v367, %v366
      %v382 = vpack.c.b16 %v369, %v368
      %v383 = vpack.c.b16 %v371, %v370
      %v384 = vpack.c.b16 %v373, %v372
      %v385 = vpack.c.b16 %v375, %v374
      %v386 = vpack.c.b16 %v377, %v376
      %v387 = vpack.c.b16 %v379, %v378
      %396 = vmatprep.subr.bf16.mxu0 0
      %397 = vmatpush1.bf16.msra.mxu0 %v380
      %398 = vmatprep.subr.bf16.mxu0 0
      %399 = vmatpush1.bf16.msra.mxu0 %v381
      %400 = vmatprep.subr.bf16.mxu0 0
      %401 = vmatpush1.bf16.msra.mxu0 %v382
      %402 = vmatprep.subr.bf16.mxu0 0
      %403 = vmatpush1.bf16.msra.mxu0 %v383
      %404 = vmatprep.subr.bf16.mxu0 0
      %405 = vmatpush1.bf16.msra.mxu0 %v384
      %406 = vmatprep.subr.bf16.mxu0 0
      %407 = vmatpush1.bf16.msra.mxu0 %v385
      %408 = vmatprep.subr.bf16.mxu0 0
      %409 = vmatpush1.bf16.msra.mxu0 %v386
      %410 = vmatprep.subr.bf16.mxu0 0
      %411 = vmatpush1.bf16.msra.mxu0 %v387
      %412 = vmatprep.subr.bf16.mxu0 0
      %413 = vmatpush1.bf16.msra.mxu0 0
      %414 = vmatprep.subr.bf16.mxu0 0
      %415 = vmatpush1.bf16.msra.mxu0 0
      %416 = vmatprep.subr.bf16.mxu0 0
      %417 = vmatpush1.bf16.msra.mxu0 0
      %418 = vmatprep.subr.bf16.mxu0 0
      %419 = vmatpush1.bf16.msra.mxu0 0
      %420 = vmatprep.subr.bf16.mxu0 0
      %421 = vmatpush1.bf16.msra.mxu0 0
      %422 = vmatprep.subr.bf16.mxu0 0
      %423 = vmatpush1.bf16.msra.mxu0 0
      %424 = vmatprep.subr.bf16.mxu0 0
      %425 = vmatpush1.bf16.msra.mxu0 0
      %426 = vmatprep.subr.bf16.mxu0 0
      %427 = vmatpush1.bf16.msra.mxu0 0
      %428 = vmatprep.mubr.bf16.mxu0 0
      %429 = vmatmul.mubr.bf16.gmra.mrb[0].mxu0 %v324
      %v430 = vpop.f32.mrb[0].mxu0
      %v431 = vadd.f32 0.0, %v430
      %v432 = vpop.f32.mrb[0].mxu0
      %v433 = vpop.f32.mrb[0].mxu0
      %v434 = vadd.f32 0.0, %v433
      %v435 = vpop.f32.mrb[0].mxu0
      %436 = vmatprep.mubr.bf16.mxu0 0
      %437 = vmatmul.mubr.bf16.gmra.mrb[0].mxu0 %v325
      %v438 = vpop.f32.mrb[0].mxu0
      %v439 = vadd.f32 0.0, %v438
      %v440 = vpop.f32.mrb[0].mxu0
      %v441 = vpop.f32.mrb[0].mxu0
      %v442 = vadd.f32 0.0, %v441
      %v443 = vpop.f32.mrb[0].mxu0
      %444 = vmatprep.mubr.bf16.mxu0 0
      %445 = vmatmul.mubr.bf16.gmra.mrb[0].mxu0 %v326
      %v446 = vpop.f32.mrb[0].mxu0
      %v447 = vadd.f32 0.0, %v446
      %v448 = vpop.f32.mrb[0].mxu0
      %v449 = vpop.f32.mrb[0].mxu0
      %v450 = vadd.f32 0.0, %v449
      %v451 = vpop.f32.mrb[0].mxu0
      %452 = vmatprep.mubr.bf16.mxu0 0
      %453 = vmatmul.mubr.bf16.gmra.mrb[0].mxu0 %v327
      %v454 = vpop.f32.mrb[0].mxu0
      %v455 = vadd.f32 0.0, %v454
      %v456 = vpop.f32.mrb[0].mxu0
      %v457 = vpop.f32.mrb[0].mxu0
      %v458 = vadd.f32 0.0, %v457
      %v459 = vpop.f32.mrb[0].mxu0
      %460 = vmatprep.mubr.bf16.mxu0 0
      %461 = vmatmul.mubr.bf16.gmra.mrb[0].mxu0 %v328
      %v462 = vpop.f32.mrb[0].mxu0
      %v463 = vadd.f32 0.0, %v462
      %v464 = vpop.f32.mrb[0].mxu0
      %v465 = vpop.f32.mrb[0].mxu0
      %v466 = vadd.f32 0.0, %v465
      %v467 = vpop.f32.mrb[0].mxu0
      %468 = vmatprep.mubr.bf16.mxu0 0
      %469 = vmatmul.mubr.bf16.gmra.mrb[0].mxu0 %v329
      %v470 = vpop.f32.mrb[0].mxu0
      %v471 = vadd.f32 0.0, %v470
      %v472 = vpop.f32.mrb[0].mxu0
      %v473 = vpop.f32.mrb[0].mxu0
      %v474 = vadd.f32 0.0, %v473
      %v475 = vpop.f32.mrb[0].mxu0
      %476 = vmatprep.mubr.bf16.mxu0 0
      %477 = vmatmul.mubr.bf16.gmra.mrb[0].mxu0 %v330
      %v478 = vpop.f32.mrb[0].mxu0
      %v479 = vadd.f32 0.0, %v478
      %v480 = vpop.f32.mrb[0].mxu0
      %v481 = vpop.f32.mrb[0].mxu0
      %v482 = vadd.f32 0.0, %v481
      %v483 = vpop.f32.mrb[0].mxu0
      %484 = vmatprep.mubr.bf16.mxu0 0
      %485 = vmatmul.mubr.bf16.gmra.mrb[0].mxu0 %v331
      %v486 = vpop.f32.mrb[0].mxu0
      %v487 = vadd.f32 0.0, %v486
      %v488 = vpop.f32.mrb[0].mxu0
      %v489 = vpop.f32.mrb[0].mxu0
      %v490 = vadd.f32 0.0, %v489
      %v491 = vpop.f32.mrb[0].mxu0
      %492 = vmatprep.mubr.bf16.mxu0 0
      %493 = vmatmul.mubr.bf16.gmra.mrb[0].mxu0 %v332
      %v494 = vpop.f32.mrb[0].mxu0
      %v495 = vadd.f32 0.0, %v494
      %v496 = vpop.f32.mrb[0].mxu0
      %v497 = vpop.f32.mrb[0].mxu0
      %v498 = vadd.f32 0.0, %v497
      %v499 = vpop.f32.mrb[0].mxu0
      %500 = vmatprep.mubr.bf16.mxu0 0
      %501 = vmatmul.mubr.bf16.gmra.mrb[0].mxu0 %v333
      %v502 = vpop.f32.mrb[0].mxu0
      %v503 = vadd.f32 0.0, %v502
      %v504 = vpop.f32.mrb[0].mxu0
      %v505 = vpop.f32.mrb[0].mxu0
      %v506 = vadd.f32 0.0, %v505
      %v507 = vpop.f32.mrb[0].mxu0
      %508 = vmatprep.mubr.bf16.mxu0 0
      %509 = vmatmul.mubr.bf16.gmra.mrb[0].mxu0 %v334
      %v510 = vpop.f32.mrb[0].mxu0
      %v511 = vadd.f32 0.0, %v510
      %v512 = vpop.f32.mrb[0].mxu0
      %v513 = vpop.f32.mrb[0].mxu0
      %v514 = vadd.f32 0.0, %v513
      %v515 = vpop.f32.mrb[0].mxu0
      %516 = vmatprep.mubr.bf16.mxu0 0
      %517 = vmatmul.mubr.bf16.gmra.mrb[0].mxu0 %v335
      %v518 = vpop.f32.mrb[0].mxu0
      %v519 = vadd.f32 0.0, %v518
      %v520 = vpop.f32.mrb[0].mxu0
      %v521 = vpop.f32.mrb[0].mxu0
      %v522 = vadd.f32 0.0, %v521
      %v523 = vpop.f32.mrb[0].mxu0
      %524 = vdwg.mxu0
      %v549 = vunpack.c.l.b16 %v195
      %v550 = vunpack.c.l.b16 %v196
      %v551 = vunpack.c.l.b16 %v197
      %v552 = vunpack.c.l.b16 %v198
      %v553 = vunpack.c.l.b16 %v199
      %v554 = vunpack.c.l.b16 %v200
      %v555 = vunpack.c.l.b16 %v201
      %v556 = vunpack.c.l.b16 %v202
      %v557 = vunpack.c.l.b16 %v203
      %v558 = vunpack.c.l.b16 %v204
      %v559 = vunpack.c.l.b16 %v205
      %v560 = vunpack.c.l.b16 %v206
      %v561 = vunpack.c.l.b16 %v207
      %v562 = vunpack.c.l.b16 %v208
      %v563 = vunpack.c.l.b16 %v209
      %v564 = vunpack.c.l.b16 %v210
      %v565 = vunpack.c.l.b16 %v211
      %v566 = vunpack.c.l.b16 %v212
      %v567 = vunpack.c.l.b16 %v213
      %v568 = vunpack.c.l.b16 %v214
      %v569 = vunpack.c.l.b16 %v215
      %v570 = vunpack.c.l.b16 %v216
      %v571 = vunpack.c.l.b16 %v217
      %v572 = vunpack.c.l.b16 %v218
      %v573 = vpack.c.b16 %v550, %v549
      %v574 = vpack.c.b16 %v552, %v551
      %v575 = vpack.c.b16 %v554, %v553
      %v576 = vpack.c.b16 %v556, %v555
      %v577 = vpack.c.b16 %v558, %v557
      %v578 = vpack.c.b16 %v560, %v559
      %v579 = vpack.c.b16 %v562, %v561
      %v580 = vpack.c.b16 %v564, %v563
      %v581 = vpack.c.b16 %v566, %v565
      %v582 = vpack.c.b16 %v568, %v567
      %v583 = vpack.c.b16 %v570, %v569
      %v584 = vpack.c.b16 %v572, %v571
      %v613 = vunpack.c.l.b16 %v219
      %v614 = vunpack.c.l.b16 %v220
      %v615 = vunpack.c.l.b16 %v221
      %v616 = vunpack.c.l.b16 %v222
      %v617 = vunpack.c.l.b16 %v223
      %v618 = vunpack.c.l.b16 %v224
      %v619 = vunpack.c.l.b16 %v225
      %v620 = vunpack.c.l.b16 %v226
      %v621 = vunpack.c.l.b16 %v227
      %v622 = vunpack.c.l.b16 %v228
      %v623 = vunpack.c.l.b16 %v229
      %v624 = vunpack.c.l.b16 %v230
      %v625 = vunpack.c.l.b16 %v231
      %v626 = vunpack.c.l.b16 %v232
      %v627 = vunpack.c.l.b16 %v233
      %v628 = vunpack.c.l.b16 %v234
      %v629 = vpack.c.b16 %v614, %v613
      %v630 = vpack.c.b16 %v616, %v615
      %v631 = vpack.c.b16 %v618, %v617
      %v632 = vpack.c.b16 %v620, %v619
      %v633 = vpack.c.b16 %v622, %v621
      %v634 = vpack.c.b16 %v624, %v623
      %v635 = vpack.c.b16 %v626, %v625
      %v636 = vpack.c.b16 %v628, %v627
      %645 = vmatprep.subr.bf16.mxu0 0
      %646 = vmatpush1.bf16.msra.mxu0 %v629
      %647 = vmatprep.subr.bf16.mxu0 0
      %648 = vmatpush1.bf16.msra.mxu0 %v630
      %649 = vmatprep.subr.bf16.mxu0 0
      %650 = vmatpush1.bf16.msra.mxu0 %v631
      %651 = vmatprep.subr.bf16.mxu0 0
      %652 = vmatpush1.bf16.msra.mxu0 %v632
      %653 = vmatprep.subr.bf16.mxu0 0
      %654 = vmatpush1.bf16.msra.mxu0 %v633
      %655 = vmatprep.subr.bf16.mxu0 0
      %656 = vmatpush1.bf16.msra.mxu0 %v634
      %657 = vmatprep.subr.bf16.mxu0 0
      %658 = vmatpush1.bf16.msra.mxu0 %v635
      %659 = vmatprep.subr.bf16.mxu0 0
      %660 = vmatpush1.bf16.msra.mxu0 %v636
      %661 = vmatprep.subr.bf16.mxu0 0
      %662 = vmatpush1.bf16.msra.mxu0 0
      %663 = vmatprep.subr.bf16.mxu0 0
      %664 = vmatpush1.bf16.msra.mxu0 0
      %665 = vmatprep.subr.bf16.mxu0 0
      %666 = vmatpush1.bf16.msra.mxu0 0
      %667 = vmatprep.subr.bf16.mxu0 0
      %668 = vmatpush1.bf16.msra.mxu0 0
      %669 = vmatprep.subr.bf16.mxu0 0
      %670 = vmatpush1.bf16.msra.mxu0 0
      %671 = vmatprep.subr.bf16.mxu0 0
      %672 = vmatpush1.bf16.msra.mxu0 0
      %673 = vmatprep.subr.bf16.mxu0 0
      %674 = vmatpush1.bf16.msra.mxu0 0
      %675 = vmatprep.subr.bf16.mxu0 0
      %676 = vmatpush1.bf16.msra.mxu0 0
      %677 = vmatprep.mubr.bf16.mxu0 0
      %678 = vmatmul.mubr.bf16.gmra.mrb[0].mxu0 %v573
      %v679 = vpop.f32.mrb[0].mxu0
      %v680 = vadd.f32 %v431, %v679
      %v681 = vpop.f32.mrb[0].mxu0
      %v682 = vpop.f32.mrb[0].mxu0
      %v683 = vadd.f32 %v434, %v682
      %v684 = vpop.f32.mrb[0].mxu0
      %685 = vmatprep.mubr.bf16.mxu0 0
      %686 = vmatmul.mubr.bf16.gmra.mrb[0].mxu0 %v574
      %v687 = vpop.f32.mrb[0].mxu0
      %v688 = vadd.f32 %v439, %v687
      %v689 = vpop.f32.mrb[0].mxu0
      %v690 = vpop.f32.mrb[0].mxu0
      %v691 = vadd.f32 %v442, %v690
      %v692 = vpop.f32.mrb[0].mxu0
      %693 = vmatprep.mubr.bf16.mxu0 0
      %694 = vmatmul.mubr.bf16.gmra.mrb[0].mxu0 %v575
      %v695 = vpop.f32.mrb[0].mxu0
      %v696 = vadd.f32 %v447, %v695
      %v697 = vpop.f32.mrb[0].mxu0
      %v698 = vpop.f32.mrb[0].mxu0
      %v699 = vadd.f32 %v450, %v698
      %v700 = vpop.f32.mrb[0].mxu0
      %701 = vmatprep.mubr.bf16.mxu0 0
      %702 = vmatmul.mubr.bf16.gmra.mrb[0].mxu0 %v576
      %v703 = vpop.f32.mrb[0].mxu0
      %v704 = vadd.f32 %v455, %v703
      %v705 = vpop.f32.mrb[0].mxu0
      %v706 = vpop.f32.mrb[0].mxu0
      %v707 = vadd.f32 %v458, %v706
      %v708 = vpop.f32.mrb[0].mxu0
      %709 = vmatprep.mubr.bf16.mxu0 0
      %710 = vmatmul.mubr.bf16.gmra.mrb[0].mxu0 %v577
      %v711 = vpop.f32.mrb[0].mxu0
      %v712 = vadd.f32 %v463, %v711
      %v713 = vpop.f32.mrb[0].mxu0
      %v714 = vpop.f32.mrb[0].mxu0
      %v715 = vadd.f32 %v466, %v714
      %v716 = vpop.f32.mrb[0].mxu0
      %717 = vmatprep.mubr.bf16.mxu0 0
      %718 = vmatmul.mubr.bf16.gmra.mrb[0].mxu0 %v578
      %v719 = vpop.f32.mrb[0].mxu0
      %v720 = vadd.f32 %v471, %v719
      %v721 = vpop.f32.mrb[0].mxu0
      %v722 = vpop.f32.mrb[0].mxu0
      %v723 = vadd.f32 %v474, %v722
      %v724 = vpop.f32.mrb[0].mxu0
      %725 = vmatprep.mubr.bf16.mxu0 0
      %726 = vmatmul.mubr.bf16.gmra.mrb[0].mxu0 %v579
      %v727 = vpop.f32.mrb[0].mxu0
      %v728 = vadd.f32 %v479, %v727
      %v729 = vpop.f32.mrb[0].mxu0
      %v730 = vpop.f32.mrb[0].mxu0
      %v731 = vadd.f32 %v482, %v730
      %v732 = vpop.f32.mrb[0].mxu0
      %733 = vmatprep.mubr.bf16.mxu0 0
      %734 = vmatmul.mubr.bf16.gmra.mrb[0].mxu0 %v580
      %v735 = vpop.f32.mrb[0].mxu0
      %v736 = vadd.f32 %v487, %v735
      %v737 = vpop.f32.mrb[0].mxu0
      %v738 = vpop.f32.mrb[0].mxu0
      %v739 = vadd.f32 %v490, %v738
      %v740 = vpop.f32.mrb[0].mxu0
      %741 = vmatprep.mubr.bf16.mxu0 0
      %742 = vmatmul.mubr.bf16.gmra.mrb[0].mxu0 %v581
      %v743 = vpop.f32.mrb[0].mxu0
      %v744 = vadd.f32 %v495, %v743
      %v745 = vpop.f32.mrb[0].mxu0
      %v746 = vpop.f32.mrb[0].mxu0
      %v747 = vadd.f32 %v498, %v746
      %v748 = vpop.f32.mrb[0].mxu0
      %749 = vmatprep.mubr.bf16.mxu0 0
      %750 = vmatmul.mubr.bf16.gmra.mrb[0].mxu0 %v582
      %v751 = vpop.f32.mrb[0].mxu0
      %v752 = vadd.f32 %v503, %v751
      %v753 = vpop.f32.mrb[0].mxu0
      %v754 = vpop.f32.mrb[0].mxu0
      %v755 = vadd.f32 %v506, %v754
      %v756 = vpop.f32.mrb[0].mxu0
      %757 = vmatprep.mubr.bf16.mxu0 0
      %758 = vmatmul.mubr.bf16.gmra.mrb[0].mxu0 %v583
      %v759 = vpop.f32.mrb[0].mxu0
      %v760 = vadd.f32 %v511, %v759
      %v761 = vpop.f32.mrb[0].mxu0
      %v762 = vpop.f32.mrb[0].mxu0
      %v763 = vadd.f32 %v514, %v762
      %v764 = vpop.f32.mrb[0].mxu0
      %765 = vmatprep.mubr.bf16.mxu0 0
      %766 = vmatmul.mubr.bf16.gmra.mrb[0].mxu0 %v584
      %v767 = vpop.f32.mrb[0].mxu0
      %v768 = vadd.f32 %v519, %v767
      %v769 = vpop.f32.mrb[0].mxu0
      %v770 = vpop.f32.mrb[0].mxu0
      %v771 = vadd.f32 %v522, %v770
      %v772 = vpop.f32.mrb[0].mxu0
      %773 = vdwg.mxu0
      %v774 = vld [vmem:[%s183 + $0xc] sm:$0xf]
      %v775 = vld [vmem:[%s183 + $0x10] sm:$0xf]
      %v776 = vld [vmem:[%s183 + $0x14] sm:$0xf]
      %v777 = vld [vmem:[%s183 + $0x18] sm:$0xf]
      %v778 = vld [vmem:[%s183 + $0x1c] sm:$0xf]
      %v779 = vld [vmem:[%s183 + $0x20] sm:$0xf]
      %v780 = vld [vmem:[%s183 + $0x24] sm:$0xf]
      %v781 = vld [vmem:[%s183 + $0x28] sm:$0xf]
      %v782 = vld [vmem:[%s183 + $0x2c] sm:$0xf]
      %v783 = vld [vmem:[%s183 + $0x30] sm:$0xf]
      %v784 = vld [vmem:[%s183 + $0x34] sm:$0xf]
      %v785 = vld [vmem:[%s183 + $0x38] sm:$0xf]
      %v786 = vld [vmem:[%s183 + $0x3c] sm:$0xf]
      %v787 = vld [vmem:[%s183 + $0x40] sm:$0xf]
      %v788 = vld [vmem:[%s183 + $0x44] sm:$0xf]
      %v789 = vld [vmem:[%s183 + $0x48] sm:$0xf]
      %v790 = vld [vmem:[%s183 + $0x4c] sm:$0xf]
      %v791 = vld [vmem:[%s183 + $0x50] sm:$0xf]
      %v792 = vld [vmem:[%s183 + $0x54] sm:$0xf]
      %v793 = vld [vmem:[%s183 + $0x58] sm:$0xf]
      %v794 = vld [vmem:[%s183 + $0x5c] sm:$0xf]
      %v795 = vld [vmem:[%s183 + $0x60] sm:$0xf]
      %v796 = vld [vmem:[%s183 + $0x64] sm:$0xf]
      %v797 = vld [vmem:[%s183 + $0x68] sm:$0xf]
      %s798 = scalar_lea.vmem %s1, 128
      %v799 = vld [vmem:[%s798] sm:$0xf]
      %v800 = vld [vmem:[%s798 + $0x4] sm:$0xf]
      %v801 = vld [vmem:[%s798 + $0x8] sm:$0xf]
      %v802 = vld [vmem:[%s798 + $0xc] sm:$0xf]
      %v803 = vld [vmem:[%s798 + $0x10] sm:$0xf]
      %v804 = vld [vmem:[%s798 + $0x14] sm:$0xf]
      %v805 = vld [vmem:[%s798 + $0x18] sm:$0xf]
      %v806 = vld [vmem:[%s798 + $0x1c] sm:$0xf]
      %v807 = vld [vmem:[%s798 + $0x20] sm:$0xf]
      %v808 = vld [vmem:[%s798 + $0x24] sm:$0xf]
      %v809 = vld [vmem:[%s798 + $0x28] sm:$0xf]
      %v810 = vld [vmem:[%s798 + $0x2c] sm:$0xf]
      %v811 = vld [vmem:[%s798 + $0x30] sm:$0xf]
      %v812 = vld [vmem:[%s798 + $0x34] sm:$0xf]
      %v813 = vld [vmem:[%s798 + $0x38] sm:$0xf]
      %v814 = vld [vmem:[%s798 + $0x3c] sm:$0xf]
      %v839 = vunpack.c.l.b16 %v774
      %v840 = vunpack.c.l.b16 %v775
      %v841 = vunpack.c.l.b16 %v776
      %v842 = vunpack.c.l.b16 %v777
      %v843 = vunpack.c.l.b16 %v778
      %v844 = vunpack.c.l.b16 %v779
      %v845 = vunpack.c.l.b16 %v780
      %v846 = vunpack.c.l.b16 %v781
      %v847 = vunpack.c.l.b16 %v782
      %v848 = vunpack.c.l.b16 %v783
      %v849 = vunpack.c.l.b16 %v784
      %v850 = vunpack.c.l.b16 %v785
      %v851 = vunpack.c.l.b16 %v786
      %v852 = vunpack.c.l.b16 %v787
      %v853 = vunpack.c.l.b16 %v788
      %v854 = vunpack.c.l.b16 %v789
      %v855 = vunpack.c.l.b16 %v790
      %v856 = vunpack.c.l.b16 %v791
      %v857 = vunpack.c.l.b16 %v792
      %v858 = vunpack.c.l.b16 %v793
      %v859 = vunpack.c.l.b16 %v794
      %v860 = vunpack.c.l.b16 %v795
      %v861 = vunpack.c.l.b16 %v796
      %v862 = vunpack.c.l.b16 %v797
      %v863 = vpack.c.b16 %v840, %v839
      %v864 = vpack.c.b16 %v842, %v841
      %v865 = vpack.c.b16 %v844, %v843
      %v866 = vpack.c.b16 %v846, %v845
      %v867 = vpack.c.b16 %v848, %v847
      %v868 = vpack.c.b16 %v850, %v849
      %v869 = vpack.c.b16 %v852, %v851
      %v870 = vpack.c.b16 %v854, %v853
      %v871 = vpack.c.b16 %v856, %v855
      %v872 = vpack.c.b16 %v858, %v857
      %v873 = vpack.c.b16 %v860, %v859
      %v874 = vpack.c.b16 %v862, %v861
      %v903 = vunpack.c.l.b16 %v799
      %v904 = vunpack.c.l.b16 %v800
      %v905 = vunpack.c.l.b16 %v801
      %v906 = vunpack.c.l.b16 %v802
      %v907 = vunpack.c.l.b16 %v803
      %v908 = vunpack.c.l.b16 %v804
      %v909 = vunpack.c.l.b16 %v805
      %v910 = vunpack.c.l.b16 %v806
      %v911 = vunpack.c.l.b16 %v807
      %v912 = vunpack.c.l.b16 %v808
      %v913 = vunpack.c.l.b16 %v809
      %v914 = vunpack.c.l.b16 %v810
      %v915 = vunpack.c.l.b16 %v811
      %v916 = vunpack.c.l.b16 %v812
      %v917 = vunpack.c.l.b16 %v813
      %v918 = vunpack.c.l.b16 %v814
      %v919 = vpack.c.b16 %v904, %v903
      %v920 = vpack.c.b16 %v906, %v905
      %v921 = vpack.c.b16 %v908, %v907
      %v922 = vpack.c.b16 %v910, %v909
      %v923 = vpack.c.b16 %v912, %v911
      %v924 = vpack.c.b16 %v914, %v913
      %v925 = vpack.c.b16 %v916, %v915
      %v926 = vpack.c.b16 %v918, %v917
      %935 = vmatprep.subr.bf16.mxu0 0
      %936 = vmatpush1.bf16.msra.mxu0 %v919
      %937 = vmatprep.subr.bf16.mxu0 0
      %938 = vmatpush1.bf16.msra.mxu0 %v920
      %939 = vmatprep.subr.bf16.mxu0 0
      %940 = vmatpush1.bf16.msra.mxu0 %v921
      %941 = vmatprep.subr.bf16.mxu0 0
      %942 = vmatpush1.bf16.msra.mxu0 %v922
      %943 = vmatprep.subr.bf16.mxu0 0
      %944 = vmatpush1.bf16.msra.mxu0 %v923
      %945 = vmatprep.subr.bf16.mxu0 0
      %946 = vmatpush1.bf16.msra.mxu0 %v924
      %947 = vmatprep.subr.bf16.mxu0 0
      %948 = vmatpush1.bf16.msra.mxu0 %v925
      %949 = vmatprep.subr.bf16.mxu0 0
      %950 = vmatpush1.bf16.msra.mxu0 %v926
      %951 = vmatprep.subr.bf16.mxu0 0
      %952 = vmatpush1.bf16.msra.mxu0 0
      %953 = vmatprep.subr.bf16.mxu0 0
      %954 = vmatpush1.bf16.msra.mxu0 0
      %955 = vmatprep.subr.bf16.mxu0 0
      %956 = vmatpush1.bf16.msra.mxu0 0
      %957 = vmatprep.subr.bf16.mxu0 0
      %958 = vmatpush1.bf16.msra.mxu0 0
      %959 = vmatprep.subr.bf16.mxu0 0
      %960 = vmatpush1.bf16.msra.mxu0 0
      %961 = vmatprep.subr.bf16.mxu0 0
      %962 = vmatpush1.bf16.msra.mxu0 0
      %963 = vmatprep.subr.bf16.mxu0 0
      %964 = vmatpush1.bf16.msra.mxu0 0
      %965 = vmatprep.subr.bf16.mxu0 0
      %966 = vmatpush1.bf16.msra.mxu0 0
      %967 = vmatprep.mubr.bf16.mxu0 0
      %968 = vmatmul.mubr.bf16.gmra.mrb[0].mxu0 %v863
      %v969 = vpop.f32.mrb[0].mxu0
      %v970 = vadd.f32 0.0, %v969
      %v971 = vpop.f32.mrb[0].mxu0
      %v972 = vpop.f32.mrb[0].mxu0
      %v973 = vadd.f32 0.0, %v972
      %v974 = vpop.f32.mrb[0].mxu0
      %975 = vmatprep.mubr.bf16.mxu0 0
      %976 = vmatmul.mubr.bf16.gmra.mrb[0].mxu0 %v864
      %v977 = vpop.f32.mrb[0].mxu0
      %v978 = vadd.f32 0.0, %v977
      %v979 = vpop.f32.mrb[0].mxu0
      %v980 = vpop.f32.mrb[0].mxu0
      %v981 = vadd.f32 0.0, %v980
      %v982 = vpop.f32.mrb[0].mxu0
      %983 = vmatprep.mubr.bf16.mxu0 0
      %984 = vmatmul.mubr.bf16.gmra.mrb[0].mxu0 %v865
      %v985 = vpop.f32.mrb[0].mxu0
      %v986 = vadd.f32 0.0, %v985
      %v987 = vpop.f32.mrb[0].mxu0
      %v988 = vpop.f32.mrb[0].mxu0
      %v989 = vadd.f32 0.0, %v988
      %v990 = vpop.f32.mrb[0].mxu0
      %991 = vmatprep.mubr.bf16.mxu0 0
      %992 = vmatmul.mubr.bf16.gmra.mrb[0].mxu0 %v866
      %v993 = vpop.f32.mrb[0].mxu0
      %v994 = vadd.f32 0.0, %v993
      %v995 = vpop.f32.mrb[0].mxu0
      %v996 = vpop.f32.mrb[0].mxu0
      %v997 = vadd.f32 0.0, %v996
      %v998 = vpop.f32.mrb[0].mxu0
      %999 = vmatprep.mubr.bf16.mxu0 0
      %1000 = vmatmul.mubr.bf16.gmra.mrb[0].mxu0 %v867
      %v1001 = vpop.f32.mrb[0].mxu0
      %v1002 = vadd.f32 0.0, %v1001
      %v1003 = vpop.f32.mrb[0].mxu0
      %v1004 = vpop.f32.mrb[0].mxu0
      %v1005 = vadd.f32 0.0, %v1004
      %v1006 = vpop.f32.mrb[0].mxu0
      %1007 = vmatprep.mubr.bf16.mxu0 0
      %1008 = vmatmul.mubr.bf16.gmra.mrb[0].mxu0 %v868
      %v1009 = vpop.f32.mrb[0].mxu0
      %v1010 = vadd.f32 0.0, %v1009
      %v1011 = vpop.f32.mrb[0].mxu0
      %v1012 = vpop.f32.mrb[0].mxu0
      %v1013 = vadd.f32 0.0, %v1012
      %v1014 = vpop.f32.mrb[0].mxu0
      %1015 = vmatprep.mubr.bf16.mxu0 0
      %1016 = vmatmul.mubr.bf16.gmra.mrb[0].mxu0 %v869
      %v1017 = vpop.f32.mrb[0].mxu0
      %v1018 = vadd.f32 0.0, %v1017
      %v1019 = vpop.f32.mrb[0].mxu0
      %v1020 = vpop.f32.mrb[0].mxu0
      %v1021 = vadd.f32 0.0, %v1020
      %v1022 = vpop.f32.mrb[0].mxu0
      %1023 = vmatprep.mubr.bf16.mxu0 0
      %1024 = vmatmul.mubr.bf16.gmra.mrb[0].mxu0 %v870
      %v1025 = vpop.f32.mrb[0].mxu0
      %v1026 = vadd.f32 0.0, %v1025
      %v1027 = vpop.f32.mrb[0].mxu0
      %v1028 = vpop.f32.mrb[0].mxu0
      %v1029 = vadd.f32 0.0, %v1028
      %v1030 = vpop.f32.mrb[0].mxu0
      %1031 = vmatprep.mubr.bf16.mxu0 0
      %1032 = vmatmul.mubr.bf16.gmra.mrb[0].mxu0 %v871
      %v1033 = vpop.f32.mrb[0].mxu0
      %v1034 = vadd.f32 0.0, %v1033
      %v1035 = vpop.f32.mrb[0].mxu0
      %v1036 = vpop.f32.mrb[0].mxu0
      %v1037 = vadd.f32 0.0, %v1036
      %v1038 = vpop.f32.mrb[0].mxu0
      %1039 = vmatprep.mubr.bf16.mxu0 0
      %1040 = vmatmul.mubr.bf16.gmra.mrb[0].mxu0 %v872
      %v1041 = vpop.f32.mrb[0].mxu0
      %v1042 = vadd.f32 0.0, %v1041
      %v1043 = vpop.f32.mrb[0].mxu0
      %v1044 = vpop.f32.mrb[0].mxu0
      %v1045 = vadd.f32 0.0, %v1044
      %v1046 = vpop.f32.mrb[0].mxu0
      %1047 = vmatprep.mubr.bf16.mxu0 0
      %1048 = vmatmul.mubr.bf16.gmra.mrb[0].mxu0 %v873
      %v1049 = vpop.f32.mrb[0].mxu0
      %v1050 = vadd.f32 0.0, %v1049
      %v1051 = vpop.f32.mrb[0].mxu0
      %v1052 = vpop.f32.mrb[0].mxu0
      %v1053 = vadd.f32 0.0, %v1052
      %v1054 = vpop.f32.mrb[0].mxu0
      %1055 = vmatprep.mubr.bf16.mxu0 0
      %1056 = vmatmul.mubr.bf16.gmra.mrb[0].mxu0 %v874
      %v1057 = vpop.f32.mrb[0].mxu0
      %v1058 = vadd.f32 0.0, %v1057
      %v1059 = vpop.f32.mrb[0].mxu0
      %v1060 = vpop.f32.mrb[0].mxu0
      %v1061 = vadd.f32 0.0, %v1060
      %v1062 = vpop.f32.mrb[0].mxu0
      %1063 = vdwg.mxu0
      %v1064 = vadd.f32 %v680, %v970
      %v1065 = vadd.f32 %v683, %v973
      %v1066 = vadd.f32 %v688, %v978
      %v1067 = vadd.f32 %v691, %v981
      %v1068 = vadd.f32 %v696, %v986
      %v1069 = vadd.f32 %v699, %v989
      %v1070 = vadd.f32 %v704, %v994
      %v1071 = vadd.f32 %v707, %v997
      %v1072 = vadd.f32 %v712, %v1002
      %v1073 = vadd.f32 %v715, %v1005
      %v1074 = vadd.f32 %v720, %v1010
      %v1075 = vadd.f32 %v723, %v1013
      %v1076 = vadd.f32 %v728, %v1018
      %v1077 = vadd.f32 %v731, %v1021
      %v1078 = vadd.f32 %v736, %v1026
      %v1079 = vadd.f32 %v739, %v1029
      %v1080 = vadd.f32 %v744, %v1034
      %v1081 = vadd.f32 %v747, %v1037
      %v1082 = vadd.f32 %v752, %v1042
      %v1083 = vadd.f32 %v755, %v1045
      %v1084 = vadd.f32 %v760, %v1050
      %v1085 = vadd.f32 %v763, %v1053
      %v1086 = vadd.f32 %v768, %v1058
      %v1087 = vadd.f32 %v771, %v1061
      %v1088 = vld [vmem:[%s2] sm:$0x1]
      %v1090 = vlaneseq
      %v1091 = vshrl.u32 %v1090, 7
      %v1092 = vsub.s32 0, %v1091
      %v1093 = vrot.slane %v1088, %v1092
      %v1095 = vadd.f32 %v1064, %v1093
      %v1096 = vadd.f32 %v1065, %v1093
      %v1097 = vadd.f32 %v1066, %v1093
      %v1098 = vadd.f32 %v1067, %v1093
      %v1099 = vadd.f32 %v1068, %v1093
      %v1100 = vadd.f32 %v1069, %v1093
      %v1101 = vadd.f32 %v1070, %v1093
      %v1102 = vadd.f32 %v1071, %v1093
      %v1103 = vadd.f32 %v1072, %v1093
      %v1104 = vadd.f32 %v1073, %v1093
      %v1105 = vadd.f32 %v1074, %v1093
      %v1106 = vadd.f32 %v1075, %v1093
      %v1107 = vadd.f32 %v1076, %v1093
      %v1108 = vadd.f32 %v1077, %v1093
      %v1109 = vadd.f32 %v1078, %v1093
      %v1110 = vadd.f32 %v1079, %v1093
      %v1111 = vadd.f32 %v1080, %v1093
      %v1112 = vadd.f32 %v1081, %v1093
      %v1113 = vadd.f32 %v1082, %v1093
      %v1114 = vadd.f32 %v1083, %v1093
      %v1115 = vadd.f32 %v1084, %v1093
      %v1116 = vadd.f32 %v1085, %v1093
      %v1117 = vadd.f32 %v1086, %v1093
      %v1118 = vadd.f32 %v1087, %v1093
      %v1119 = vmul.f32 %v1095, %v1095
      %v1120 = vmul.f32 %v1096, %v1096
      %v1121 = vmul.f32 %v1097, %v1097
      %v1122 = vmul.f32 %v1098, %v1098
      %v1123 = vmul.f32 %v1099, %v1099
      %v1124 = vmul.f32 %v1100, %v1100
      %v1125 = vmul.f32 %v1101, %v1101
      %v1126 = vmul.f32 %v1102, %v1102
      %v1127 = vmul.f32 %v1103, %v1103
      %v1128 = vmul.f32 %v1104, %v1104
      %v1129 = vmul.f32 %v1105, %v1105
      %v1130 = vmul.f32 %v1106, %v1106
      %v1131 = vmul.f32 %v1107, %v1107
      %v1132 = vmul.f32 %v1108, %v1108
      %v1133 = vmul.f32 %v1109, %v1109
      %v1134 = vmul.f32 %v1110, %v1110
      %v1135 = vmul.f32 %v1111, %v1111
      %v1136 = vmul.f32 %v1112, %v1112
      %v1137 = vmul.f32 %v1113, %v1113
      %v1138 = vmul.f32 %v1114, %v1114
      %v1139 = vmul.f32 %v1115, %v1115
      %v1140 = vmul.f32 %v1116, %v1116
      %v1141 = vmul.f32 %v1117, %v1117
      %v1142 = vmul.f32 %v1118, %v1118
      %1143 = vadd.xlane.f32.xlu0 %v1119
      %v1144 = vpop.xlane.xlu0 %1143
      %1145 = vadd.xlane.f32.xlu0 %v1120
      %v1146 = vpop.xlane.xlu0 %1145
      %1147 = vadd.xlane.f32.xlu0 %v1121
      %v1148 = vpop.xlane.xlu0 %1147
      %1149 = vadd.xlane.f32.xlu0 %v1122
      %v1150 = vpop.xlane.xlu0 %1149
      %1151 = vadd.xlane.f32.xlu0 %v1123
      %v1152 = vpop.xlane.xlu0 %1151
      %1153 = vadd.xlane.f32.xlu0 %v1124
      %v1154 = vpop.xlane.xlu0 %1153
      %1155 = vadd.xlane.f32.xlu0 %v1125
      %v1156 = vpop.xlane.xlu0 %1155
      %1157 = vadd.xlane.f32.xlu0 %v1126
      %v1158 = vpop.xlane.xlu0 %1157
      %1159 = vadd.xlane.f32.xlu0 %v1127
      %v1160 = vpop.xlane.xlu0 %1159
      %1161 = vadd.xlane.f32.xlu0 %v1128
      %v1162 = vpop.xlane.xlu0 %1161
      %1163 = vadd.xlane.f32.xlu0 %v1129
      %v1164 = vpop.xlane.xlu0 %1163
      %1165 = vadd.xlane.f32.xlu0 %v1130
      %v1166 = vpop.xlane.xlu0 %1165
      %1167 = vadd.xlane.f32.xlu0 %v1131
      %v1168 = vpop.xlane.xlu0 %1167
      %1169 = vadd.xlane.f32.xlu0 %v1132
      %v1170 = vpop.xlane.xlu0 %1169
      %1171 = vadd.xlane.f32.xlu0 %v1133
      %v1172 = vpop.xlane.xlu0 %1171
      %1173 = vadd.xlane.f32.xlu0 %v1134
      %v1174 = vpop.xlane.xlu0 %1173
      %1175 = vadd.xlane.f32.xlu0 %v1135
      %v1176 = vpop.xlane.xlu0 %1175
      %1177 = vadd.xlane.f32.xlu0 %v1136
      %v1178 = vpop.xlane.xlu0 %1177
      %1179 = vadd.xlane.f32.xlu0 %v1137
      %v1180 = vpop.xlane.xlu0 %1179
      %1181 = vadd.xlane.f32.xlu0 %v1138
      %v1182 = vpop.xlane.xlu0 %1181
      %1183 = vadd.xlane.f32.xlu0 %v1139
      %v1184 = vpop.xlane.xlu0 %1183
      %1185 = vadd.xlane.f32.xlu0 %v1140
      %v1186 = vpop.xlane.xlu0 %1185
      %1187 = vadd.xlane.f32.xlu0 %v1141
      %v1188 = vpop.xlane.xlu0 %1187
      %1189 = vadd.xlane.f32.xlu0 %v1142
      %v1190 = vpop.xlane.xlu0 %1189
      %v1191 = vmul.f32 %v1144, 0.0625
      %v1192 = vmul.f32 %v1146, 0.0625
      %v1193 = vmul.f32 %v1148, 0.0625
      %v1194 = vmul.f32 %v1150, 0.0625
      %v1195 = vmul.f32 %v1152, 0.0625
      %v1196 = vmul.f32 %v1154, 0.0625
      %v1197 = vmul.f32 %v1156, 0.0625
      %v1198 = vmul.f32 %v1158, 0.0625
      %v1199 = vmul.f32 %v1160, 0.0625
      %v1200 = vmul.f32 %v1162, 0.0625
      %v1201 = vmul.f32 %v1164, 0.0625
      %v1202 = vmul.f32 %v1166, 0.0625
      %v1203 = vmul.f32 %v1168, 0.0625
      %v1204 = vmul.f32 %v1170, 0.0625
      %v1205 = vmul.f32 %v1172, 0.0625
      %v1206 = vmul.f32 %v1174, 0.0625
      %v1207 = vmul.f32 %v1176, 0.0625
      %v1208 = vmul.f32 %v1178, 0.0625
      %v1209 = vmul.f32 %v1180, 0.0625
      %v1210 = vmul.f32 %v1182, 0.0625
      %v1211 = vmul.f32 %v1184, 0.0625
      %v1212 = vmul.f32 %v1186, 0.0625
      %v1213 = vmul.f32 %v1188, 0.0625
      %v1214 = vmul.f32 %v1190, 0.0625
      %v1215 = vadd.f32 %v1191, 1e-05
      %v1216 = vadd.f32 %v1192, 1e-05
      %v1217 = vadd.f32 %v1193, 1e-05
      %v1218 = vadd.f32 %v1194, 1e-05
      %v1219 = vadd.f32 %v1195, 1e-05
      %v1220 = vadd.f32 %v1196, 1e-05
      %v1221 = vadd.f32 %v1197, 1e-05
      %v1222 = vadd.f32 %v1198, 1e-05
      %v1223 = vadd.f32 %v1199, 1e-05
      %v1224 = vadd.f32 %v1200, 1e-05
      %v1225 = vadd.f32 %v1201, 1e-05
      %v1226 = vadd.f32 %v1202, 1e-05
      %v1227 = vadd.f32 %v1203, 1e-05
      %v1228 = vadd.f32 %v1204, 1e-05
      %v1229 = vadd.f32 %v1205, 1e-05
      %v1230 = vadd.f32 %v1206, 1e-05
      %v1231 = vadd.f32 %v1207, 1e-05
      %v1232 = vadd.f32 %v1208, 1e-05
      %v1233 = vadd.f32 %v1209, 1e-05
      %v1234 = vadd.f32 %v1210, 1e-05
      %v1235 = vadd.f32 %v1211, 1e-05
      %v1236 = vadd.f32 %v1212, 1e-05
      %v1237 = vadd.f32 %v1213, 1e-05
      %v1238 = vadd.f32 %v1214, 1e-05
      %v1239 = vrsqrt.pop %v1215
      %v1240 = vrsqrt.pop %v1216
      %v1241 = vrsqrt.pop %v1217
      %v1242 = vrsqrt.pop %v1218
      %v1243 = vrsqrt.pop %v1219
      %v1244 = vrsqrt.pop %v1220
      %v1245 = vrsqrt.pop %v1221
      %v1246 = vrsqrt.pop %v1222
      %v1247 = vrsqrt.pop %v1223
      %v1248 = vrsqrt.pop %v1224
      %v1249 = vrsqrt.pop %v1225
      %v1250 = vrsqrt.pop %v1226
      %v1251 = vrsqrt.pop %v1227
      %v1252 = vrsqrt.pop %v1228
      %v1253 = vrsqrt.pop %v1229
      %v1254 = vrsqrt.pop %v1230
      %v1255 = vrsqrt.pop %v1231
      %v1256 = vrsqrt.pop %v1232
      %v1257 = vrsqrt.pop %v1233
      %v1258 = vrsqrt.pop %v1234
      %v1259 = vrsqrt.pop %v1235
      %v1260 = vrsqrt.pop %v1236
      %v1261 = vrsqrt.pop %v1237
      %v1262 = vrsqrt.pop %v1238
      %v1263 = vmul.f32 %v1095, %v1239
      %v1264 = vmul.f32 %v1096, %v1240
      %v1265 = vmul.f32 %v1097, %v1241
      %v1266 = vmul.f32 %v1098, %v1242
      %v1267 = vmul.f32 %v1099, %v1243
      %v1268 = vmul.f32 %v1100, %v1244
      %v1269 = vmul.f32 %v1101, %v1245
      %v1270 = vmul.f32 %v1102, %v1246
      %v1271 = vmul.f32 %v1103, %v1247
      %v1272 = vmul.f32 %v1104, %v1248
      %v1273 = vmul.f32 %v1105, %v1249
      %v1274 = vmul.f32 %v1106, %v1250
      %v1275 = vmul.f32 %v1107, %v1251
      %v1276 = vmul.f32 %v1108, %v1252
      %v1277 = vmul.f32 %v1109, %v1253
      %v1278 = vmul.f32 %v1110, %v1254
      %v1279 = vmul.f32 %v1111, %v1255
      %v1280 = vmul.f32 %v1112, %v1256
      %v1281 = vmul.f32 %v1113, %v1257
      %v1282 = vmul.f32 %v1114, %v1258
      %v1283 = vmul.f32 %v1115, %v1259
      %v1284 = vmul.f32 %v1116, %v1260
      %v1285 = vmul.f32 %v1117, %v1261
      %v1286 = vmul.f32 %v1118, %v1262
      %v1287 = vmax.f32 %v1263, 0.0
      %v1288 = vmax.f32 %v1264, 0.0
      %v1289 = vmax.f32 %v1265, 0.0
      %v1290 = vmax.f32 %v1266, 0.0
      %v1291 = vmax.f32 %v1267, 0.0
      %v1292 = vmax.f32 %v1268, 0.0
      %v1293 = vmax.f32 %v1269, 0.0
      %v1294 = vmax.f32 %v1270, 0.0
      %v1295 = vmax.f32 %v1271, 0.0
      %v1296 = vmax.f32 %v1272, 0.0
      %v1297 = vmax.f32 %v1273, 0.0
      %v1298 = vmax.f32 %v1274, 0.0
      %v1299 = vmax.f32 %v1275, 0.0
      %v1300 = vmax.f32 %v1276, 0.0
      %v1301 = vmax.f32 %v1277, 0.0
      %v1302 = vmax.f32 %v1278, 0.0
      %v1303 = vmax.f32 %v1279, 0.0
      %v1304 = vmax.f32 %v1280, 0.0
      %v1305 = vmax.f32 %v1281, 0.0
      %v1306 = vmax.f32 %v1282, 0.0
      %v1307 = vmax.f32 %v1283, 0.0
      %v1308 = vmax.f32 %v1284, 0.0
      %v1309 = vmax.f32 %v1285, 0.0
      %v1310 = vmax.f32 %v1286, 0.0
      %v1311 = vpack.c.bf16 %v1288, %v1287
      %v1312 = vpack.c.bf16 %v1290, %v1289
      %v1313 = vpack.c.bf16 %v1292, %v1291
      %v1314 = vpack.c.bf16 %v1294, %v1293
      %v1315 = vpack.c.bf16 %v1296, %v1295
      %v1316 = vpack.c.bf16 %v1298, %v1297
      %v1317 = vpack.c.bf16 %v1300, %v1299
      %v1318 = vpack.c.bf16 %v1302, %v1301
      %v1319 = vpack.c.bf16 %v1304, %v1303
      %v1320 = vpack.c.bf16 %v1306, %v1305
      %v1321 = vpack.c.bf16 %v1308, %v1307
      %v1322 = vpack.c.bf16 %v1310, %v1309
      %v1335 = vunpack.c.l.b16 %v1311
      %v1336 = vunpack.c.h.b16 %v1311
      %v1337 = vunpack.c.l.b16 %v1312
      %v1338 = vunpack.c.h.b16 %v1312
      %v1339 = vunpack.c.l.b16 %v1313
      %v1340 = vunpack.c.h.b16 %v1313
      %v1341 = vunpack.c.l.b16 %v1314
      %v1342 = vunpack.c.h.b16 %v1314
      %v1343 = vunpack.c.l.b16 %v1315
      %v1344 = vunpack.c.h.b16 %v1315
      %v1345 = vunpack.c.l.b16 %v1316
      %v1346 = vunpack.c.h.b16 %v1316
      %v1347 = vunpack.c.l.b16 %v1317
      %v1348 = vunpack.c.h.b16 %v1317
      %v1349 = vunpack.c.l.b16 %v1318
      %v1350 = vunpack.c.h.b16 %v1318
      %v1351 = vunpack.c.l.b16 %v1319
      %v1352 = vunpack.c.h.b16 %v1319
      %v1353 = vunpack.c.l.b16 %v1320
      %v1354 = vunpack.c.h.b16 %v1320
      %v1355 = vunpack.c.l.b16 %v1321
      %v1356 = vunpack.c.h.b16 %v1321
      %v1357 = vunpack.c.l.b16 %v1322
      %v1358 = vunpack.c.h.b16 %v1322
      %v1359 = vpack.c.b16 %v1335, %v1335
      %v1360 = vpack.c.b16 %v1336, %v1336
      %v1361 = vpack.c.b16 %v1337, %v1337
      %v1362 = vpack.c.b16 %v1338, %v1338
      %v1363 = vpack.c.b16 %v1339, %v1339
      %v1364 = vpack.c.b16 %v1340, %v1340
      %v1365 = vpack.c.b16 %v1341, %v1341
      %v1366 = vpack.c.b16 %v1342, %v1342
      %v1367 = vpack.c.b16 %v1343, %v1343
      %v1368 = vpack.c.b16 %v1344, %v1344
      %v1369 = vpack.c.b16 %v1345, %v1345
      %v1370 = vpack.c.b16 %v1346, %v1346
      %v1371 = vpack.c.b16 %v1347, %v1347
      %v1372 = vpack.c.b16 %v1348, %v1348
      %v1373 = vpack.c.b16 %v1349, %v1349
      %v1374 = vpack.c.b16 %v1350, %v1350
      %v1375 = vpack.c.b16 %v1351, %v1351
      %v1376 = vpack.c.b16 %v1352, %v1352
      %v1377 = vpack.c.b16 %v1353, %v1353
      %v1378 = vpack.c.b16 %v1354, %v1354
      %v1379 = vpack.c.b16 %v1355, %v1355
      %v1380 = vpack.c.b16 %v1356, %v1356
      %v1381 = vpack.c.b16 %v1357, %v1357
      %v1382 = vpack.c.b16 %v1358, %v1358
      %1407 = vst [vmem:[%s192] sm:$0xf] %v1359
      %1408 = vst [vmem:[%s192 + $0x4] sm:$0xf] %v1360
      %1409 = vst [vmem:[%s192 + $0x8] sm:$0xf] %v1361
      %1410 = vst [vmem:[%s192 + $0xc] sm:$0xf] %v1362
      %1411 = vst [vmem:[%s192 + $0x10] sm:$0xf] %v1363
      %1412 = vst [vmem:[%s192 + $0x14] sm:$0xf] %v1364
      %1413 = vst [vmem:[%s192 + $0x18] sm:$0xf] %v1365
      %1414 = vst [vmem:[%s192 + $0x1c] sm:$0xf] %v1366
      %1415 = vst [vmem:[%s192 + $0x20] sm:$0xf] %v1367
      %1416 = vst [vmem:[%s192 + $0x24] sm:$0xf] %v1368
      %1417 = vst [vmem:[%s192 + $0x28] sm:$0xf] %v1369
      %1418 = vst [vmem:[%s192 + $0x2c] sm:$0xf] %v1370
      %1419 = vst [vmem:[%s192 + $0x30] sm:$0xf] %v1371
      %1420 = vst [vmem:[%s192 + $0x34] sm:$0xf] %v1372
      %1421 = vst [vmem:[%s192 + $0x38] sm:$0xf] %v1373
      %1422 = vst [vmem:[%s192 + $0x3c] sm:$0xf] %v1374
      %1423 = vst [vmem:[%s192 + $0x40] sm:$0xf] %v1375
      %1424 = vst [vmem:[%s192 + $0x44] sm:$0xf] %v1376
      %1425 = vst [vmem:[%s192 + $0x48] sm:$0xf] %v1377
      %1426 = vst [vmem:[%s192 + $0x4c] sm:$0xf] %v1378
      %1427 = vst [vmem:[%s192 + $0x50] sm:$0xf] %v1379
      %1428 = vst [vmem:[%s192 + $0x54] sm:$0xf] %v1380
      %1429 = vst [vmem:[%s192 + $0x58] sm:$0xf] %v1381
      %1430 = vst [vmem:[%s192 + $0x5c] sm:$0xf] %v1382
      %s1431 = smul.u32 24, %s19
      %p1432 = scmp.lt.s32.totalorder %s18, 1
      %s1433 = scalar_select %p1432, %s18, 1
      %p1434 = scmp.lt.s32.totalorder %s1431, 23
      %s1435 = scalar_select %p1434, %s1431, 23
      %s1436 = smul.addr %s1433, 24
      %s1437 = sadd.s32 %s1435, %s1436
      %s1438 = smul.addr %s1437, 4
      %s1439 = scalar_lea.vmem %s3, %s1438
      // Predicated region
      $region33: #{gddc_encoder_forward.11} parent=31 // pred_check
        %p1440 = pneg %p114
      $region34: #{gddc_encoder_forward.11} parent=31 // pred_check_branch
        %1442 = sbr.rel (%p1440) target = $region36
      $region35: #{gddc_encoder_forward.11} parent=31 // pred_region
        %s1443 = smul.u32 24, %s19
      $region36: #{gddc_encoder_forward.11} parent=31 // pred_fallthru
        _
    $region32: #{gddc_encoder_forward.11} parent=5 // pred_fallthru
      _
    %p1444 = scmp.le.s32.totalorder 2, %s9
    // Predicated region
    $region37: #{gddc_encoder_forward.11} parent=5 // pred_check
      %p1445 = pneg %p1444
    $region38: #{gddc_encoder_forward.11} parent=5 // pred_check_branch
      %1447 = sbr.rel (%p1445) target = $region40
    $region39: #{gddc_encoder_forward.11} parent=5 // pred_region
      %s1448 = ssub.s32 %s9, 2
      // Predicated region
      $region41: #{gddc_encoder_forward.11} parent=39 // pred_check
        %p1449 = pneg %p120
      $region42: #{gddc_encoder_forward.11} parent=39 // pred_check_branch
        %1451 = sbr.rel (%p1449) target = $region44
      $region43: #{gddc_encoder_forward.11} parent=39 // pred_region
        %s1452 = smul.u32 24, %s21
        %p1453 = scmp.lt.s32.totalorder %s20, 1
        %s1454 = scalar_select %p1453, %s20, 1
        %p1455 = scmp.lt.s32.totalorder %s1452, 23
        %s1456 = scalar_select %p1455, %s1452, 23
        %s1457 = smul.addr %s1454, 24
        %s1458 = sadd.s32 %s1456, %s1457
        %s1459 = smul.addr %s1458, 4
        %s1460 = scalar_lea.vmem %s3, %s1459
      $region44: #{gddc_encoder_forward.11} parent=39 // pred_fallthru
        _
    $region40: #{gddc_encoder_forward.11} parent=5 // pred_fallthru
      _
  $region6: #{gddc_encoder_forward.11} parent=0 // loop_footer
    %s13 = sadd.s32 1, %s9
  $region7: #{gddc_encoder_forward.11} parent=0 // loop_footer_branch
    %8 = sbr.rel target = $region3
  $region8: #{gddc_encoder_forward.11} parent=0 // loop_exit
    _

// kernel: gddc_encoder_forward.12
$region0: #{gddc_encoder_forward.12}
  #allocation0 [shape = 'u32[]', space=smem, size = 0x4, offset = 0x4, fixed_abs, tag = 'smem constant byte address 0x4 - core index']
  #allocation1 [shape = 'u32[144,128]{1,0:T(1,128)}', space=vmem, size = 0x12000, scoped, tag = 'internal scratch']
  %s0 = inlined_call_operand.vmem [shape: bf16[2,224,128], index: 0, kind: input, shape index: {}]
  %s1 = inlined_call_operand.vmem [shape: bf16[3,128,128], index: 1, kind: input, shape index: {}]
  %s2 = inlined_call_operand.vmem [shape: f32[1,128], index: 2, kind: input, shape index: {}]
  %s3 = inlined_call_operand.vmem [shape: bf16[2,64,128], index: 3, kind: output, shape index: {}]
  %s4 = sld [smem:[#allocation0]]
  $region45: #{gddc_encoder_forward.12} parent=0
    _
  %s6 = ssub.s32 1, %s4
  %s7 = scalar_select 0, %s6, %s4
  loop: start=0, step=1, limit=4
  $region2: #{gddc_encoder_forward.12} parent=0 // loop_pre_header
    _
  $region3: #{gddc_encoder_forward.12} parent=0 // loop_header
    %s9 = sphi 0, %s13
    %p10 = scmp.ge.s32.totalorder %s9, 4
    %s16 = sphi 0, %s28
    %s17 = sphi 0, %s24
    %s18 = sphi 0, %s16
    %s19 = sphi 0, %s17
    %s20 = sphi 0, %s18
    %s21 = sphi 0, %s19
    %s31 = sphi 0, %s33
    %s34 = sphi 0, %s31
    %s35 = sphi 0, %s34
    %s51 = sphi 0, %s35
    %s55 = sphi 0, %s55
    %s57 = sphi 0, %s55
    %s58 = sphi 0, %s57
    %s72 = sphi 0, %s58
    %s76 = sphi 0, %s76
    %s78 = sphi 0, %s76
    %s79 = sphi 0, %s78
    %s93 = sphi 0, %s79
    %s101 = sphi 0, %s103
    %s104 = sphi 0, %s101
    %s105 = sphi 0, %s104
    %s121 = sphi 0, %s105
  $region4: #{gddc_encoder_forward.12} parent=0 // loop_header_branch
    %12 = sbr.rel (%p10) target = $region8
  $region5: #{gddc_encoder_forward.12} parent=0 // loop_body
    %s14 = ssub.s32 %s9, 1
    %s15 = ssub.s32 %s9, 2
    %s22 = sadd.s32 1, %s17
    %p23 = scmp.ge.s32.totalorder %s22, 1
    %s24 = scalar_select %p23, 0, %s22
    %s25 = sadd.s32 1, %s16
    %s26 = scalar_select %p23, %s25, %s16
    %p27 = scmp.ge.s32.totalorder %s26, 2
    %s28 = scalar_select %p27, 0, %s26
    %s29 = ssub.s32 %s16, %s28
    %p30 = scmp.eq.s32.totalorder %s29, 0
    %s32 = sadd.s32 %s31, 1
    %s33 = scalar_select %p30, %s31, %s32
    %p36 = pneg %p30
    %p37 = scmp.eq.s32.totalorder %s9, 1
    %p38 = por %p36, %p37
    %p39 = scmp.ne.s32.totalorder %s31, %s34
    %p40 = scmp.eq.s32.totalorder %s9, 0
    %p41 = por %p39, %p40
    %p42 = scmp.ne.s32.totalorder %s31, %s34
    %p43 = scmp.eq.s32.totalorder %s14, 1
    %p44 = por %p42, %p43
    %p45 = scmp.ne.s32.totalorder %s34, %s35
    %p46 = scmp.eq.s32.totalorder %s14, 0
    %p47 = por %p45, %p46
    %p48 = scmp.ne.s32.totalorder %s34, %s35
    %p49 = scmp.eq.s32.totalorder %s15, 1
    %p50 = por %p48, %p49
    %p52 = scmp.ne.s32.totalorder %s35, %s51
    %p53 = scmp.eq.s32.totalorder %s15, 0
    %p54 = por %p52, %p53
    %s56 = sadd.s32 %s55, 1
    %p59 = scmp.eq.s32.totalorder %s9, 1
    %p60 = scmp.ne.s32.totalorder %s55, %s57
    %p61 = scmp.eq.s32.totalorder %s9, 0
    %p62 = por %p60, %p61
    %p63 = scmp.ne.s32.totalorder %s55, %s57
    %p64 = scmp.eq.s32.totalorder %s14, 1
    %p65 = por %p63, %p64
    %p66 = scmp.ne.s32.totalorder %s57, %s58
    %p67 = scmp.eq.s32.totalorder %s14, 0
    %p68 = por %p66, %p67
    %p69 = scmp.ne.s32.totalorder %s57, %s58
    %p70 = scmp.eq.s32.totalorder %s15, 1
    %p71 = por %p69, %p70
    %p73 = scmp.ne.s32.totalorder %s58, %s72
    %p74 = scmp.eq.s32.totalorder %s15, 0
    %p75 = por %p73, %p74
    %s77 = sadd.s32 %s76, 1
    %p80 = scmp.eq.s32.totalorder %s9, 1
    %p81 = scmp.ne.s32.totalorder %s76, %s78
    %p82 = scmp.eq.s32.totalorder %s9, 0
    %p83 = por %p81, %p82
    %p84 = scmp.ne.s32.totalorder %s76, %s78
    %p85 = scmp.eq.s32.totalorder %s14, 1
    %p86 = por %p84, %p85
    %p87 = scmp.ne.s32.totalorder %s78, %s79
    %p88 = scmp.eq.s32.totalorder %s14, 0
    %p89 = por %p87, %p88
    %p90 = scmp.ne.s32.totalorder %s78, %s79
    %p91 = scmp.eq.s32.totalorder %s15, 1
    %p92 = por %p90, %p91
    %p94 = scmp.ne.s32.totalorder %s79, %s93
    %p95 = scmp.eq.s32.totalorder %s15, 0
    %p96 = por %p94, %p95
    %s97 = ssub.s32 %s16, %s28
    %s98 = ssub.s32 %s17, %s24
    %s99 = sor.u32 %s97, %s98
    %p100 = scmp.eq.s32.totalorder %s99, 0
    %s102 = sadd.s32 %s101, 1
    %s103 = scalar_select %p100, %s101, %s102
    %p106 = pneg %p100
    %p107 = scmp.eq.s32.totalorder %s9, 1
    %p108 = por %p106, %p107
    %p109 = scmp.ne.s32.totalorder %s101, %s104
    %p110 = scmp.eq.s32.totalorder %s9, 0
    %p111 = por %p109, %p110
    %p112 = scmp.ne.s32.totalorder %s101, %s104
    %p113 = scmp.eq.s32.totalorder %s14, 1
    %p114 = por %p112, %p113
    %p115 = scmp.ne.s32.totalorder %s104, %s105
    %p116 = scmp.eq.s32.totalorder %s14, 0
    %p117 = por %p115, %p116
    %p118 = scmp.ne.s32.totalorder %s104, %s105
    %p119 = scmp.eq.s32.totalorder %s15, 1
    %p120 = por %p118, %p119
    %p122 = scmp.ne.s32.totalorder %s105, %s121
    %p123 = scmp.eq.s32.totalorder %s15, 0
    %p124 = por %p122, %p123
    %p125 = scmp.le.s32.totalorder 1, %s9
    %p126 = scmp.lt.s32.totalorder %s9, 3
    %p127 = pnand %p125, %p126
    %p128 = pneg %p127
    // Predicated region
    $region9: #{gddc_encoder_forward.12} parent=5 // pred_check
      _
    $region10: #{gddc_encoder_forward.12} parent=5 // pred_check_branch
      %130 = sbr.rel (%p127) target = $region12
    $region11: #{gddc_encoder_forward.12} parent=5 // pred_region
      %s131 = ssub.s32 %s9, 1
      // Predicated region
      $region13: #{gddc_encoder_forward.12} parent=11 // pred_check
        %p132 = pneg %p68
      $region14: #{gddc_encoder_forward.12} parent=11 // pred_check_branch
        %134 = sbr.rel (%p132) target = $region16
      $region15: #{gddc_encoder_forward.12} parent=11 // pred_region
        _
      $region16: #{gddc_encoder_forward.12} parent=11 // pred_fallthru
        _
      // Predicated region
      $region17: #{gddc_encoder_forward.12} parent=11 // pred_check
        %p135 = pneg %p89
      $region18: #{gddc_encoder_forward.12} parent=11 // pred_check_branch
        %137 = sbr.rel (%p135) target = $region20
      $region19: #{gddc_encoder_forward.12} parent=11 // pred_region
        _
      $region20: #{gddc_encoder_forward.12} parent=11 // pred_fallthru
        _
    $region12: #{gddc_encoder_forward.12} parent=5 // pred_fallthru
      _
    %p138 = scmp.lt.s32.totalorder %s9, 2
    // Predicated region
    $region21: #{gddc_encoder_forward.12} parent=5 // pred_check
      %p139 = pneg %p138
    $region22: #{gddc_encoder_forward.12} parent=5 // pred_check_branch
      %141 = sbr.rel (%p139) target = $region24
    $region23: #{gddc_encoder_forward.12} parent=5 // pred_region
      // Predicated region
      $region25: #{gddc_encoder_forward.12} parent=23 // pred_check
        %p142 = pneg %p41
      $region26: #{gddc_encoder_forward.12} parent=23 // pred_check_branch
        %144 = sbr.rel (%p142) target = $region28
      $region27: #{gddc_encoder_forward.12} parent=23 // pred_region
        %p145 = scmp.lt.s32.totalorder %s16, 1
        %s146 = scalar_select %p145, %s16, 1
        %s147 = smul.addr %s146, 28
        %s148 = smul.addr %s147, 4
        %s149 = scalar_lea.vmem %s0, %s148
      $region28: #{gddc_encoder_forward.12} parent=23 // pred_fallthru
        _
    $region24: #{gddc_encoder_forward.12} parent=5 // pred_fallthru
      _
    %p150 = scmp.le.s32.totalorder 1, %s9
    %p151 = scmp.lt.s32.totalorder %s9, 3
    %p152 = pnand %p150, %p151
    %p153 = pneg %p152
    // Predicated region
    $region29: #{gddc_encoder_forward.12} parent=5 // pred_check
      _
    $region30: #{gddc_encoder_forward.12} parent=5 // pred_check_branch
      %155 = sbr.rel (%p152) target = $region32
    $region31: #{gddc_encoder_forward.12} parent=5 // pred_region
      %s156 = ssub.s32 %s9, 1
      %p157 = scmp.lt.s32.totalorder %s18, 1
      %s158 = scalar_select %p157, %s18, 1
      %s159 = smul.addr %s158, 28
      %s160 = smul.addr %s159, 4
      %s161 = scalar_lea.vmem %s0, %s160
      %p162 = pneg %p47
      %p163 = pneg %p44
      %p164 = pneg %p68
      %p165 = pneg %p65
      %p166 = pneg %p89
      %p167 = pneg %p86
      %p168 = pneg %p117
      %p169 = pneg %p114
      %s170 = smul.u32 8, %s19
      %p171 = scmp.lt.s32.totalorder %s18, 1
      %s172 = scalar_select %p171, %s18, 1
      %p173 = scmp.lt.s32.totalorder %s170, 7
      %s174 = scalar_select %p173, %s170, 7
      %s175 = smul.addr %s172, 8
      %s176 = sadd.s32 %s174, %s175
      %s177 = smul.addr %s176, 4
      %s178 = scalar_lea.vmem %s3, %s177
      %p179 = scmp.lt.s32.totalorder %s18, 1
      %s180 = scalar_select %p179, %s18, 1
      %s181 = smul.addr %s180, 28
      %s182 = smul.addr %s181, 4
      %s183 = scalar_lea.vmem %s0, %s182
      %s184 = smul.u32 8, %s19
      %p185 = scmp.lt.s32.totalorder %s18, 1
      %s186 = scalar_select %p185, %s18, 1
      %p187 = scmp.lt.s32.totalorder %s184, 7
      %s188 = scalar_select %p187, %s184, 7
      %s189 = smul.addr %s186, 8
      %s190 = sadd.s32 %s188, %s189
      %s191 = smul.addr %s190, 4
      %s192 = scalar_lea.vmem %s3, %s191
      %s193 = smul.u32 8, %s19
      %v195 = vld [vmem:[%s183] sm:$0xf]
      %v196 = vld [vmem:[%s183 + $0x4] sm:$0xf]
      %v197 = vld [vmem:[%s183 + $0x8] sm:$0xf]
      %v198 = vld [vmem:[%s183 + $0xc] sm:$0xf]
      %v199 = vld [vmem:[%s183 + $0x10] sm:$0xf]
      %v200 = vld [vmem:[%s183 + $0x14] sm:$0xf]
      %v201 = vld [vmem:[%s183 + $0x18] sm:$0xf]
      %v202 = vld [vmem:[%s183 + $0x1c] sm:$0xf]
      %v203 = vld [vmem:[%s1] sm:$0xf]
      %v204 = vld [vmem:[%s1 + $0x4] sm:$0xf]
      %v205 = vld [vmem:[%s1 + $0x8] sm:$0xf]
      %v206 = vld [vmem:[%s1 + $0xc] sm:$0xf]
      %v207 = vld [vmem:[%s1 + $0x10] sm:$0xf]
      %v208 = vld [vmem:[%s1 + $0x14] sm:$0xf]
      %v209 = vld [vmem:[%s1 + $0x18] sm:$0xf]
      %v210 = vld [vmem:[%s1 + $0x1c] sm:$0xf]
      %v211 = vld [vmem:[%s1 + $0x20] sm:$0xf]
      %v212 = vld [vmem:[%s1 + $0x24] sm:$0xf]
      %v213 = vld [vmem:[%s1 + $0x28] sm:$0xf]
      %v214 = vld [vmem:[%s1 + $0x2c] sm:$0xf]
      %v215 = vld [vmem:[%s1 + $0x30] sm:$0xf]
      %v216 = vld [vmem:[%s1 + $0x34] sm:$0xf]
      %v217 = vld [vmem:[%s1 + $0x38] sm:$0xf]
      %v218 = vld [vmem:[%s1 + $0x3c] sm:$0xf]
      %v219 = vld [vmem:[%s183 + $0x38] sm:$0xf]
      %v220 = vld [vmem:[%s183 + $0x3c] sm:$0xf]
      %v221 = vld [vmem:[%s183 + $0x40] sm:$0xf]
      %v222 = vld [vmem:[%s183 + $0x44] sm:$0xf]
      %v223 = vld [vmem:[%s183 + $0x48] sm:$0xf]
      %v224 = vld [vmem:[%s183 + $0x4c] sm:$0xf]
      %v225 = vld [vmem:[%s183 + $0x50] sm:$0xf]
      %v226 = vld [vmem:[%s183 + $0x54] sm:$0xf]
      %s227 = scalar_lea.vmem %s1, 64
      %v228 = vld [vmem:[%s227] sm:$0xf]
      %v229 = vld [vmem:[%s227 + $0x4] sm:$0xf]
      %v230 = vld [vmem:[%s227 + $0x8] sm:$0xf]
      %v231 = vld [vmem:[%s227 + $0xc] sm:$0xf]
      %v232 = vld [vmem:[%s227 + $0x10] sm:$0xf]
      %v233 = vld [vmem:[%s227 + $0x14] sm:$0xf]
      %v234 = vld [vmem:[%s227 + $0x18] sm:$0xf]
      %v235 = vld [vmem:[%s227 + $0x1c] sm:$0xf]
      %v236 = vld [vmem:[%s227 + $0x20] sm:$0xf]
      %v237 = vld [vmem:[%s227 + $0x24] sm:$0xf]
      %v238 = vld [vmem:[%s227 + $0x28] sm:$0xf]
      %v239 = vld [vmem:[%s227 + $0x2c] sm:$0xf]
      %v240 = vld [vmem:[%s227 + $0x30] sm:$0xf]
      %v241 = vld [vmem:[%s227 + $0x34] sm:$0xf]
      %v242 = vld [vmem:[%s227 + $0x38] sm:$0xf]
      %v243 = vld [vmem:[%s227 + $0x3c] sm:$0xf]
      %v252 = vunpack.c.l.b16 %v219
      %v253 = vunpack.c.l.b16 %v220
      %v254 = vunpack.c.l.b16 %v221
      %v255 = vunpack.c.l.b16 %v222
      %v256 = vunpack.c.l.b16 %v223
      %v257 = vunpack.c.l.b16 %v224
      %v258 = vunpack.c.l.b16 %v225
      %v259 = vunpack.c.l.b16 %v226
      %v260 = vpack.c.b16 %v253, %v252
      %v261 = vpack.c.b16 %v255, %v254
      %v262 = vpack.c.b16 %v257, %v256
      %v263 = vpack.c.b16 %v259, %v258
      %v284 = vunpack.c.l.b16 %v228
      %v285 = vunpack.c.l.b16 %v229
      %v286 = vunpack.c.l.b16 %v230
      %v287 = vunpack.c.l.b16 %v231
      %v288 = vunpack.c.l.b16 %v232
      %v289 = vunpack.c.l.b16 %v233
      %v290 = vunpack.c.l.b16 %v234
      %v291 = vunpack.c.l.b16 %v235
      %v292 = vunpack.c.l.b16 %v236
      %v293 = vunpack.c.l.b16 %v237
      %v294 = vunpack.c.l.b16 %v238
      %v295 = vunpack.c.l.b16 %v239
      %v296 = vunpack.c.l.b16 %v240
      %v297 = vunpack.c.l.b16 %v241
      %v298 = vunpack.c.l.b16 %v242
      %v299 = vunpack.c.l.b16 %v243
      %v300 = vpack.c.b16 %v285, %v284
      %v301 = vpack.c.b16 %v287, %v286
      %v302 = vpack.c.b16 %v289, %v288
      %v303 = vpack.c.b16 %v291, %v290
      %v304 = vpack.c.b16 %v293, %v292
      %v305 = vpack.c.b16 %v295, %v294
      %v306 = vpack.c.b16 %v297, %v296
      %v307 = vpack.c.b16 %v299, %v298
      %316 = vmatprep.subr.bf16.mxu0 0
      %317 = vmatpush1.bf16.msra.mxu0 %v300
      %318 = vmatprep.subr.bf16.mxu0 0
      %319 = vmatpush1.bf16.msra.mxu0 %v301
      %320 = vmatprep.subr.bf16.mxu0 0
      %321 = vmatpush1.bf16.msra.mxu0 %v302
      %322 = vmatprep.subr.bf16.mxu0 0
      %323 = vmatpush1.bf16.msra.mxu0 %v303
      %324 = vmatprep.subr.bf16.mxu0 0
      %325 = vmatpush1.bf16.msra.mxu0 %v304
      %326 = vmatprep.subr.bf16.mxu0 0
      %327 = vmatpush1.bf16.msra.mxu0 %v305
      %328 = vmatprep.subr.bf16.mxu0 0
      %329 = vmatpush1.bf16.msra.mxu0 %v306
      %330 = vmatprep.subr.bf16.mxu0 0
      %331 = vmatpush1.bf16.msra.mxu0 %v307
      %332 = vmatprep.subr.bf16.mxu0 0
      %333 = vmatpush1.bf16.msra.mxu0 0
      %334 = vmatprep.subr.bf16.mxu0 0
      %335 = vmatpush1.bf16.msra.mxu0 0
      %336 = vmatprep.subr.bf16.mxu0 0
      %337 = vmatpush1.bf16.msra.mxu0 0
      %338 = vmatprep.subr.bf16.mxu0 0
      %339 = vmatpush1.bf16.msra.mxu0 0
      %340 = vmatprep.subr.bf16.mxu0 0
      %341 = vmatpush1.bf16.msra.mxu0 0
      %342 = vmatprep.subr.bf16.mxu0 0
      %343 = vmatpush1.bf16.msra.mxu0 0
      %344 = vmatprep.subr.bf16.mxu0 0
      %345 = vmatpush1.bf16.msra.mxu0 0
      %346 = vmatprep.subr.bf16.mxu0 0
      %347 = vmatpush1.bf16.msra.mxu0 0
      %348 = vmatprep.mubr.bf16.mxu0 0
      %349 = vmatmul.mubr.bf16.gmra.mrb[0].mxu0 %v260
      %v350 = vpop.f32.mrb[0].mxu0
      %v351 = vadd.f32 0.0, %v350
      %v352 = vpop.f32.mrb[0].mxu0
      %v353 = vpop.f32.mrb[0].mxu0
      %v354 = vadd.f32 0.0, %v353
      %v355 = vpop.f32.mrb[0].mxu0
      %356 = vmatprep.mubr.bf16.mxu0 0
      %357 = vmatmul.mubr.bf16.gmra.mrb[0].mxu0 %v261
      %v358 = vpop.f32.mrb[0].mxu0
      %v359 = vadd.f32 0.0, %v358
      %v360 = vpop.f32.mrb[0].mxu0
      %v361 = vpop.f32.mrb[0].mxu0
      %v362 = vadd.f32 0.0, %v361
      %v363 = vpop.f32.mrb[0].mxu0
      %364 = vmatprep.mubr.bf16.mxu0 0
      %365 = vmatmul.mubr.bf16.gmra.mrb[0].mxu0 %v262
      %v366 = vpop.f32.mrb[0].mxu0
      %v367 = vadd.f32 0.0, %v366
      %v368 = vpop.f32.mrb[0].mxu0
      %v369 = vpop.f32.mrb[0].mxu0
      %v370 = vadd.f32 0.0, %v369
      %v371 = vpop.f32.mrb[0].mxu0
      %372 = vmatprep.mubr.bf16.mxu0 0
      %373 = vmatmul.mubr.bf16.gmra.mrb[0].mxu0 %v263
      %v374 = vpop.f32.mrb[0].mxu0
      %v375 = vadd.f32 0.0, %v374
      %v376 = vpop.f32.mrb[0].mxu0
      %v377 = vpop.f32.mrb[0].mxu0
      %v378 = vadd.f32 0.0, %v377
      %v379 = vpop.f32.mrb[0].mxu0
      %380 = vdwg.mxu0
      %v389 = vunpack.c.l.b16 %v195
      %v390 = vunpack.c.l.b16 %v196
      %v391 = vunpack.c.l.b16 %v197
      %v392 = vunpack.c.l.b16 %v198
      %v393 = vunpack.c.l.b16 %v199
      %v394 = vunpack.c.l.b16 %v200
      %v395 = vunpack.c.l.b16 %v201
      %v396 = vunpack.c.l.b16 %v202
      %v397 = vpack.c.b16 %v390, %v389
      %v398 = vpack.c.b16 %v392, %v391
      %v399 = vpack.c.b16 %v394, %v393
      %v400 = vpack.c.b16 %v396, %v395
      %v421 = vunpack.c.l.b16 %v203
      %v422 = vunpack.c.l.b16 %v204
      %v423 = vunpack.c.l.b16 %v205
      %v424 = vunpack.c.l.b16 %v206
      %v425 = vunpack.c.l.b16 %v207
      %v426 = vunpack.c.l.b16 %v208
      %v427 = vunpack.c.l.b16 %v209
      %v428 = vunpack.c.l.b16 %v210
      %v429 = vunpack.c.l.b16 %v211
      %v430 = vunpack.c.l.b16 %v212
      %v431 = vunpack.c.l.b16 %v213
      %v432 = vunpack.c.l.b16 %v214
      %v433 = vunpack.c.l.b16 %v215
      %v434 = vunpack.c.l.b16 %v216
      %v435 = vunpack.c.l.b16 %v217
      %v436 = vunpack.c.l.b16 %v218
      %v437 = vpack.c.b16 %v422, %v421
      %v438 = vpack.c.b16 %v424, %v423
      %v439 = vpack.c.b16 %v426, %v425
      %v440 = vpack.c.b16 %v428, %v427
      %v441 = vpack.c.b16 %v430, %v429
      %v442 = vpack.c.b16 %v432, %v431
      %v443 = vpack.c.b16 %v434, %v433
      %v444 = vpack.c.b16 %v436, %v435
      %453 = vmatprep.subr.bf16.mxu0 0
      %454 = vmatpush1.bf16.msra.mxu0 %v437
      %455 = vmatprep.subr.bf16.mxu0 0
      %456 = vmatpush1.bf16.msra.mxu0 %v438
      %457 = vmatprep.subr.bf16.mxu0 0
      %458 = vmatpush1.bf16.msra.mxu0 %v439
      %459 = vmatprep.subr.bf16.mxu0 0
      %460 = vmatpush1.bf16.msra.mxu0 %v440
      %461 = vmatprep.subr.bf16.mxu0 0
      %462 = vmatpush1.bf16.msra.mxu0 %v441
      %463 = vmatprep.subr.bf16.mxu0 0
      %464 = vmatpush1.bf16.msra.mxu0 %v442
      %465 = vmatprep.subr.bf16.mxu0 0
      %466 = vmatpush1.bf16.msra.mxu0 %v443
      %467 = vmatprep.subr.bf16.mxu0 0
      %468 = vmatpush1.bf16.msra.mxu0 %v444
      %469 = vmatprep.subr.bf16.mxu0 0
      %470 = vmatpush1.bf16.msra.mxu0 0
      %471 = vmatprep.subr.bf16.mxu0 0
      %472 = vmatpush1.bf16.msra.mxu0 0
      %473 = vmatprep.subr.bf16.mxu0 0
      %474 = vmatpush1.bf16.msra.mxu0 0
      %475 = vmatprep.subr.bf16.mxu0 0
      %476 = vmatpush1.bf16.msra.mxu0 0
      %477 = vmatprep.subr.bf16.mxu0 0
      %478 = vmatpush1.bf16.msra.mxu0 0
      %479 = vmatprep.subr.bf16.mxu0 0
      %480 = vmatpush1.bf16.msra.mxu0 0
      %481 = vmatprep.subr.bf16.mxu0 0
      %482 = vmatpush1.bf16.msra.mxu0 0
      %483 = vmatprep.subr.bf16.mxu0 0
      %484 = vmatpush1.bf16.msra.mxu0 0
      %485 = vmatprep.mubr.bf16.mxu0 0
      %486 = vmatmul.mubr.bf16.gmra.mrb[0].mxu0 %v397
      %v487 = vpop.f32.mrb[0].mxu0
      %v488 = vadd.f32 %v351, %v487
      %v489 = vpop.f32.mrb[0].mxu0
      %v490 = vpop.f32.mrb[0].mxu0
      %v491 = vadd.f32 %v354, %v490
      %v492 = vpop.f32.mrb[0].mxu0
      %493 = vmatprep.mubr.bf16.mxu0 0
      %494 = vmatmul.mubr.bf16.gmra.mrb[0].mxu0 %v398
      %v495 = vpop.f32.mrb[0].mxu0
      %v496 = vadd.f32 %v359, %v495
      %v497 = vpop.f32.mrb[0].mxu0
      %v498 = vpop.f32.mrb[0].mxu0
      %v499 = vadd.f32 %v362, %v498
      %v500 = vpop.f32.mrb[0].mxu0
      %501 = vmatprep.mubr.bf16.mxu0 0
      %502 = vmatmul.mubr.bf16.gmra.mrb[0].mxu0 %v399
      %v503 = vpop.f32.mrb[0].mxu0
      %v504 = vadd.f32 %v367, %v503
      %v505 = vpop.f32.mrb[0].mxu0
      %v506 = vpop.f32.mrb[0].mxu0
      %v507 = vadd.f32 %v370, %v506
      %v508 = vpop.f32.mrb[0].mxu0
      %509 = vmatprep.mubr.bf16.mxu0 0
      %510 = vmatmul.mubr.bf16.gmra.mrb[0].mxu0 %v400
      %v511 = vpop.f32.mrb[0].mxu0
      %v512 = vadd.f32 %v375, %v511
      %v513 = vpop.f32.mrb[0].mxu0
      %v514 = vpop.f32.mrb[0].mxu0
      %v515 = vadd.f32 %v378, %v514
      %v516 = vpop.f32.mrb[0].mxu0
      %517 = vdwg.mxu0
      %v518 = vld [vmem:[%s183 + $0x8] sm:$0xf]
      %v519 = vld [vmem:[%s183 + $0xc] sm:$0xf]
      %v520 = vld [vmem:[%s183 + $0x10] sm:$0xf]
      %v521 = vld [vmem:[%s183 + $0x14] sm:$0xf]
      %v522 = vld [vmem:[%s183 + $0x18] sm:$0xf]
      %v523 = vld [vmem:[%s183 + $0x1c] sm:$0xf]
      %v524 = vld [vmem:[%s183 + $0x20] sm:$0xf]
      %v525 = vld [vmem:[%s183 + $0x24] sm:$0xf]
      %s526 = scalar_lea.vmem %s1, 128
      %v527 = vld [vmem:[%s526] sm:$0xf]
      %v528 = vld [vmem:[%s526 + $0x4] sm:$0xf]
      %v529 = vld [vmem:[%s526 + $0x8] sm:$0xf]
      %v530 = vld [vmem:[%s526 + $0xc] sm:$0xf]
      %v531 = vld [vmem:[%s526 + $0x10] sm:$0xf]
      %v532 = vld [vmem:[%s526 + $0x14] sm:$0xf]
      %v533 = vld [vmem:[%s526 + $0x18] sm:$0xf]
      %v534 = vld [vmem:[%s526 + $0x1c] sm:$0xf]
      %v535 = vld [vmem:[%s526 + $0x20] sm:$0xf]
      %v536 = vld [vmem:[%s526 + $0x24] sm:$0xf]
      %v537 = vld [vmem:[%s526 + $0x28] sm:$0xf]
      %v538 = vld [vmem:[%s526 + $0x2c] sm:$0xf]
      %v539 = vld [vmem:[%s526 + $0x30] sm:$0xf]
      %v540 = vld [vmem:[%s526 + $0x34] sm:$0xf]
      %v541 = vld [vmem:[%s526 + $0x38] sm:$0xf]
      %v542 = vld [vmem:[%s526 + $0x3c] sm:$0xf]
      %v551 = vunpack.c.l.b16 %v518
      %v552 = vunpack.c.l.b16 %v519
      %v553 = vunpack.c.l.b16 %v520
      %v554 = vunpack.c.l.b16 %v521
      %v555 = vunpack.c.l.b16 %v522
      %v556 = vunpack.c.l.b16 %v523
      %v557 = vunpack.c.l.b16 %v524
      %v558 = vunpack.c.l.b16 %v525
      %v559 = vpack.c.b16 %v552, %v551
      %v560 = vpack.c.b16 %v554, %v553
      %v561 = vpack.c.b16 %v556, %v555
      %v562 = vpack.c.b16 %v558, %v557
      %v583 = vunpack.c.l.b16 %v527
      %v584 = vunpack.c.l.b16 %v528
      %v585 = vunpack.c.l.b16 %v529
      %v586 = vunpack.c.l.b16 %v530
      %v587 = vunpack.c.l.b16 %v531
      %v588 = vunpack.c.l.b16 %v532
      %v589 = vunpack.c.l.b16 %v533
      %v590 = vunpack.c.l.b16 %v534
      %v591 = vunpack.c.l.b16 %v535
      %v592 = vunpack.c.l.b16 %v536
      %v593 = vunpack.c.l.b16 %v537
      %v594 = vunpack.c.l.b16 %v538
      %v595 = vunpack.c.l.b16 %v539
      %v596 = vunpack.c.l.b16 %v540
      %v597 = vunpack.c.l.b16 %v541
      %v598 = vunpack.c.l.b16 %v542
      %v599 = vpack.c.b16 %v584, %v583
      %v600 = vpack.c.b16 %v586, %v585
      %v601 = vpack.c.b16 %v588, %v587
      %v602 = vpack.c.b16 %v590, %v589
      %v603 = vpack.c.b16 %v592, %v591
      %v604 = vpack.c.b16 %v594, %v593
      %v605 = vpack.c.b16 %v596, %v595
      %v606 = vpack.c.b16 %v598, %v597
      %615 = vmatprep.subr.bf16.mxu0 0
      %616 = vmatpush1.bf16.msra.mxu0 %v599
      %617 = vmatprep.subr.bf16.mxu0 0
      %618 = vmatpush1.bf16.msra.mxu0 %v600
      %619 = vmatprep.subr.bf16.mxu0 0
      %620 = vmatpush1.bf16.msra.mxu0 %v601
      %621 = vmatprep.subr.bf16.mxu0 0
      %622 = vmatpush1.bf16.msra.mxu0 %v602
      %623 = vmatprep.subr.bf16.mxu0 0
      %624 = vmatpush1.bf16.msra.mxu0 %v603
      %625 = vmatprep.subr.bf16.mxu0 0
      %626 = vmatpush1.bf16.msra.mxu0 %v604
      %627 = vmatprep.subr.bf16.mxu0 0
      %628 = vmatpush1.bf16.msra.mxu0 %v605
      %629 = vmatprep.subr.bf16.mxu0 0
      %630 = vmatpush1.bf16.msra.mxu0 %v606
      %631 = vmatprep.subr.bf16.mxu0 0
      %632 = vmatpush1.bf16.msra.mxu0 0
      %633 = vmatprep.subr.bf16.mxu0 0
      %634 = vmatpush1.bf16.msra.mxu0 0
      %635 = vmatprep.subr.bf16.mxu0 0
      %636 = vmatpush1.bf16.msra.mxu0 0
      %637 = vmatprep.subr.bf16.mxu0 0
      %638 = vmatpush1.bf16.msra.mxu0 0
      %639 = vmatprep.subr.bf16.mxu0 0
      %640 = vmatpush1.bf16.msra.mxu0 0
      %641 = vmatprep.subr.bf16.mxu0 0
      %642 = vmatpush1.bf16.msra.mxu0 0
      %643 = vmatprep.subr.bf16.mxu0 0
      %644 = vmatpush1.bf16.msra.mxu0 0
      %645 = vmatprep.subr.bf16.mxu0 0
      %646 = vmatpush1.bf16.msra.mxu0 0
      %647 = vmatprep.mubr.bf16.mxu0 0
      %648 = vmatmul.mubr.bf16.gmra.mrb[0].mxu0 %v559
      %v649 = vpop.f32.mrb[0].mxu0
      %v650 = vadd.f32 0.0, %v649
      %v651 = vpop.f32.mrb[0].mxu0
      %v652 = vpop.f32.mrb[0].mxu0
      %v653 = vadd.f32 0.0, %v652
      %v654 = vpop.f32.mrb[0].mxu0
      %655 = vmatprep.mubr.bf16.mxu0 0
      %656 = vmatmul.mubr.bf16.gmra.mrb[0].mxu0 %v560
      %v657 = vpop.f32.mrb[0].mxu0
      %v658 = vadd.f32 0.0, %v657
      %v659 = vpop.f32.mrb[0].mxu0
      %v660 = vpop.f32.mrb[0].mxu0
      %v661 = vadd.f32 0.0, %v660
      %v662 = vpop.f32.mrb[0].mxu0
      %663 = vmatprep.mubr.bf16.mxu0 0
      %664 = vmatmul.mubr.bf16.gmra.mrb[0].mxu0 %v561
      %v665 = vpop.f32.mrb[0].mxu0
      %v666 = vadd.f32 0.0, %v665
      %v667 = vpop.f32.mrb[0].mxu0
      %v668 = vpop.f32.mrb[0].mxu0
      %v669 = vadd.f32 0.0, %v668
      %v670 = vpop.f32.mrb[0].mxu0
      %671 = vmatprep.mubr.bf16.mxu0 0
      %672 = vmatmul.mubr.bf16.gmra.mrb[0].mxu0 %v562
      %v673 = vpop.f32.mrb[0].mxu0
      %v674 = vadd.f32 0.0, %v673
      %v675 = vpop.f32.mrb[0].mxu0
      %v676 = vpop.f32.mrb[0].mxu0
      %v677 = vadd.f32 0.0, %v676
      %v678 = vpop.f32.mrb[0].mxu0
      %679 = vdwg.mxu0
      %v680 = vadd.f32 %v488, %v650
      %v681 = vadd.f32 %v491, %v653
      %v682 = vadd.f32 %v496, %v658
      %v683 = vadd.f32 %v499, %v661
      %v684 = vadd.f32 %v504, %v666
      %v685 = vadd.f32 %v507, %v669
      %v686 = vadd.f32 %v512, %v674
      %v687 = vadd.f32 %v515, %v677
      %v688 = vld [vmem:[%s2] sm:$0x1]
      %v690 = vlaneseq
      %v691 = vshrl.u32 %v690, 7
      %v692 = vsub.s32 0, %v691
      %v693 = vrot.slane %v688, %v692
      %v695 = vadd.f32 %v680, %v693
      %v696 = vadd.f32 %v681, %v693
      %v697 = vadd.f32 %v682, %v693
      %v698 = vadd.f32 %v683, %v693
      %v699 = vadd.f32 %v684, %v693
      %v700 = vadd.f32 %v685, %v693
      %v701 = vadd.f32 %v686, %v693
      %v702 = vadd.f32 %v687, %v693
      %v703 = vmul.f32 %v695, %v695
      %v704 = vmul.f32 %v696, %v696
      %v705 = vmul.f32 %v697, %v697
      %v706 = vmul.f32 %v698, %v698
      %v707 = vmul.f32 %v699, %v699
      %v708 = vmul.f32 %v700, %v700
      %v709 = vmul.f32 %v701, %v701
      %v710 = vmul.f32 %v702, %v702
      %711 = vadd.xlane.f32.xlu0 %v703
      %v712 = vpop.xlane.xlu0 %711
      %713 = vadd.xlane.f32.xlu0 %v704
      %v714 = vpop.xlane.xlu0 %713
      %715 = vadd.xlane.f32.xlu0 %v705
      %v716 = vpop.xlane.xlu0 %715
      %717 = vadd.xlane.f32.xlu0 %v706
      %v718 = vpop.xlane.xlu0 %717
      %719 = vadd.xlane.f32.xlu0 %v707
      %v720 = vpop.xlane.xlu0 %719
      %721 = vadd.xlane.f32.xlu0 %v708
      %v722 = vpop.xlane.xlu0 %721
      %723 = vadd.xlane.f32.xlu0 %v709
      %v724 = vpop.xlane.xlu0 %723
      %725 = vadd.xlane.f32.xlu0 %v710
      %v726 = vpop.xlane.xlu0 %725
      %v727 = vmul.f32 %v712, 0.03125
      %v728 = vmul.f32 %v714, 0.03125
      %v729 = vmul.f32 %v716, 0.03125
      %v730 = vmul.f32 %v718, 0.03125
      %v731 = vmul.f32 %v720, 0.03125
      %v732 = vmul.f32 %v722, 0.03125
      %v733 = vmul.f32 %v724, 0.03125
      %v734 = vmul.f32 %v726, 0.03125
      %v735 = vadd.f32 %v727, 1e-05
      %v736 = vadd.f32 %v728, 1e-05
      %v737 = vadd.f32 %v729, 1e-05
      %v738 = vadd.f32 %v730, 1e-05
      %v739 = vadd.f32 %v731, 1e-05
      %v740 = vadd.f32 %v732, 1e-05
      %v741 = vadd.f32 %v733, 1e-05
      %v742 = vadd.f32 %v734, 1e-05
      %v743 = vrsqrt.pop %v735
      %v744 = vrsqrt.pop %v736
      %v745 = vrsqrt.pop %v737
      %v746 = vrsqrt.pop %v738
      %v747 = vrsqrt.pop %v739
      %v748 = vrsqrt.pop %v740
      %v749 = vrsqrt.pop %v741
      %v750 = vrsqrt.pop %v742
      %v751 = vmul.f32 %v695, %v743
      %v752 = vmul.f32 %v696, %v744
      %v753 = vmul.f32 %v697, %v745
      %v754 = vmul.f32 %v698, %v746
      %v755 = vmul.f32 %v699, %v747
      %v756 = vmul.f32 %v700, %v748
      %v757 = vmul.f32 %v701, %v749
      %v758 = vmul.f32 %v702, %v750
      %v759 = vmax.f32 %v751, 0.0
      %v760 = vmax.f32 %v752, 0.0
      %v761 = vmax.f32 %v753, 0.0
      %v762 = vmax.f32 %v754, 0.0
      %v763 = vmax.f32 %v755, 0.0
      %v764 = vmax.f32 %v756, 0.0
      %v765 = vmax.f32 %v757, 0.0
      %v766 = vmax.f32 %v758, 0.0
      %v767 = vpack.c.bf16 %v760, %v759
      %v768 = vpack.c.bf16 %v762, %v761
      %v769 = vpack.c.bf16 %v764, %v763
      %v770 = vpack.c.bf16 %v766, %v765
      %v775 = vunpack.c.l.b16 %v767
      %v776 = vunpack.c.h.b16 %v767
      %v777 = vunpack.c.l.b16 %v768
      %v778 = vunpack.c.h.b16 %v768
      %v779 = vunpack.c.l.b16 %v769
      %v780 = vunpack.c.h.b16 %v769
      %v781 = vunpack.c.l.b16 %v770
      %v782 = vunpack.c.h.b16 %v770
      %v783 = vpack.c.b16 %v775, %v775
      %v784 = vpack.c.b16 %v776, %v776
      %v785 = vpack.c.b16 %v777, %v777
      %v786 = vpack.c.b16 %v778, %v778
      %v787 = vpack.c.b16 %v779, %v779
      %v788 = vpack.c.b16 %v780, %v780
      %v789 = vpack.c.b16 %v781, %v781
      %v790 = vpack.c.b16 %v782, %v782
      %799 = vst [vmem:[%s192] sm:$0xf] %v783
      %800 = vst [vmem:[%s192 + $0x4] sm:$0xf] %v784
      %801 = vst [vmem:[%s192 + $0x8] sm:$0xf] %v785
      %802 = vst [vmem:[%s192 + $0xc] sm:$0xf] %v786
      %803 = vst [vmem:[%s192 + $0x10] sm:$0xf] %v787
      %804 = vst [vmem:[%s192 + $0x14] sm:$0xf] %v788
      %805 = vst [vmem:[%s192 + $0x18] sm:$0xf] %v789
      %806 = vst [vmem:[%s192 + $0x1c] sm:$0xf] %v790
      %s807 = smul.u32 8, %s19
      %p808 = scmp.lt.s32.totalorder %s18, 1
      %s809 = scalar_select %p808, %s18, 1
      %p810 = scmp.lt.s32.totalorder %s807, 7
      %s811 = scalar_select %p810, %s807, 7
      %s812 = smul.addr %s809, 8
      %s813 = sadd.s32 %s811, %s812
      %s814 = smul.addr %s813, 4
      %s815 = scalar_lea.vmem %s3, %s814
      // Predicated region
      $region33: #{gddc_encoder_forward.12} parent=31 // pred_check
        %p816 = pneg %p114
      $region34: #{gddc_encoder_forward.12} parent=31 // pred_check_branch
        %818 = sbr.rel (%p816) target = $region36
      $region35: #{gddc_encoder_forward.12} parent=31 // pred_region
        %s819 = smul.u32 8, %s19
      $region36: #{gddc_encoder_forward.12} parent=31 // pred_fallthru
        _
    $region32: #{gddc_encoder_forward.12} parent=5 // pred_fallthru
      _
    %p820 = scmp.le.s32.totalorder 2, %s9
    // Predicated region
    $region37: #{gddc_encoder_forward.12} parent=5 // pred_check
      %p821 = pneg %p820
    $region38: #{gddc_encoder_forward.12} parent=5 // pred_check_branch
      %823 = sbr.rel (%p821) target = $region40
    $region39: #{gddc_encoder_forward.12} parent=5 // pred_region
      %s824 = ssub.s32 %s9, 2
      // Predicated region
      $region41: #{gddc_encoder_forward.12} parent=39 // pred_check
        %p825 = pneg %p120
      $region42: #{gddc_encoder_forward.12} parent=39 // pred_check_branch
        %827 = sbr.rel (%p825) target = $region44
      $region43: #{gddc_encoder_forward.12} parent=39 // pred_region
        %s828 = smul.u32 8, %s21
        %p829 = scmp.lt.s32.totalorder %s20, 1
        %s830 = scalar_select %p829, %s20, 1
        %p831 = scmp.lt.s32.totalorder %s828, 7
        %s832 = scalar_select %p831, %s828, 7
        %s833 = smul.addr %s830, 8
        %s834 = sadd.s32 %s832, %s833
        %s835 = smul.addr %s834, 4
        %s836 = scalar_lea.vmem %s3, %s835
      $region44: #{gddc_encoder_forward.12} parent=39 // pred_fallthru
        _
    $region40: #{gddc_encoder_forward.12} parent=5 // pred_fallthru
      _
  $region6: #{gddc_encoder_forward.12} parent=0 // loop_footer
    %s13 = sadd.s32 1, %s9
  $region7: #{gddc_encoder_forward.12} parent=0 // loop_footer_branch
    %8 = sbr.rel target = $region3
  $region8: #{gddc_encoder_forward.12} parent=0 // loop_exit
    _

// kernel: gddc_encoder_forward.15
$region0: #{gddc_encoder_forward.15}
  #allocation0 [shape = 'u32[]', space=smem, size = 0x4, offset = 0x4, fixed_abs, tag = 'smem constant byte address 0x4 - core index']
  #allocation1 [shape = 'u32[144,128]{1,0:T(1,128)}', space=vmem, size = 0x12000, scoped, tag = 'internal scratch']
  %s0 = inlined_call_operand.vmem [shape: bf16[2,80,128], index: 0, kind: input, shape index: {}]
  %s1 = inlined_call_operand.vmem [shape: bf16[3,128,128], index: 1, kind: input, shape index: {}]
  %s2 = inlined_call_operand.vmem [shape: f32[1,128], index: 2, kind: input, shape index: {}]
  %s3 = inlined_call_operand.vmem [shape: bf16[2,16,128], index: 3, kind: output, shape index: {}]
  %s4 = sld [smem:[#allocation0]]
  $region45: #{gddc_encoder_forward.15} parent=0
    _
  %s6 = ssub.s32 1, %s4
  %s7 = scalar_select 0, %s6, %s4
  loop: start=0, step=1, limit=4
  $region2: #{gddc_encoder_forward.15} parent=0 // loop_pre_header
    _
  $region3: #{gddc_encoder_forward.15} parent=0 // loop_header
    %s9 = sphi 0, %s13
    %p10 = scmp.ge.s32.totalorder %s9, 4
    %s16 = sphi 0, %s28
    %s17 = sphi 0, %s24
    %s18 = sphi 0, %s16
    %s19 = sphi 0, %s17
    %s20 = sphi 0, %s18
    %s21 = sphi 0, %s19
    %s31 = sphi 0, %s33
    %s34 = sphi 0, %s31
    %s35 = sphi 0, %s34
    %s51 = sphi 0, %s35
    %s55 = sphi 0, %s55
    %s57 = sphi 0, %s55
    %s58 = sphi 0, %s57
    %s72 = sphi 0, %s58
    %s76 = sphi 0, %s76
    %s78 = sphi 0, %s76
    %s79 = sphi 0, %s78
    %s93 = sphi 0, %s79
    %s101 = sphi 0, %s103
    %s104 = sphi 0, %s101
    %s105 = sphi 0, %s104
    %s121 = sphi 0, %s105
  $region4: #{gddc_encoder_forward.15} parent=0 // loop_header_branch
    %12 = sbr.rel (%p10) target = $region8
  $region5: #{gddc_encoder_forward.15} parent=0 // loop_body
    %s14 = ssub.s32 %s9, 1
    %s15 = ssub.s32 %s9, 2
    %s22 = sadd.s32 1, %s17
    %p23 = scmp.ge.s32.totalorder %s22, 1
    %s24 = scalar_select %p23, 0, %s22
    %s25 = sadd.s32 1, %s16
    %s26 = scalar_select %p23, %s25, %s16
    %p27 = scmp.ge.s32.totalorder %s26, 2
    %s28 = scalar_select %p27, 0, %s26
    %s29 = ssub.s32 %s16, %s28
    %p30 = scmp.eq.s32.totalorder %s29, 0
    %s32 = sadd.s32 %s31, 1
    %s33 = scalar_select %p30, %s31, %s32
    %p36 = pneg %p30
    %p37 = scmp.eq.s32.totalorder %s9, 1
    %p38 = por %p36, %p37
    %p39 = scmp.ne.s32.totalorder %s31, %s34
    %p40 = scmp.eq.s32.totalorder %s9, 0
    %p41 = por %p39, %p40
    %p42 = scmp.ne.s32.totalorder %s31, %s34
    %p43 = scmp.eq.s32.totalorder %s14, 1
    %p44 = por %p42, %p43
    %p45 = scmp.ne.s32.totalorder %s34, %s35
    %p46 = scmp.eq.s32.totalorder %s14, 0
    %p47 = por %p45, %p46
    %p48 = scmp.ne.s32.totalorder %s34, %s35
    %p49 = scmp.eq.s32.totalorder %s15, 1
    %p50 = por %p48, %p49
    %p52 = scmp.ne.s32.totalorder %s35, %s51
    %p53 = scmp.eq.s32.totalorder %s15, 0
    %p54 = por %p52, %p53
    %s56 = sadd.s32 %s55, 1
    %p59 = scmp.eq.s32.totalorder %s9, 1
    %p60 = scmp.ne.s32.totalorder %s55, %s57
    %p61 = scmp.eq.s32.totalorder %s9, 0
    %p62 = por %p60, %p61
    %p63 = scmp.ne.s32.totalorder %s55, %s57
    %p64 = scmp.eq.s32.totalorder %s14, 1
    %p65 = por %p63, %p64
    %p66 = scmp.ne.s32.totalorder %s57, %s58
    %p67 = scmp.eq.s32.totalorder %s14, 0
    %p68 = por %p66, %p67
    %p69 = scmp.ne.s32.totalorder %s57, %s58
    %p70 = scmp.eq.s32.totalorder %s15, 1
    %p71 = por %p69, %p70
    %p73 = scmp.ne.s32.totalorder %s58, %s72
    %p74 = scmp.eq.s32.totalorder %s15, 0
    %p75 = por %p73, %p74
    %s77 = sadd.s32 %s76, 1
    %p80 = scmp.eq.s32.totalorder %s9, 1
    %p81 = scmp.ne.s32.totalorder %s76, %s78
    %p82 = scmp.eq.s32.totalorder %s9, 0
    %p83 = por %p81, %p82
    %p84 = scmp.ne.s32.totalorder %s76, %s78
    %p85 = scmp.eq.s32.totalorder %s14, 1
    %p86 = por %p84, %p85
    %p87 = scmp.ne.s32.totalorder %s78, %s79
    %p88 = scmp.eq.s32.totalorder %s14, 0
    %p89 = por %p87, %p88
    %p90 = scmp.ne.s32.totalorder %s78, %s79
    %p91 = scmp.eq.s32.totalorder %s15, 1
    %p92 = por %p90, %p91
    %p94 = scmp.ne.s32.totalorder %s79, %s93
    %p95 = scmp.eq.s32.totalorder %s15, 0
    %p96 = por %p94, %p95
    %s97 = ssub.s32 %s16, %s28
    %s98 = ssub.s32 %s17, %s24
    %s99 = sor.u32 %s97, %s98
    %p100 = scmp.eq.s32.totalorder %s99, 0
    %s102 = sadd.s32 %s101, 1
    %s103 = scalar_select %p100, %s101, %s102
    %p106 = pneg %p100
    %p107 = scmp.eq.s32.totalorder %s9, 1
    %p108 = por %p106, %p107
    %p109 = scmp.ne.s32.totalorder %s101, %s104
    %p110 = scmp.eq.s32.totalorder %s9, 0
    %p111 = por %p109, %p110
    %p112 = scmp.ne.s32.totalorder %s101, %s104
    %p113 = scmp.eq.s32.totalorder %s14, 1
    %p114 = por %p112, %p113
    %p115 = scmp.ne.s32.totalorder %s104, %s105
    %p116 = scmp.eq.s32.totalorder %s14, 0
    %p117 = por %p115, %p116
    %p118 = scmp.ne.s32.totalorder %s104, %s105
    %p119 = scmp.eq.s32.totalorder %s15, 1
    %p120 = por %p118, %p119
    %p122 = scmp.ne.s32.totalorder %s105, %s121
    %p123 = scmp.eq.s32.totalorder %s15, 0
    %p124 = por %p122, %p123
    %p125 = scmp.le.s32.totalorder 1, %s9
    %p126 = scmp.lt.s32.totalorder %s9, 3
    %p127 = pnand %p125, %p126
    %p128 = pneg %p127
    // Predicated region
    $region9: #{gddc_encoder_forward.15} parent=5 // pred_check
      _
    $region10: #{gddc_encoder_forward.15} parent=5 // pred_check_branch
      %130 = sbr.rel (%p127) target = $region12
    $region11: #{gddc_encoder_forward.15} parent=5 // pred_region
      %s131 = ssub.s32 %s9, 1
      // Predicated region
      $region13: #{gddc_encoder_forward.15} parent=11 // pred_check
        %p132 = pneg %p68
      $region14: #{gddc_encoder_forward.15} parent=11 // pred_check_branch
        %134 = sbr.rel (%p132) target = $region16
      $region15: #{gddc_encoder_forward.15} parent=11 // pred_region
        _
      $region16: #{gddc_encoder_forward.15} parent=11 // pred_fallthru
        _
      // Predicated region
      $region17: #{gddc_encoder_forward.15} parent=11 // pred_check
        %p135 = pneg %p89
      $region18: #{gddc_encoder_forward.15} parent=11 // pred_check_branch
        %137 = sbr.rel (%p135) target = $region20
      $region19: #{gddc_encoder_forward.15} parent=11 // pred_region
        _
      $region20: #{gddc_encoder_forward.15} parent=11 // pred_fallthru
        _
    $region12: #{gddc_encoder_forward.15} parent=5 // pred_fallthru
      _
    %p138 = scmp.lt.s32.totalorder %s9, 2
    // Predicated region
    $region21: #{gddc_encoder_forward.15} parent=5 // pred_check
      %p139 = pneg %p138
    $region22: #{gddc_encoder_forward.15} parent=5 // pred_check_branch
      %141 = sbr.rel (%p139) target = $region24
    $region23: #{gddc_encoder_forward.15} parent=5 // pred_region
      // Predicated region
      $region25: #{gddc_encoder_forward.15} parent=23 // pred_check
        %p142 = pneg %p41
      $region26: #{gddc_encoder_forward.15} parent=23 // pred_check_branch
        %144 = sbr.rel (%p142) target = $region28
      $region27: #{gddc_encoder_forward.15} parent=23 // pred_region
        %p145 = scmp.lt.s32.totalorder %s16, 1
        %s146 = scalar_select %p145, %s16, 1
        %s147 = smul.addr %s146, 10
        %s148 = smul.addr %s147, 4
        %s149 = scalar_lea.vmem %s0, %s148
      $region28: #{gddc_encoder_forward.15} parent=23 // pred_fallthru
        _
    $region24: #{gddc_encoder_forward.15} parent=5 // pred_fallthru
      _
    %p150 = scmp.le.s32.totalorder 1, %s9
    %p151 = scmp.lt.s32.totalorder %s9, 3
    %p152 = pnand %p150, %p151
    %p153 = pneg %p152
    // Predicated region
    $region29: #{gddc_encoder_forward.15} parent=5 // pred_check
      _
    $region30: #{gddc_encoder_forward.15} parent=5 // pred_check_branch
      %155 = sbr.rel (%p152) target = $region32
    $region31: #{gddc_encoder_forward.15} parent=5 // pred_region
      %s156 = ssub.s32 %s9, 1
      %p157 = scmp.lt.s32.totalorder %s18, 1
      %s158 = scalar_select %p157, %s18, 1
      %s159 = smul.addr %s158, 10
      %s160 = smul.addr %s159, 4
      %s161 = scalar_lea.vmem %s0, %s160
      %p162 = pneg %p47
      %p163 = pneg %p44
      %p164 = pneg %p68
      %p165 = pneg %p65
      %p166 = pneg %p89
      %p167 = pneg %p86
      %p168 = pneg %p117
      %p169 = pneg %p114
      %s170 = smul.u32 2, %s19
      %p171 = scmp.lt.s32.totalorder %s18, 1
      %s172 = scalar_select %p171, %s18, 1
      %p173 = scmp.lt.s32.totalorder %s170, 1
      %s174 = scalar_select %p173, %s170, 1
      %s175 = smul.addr %s172, 2
      %s176 = sadd.s32 %s174, %s175
      %s177 = smul.addr %s176, 4
      %s178 = scalar_lea.vmem %s3, %s177
      %p179 = scmp.lt.s32.totalorder %s18, 1
      %s180 = scalar_select %p179, %s18, 1
      %s181 = smul.addr %s180, 10
      %s182 = smul.addr %s181, 4
      %s183 = scalar_lea.vmem %s0, %s182
      %s184 = smul.u32 2, %s19
      %p185 = scmp.lt.s32.totalorder %s18, 1
      %s186 = scalar_select %p185, %s18, 1
      %p187 = scmp.lt.s32.totalorder %s184, 1
      %s188 = scalar_select %p187, %s184, 1
      %s189 = smul.addr %s186, 2
      %s190 = sadd.s32 %s188, %s189
      %s191 = smul.addr %s190, 4
      %s192 = scalar_lea.vmem %s3, %s191
      %s193 = smul.u32 2, %s19
      %v195 = vld [vmem:[%s183] sm:$0xf]
      %v196 = vld [vmem:[%s183 + $0x4] sm:$0xf]
      %v197 = vld [vmem:[%s1] sm:$0xf]
      %v198 = vld [vmem:[%s1 + $0x4] sm:$0xf]
      %v199 = vld [vmem:[%s1 + $0x8] sm:$0xf]
      %v200 = vld [vmem:[%s1 + $0xc] sm:$0xf]
      %v201 = vld [vmem:[%s1 + $0x10] sm:$0xf]
      %v202 = vld [vmem:[%s1 + $0x14] sm:$0xf]
      %v203 = vld [vmem:[%s1 + $0x18] sm:$0xf]
      %v204 = vld [vmem:[%s1 + $0x1c] sm:$0xf]
      %v205 = vld [vmem:[%s1 + $0x20] sm:$0xf]
      %v206 = vld [vmem:[%s1 + $0x24] sm:$0xf]
      %v207 = vld [vmem:[%s1 + $0x28] sm:$0xf]
      %v208 = vld [vmem:[%s1 + $0x2c] sm:$0xf]
      %v209 = vld [vmem:[%s1 + $0x30] sm:$0xf]
      %v210 = vld [vmem:[%s1 + $0x34] sm:$0xf]
      %v211 = vld [vmem:[%s1 + $0x38] sm:$0xf]
      %v212 = vld [vmem:[%s1 + $0x3c] sm:$0xf]
      %v213 = vld [vmem:[%s183 + $0x14] sm:$0xf]
      %v214 = vld [vmem:[%s183 + $0x18] sm:$0xf]
      %s215 = scalar_lea.vmem %s1, 64
      %v216 = vld [vmem:[%s215] sm:$0xf]
      %v217 = vld [vmem:[%s215 + $0x4] sm:$0xf]
      %v218 = vld [vmem:[%s215 + $0x8] sm:$0xf]
      %v219 = vld [vmem:[%s215 + $0xc] sm:$0xf]
      %v220 = vld [vmem:[%s215 + $0x10] sm:$0xf]
      %v221 = vld [vmem:[%s215 + $0x14] sm:$0xf]
      %v222 = vld [vmem:[%s215 + $0x18] sm:$0xf]
      %v223 = vld [vmem:[%s215 + $0x1c] sm:$0xf]
      %v224 = vld [vmem:[%s215 + $0x20] sm:$0xf]
      %v225 = vld [vmem:[%s215 + $0x24] sm:$0xf]
      %v226 = vld [vmem:[%s215 + $0x28] sm:$0xf]
      %v227 = vld [vmem:[%s215 + $0x2c] sm:$0xf]
      %v228 = vld [vmem:[%s215 + $0x30] sm:$0xf]
      %v229 = vld [vmem:[%s215 + $0x34] sm:$0xf]
      %v230 = vld [vmem:[%s215 + $0x38] sm:$0xf]
      %v231 = vld [vmem:[%s215 + $0x3c] sm:$0xf]
      %v234 = vunpack.c.l.b16 %v213
      %v235 = vunpack.c.l.b16 %v214
      %v236 = vpack.c.b16 %v235, %v234
      %v254 = vunpack.c.l.b16 %v216
      %v255 = vunpack.c.l.b16 %v217
      %v256 = vunpack.c.l.b16 %v218
      %v257 = vunpack.c.l.b16 %v219
      %v258 = vunpack.c.l.b16 %v220
      %v259 = vunpack.c.l.b16 %v221
      %v260 = vunpack.c.l.b16 %v222
      %v261 = vunpack.c.l.b16 %v223
      %v262 = vunpack.c.l.b16 %v224
      %v263 = vunpack.c.l.b16 %v225
      %v264 = vunpack.c.l.b16 %v226
      %v265 = vunpack.c.l.b16 %v227
      %v266 = vunpack.c.l.b16 %v228
      %v267 = vunpack.c.l.b16 %v229
      %v268 = vunpack.c.l.b16 %v230
      %v269 = vunpack.c.l.b16 %v231
      %v270 = vpack.c.b16 %v255, %v254
      %v271 = vpack.c.b16 %v257, %v256
      %v272 = vpack.c.b16 %v259, %v258
      %v273 = vpack.c.b16 %v261, %v260
      %v274 = vpack.c.b16 %v263, %v262
      %v275 = vpack.c.b16 %v265, %v264
      %v276 = vpack.c.b16 %v267, %v266
      %v277 = vpack.c.b16 %v269, %v268
      %286 = vmatprep.subr.bf16.mxu0 0
      %287 = vmatpush1.bf16.msra.mxu0 %v270
      %288 = vmatprep.subr.bf16.mxu0 0
      %289 = vmatpush1.bf16.msra.mxu0 %v271
      %290 = vmatprep.subr.bf16.mxu0 0
      %291 = vmatpush1.bf16.msra.mxu0 %v272
      %292 = vmatprep.subr.bf16.mxu0 0
      %293 = vmatpush1.bf16.msra.mxu0 %v273
      %294 = vmatprep.subr.bf16.mxu0 0
      %295 = vmatpush1.bf16.msra.mxu0 %v274
      %296 = vmatprep.subr.bf16.mxu0 0
      %297 = vmatpush1.bf16.msra.mxu0 %v275
      %298 = vmatprep.subr.bf16.mxu0 0
      %299 = vmatpush1.bf16.msra.mxu0 %v276
      %300 = vmatprep.subr.bf16.mxu0 0
      %301 = vmatpush1.bf16.msra.mxu0 %v277
      %302 = vmatprep.subr.bf16.mxu0 0
      %303 = vmatpush1.bf16.msra.mxu0 0
      %304 = vmatprep.subr.bf16.mxu0 0
      %305 = vmatpush1.bf16.msra.mxu0 0
      %306 = vmatprep.subr.bf16.mxu0 0
      %307 = vmatpush1.bf16.msra.mxu0 0
      %308 = vmatprep.subr.bf16.mxu0 0
      %309 = vmatpush1.bf16.msra.mxu0 0
      %310 = vmatprep.subr.bf16.mxu0 0
      %311 = vmatpush1.bf16.msra.mxu0 0
      %312 = vmatprep.subr.bf16.mxu0 0
      %313 = vmatpush1.bf16.msra.mxu0 0
      %314 = vmatprep.subr.bf16.mxu0 0
      %315 = vmatpush1.bf16.msra.mxu0 0
      %316 = vmatprep.subr.bf16.mxu0 0
      %317 = vmatpush1.bf16.msra.mxu0 0
      %318 = vmatprep.mubr.bf16.mxu0 0
      %319 = vmatmul.mubr.bf16.gmra.mrb[0].mxu0 %v236
      %v320 = vpop.f32.mrb[0].mxu0
      %v321 = vadd.f32 0.0, %v320
      %v322 = vpop.f32.mrb[0].mxu0
      %v323 = vpop.f32.mrb[0].mxu0
      %v324 = vadd.f32 0.0, %v323
      %v325 = vpop.f32.mrb[0].mxu0
      %326 = vdwg.mxu0
      %v329 = vunpack.c.l.b16 %v195
      %v330 = vunpack.c.l.b16 %v196
      %v331 = vpack.c.b16 %v330, %v329
      %v349 = vunpack.c.l.b16 %v197
      %v350 = vunpack.c.l.b16 %v198
      %v351 = vunpack.c.l.b16 %v199
      %v352 = vunpack.c.l.b16 %v200
      %v353 = vunpack.c.l.b16 %v201
      %v354 = vunpack.c.l.b16 %v202
      %v355 = vunpack.c.l.b16 %v203
      %v356 = vunpack.c.l.b16 %v204
      %v357 = vunpack.c.l.b16 %v205
      %v358 = vunpack.c.l.b16 %v206
      %v359 = vunpack.c.l.b16 %v207
      %v360 = vunpack.c.l.b16 %v208
      %v361 = vunpack.c.l.b16 %v209
      %v362 = vunpack.c.l.b16 %v210
      %v363 = vunpack.c.l.b16 %v211
      %v364 = vunpack.c.l.b16 %v212
      %v365 = vpack.c.b16 %v350, %v349
      %v366 = vpack.c.b16 %v352, %v351
      %v367 = vpack.c.b16 %v354, %v353
      %v368 = vpack.c.b16 %v356, %v355
      %v369 = vpack.c.b16 %v358, %v357
      %v370 = vpack.c.b16 %v360, %v359
      %v371 = vpack.c.b16 %v362, %v361
      %v372 = vpack.c.b16 %v364, %v363
      %381 = vmatprep.subr.bf16.mxu0 0
      %382 = vmatpush1.bf16.msra.mxu0 %v365
      %383 = vmatprep.subr.bf16.mxu0 0
      %384 = vmatpush1.bf16.msra.mxu0 %v366
      %385 = vmatprep.subr.bf16.mxu0 0
      %386 = vmatpush1.bf16.msra.mxu0 %v367
      %387 = vmatprep.subr.bf16.mxu0 0
      %388 = vmatpush1.bf16.msra.mxu0 %v368
      %389 = vmatprep.subr.bf16.mxu0 0
      %390 = vmatpush1.bf16.msra.mxu0 %v369
      %391 = vmatprep.subr.bf16.mxu0 0
      %392 = vmatpush1.bf16.msra.mxu0 %v370
      %393 = vmatprep.subr.bf16.mxu0 0
      %394 = vmatpush1.bf16.msra.mxu0 %v371
      %395 = vmatprep.subr.bf16.mxu0 0
      %396 = vmatpush1.bf16.msra.mxu0 %v372
      %397 = vmatprep.subr.bf16.mxu0 0
      %398 = vmatpush1.bf16.msra.mxu0 0
      %399 = vmatprep.subr.bf16.mxu0 0
      %400 = vmatpush1.bf16.msra.mxu0 0
      %401 = vmatprep.subr.bf16.mxu0 0
      %402 = vmatpush1.bf16.msra.mxu0 0
      %403 = vmatprep.subr.bf16.mxu0 0
      %404 = vmatpush1.bf16.msra.mxu0 0
      %405 = vmatprep.subr.bf16.mxu0 0
      %406 = vmatpush1.bf16.msra.mxu0 0
      %407 = vmatprep.subr.bf16.mxu0 0
      %408 = vmatpush1.bf16.msra.mxu0 0
      %409 = vmatprep.subr.bf16.mxu0 0
      %410 = vmatpush1.bf16.msra.mxu0 0
      %411 = vmatprep.subr.bf16.mxu0 0
      %412 = vmatpush1.bf16.msra.mxu0 0
      %413 = vmatprep.mubr.bf16.mxu0 0
      %414 = vmatmul.mubr.bf16.gmra.mrb[0].mxu0 %v331
      %v415 = vpop.f32.mrb[0].mxu0
      %v416 = vadd.f32 %v321, %v415
      %v417 = vpop.f32.mrb[0].mxu0
      %v418 = vpop.f32.mrb[0].mxu0
      %v419 = vadd.f32 %v324, %v418
      %v420 = vpop.f32.mrb[0].mxu0
      %421 = vdwg.mxu0
      %v422 = vld [vmem:[%s183 + $0x4] sm:$0xf]
      %v423 = vld [vmem:[%s183 + $0x8] sm:$0xf]
      %s424 = scalar_lea.vmem %s1, 128
      %v425 = vld [vmem:[%s424] sm:$0xf]
      %v426 = vld [vmem:[%s424 + $0x4] sm:$0xf]
      %v427 = vld [vmem:[%s424 + $0x8] sm:$0xf]
      %v428 = vld [vmem:[%s424 + $0xc] sm:$0xf]
      %v429 = vld [vmem:[%s424 + $0x10] sm:$0xf]
      %v430 = vld [vmem:[%s424 + $0x14] sm:$0xf]
      %v431 = vld [vmem:[%s424 + $0x18] sm:$0xf]
      %v432 = vld [vmem:[%s424 + $0x1c] sm:$0xf]
      %v433 = vld [vmem:[%s424 + $0x20] sm:$0xf]
      %v434 = vld [vmem:[%s424 + $0x24] sm:$0xf]
      %v435 = vld [vmem:[%s424 + $0x28] sm:$0xf]
      %v436 = vld [vmem:[%s424 + $0x2c] sm:$0xf]
      %v437 = vld [vmem:[%s424 + $0x30] sm:$0xf]
      %v438 = vld [vmem:[%s424 + $0x34] sm:$0xf]
      %v439 = vld [vmem:[%s424 + $0x38] sm:$0xf]
      %v440 = vld [vmem:[%s424 + $0x3c] sm:$0xf]
      %v443 = vunpack.c.l.b16 %v422
      %v444 = vunpack.c.l.b16 %v423
      %v445 = vpack.c.b16 %v444, %v443
      %v463 = vunpack.c.l.b16 %v425
      %v464 = vunpack.c.l.b16 %v426
      %v465 = vunpack.c.l.b16 %v427
      %v466 = vunpack.c.l.b16 %v428
      %v467 = vunpack.c.l.b16 %v429
      %v468 = vunpack.c.l.b16 %v430
      %v469 = vunpack.c.l.b16 %v431
      %v470 = vunpack.c.l.b16 %v432
      %v471 = vunpack.c.l.b16 %v433
      %v472 = vunpack.c.l.b16 %v434
      %v473 = vunpack.c.l.b16 %v435
      %v474 = vunpack.c.l.b16 %v436
      %v475 = vunpack.c.l.b16 %v437
      %v476 = vunpack.c.l.b16 %v438
      %v477 = vunpack.c.l.b16 %v439
      %v478 = vunpack.c.l.b16 %v440
      %v479 = vpack.c.b16 %v464, %v463
      %v480 = vpack.c.b16 %v466, %v465
      %v481 = vpack.c.b16 %v468, %v467
      %v482 = vpack.c.b16 %v470, %v469
      %v483 = vpack.c.b16 %v472, %v471
      %v484 = vpack.c.b16 %v474, %v473
      %v485 = vpack.c.b16 %v476, %v475
      %v486 = vpack.c.b16 %v478, %v477
      %495 = vmatprep.subr.bf16.mxu0 0
      %496 = vmatpush1.bf16.msra.mxu0 %v479
      %497 = vmatprep.subr.bf16.mxu0 0
      %498 = vmatpush1.bf16.msra.mxu0 %v480
      %499 = vmatprep.subr.bf16.mxu0 0
      %500 = vmatpush1.bf16.msra.mxu0 %v481
      %501 = vmatprep.subr.bf16.mxu0 0
      %502 = vmatpush1.bf16.msra.mxu0 %v482
      %503 = vmatprep.subr.bf16.mxu0 0
      %504 = vmatpush1.bf16.msra.mxu0 %v483
      %505 = vmatprep.subr.bf16.mxu0 0
      %506 = vmatpush1.bf16.msra.mxu0 %v484
      %507 = vmatprep.subr.bf16.mxu0 0
      %508 = vmatpush1.bf16.msra.mxu0 %v485
      %509 = vmatprep.subr.bf16.mxu0 0
      %510 = vmatpush1.bf16.msra.mxu0 %v486
      %511 = vmatprep.subr.bf16.mxu0 0
      %512 = vmatpush1.bf16.msra.mxu0 0
      %513 = vmatprep.subr.bf16.mxu0 0
      %514 = vmatpush1.bf16.msra.mxu0 0
      %515 = vmatprep.subr.bf16.mxu0 0
      %516 = vmatpush1.bf16.msra.mxu0 0
      %517 = vmatprep.subr.bf16.mxu0 0
      %518 = vmatpush1.bf16.msra.mxu0 0
      %519 = vmatprep.subr.bf16.mxu0 0
      %520 = vmatpush1.bf16.msra.mxu0 0
      %521 = vmatprep.subr.bf16.mxu0 0
      %522 = vmatpush1.bf16.msra.mxu0 0
      %523 = vmatprep.subr.bf16.mxu0 0
      %524 = vmatpush1.bf16.msra.mxu0 0
      %525 = vmatprep.subr.bf16.mxu0 0
      %526 = vmatpush1.bf16.msra.mxu0 0
      %527 = vmatprep.mubr.bf16.mxu0 0
      %528 = vmatmul.mubr.bf16.gmra.mrb[0].mxu0 %v445
      %v529 = vpop.f32.mrb[0].mxu0
      %v530 = vadd.f32 0.0, %v529
      %v531 = vpop.f32.mrb[0].mxu0
      %v532 = vpop.f32.mrb[0].mxu0
      %v533 = vadd.f32 0.0, %v532
      %v534 = vpop.f32.mrb[0].mxu0
      %535 = vdwg.mxu0
      %v536 = vadd.f32 %v416, %v530
      %v537 = vadd.f32 %v419, %v533
      %v538 = vld [vmem:[%s2] sm:$0x1]
      %v540 = vlaneseq
      %v541 = vshrl.u32 %v540, 7
      %v542 = vsub.s32 0, %v541
      %v543 = vrot.slane %v538, %v542
      %v545 = vadd.f32 %v536, %v543
      %v546 = vadd.f32 %v537, %v543
      %v547 = vmul.f32 %v545, %v545
      %v548 = vmul.f32 %v546, %v546
      %549 = vadd.xlane.f32.xlu0 %v547
      %v550 = vpop.xlane.xlu0 %549
      %551 = vadd.xlane.f32.xlu0 %v548
      %v552 = vpop.xlane.xlu0 %551
      %v553 = vmul.f32 %v550, 0.015625
      %v554 = vmul.f32 %v552, 0.015625
      %v555 = vadd.f32 %v553, 1e-05
      %v556 = vadd.f32 %v554, 1e-05
      %v557 = vrsqrt.pop %v555
      %v558 = vrsqrt.pop %v556
      %v559 = vmul.f32 %v545, %v557
      %v560 = vmul.f32 %v546, %v558
      %v561 = vmax.f32 %v559, 0.0
      %v562 = vmax.f32 %v560, 0.0
      %v563 = vpack.c.bf16 %v562, %v561
      %v565 = vunpack.c.l.b16 %v563
      %v566 = vunpack.c.h.b16 %v563
      %v567 = vpack.c.b16 %v565, %v565
      %v568 = vpack.c.b16 %v566, %v566
      %571 = vst [vmem:[%s192] sm:$0xf] %v567
      %572 = vst [vmem:[%s192 + $0x4] sm:$0xf] %v568
      %s573 = smul.u32 2, %s19
      %p574 = scmp.lt.s32.totalorder %s18, 1
      %s575 = scalar_select %p574, %s18, 1
      %p576 = scmp.lt.s32.totalorder %s573, 1
      %s577 = scalar_select %p576, %s573, 1
      %s578 = smul.addr %s575, 2
      %s579 = sadd.s32 %s577, %s578
      %s580 = smul.addr %s579, 4
      %s581 = scalar_lea.vmem %s3, %s580
      // Predicated region
      $region33: #{gddc_encoder_forward.15} parent=31 // pred_check
        %p582 = pneg %p114
      $region34: #{gddc_encoder_forward.15} parent=31 // pred_check_branch
        %584 = sbr.rel (%p582) target = $region36
      $region35: #{gddc_encoder_forward.15} parent=31 // pred_region
        %s585 = smul.u32 2, %s19
      $region36: #{gddc_encoder_forward.15} parent=31 // pred_fallthru
        _
    $region32: #{gddc_encoder_forward.15} parent=5 // pred_fallthru
      _
    %p586 = scmp.le.s32.totalorder 2, %s9
    // Predicated region
    $region37: #{gddc_encoder_forward.15} parent=5 // pred_check
      %p587 = pneg %p586
    $region38: #{gddc_encoder_forward.15} parent=5 // pred_check_branch
      %589 = sbr.rel (%p587) target = $region40
    $region39: #{gddc_encoder_forward.15} parent=5 // pred_region
      %s590 = ssub.s32 %s9, 2
      // Predicated region
      $region41: #{gddc_encoder_forward.15} parent=39 // pred_check
        %p591 = pneg %p120
      $region42: #{gddc_encoder_forward.15} parent=39 // pred_check_branch
        %593 = sbr.rel (%p591) target = $region44
      $region43: #{gddc_encoder_forward.15} parent=39 // pred_region
        %s594 = smul.u32 2, %s21
        %p595 = scmp.lt.s32.totalorder %s20, 1
        %s596 = scalar_select %p595, %s20, 1
        %p597 = scmp.lt.s32.totalorder %s594, 1
        %s598 = scalar_select %p597, %s594, 1
        %s599 = smul.addr %s596, 2
        %s600 = sadd.s32 %s598, %s599
        %s601 = smul.addr %s600, 4
        %s602 = scalar_lea.vmem %s3, %s601
      $region44: #{gddc_encoder_forward.15} parent=39 // pred_fallthru
        _
    $region40: #{gddc_encoder_forward.15} parent=5 // pred_fallthru
      _
  $region6: #{gddc_encoder_forward.15} parent=0 // loop_footer
    %s13 = sadd.s32 1, %s9
  $region7: #{gddc_encoder_forward.15} parent=0 // loop_footer_branch
    %8 = sbr.rel target = $region3
  $region8: #{gddc_encoder_forward.15} parent=0 // loop_exit
    _

// kernel: gddc_encoder_forward.13
$region0: #{gddc_encoder_forward.13}
  #allocation0 [shape = 'u32[]', space=smem, size = 0x4, offset = 0x4, fixed_abs, tag = 'smem constant byte address 0x4 - core index']
  #allocation1 [shape = 'u32[144,128]{1,0:T(1,128)}', space=vmem, size = 0x12000, scoped, tag = 'internal scratch']
  #allocation2 [shape = 'bf16[56,128]{1,0:T(8,128)(2,1)}', space=vmem, size = 0x3800, scoped, tag = 'scratch operand']
  %s0 = inlined_call_operand.vmem [shape: bf16[2,64,256], index: 0, kind: input, shape index: {}]
  %s1 = inlined_call_operand.vmem [shape: bf16[2,256,128], index: 1, kind: input, shape index: {}]
  %s2 = inlined_call_operand.vmem [shape: f32[1,128], index: 2, kind: input, shape index: {}]
  %s3 = inlined_call_operand.vmem [shape: bf16[9,128,128], index: 3, kind: input, shape index: {}]
  %s4 = inlined_call_operand.vmem [shape: f32[1,128], index: 4, kind: input, shape index: {}]
  %s5 = inlined_call_operand.vmem [shape: bf16[2,32,128], index: 5, kind: output, shape index: {}]
  %s6 = sld [smem:[#allocation0]]
  $region53: #{gddc_encoder_forward.13} parent=0
    _
  %s8 = ssub.s32 1, %s6
  %s9 = scalar_select 0, %s8, %s6
  loop: start=0, step=1, limit=4
  $region2: #{gddc_encoder_forward.13} parent=0 // loop_pre_header
    _
  $region3: #{gddc_encoder_forward.13} parent=0 // loop_header
    %s11 = sphi 0, %s15
    %p12 = scmp.ge.s32.totalorder %s11, 4
    %s21 = sphi 0, %s23
    %s24 = sphi 0, %s21
    %s25 = sphi 0, %s24
    %s41 = sphi 0, %s25
    %s45 = sphi 0, %s45
    %s47 = sphi 0, %s45
    %s48 = sphi 0, %s47
    %s62 = sphi 0, %s48
    %s66 = sphi 0, %s66
    %s68 = sphi 0, %s66
    %s69 = sphi 0, %s68
    %s83 = sphi 0, %s69
    %s87 = sphi 0, %s87
    %s89 = sphi 0, %s87
    %s90 = sphi 0, %s89
    %s104 = sphi 0, %s90
    %s108 = sphi 0, %s108
    %s110 = sphi 0, %s108
    %s111 = sphi 0, %s110
    %s125 = sphi 0, %s111
    %s131 = sphi 0, %s133
    %s134 = sphi 0, %s131
    %s135 = sphi 0, %s134
    %s151 = sphi 0, %s135
  $region4: #{gddc_encoder_forward.13} parent=0 // loop_header_branch
    %14 = sbr.rel (%p12) target = $region8
  $region5: #{gddc_encoder_forward.13} parent=0 // loop_body
    %s16 = ssub.s32 %s11, 1
    %s17 = ssub.s32 %s11, 2
    %s18 = sadd.s32 %s11, 1
    %s19 = ssub.s32 %s11, %s18
    %p20 = scmp.eq.s32.totalorder %s19, 0
    %s22 = sadd.s32 %s21, 1
    %s23 = scalar_select %p20, %s21, %s22
    %p26 = pneg %p20
    %p27 = scmp.eq.s32.totalorder %s11, 1
    %p28 = por %p26, %p27
    %p29 = scmp.ne.s32.totalorder %s21, %s24
    %p30 = scmp.eq.s32.totalorder %s11, 0
    %p31 = por %p29, %p30
    %p32 = scmp.ne.s32.totalorder %s21, %s24
    %p33 = scmp.eq.s32.totalorder %s16, 1
    %p34 = por %p32, %p33
    %p35 = scmp.ne.s32.totalorder %s24, %s25
    %p36 = scmp.eq.s32.totalorder %s16, 0
    %p37 = por %p35, %p36
    %p38 = scmp.ne.s32.totalorder %s24, %s25
    %p39 = scmp.eq.s32.totalorder %s17, 1
    %p40 = por %p38, %p39
    %p42 = scmp.ne.s32.totalorder %s25, %s41
    %p43 = scmp.eq.s32.totalorder %s17, 0
    %p44 = por %p42, %p43
    %s46 = sadd.s32 %s45, 1
    %p49 = scmp.eq.s32.totalorder %s11, 1
    %p50 = scmp.ne.s32.totalorder %s45, %s47
    %p51 = scmp.eq.s32.totalorder %s11, 0
    %p52 = por %p50, %p51
    %p53 = scmp.ne.s32.totalorder %s45, %s47
    %p54 = scmp.eq.s32.totalorder %s16, 1
    %p55 = por %p53, %p54
    %p56 = scmp.ne.s32.totalorder %s47, %s48
    %p57 = scmp.eq.s32.totalorder %s16, 0
    %p58 = por %p56, %p57
    %p59 = scmp.ne.s32.totalorder %s47, %s48
    %p60 = scmp.eq.s32.totalorder %s17, 1
    %p61 = por %p59, %p60
    %p63 = scmp.ne.s32.totalorder %s48, %s62
    %p64 = scmp.eq.s32.totalorder %s17, 0
    %p65 = por %p63, %p64
    %s67 = sadd.s32 %s66, 1
    %p70 = scmp.eq.s32.totalorder %s11, 1
    %p71 = scmp.ne.s32.totalorder %s66, %s68
    %p72 = scmp.eq.s32.totalorder %s11, 0
    %p73 = por %p71, %p72
    %p74 = scmp.ne.s32.totalorder %s66, %s68
    %p75 = scmp.eq.s32.totalorder %s16, 1
    %p76 = por %p74, %p75
    %p77 = scmp.ne.s32.totalorder %s68, %s69
    %p78 = scmp.eq.s32.totalorder %s16, 0
    %p79 = por %p77, %p78
    %p80 = scmp.ne.s32.totalorder %s68, %s69
    %p81 = scmp.eq.s32.totalorder %s17, 1
    %p82 = por %p80, %p81
    %p84 = scmp.ne.s32.totalorder %s69, %s83
    %p85 = scmp.eq.s32.totalorder %s17, 0
    %p86 = por %p84, %p85
    %s88 = sadd.s32 %s87, 1
    %p91 = scmp.eq.s32.totalorder %s11, 1
    %p92 = scmp.ne.s32.totalorder %s87, %s89
    %p93 = scmp.eq.s32.totalorder %s11, 0
    %p94 = por %p92, %p93
    %p95 = scmp.ne.s32.totalorder %s87, %s89
    %p96 = scmp.eq.s32.totalorder %s16, 1
    %p97 = por %p95, %p96
    %p98 = scmp.ne.s32.totalorder %s89, %s90
    %p99 = scmp.eq.s32.totalorder %s16, 0
    %p100 = por %p98, %p99
    %p101 = scmp.ne.s32.totalorder %s89, %s90
    %p102 = scmp.eq.s32.totalorder %s17, 1
    %p103 = por %p101, %p102
    %p105 = scmp.ne.s32.totalorder %s90, %s104
    %p106 = scmp.eq.s32.totalorder %s17, 0
    %p107 = por %p105, %p106
    %s109 = sadd.s32 %s108, 1
    %p112 = scmp.eq.s32.totalorder %s11, 1
    %p113 = scmp.ne.s32.totalorder %s108, %s110
    %p114 = scmp.eq.s32.totalorder %s11, 0
    %p115 = por %p113, %p114
    %p116 = scmp.ne.s32.totalorder %s108, %s110
    %p117 = scmp.eq.s32.totalorder %s16, 1
    %p118 = por %p116, %p117
    %p119 = scmp.ne.s32.totalorder %s110, %s111
    %p120 = scmp.eq.s32.totalorder %s16, 0
    %p121 = por %p119, %p120
    %p122 = scmp.ne.s32.totalorder %s110, %s111
    %p123 = scmp.eq.s32.totalorder %s17, 1
    %p124 = por %p122, %p123
    %p126 = scmp.ne.s32.totalorder %s111, %s125
    %p127 = scmp.eq.s32.totalorder %s17, 0
    %p128 = por %p126, %p127
    %s129 = ssub.s32 %s11, %s18
    %p130 = scmp.eq.s32.totalorder %s129, 0
    %s132 = sadd.s32 %s131, 1
    %s133 = scalar_select %p130, %s131, %s132
    %p136 = pneg %p130
    %p137 = scmp.eq.s32.totalorder %s11, 1
    %p138 = por %p136, %p137
    %p139 = scmp.ne.s32.totalorder %s131, %s134
    %p140 = scmp.eq.s32.totalorder %s11, 0
    %p141 = por %p139, %p140
    %p142 = scmp.ne.s32.totalorder %s131, %s134
    %p143 = scmp.eq.s32.totalorder %s16, 1
    %p144 = por %p142, %p143
    %p145 = scmp.ne.s32.totalorder %s134, %s135
    %p146 = scmp.eq.s32.totalorder %s16, 0
    %p147 = por %p145, %p146
    %p148 = scmp.ne.s32.totalorder %s134, %s135
    %p149 = scmp.eq.s32.totalorder %s17, 1
    %p150 = por %p148, %p149
    %p152 = scmp.ne.s32.totalorder %s135, %s151
    %p153 = scmp.eq.s32.totalorder %s17, 0
    %p154 = por %p152, %p153
    %p155 = scmp.le.s32.totalorder 1, %s11
    %p156 = scmp.lt.s32.totalorder %s11, 3
    %p157 = pnand %p155, %p156
    %p158 = pneg %p157
    // Predicated region
    $region9: #{gddc_encoder_forward.13} parent=5 // pred_check
      _
    $region10: #{gddc_encoder_forward.13} parent=5 // pred_check_branch
      %160 = sbr.rel (%p157) target = $region12
    $region11: #{gddc_encoder_forward.13} parent=5 // pred_region
      %s161 = ssub.s32 %s11, 1
      // Predicated region
      $region13: #{gddc_encoder_forward.13} parent=11 // pred_check
        %p162 = pneg %p58
      $region14: #{gddc_encoder_forward.13} parent=11 // pred_check_branch
        %164 = sbr.rel (%p162) target = $region16
      $region15: #{gddc_encoder_forward.13} parent=11 // pred_region
        _
      $region16: #{gddc_encoder_forward.13} parent=11 // pred_fallthru
        _
      // Predicated region
      $region17: #{gddc_encoder_forward.13} parent=11 // pred_check
        %p165 = pneg %p79
      $region18: #{gddc_encoder_forward.13} parent=11 // pred_check_branch
        %167 = sbr.rel (%p165) target = $region20
      $region19: #{gddc_encoder_forward.13} parent=11 // pred_region
        _
      $region20: #{gddc_encoder_forward.13} parent=11 // pred_fallthru
        _
      // Predicated region
      $region21: #{gddc_encoder_forward.13} parent=11 // pred_check
        %p168 = pneg %p100
      $region22: #{gddc_encoder_forward.13} parent=11 // pred_check_branch
        %170 = sbr.rel (%p168) target = $region24
      $region23: #{gddc_encoder_forward.13} parent=11 // pred_region
        _
      $region24: #{gddc_encoder_forward.13} parent=11 // pred_fallthru
        _
      // Predicated region
      $region25: #{gddc_encoder_forward.13} parent=11 // pred_check
        %p171 = pneg %p121
      $region26: #{gddc_encoder_forward.13} parent=11 // pred_check_branch
        %173 = sbr.rel (%p171) target = $region28
      $region27: #{gddc_encoder_forward.13} parent=11 // pred_region
        _
      $region28: #{gddc_encoder_forward.13} parent=11 // pred_fallthru
        _
    $region12: #{gddc_encoder_forward.13} parent=5 // pred_fallthru
      _
    %p174 = scmp.lt.s32.totalorder %s11, 2
    // Predicated region
    $region29: #{gddc_encoder_forward.13} parent=5 // pred_check
      %p175 = pneg %p174
    $region30: #{gddc_encoder_forward.13} parent=5 // pred_check_branch
      %177 = sbr.rel (%p175) target = $region32
    $region31: #{gddc_encoder_forward.13} parent=5 // pred_region
      // Predicated region
      $region33: #{gddc_encoder_forward.13} parent=31 // pred_check
        %p178 = pneg %p31
      $region34: #{gddc_encoder_forward.13} parent=31 // pred_check_branch
        %180 = sbr.rel (%p178) target = $region36
      $region35: #{gddc_encoder_forward.13} parent=31 // pred_region
        %p181 = scmp.lt.s32.totalorder %s11, 1
        %s182 = scalar_select %p181, %s11, 1
        %s183 = smul.addr %s182, 16
        %s184 = smul.addr %s183, 4
        %s185 = scalar_lea.vmem %s0, %s184
      $region36: #{gddc_encoder_forward.13} parent=31 // pred_fallthru
        _
    $region32: #{gddc_encoder_forward.13} parent=5 // pred_fallthru
      _
    %p186 = scmp.le.s32.totalorder 1, %s11
    %p187 = scmp.lt.s32.totalorder %s11, 3
    %p188 = pnand %p186, %p187
    %p189 = pneg %p188
    // Predicated region
    $region37: #{gddc_encoder_forward.13} parent=5 // pred_check
      _
    $region38: #{gddc_encoder_forward.13} parent=5 // pred_check_branch
      %191 = sbr.rel (%p188) target = $region40
    $region39: #{gddc_encoder_forward.13} parent=5 // pred_region
      %s192 = ssub.s32 %s11, 1
      %p193 = scmp.lt.s32.totalorder %s16, 1
      %s194 = scalar_select %p193, %s16, 1
      %s195 = smul.addr %s194, 16
      %s196 = smul.addr %s195, 4
      %s197 = scalar_lea.vmem %s0, %s196
      %p198 = pneg %p37
      %p199 = pneg %p34
      %p200 = pneg %p58
      %p201 = pneg %p55
      %p202 = pneg %p79
      %p203 = pneg %p76
      %p204 = pneg %p100
      %p205 = pneg %p97
      %p206 = pneg %p121
      %p207 = pneg %p118
      %p208 = pneg %p147
      %p209 = pneg %p144
      %p210 = scmp.lt.s32.totalorder %s16, 1
      %s211 = scalar_select %p210, %s16, 1
      %s212 = smul.addr %s211, 4
      %s213 = smul.addr %s212, 4
      %s214 = scalar_lea.vmem %s5, %s213
      %p215 = scmp.lt.s32.totalorder %s16, 1
      %s216 = scalar_select %p215, %s16, 1
      %s217 = smul.addr %s216, 16
      %s218 = smul.addr %s217, 4
      %s219 = scalar_lea.vmem %s0, %s218
      %p220 = scmp.lt.s32.totalorder %s16, 1
      %s221 = scalar_select %p220, %s16, 1
      %s222 = smul.addr %s221, 4
      %s223 = smul.addr %s222, 4
      %s224 = scalar_lea.vmem %s5, %s223
      %226 = vst [vmem:[#allocation2] sm:$0xf] 0
      %227 = vst [vmem:[#allocation2 + $0x4] sm:$0xf] 0
      %228 = vst [vmem:[#allocation2 + $0x8] sm:$0xf] 0
      %229 = vst [vmem:[#allocation2 + $0xc] sm:$0xf] 0
      %230 = vst [vmem:[#allocation2 + $0x10] sm:$0xf] 0
      %231 = vst [vmem:[#allocation2 + $0x14] sm:$0xf] 0
      %232 = vst [vmem:[#allocation2 + $0x18] sm:$0xf] 0
      %v233 = vld [vmem:[%s219] sm:$0xff]
      %v234 = vld [vmem:[%s219 + $0x8] sm:$0xff]
      %v235 = vld [vmem:[%s219 + $0x10] sm:$0xff]
      %v236 = vld [vmem:[%s219 + $0x18] sm:$0xff]
      %v237 = vld [vmem:[%s1] sm:$0xf]
      %v238 = vld [vmem:[%s1 + $0x4] sm:$0xf]
      %v239 = vld [vmem:[%s1 + $0x8] sm:$0xf]
      %v240 = vld [vmem:[%s1 + $0xc] sm:$0xf]
      %v241 = vld [vmem:[%s1 + $0x10] sm:$0xf]
      %v242 = vld [vmem:[%s1 + $0x14] sm:$0xf]
      %v243 = vld [vmem:[%s1 + $0x18] sm:$0xf]
      %v244 = vld [vmem:[%s1 + $0x1c] sm:$0xf]
      %v245 = vld [vmem:[%s1 + $0x20] sm:$0xf]
      %v246 = vld [vmem:[%s1 + $0x24] sm:$0xf]
      %v247 = vld [vmem:[%s1 + $0x28] sm:$0xf]
      %v248 = vld [vmem:[%s1 + $0x2c] sm:$0xf]
      %v249 = vld [vmem:[%s1 + $0x30] sm:$0xf]
      %v250 = vld [vmem:[%s1 + $0x34] sm:$0xf]
      %v251 = vld [vmem:[%s1 + $0x38] sm:$0xf]
      %v252 = vld [vmem:[%s1 + $0x3c] sm:$0xf]
      %v253 = vld [vmem:[%s1 + $0x40] sm:$0xf]
      %v254 = vld [vmem:[%s1 + $0x44] sm:$0xf]
      %v255 = vld [vmem:[%s1 + $0x48] sm:$0xf]
      %v256 = vld [vmem:[%s1 + $0x4c] sm:$0xf]
      %v257 = vld [vmem:[%s1 + $0x50] sm:$0xf]
      %v258 = vld [vmem:[%s1 + $0x54] sm:$0xf]
      %v259 = vld [vmem:[%s1 + $0x58] sm:$0xf]
      %v260 = vld [vmem:[%s1 + $0x5c] sm:$0xf]
      %v261 = vld [vmem:[%s1 + $0x60] sm:$0xf]
      %v262 = vld [vmem:[%s1 + $0x64] sm:$0xf]
      %v263 = vld [vmem:[%s1 + $0x68] sm:$0xf]
      %v264 = vld [vmem:[%s1 + $0x6c] sm:$0xf]
      %v265 = vld [vmem:[%s1 + $0x70] sm:$0xf]
      %v266 = vld [vmem:[%s1 + $0x74] sm:$0xf]
      %v267 = vld [vmem:[%s1 + $0x78] sm:$0xf]
      %v268 = vld [vmem:[%s1 + $0x7c] sm:$0xf]
      %v269 = vld [vmem:[%s219 + $0x20] sm:$0xff]
      %v270 = vld [vmem:[%s219 + $0x28] sm:$0xff]
      %s271 = scalar_lea.vmem %s1, 128
      %v272 = vld [vmem:[%s271] sm:$0xf]
      %v273 = vld [vmem:[%s271 + $0x4] sm:$0xf]
      %v274 = vld [vmem:[%s271 + $0x8] sm:$0xf]
      %v275 = vld [vmem:[%s271 + $0xc] sm:$0xf]
      %v276 = vld [vmem:[%s271 + $0x10] sm:$0xf]
      %v277 = vld [vmem:[%s271 + $0x14] sm:$0xf]
      %v278 = vld [vmem:[%s271 + $0x18] sm:$0xf]
      %v279 = vld [vmem:[%s271 + $0x1c] sm:$0xf]
      %v280 = vld [vmem:[%s271 + $0x20] sm:$0xf]
      %v281 = vld [vmem:[%s271 + $0x24] sm:$0xf]
      %v282 = vld [vmem:[%s271 + $0x28] sm:$0xf]
      %v283 = vld [vmem:[%s271 + $0x2c] sm:$0xf]
      %v284 = vld [vmem:[%s271 + $0x30] sm:$0xf]
      %v285 = vld [vmem:[%s271 + $0x34] sm:$0xf]
      %v286 = vld [vmem:[%s271 + $0x38] sm:$0xf]
      %v287 = vld [vmem:[%s271 + $0x3c] sm:$0xf]
      %v288 = vld [vmem:[%s271 + $0x40] sm:$0xf]
      %v289 = vld [vmem:[%s271 + $0x44] sm:$0xf]
      %v290 = vld [vmem:[%s271 + $0x48] sm:$0xf]
      %v291 = vld [vmem:[%s271 + $0x4c] sm:$0xf]
      %v292 = vld [vmem:[%s271 + $0x50] sm:$0xf]
      %v293 = vld [vmem:[%s271 + $0x54] sm:$0xf]
      %v294 = vld [vmem:[%s271 + $0x58] sm:$0xf]
      %v295 = vld [vmem:[%s271 + $0x5c] sm:$0xf]
      %v296 = vld [vmem:[%s271 + $0x60] sm:$0xf]
      %v297 = vld [vmem:[%s271 + $0x64] sm:$0xf]
      %v298 = vld [vmem:[%s271 + $0x68] sm:$0xf]
      %v299 = vld [vmem:[%s271 + $0x6c] sm:$0xf]
      %v300 = vld [vmem:[%s271 + $0x70] sm:$0xf]
      %v301 = vld [vmem:[%s271 + $0x74] sm:$0xf]
      %v302 = vld [vmem:[%s271 + $0x78] sm:$0xf]
      %v303 = vld [vmem:[%s271 + $0x7c] sm:$0xf]
      %v308 = vunpack.c.l.b16 %v235
      %v309 = vunpack.c.h.b16 %v235
      %v310 = vunpack.c.l.b16 %v236
      %v311 = vunpack.c.h.b16 %v236
      %v312 = vunpack.c.l.b16 %v269
      %v313 = vunpack.c.h.b16 %v269
      %v314 = vunpack.c.l.b16 %v270
      %v315 = vunpack.c.h.b16 %v270
      %v316 = vpack.c.b16 %v310, %v308
      %v317 = vpack.c.b16 %v311, %v309
      %v318 = vpack.c.b16 %v314, %v312
      %v319 = vpack.c.b16 %v315, %v313
      %v356 = vunpack.c.l.b16 %v272
      %v357 = vunpack.c.l.b16 %v273
      %v358 = vunpack.c.l.b16 %v274
      %v359 = vunpack.c.l.b16 %v275
      %v360 = vunpack.c.l.b16 %v276
      %v361 = vunpack.c.l.b16 %v277
      %v362 = vunpack.c.l.b16 %v278
      %v363 = vunpack.c.l.b16 %v279
      %v364 = vunpack.c.l.b16 %v280
      %v365 = vunpack.c.l.b16 %v281
      %v366 = vunpack.c.l.b16 %v282
      %v367 = vunpack.c.l.b16 %v283
      %v368 = vunpack.c.l.b16 %v284
      %v369 = vunpack.c.l.b16 %v285
      %v370 = vunpack.c.l.b16 %v286
      %v371 = vunpack.c.l.b16 %v287
      %v372 = vunpack.c.l.b16 %v288
      %v373 = vunpack.c.l.b16 %v289
      %v374 = vunpack.c.l.b16 %v290
      %v375 = vunpack.c.l.b16 %v291
      %v376 = vunpack.c.l.b16 %v292
      %v377 = vunpack.c.l.b16 %v293
      %v378 = vunpack.c.l.b16 %v294
      %v379 = vunpack.c.l.b16 %v295
      %v380 = vunpack.c.l.b16 %v296
      %v381 = vunpack.c.l.b16 %v297
      %v382 = vunpack.c.l.b16 %v298
      %v383 = vunpack.c.l.b16 %v299
      %v384 = vunpack.c.l.b16 %v300
      %v385 = vunpack.c.l.b16 %v301
      %v386 = vunpack.c.l.b16 %v302
      %v387 = vunpack.c.l.b16 %v303
      %v388 = vpack.c.b16 %v357, %v356
      %v389 = vpack.c.b16 %v359, %v358
      %v390 = vpack.c.b16 %v361, %v360
      %v391 = vpack.c.b16 %v363, %v362
      %v392 = vpack.c.b16 %v365, %v364
      %v393 = vpack.c.b16 %v367, %v366
      %v394 = vpack.c.b16 %v369, %v368
      %v395 = vpack.c.b16 %v371, %v370
      %v396 = vpack.c.b16 %v373, %v372
      %v397 = vpack.c.b16 %v375, %v374
      %v398 = vpack.c.b16 %v377, %v376
      %v399 = vpack.c.b16 %v379, %v378
      %v400 = vpack.c.b16 %v381, %v380
      %v401 = vpack.c.b16 %v383, %v382
      %v402 = vpack.c.b16 %v385, %v384
      %v403 = vpack.c.b16 %v387, %v386
      %420 = vmatprep.subr.bf16.mxu0 0
      %421 = vmatpush1.bf16.msra.mxu0 %v388
      %422 = vmatprep.subr.bf16.mxu0 0
      %423 = vmatpush1.bf16.msra.mxu0 %v389
      %424 = vmatprep.subr.bf16.mxu0 0
      %425 = vmatpush1.bf16.msra.mxu0 %v390
      %426 = vmatprep.subr.bf16.mxu0 0
      %427 = vmatpush1.bf16.msra.mxu0 %v391
      %428 = vmatprep.subr.bf16.mxu0 0
      %429 = vmatpush1.bf16.msra.mxu0 %v392
      %430 = vmatprep.subr.bf16.mxu0 0
      %431 = vmatpush1.bf16.msra.mxu0 %v393
      %432 = vmatprep.subr.bf16.mxu0 0
      %433 = vmatpush1.bf16.msra.mxu0 %v394
      %434 = vmatprep.subr.bf16.mxu0 0
      %435 = vmatpush1.bf16.msra.mxu0 %v395
      %436 = vmatprep.subr.bf16.mxu0 0
      %437 = vmatpush1.bf16.msra.mxu0 %v396
      %438 = vmatprep.subr.bf16.mxu0 0
      %439 = vmatpush1.bf16.msra.mxu0 %v397
      %440 = vmatprep.subr.bf16.mxu0 0
      %441 = vmatpush1.bf16.msra.mxu0 %v398
      %442 = vmatprep.subr.bf16.mxu0 0
      %443 = vmatpush1.bf16.msra.mxu0 %v399
      %444 = vmatprep.subr.bf16.mxu0 0
      %445 = vmatpush1.bf16.msra.mxu0 %v400
      %446 = vmatprep.subr.bf16.mxu0 0
      %447 = vmatpush1.bf16.msra.mxu0 %v401
      %448 = vmatprep.subr.bf16.mxu0 0
      %449 = vmatpush1.bf16.msra.mxu0 %v402
      %450 = vmatprep.subr.bf16.mxu0 0
      %451 = vmatpush1.bf16.msra.mxu0 %v403
      %452 = vmatprep.mubr.bf16.mxu0 %v317
      %453 = vmatmul.mubr.bf16.gmra.mrb[0].mxu0 %v316
      %v454 = vpop.f32.mrb[0].mxu0
      %v455 = vadd.f32 0.0, %v454
      %v456 = vpop.f32.mrb[0].mxu0
      %v457 = vpop.f32.mrb[0].mxu0
      %v458 = vadd.f32 0.0, %v457
      %v459 = vpop.f32.mrb[0].mxu0
      %460 = vmatprep.mubr.bf16.mxu0 %v319
      %461 = vmatmul.mubr.bf16.gmra.mrb[0].mxu0 %v318
      %v462 = vpop.f32.mrb[0].mxu0
      %v463 = vadd.f32 0.0, %v462
      %v464 = vpop.f32.mrb[0].mxu0
      %v465 = vpop.f32.mrb[0].mxu0
      %v466 = vadd.f32 0.0, %v465
      %v467 = vpop.f32.mrb[0].mxu0
      %468 = vdwg.mxu0
      %v471 = vunpack.c.l.b16 %v233
      %v472 = vunpack.c.h.b16 %v233
      %v473 = vunpack.c.l.b16 %v234
      %v474 = vunpack.c.h.b16 %v234
      %v475 = vpack.c.b16 %v473, %v471
      %v476 = vpack.c.b16 %v474, %v472
      %v511 = vunpack.c.l.b16 %v237
      %v512 = vunpack.c.l.b16 %v238
      %v513 = vunpack.c.l.b16 %v239
      %v514 = vunpack.c.l.b16 %v240
      %v515 = vunpack.c.l.b16 %v241
      %v516 = vunpack.c.l.b16 %v242
      %v517 = vunpack.c.l.b16 %v243
      %v518 = vunpack.c.l.b16 %v244
      %v519 = vunpack.c.l.b16 %v245
      %v520 = vunpack.c.l.b16 %v246
      %v521 = vunpack.c.l.b16 %v247
      %v522 = vunpack.c.l.b16 %v248
      %v523 = vunpack.c.l.b16 %v249
      %v524 = vunpack.c.l.b16 %v250
      %v525 = vunpack.c.l.b16 %v251
      %v526 = vunpack.c.l.b16 %v252
      %v527 = vunpack.c.l.b16 %v253
      %v528 = vunpack.c.l.b16 %v254
      %v529 = vunpack.c.l.b16 %v255
      %v530 = vunpack.c.l.b16 %v256
      %v531 = vunpack.c.l.b16 %v257
      %v532 = vunpack.c.l.b16 %v258
      %v533 = vunpack.c.l.b16 %v259
      %v534 = vunpack.c.l.b16 %v260
      %v535 = vunpack.c.l.b16 %v261
      %v536 = vunpack.c.l.b16 %v262
      %v537 = vunpack.c.l.b16 %v263
      %v538 = vunpack.c.l.b16 %v264
      %v539 = vunpack.c.l.b16 %v265
      %v540 = vunpack.c.l.b16 %v266
      %v541 = vunpack.c.l.b16 %v267
      %v542 = vunpack.c.l.b16 %v268
      %v543 = vpack.c.b16 %v512, %v511
      %v544 = vpack.c.b16 %v514, %v513
      %v545 = vpack.c.b16 %v516, %v515
      %v546 = vpack.c.b16 %v518, %v517
      %v547 = vpack.c.b16 %v520, %v519
      %v548 = vpack.c.b16 %v522, %v521
      %v549 = vpack.c.b16 %v524, %v523
      %v550 = vpack.c.b16 %v526, %v525
      %v551 = vpack.c.b16 %v528, %v527
      %v552 = vpack.c.b16 %v530, %v529
      %v553 = vpack.c.b16 %v532, %v531
      %v554 = vpack.c.b16 %v534, %v533
      %v555 = vpack.c.b16 %v536, %v535
      %v556 = vpack.c.b16 %v538, %v537
      %v557 = vpack.c.b16 %v540, %v539
      %v558 = vpack.c.b16 %v542, %v541
      %575 = vmatprep.subr.bf16.mxu0 0
      %576 = vmatpush1.bf16.msra.mxu0 %v543
      %577 = vmatprep.subr.bf16.mxu0 0
      %578 = vmatpush1.bf16.msra.mxu0 %v544
      %579 = vmatprep.subr.bf16.mxu0 0
      %580 = vmatpush1.bf16.msra.mxu0 %v545
      %581 = vmatprep.subr.bf16.mxu0 0
      %582 = vmatpush1.bf16.msra.mxu0 %v546
      %583 = vmatprep.subr.bf16.mxu0 0
      %584 = vmatpush1.bf16.msra.mxu0 %v547
      %585 = vmatprep.subr.bf16.mxu0 0
      %586 = vmatpush1.bf16.msra.mxu0 %v548
      %587 = vmatprep.subr.bf16.mxu0 0
      %588 = vmatpush1.bf16.msra.mxu0 %v549
      %589 = vmatprep.subr.bf16.mxu0 0
      %590 = vmatpush1.bf16.msra.mxu0 %v550
      %591 = vmatprep.subr.bf16.mxu0 0
      %592 = vmatpush1.bf16.msra.mxu0 %v551
      %593 = vmatprep.subr.bf16.mxu0 0
      %594 = vmatpush1.bf16.msra.mxu0 %v552
      %595 = vmatprep.subr.bf16.mxu0 0
      %596 = vmatpush1.bf16.msra.mxu0 %v553
      %597 = vmatprep.subr.bf16.mxu0 0
      %598 = vmatpush1.bf16.msra.mxu0 %v554
      %599 = vmatprep.subr.bf16.mxu0 0
      %600 = vmatpush1.bf16.msra.mxu0 %v555
      %601 = vmatprep.subr.bf16.mxu0 0
      %602 = vmatpush1.bf16.msra.mxu0 %v556
      %603 = vmatprep.subr.bf16.mxu0 0
      %604 = vmatpush1.bf16.msra.mxu0 %v557
      %605 = vmatprep.subr.bf16.mxu0 0
      %606 = vmatpush1.bf16.msra.mxu0 %v558
      %607 = vmatprep.mubr.bf16.mxu0 %v476
      %608 = vmatmul.mubr.bf16.gmra.mrb[0].mxu0 %v475
      %v609 = vpop.f32.mrb[0].mxu0
      %v610 = vadd.f32 %v455, %v609
      %v611 = vpop.f32.mrb[0].mxu0
      %v612 = vpop.f32.mrb[0].mxu0
      %v613 = vadd.f32 %v458, %v612
      %v614 = vpop.f32.mrb[0].mxu0
      %615 = vmatprep.mubr.bf16.mxu0 %v317
      %616 = vmatmul.mubr.bf16.gmra.mrb[0].mxu0 %v316
      %v617 = vpop.f32.mrb[0].mxu0
      %v618 = vadd.f32 %v463, %v617
      %v619 = vpop.f32.mrb[0].mxu0
      %v620 = vpop.f32.mrb[0].mxu0
      %v621 = vadd.f32 %v466, %v620
      %v622 = vpop.f32.mrb[0].mxu0
      %623 = vdwg.mxu0
      %v624 = vld [vmem:[%s2] sm:$0x1]
      %v626 = vlaneseq
      %v627 = vshrl.u32 %v626, 7
      %v628 = vsub.s32 0, %v627
      %v629 = vrot.slane %v624, %v628
      %v631 = vadd.f32 %v610, %v629
      %v632 = vadd.f32 %v613, %v629
      %v633 = vadd.f32 %v618, %v629
      %v634 = vadd.f32 %v621, %v629
      %v635 = vmul.f32 %v631, %v631
      %v636 = vmul.f32 %v632, %v632
      %v637 = vmul.f32 %v633, %v633
      %v638 = vmul.f32 %v634, %v634
      %639 = vadd.xlane.f32.xlu0 %v635
      %v640 = vpop.xlane.xlu0 %639
      %641 = vadd.xlane.f32.xlu0 %v636
      %v642 = vpop.xlane.xlu0 %641
      %643 = vadd.xlane.f32.xlu0 %v637
      %v644 = vpop.xlane.xlu0 %643
      %645 = vadd.xlane.f32.xlu0 %v638
      %v646 = vpop.xlane.xlu0 %645
      %v647 = vmul.f32 %v640, 0.03125
      %v648 = vmul.f32 %v642, 0.03125
      %v649 = vmul.f32 %v644, 0.03125
      %v650 = vmul.f32 %v646, 0.03125
      %v651 = vadd.f32 %v647, 1e-05
      %v652 = vadd.f32 %v648, 1e-05
      %v653 = vadd.f32 %v649, 1e-05
      %v654 = vadd.f32 %v650, 1e-05
      %v655 = vrsqrt.pop %v651
      %v656 = vrsqrt.pop %v652
      %v657 = vrsqrt.pop %v653
      %v658 = vrsqrt.pop %v654
      %v659 = vmul.f32 %v631, %v655
      %v660 = vmul.f32 %v632, %v656
      %v661 = vmul.f32 %v633, %v657
      %v662 = vmul.f32 %v634, %v658
      %v663 = vmax.f32 %v659, 0.0
      %v664 = vmax.f32 %v660, 0.0
      %v665 = vmax.f32 %v661, 0.0
      %v666 = vmax.f32 %v662, 0.0
      %v667 = vpack.c.bf16 %v664, %v663
      %v668 = vpack.c.bf16 %v666, %v665
      %v671 = vunpack.c.l.b16 %v667
      %v672 = vunpack.c.h.b16 %v667
      %v673 = vunpack.c.l.b16 %v668
      %v674 = vunpack.c.h.b16 %v668
      %v675 = vpack.c.b16 %v671, %v671
      %v676 = vpack.c.b16 %v672, %v672
      %v677 = vpack.c.b16 %v673, %v673
      %v678 = vpack.c.b16 %v674, %v674
      %vm679 = vsmask.f32 256
      %vm680 = vsmask.f32 4368
      %vm681 = vmor %vm679, %vm680
      %v683 = vshrl.u32 %v675, 16
      %v685 = vrot.slane %v683, 7
      %v686 = vshll.u32 %v675, 16
      %v688 = vor.u32 %v685, %v686
      %v689 = vrot.slane %v685, 4
      %v691 = vshrl.u32 %v676, 16
      %v693 = vrot.slane %v691, 7
      %v694 = vshll.u32 %v676, 16
      %v696 = vor.u32 %v693, %v694
      %v697 = vsel %vm681, %v689, %v696
      %v698 = vrot.slane %v693, 4
      %v700 = vshrl.u32 %v677, 16
      %v702 = vrot.slane %v700, 7
      %v703 = vshll.u32 %v677, 16
      %v705 = vor.u32 %v702, %v703
      %v706 = vsel %vm681, %v698, %v705
      %v707 = vrot.slane %v702, 4
      %v709 = vshrl.u32 %v678, 16
      %v711 = vrot.slane %v709, 7
      %v712 = vshll.u32 %v678, 16
      %v714 = vor.u32 %v711, %v712
      %v715 = vsel %vm681, %v707, %v714
      %v716 = vrot.slane %v711, 4
      %vm722 = vcmask 1043456
      %vm723 = vsmask.f32 7938
      %vm724 = vmand %vm722, %vm723
      %v725 = vld [vmem:[#allocation2 + $0x4] sm:$0xf]
      %v726 = vsel %vm724, %v688, %v725
      %727 = vst [vmem:[#allocation2 + $0x4] sm:$0xf] %v726
      %728 = vst [vmem:[#allocation2 + $0x8] sm:$0xf] %v697
      %729 = vst [vmem:[#allocation2 + $0xc] sm:$0xf] %v706
      %730 = vst [vmem:[#allocation2 + $0x10] sm:$0xf] %v715
      %vm731 = vcmask 1040384
      %vm732 = vmand %vm731, %vm679
      %v733 = vld [vmem:[#allocation2 + $0x14] sm:$0x1]
      %v734 = vsel %vm732, %v716, %v733
      %735 = vst [vmem:[#allocation2 + $0x14] sm:$0x1] %v734
      %v736 = vld [vmem:[#allocation2 + $0x8] sm:$0x7]
      %vm737 = vcmask 1042432
      %vm738 = vsmask.f32 2306
      %vm739 = vmand %vm737, %vm738
      %v740 = vld [vmem:[#allocation2] sm:$0x7]
      %v741 = vsel %vm739, %v736, %v740
      %742 = vst [vmem:[#allocation2] sm:$0x7] %v741
      %v743 = vld [vmem:[#allocation2 + $0xc] sm:$0x7]
      %v744 = vld [vmem:[#allocation2 + $0x14] sm:$0x7]
      %v745 = vsel %vm739, %v743, %v744
      %746 = vst [vmem:[#allocation2 + $0x14] sm:$0x7] %v745
      %v747 = vld [vmem:[#allocation2] sm:$0x2]
      %v749 = vrot.slane %v747, 5
      %v750 = vrot.slane %v749, 4
      %v752 = vld [vmem:[#allocation2] sm:$0x1]
      %v753 = vsel %vm732, %v750, %v752
      %754 = vst [vmem:[#allocation2] sm:$0x1] %v753
      %v755 = vld [vmem:[#allocation2] sm:$0x2]
      %v757 = vrot.slane %v755, 7
      %vm759 = vcmask 1042434
      %vm760 = vsmask.f32 7946
      %vm761 = vmand %vm759, %vm760
      %v762 = vld [vmem:[#allocation2] sm:$0x4]
      %v763 = vsel %vm761, %v757, %v762
      %764 = vst [vmem:[#allocation2] sm:$0x4] %v763
      %v765 = vld [vmem:[#allocation2 + $0x4] sm:$0x2]
      %v767 = vrot.slane %v765, 5
      %v768 = vrot.slane %v767, 4
      %v770 = vld [vmem:[#allocation2 + $0x4] sm:$0x1]
      %v771 = vsel %vm732, %v768, %v770
      %772 = vst [vmem:[#allocation2 + $0x4] sm:$0x1] %v771
      %v773 = vld [vmem:[#allocation2 + $0x4] sm:$0x2]
      %v775 = vrot.slane %v773, 7
      %v777 = vld [vmem:[#allocation2 + $0x4] sm:$0x4]
      %v778 = vsel %vm761, %v775, %v777
      %779 = vst [vmem:[#allocation2 + $0x4] sm:$0x4] %v778
      %v780 = vld [vmem:[#allocation2 + $0x8] sm:$0x2]
      %v782 = vrot.slane %v780, 5
      %v783 = vrot.slane %v782, 4
      %v785 = vld [vmem:[#allocation2 + $0x8] sm:$0x1]
      %v786 = vsel %vm732, %v783, %v785
      %787 = vst [vmem:[#allocation2 + $0x8] sm:$0x1] %v786
      %v788 = vld [vmem:[#allocation2 + $0x8] sm:$0x2]
      %v790 = vrot.slane %v788, 7
      %v792 = vld [vmem:[#allocation2 + $0x8] sm:$0x4]
      %v793 = vsel %vm761, %v790, %v792
      %794 = vst [vmem:[#allocation2 + $0x8] sm:$0x4] %v793
      %v795 = vld [vmem:[#allocation2 + $0xc] sm:$0x2]
      %v797 = vrot.slane %v795, 5
      %v798 = vrot.slane %v797, 4
      %v800 = vld [vmem:[#allocation2 + $0xc] sm:$0x1]
      %v801 = vsel %vm732, %v798, %v800
      %802 = vst [vmem:[#allocation2 + $0xc] sm:$0x1] %v801
      %v803 = vld [vmem:[#allocation2 + $0xc] sm:$0x2]
      %v805 = vrot.slane %v803, 7
      %v807 = vld [vmem:[#allocation2 + $0xc] sm:$0x4]
      %v808 = vsel %vm761, %v805, %v807
      %809 = vst [vmem:[#allocation2 + $0xc] sm:$0x4] %v808
      %v810 = vld [vmem:[#allocation2 + $0x10] sm:$0x2]
      %v812 = vrot.slane %v810, 5
      %v813 = vrot.slane %v812, 4
      %v815 = vld [vmem:[#allocation2 + $0x10] sm:$0x1]
      %v816 = vsel %vm732, %v813, %v815
      %817 = vst [vmem:[#allocation2 + $0x10] sm:$0x1] %v816
      %v818 = vld [vmem:[#allocation2 + $0x10] sm:$0x2]
      %v820 = vrot.slane %v818, 7
      %v822 = vld [vmem:[#allocation2 + $0x10] sm:$0x4]
      %v823 = vsel %vm761, %v820, %v822
      %824 = vst [vmem:[#allocation2 + $0x10] sm:$0x4] %v823
      %v825 = vld [vmem:[#allocation2 + $0x14] sm:$0x2]
      %v827 = vrot.slane %v825, 5
      %v828 = vrot.slane %v827, 4
      %v830 = vld [vmem:[#allocation2 + $0x14] sm:$0x1]
      %v831 = vsel %vm732, %v828, %v830
      %832 = vst [vmem:[#allocation2 + $0x14] sm:$0x1] %v831
      %v833 = vld [vmem:[#allocation2 + $0x14] sm:$0x2]
      %v835 = vrot.slane %v833, 7
      %v837 = vld [vmem:[#allocation2 + $0x14] sm:$0x4]
      %v838 = vsel %vm761, %v835, %v837
      %839 = vst [vmem:[#allocation2 + $0x14] sm:$0x4] %v838
      %v840 = vlaneseq
      %v841 = vand.u32 %v840, 127
      %v842 = vld [vmem:[#allocation2] sm:$0xf]
      %v843 = vld [vmem:[#allocation2 + $0x4] sm:$0xf]
      %v844 = vld [vmem:[#allocation2 + $0x8] sm:$0xf]
      %v845 = vld [vmem:[#allocation2 + $0xc] sm:$0xf]
      %v846 = vld [vmem:[%s3] sm:$0xf]
      %v847 = vld [vmem:[%s3 + $0x4] sm:$0xf]
      %v848 = vld [vmem:[%s3 + $0x8] sm:$0xf]
      %v849 = vld [vmem:[%s3 + $0xc] sm:$0xf]
      %v850 = vld [vmem:[%s3 + $0x10] sm:$0xf]
      %v851 = vld [vmem:[%s3 + $0x14] sm:$0xf]
      %v852 = vld [vmem:[%s3 + $0x18] sm:$0xf]
      %v853 = vld [vmem:[%s3 + $0x1c] sm:$0xf]
      %v854 = vld [vmem:[%s3 + $0x20] sm:$0xf]
      %v855 = vld [vmem:[%s3 + $0x24] sm:$0xf]
      %v856 = vld [vmem:[%s3 + $0x28] sm:$0xf]
      %v857 = vld [vmem:[%s3 + $0x2c] sm:$0xf]
      %v858 = vld [vmem:[%s3 + $0x30] sm:$0xf]
      %v859 = vld [vmem:[%s3 + $0x34] sm:$0xf]
      %v860 = vld [vmem:[%s3 + $0x38] sm:$0xf]
      %v861 = vld [vmem:[%s3 + $0x3c] sm:$0xf]
      %v862 = vld [vmem:[#allocation2 + $0x10] sm:$0x1]
      %s863 = scalar_lea.vmem %s3, 64
      %v864 = vld [vmem:[%s863] sm:$0xf]
      %v865 = vld [vmem:[%s863 + $0x4] sm:$0xf]
      %v866 = vld [vmem:[%s863 + $0x8] sm:$0xf]
      %v867 = vld [vmem:[%s863 + $0xc] sm:$0xf]
      %v868 = vld [vmem:[%s863 + $0x10] sm:$0xf]
      %v869 = vld [vmem:[%s863 + $0x14] sm:$0xf]
      %v870 = vld [vmem:[%s863 + $0x18] sm:$0xf]
      %v871 = vld [vmem:[%s863 + $0x1c] sm:$0xf]
      %v872 = vld [vmem:[%s863 + $0x20] sm:$0xf]
      %v873 = vld [vmem:[%s863 + $0x24] sm:$0xf]
      %v874 = vld [vmem:[%s863 + $0x28] sm:$0xf]
      %v875 = vld [vmem:[%s863 + $0x2c] sm:$0xf]
      %v876 = vld [vmem:[%s863 + $0x30] sm:$0xf]
      %v877 = vld [vmem:[%s863 + $0x34] sm:$0xf]
      %v878 = vld [vmem:[%s863 + $0x38] sm:$0xf]
      %v879 = vld [vmem:[%s863 + $0x3c] sm:$0xf]
      %v885 = vunpack.c.l.b16 %v842
      %v886 = vunpack.c.l.b16 %v843
      %v887 = vunpack.c.l.b16 %v844
      %v888 = vunpack.c.l.b16 %v845
      %v889 = vunpack.c.l.b16 %v862
      %v890 = vpack.c.b16 %v886, %v885
      %v891 = vpack.c.b16 %v888, %v887
      %v892 = vpack.c.b16 %v889, %v889
      %vm893 = vsmask.f32 7424
      %v895 = vshrl.u32 %v890, 16
      %v897 = vshll.u32 %v890, 16
      %v899 = vrot.slane %v897, 1
      %v900 = vor.u32 %v895, %v899
      %v902 = vshll.u32 %v891, 16
      %v904 = vrot.slane %v902, 1
      %v905 = vsel %vm893, %v900, %v904
      %v906 = vshrl.u32 %v891, 16
      %v908 = vor.u32 %v906, %v904
      %v910 = vshll.u32 %v892, 16
      %v912 = vrot.slane %v910, 1
      %v913 = vsel %vm893, %v908, %v912
      %v932 = vunpack.c.l.b16 %v864
      %v933 = vunpack.c.l.b16 %v865
      %v934 = vunpack.c.l.b16 %v866
      %v935 = vunpack.c.l.b16 %v867
      %v936 = vunpack.c.l.b16 %v868
      %v937 = vunpack.c.l.b16 %v869
      %v938 = vunpack.c.l.b16 %v870
      %v939 = vunpack.c.l.b16 %v871
      %v940 = vunpack.c.l.b16 %v872
      %v941 = vunpack.c.l.b16 %v873
      %v942 = vunpack.c.l.b16 %v874
      %v943 = vunpack.c.l.b16 %v875
      %v944 = vunpack.c.l.b16 %v876
      %v945 = vunpack.c.l.b16 %v877
      %v946 = vunpack.c.l.b16 %v878
      %v947 = vunpack.c.l.b16 %v879
      %v948 = vpack.c.b16 %v933, %v932
      %v949 = vpack.c.b16 %v935, %v934
      %v950 = vpack.c.b16 %v937, %v936
      %v951 = vpack.c.b16 %v939, %v938
      %v952 = vpack.c.b16 %v941, %v940
      %v953 = vpack.c.b16 %v943, %v942
      %v954 = vpack.c.b16 %v945, %v944
      %v955 = vpack.c.b16 %v947, %v946
      %964 = vmatprep.subr.bf16.mxu0 0
      %965 = vmatpush1.bf16.msra.mxu0 %v948
      %966 = vmatprep.subr.bf16.mxu0 0
      %967 = vmatpush1.bf16.msra.mxu0 %v949
      %968 = vmatprep.subr.bf16.mxu0 0
      %969 = vmatpush1.bf16.msra.mxu0 %v950
      %970 = vmatprep.subr.bf16.mxu0 0
      %971 = vmatpush1.bf16.msra.mxu0 %v951
      %972 = vmatprep.subr.bf16.mxu0 0
      %973 = vmatpush1.bf16.msra.mxu0 %v952
      %974 = vmatprep.subr.bf16.mxu0 0
      %975 = vmatpush1.bf16.msra.mxu0 %v953
      %976 = vmatprep.subr.bf16.mxu0 0
      %977 = vmatpush1.bf16.msra.mxu0 %v954
      %978 = vmatprep.subr.bf16.mxu0 0
      %979 = vmatpush1.bf16.msra.mxu0 %v955
      %980 = vmatprep.subr.bf16.mxu0 0
      %981 = vmatpush1.bf16.msra.mxu0 0
      %982 = vmatprep.subr.bf16.mxu0 0
      %983 = vmatpush1.bf16.msra.mxu0 0
      %984 = vmatprep.subr.bf16.mxu0 0
      %985 = vmatpush1.bf16.msra.mxu0 0
      %986 = vmatprep.subr.bf16.mxu0 0
      %987 = vmatpush1.bf16.msra.mxu0 0
      %988 = vmatprep.subr.bf16.mxu0 0
      %989 = vmatpush1.bf16.msra.mxu0 0
      %990 = vmatprep.subr.bf16.mxu0 0
      %991 = vmatpush1.bf16.msra.mxu0 0
      %992 = vmatprep.subr.bf16.mxu0 0
      %993 = vmatpush1.bf16.msra.mxu0 0
      %994 = vmatprep.subr.bf16.mxu0 0
      %995 = vmatpush1.bf16.msra.mxu0 0
      %996 = vmatprep.mubr.bf16.mxu0 0
      %997 = vmatmul.mubr.bf16.gmra.mrb[0].mxu0 %v905
      %v998 = vpop.f32.mrb[0].mxu0
      %v999 = vadd.f32 0.0, %v998
      %v1000 = vpop.f32.mrb[0].mxu0
      %v1001 = vpop.f32.mrb[0].mxu0
      %v1002 = vadd.f32 0.0, %v1001
      %v1003 = vpop.f32.mrb[0].mxu0
      %1004 = vmatprep.mubr.bf16.mxu0 0
      %1005 = vmatmul.mubr.bf16.gmra.mrb[0].mxu0 %v913
      %v1006 = vpop.f32.mrb[0].mxu0
      %v1007 = vadd.f32 0.0, %v1006
      %v1008 = vpop.f32.mrb[0].mxu0
      %v1009 = vpop.f32.mrb[0].mxu0
      %v1010 = vadd.f32 0.0, %v1009
      %v1011 = vpop.f32.mrb[0].mxu0
      %1012 = vdwg.mxu0
      %v1031 = vunpack.c.l.b16 %v846
      %v1032 = vunpack.c.l.b16 %v847
      %v1033 = vunpack.c.l.b16 %v848
      %v1034 = vunpack.c.l.b16 %v849
      %v1035 = vunpack.c.l.b16 %v850
      %v1036 = vunpack.c.l.b16 %v851
      %v1037 = vunpack.c.l.b16 %v852
      %v1038 = vunpack.c.l.b16 %v853
      %v1039 = vunpack.c.l.b16 %v854
      %v1040 = vunpack.c.l.b16 %v855
      %v1041 = vunpack.c.l.b16 %v856
      %v1042 = vunpack.c.l.b16 %v857
      %v1043 = vunpack.c.l.b16 %v858
      %v1044 = vunpack.c.l.b16 %v859
      %v1045 = vunpack.c.l.b16 %v860
      %v1046 = vunpack.c.l.b16 %v861
      %v1047 = vpack.c.b16 %v1032, %v1031
      %v1048 = vpack.c.b16 %v1034, %v1033
      %v1049 = vpack.c.b16 %v1036, %v1035
      %v1050 = vpack.c.b16 %v1038, %v1037
      %v1051 = vpack.c.b16 %v1040, %v1039
      %v1052 = vpack.c.b16 %v1042, %v1041
      %v1053 = vpack.c.b16 %v1044, %v1043
      %v1054 = vpack.c.b16 %v1046, %v1045
      %1063 = vmatprep.subr.bf16.mxu0 0
      %1064 = vmatpush1.bf16.msra.mxu0 %v1047
      %1065 = vmatprep.subr.bf16.mxu0 0
      %1066 = vmatpush1.bf16.msra.mxu0 %v1048
      %1067 = vmatprep.subr.bf16.mxu0 0
      %1068 = vmatpush1.bf16.msra.mxu0 %v1049
      %1069 = vmatprep.subr.bf16.mxu0 0
      %1070 = vmatpush1.bf16.msra.mxu0 %v1050
      %1071 = vmatprep.subr.bf16.mxu0 0
      %1072 = vmatpush1.bf16.msra.mxu0 %v1051
      %1073 = vmatprep.subr.bf16.mxu0 0
      %1074 = vmatpush1.bf16.msra.mxu0 %v1052
      %1075 = vmatprep.subr.bf16.mxu0 0
      %1076 = vmatpush1.bf16.msra.mxu0 %v1053
      %1077 = vmatprep.subr.bf16.mxu0 0
      %1078 = vmatpush1.bf16.msra.mxu0 %v1054
      %1079 = vmatprep.subr.bf16.mxu0 0
      %1080 = vmatpush1.bf16.msra.mxu0 0
      %1081 = vmatprep.subr.bf16.mxu0 0
      %1082 = vmatpush1.bf16.msra.mxu0 0
      %1083 = vmatprep.subr.bf16.mxu0 0
      %1084 = vmatpush1.bf16.msra.mxu0 0
      %1085 = vmatprep.subr.bf16.mxu0 0
      %1086 = vmatpush1.bf16.msra.mxu0 0
      %1087 = vmatprep.subr.bf16.mxu0 0
      %1088 = vmatpush1.bf16.msra.mxu0 0
      %1089 = vmatprep.subr.bf16.mxu0 0
      %1090 = vmatpush1.bf16.msra.mxu0 0
      %1091 = vmatprep.subr.bf16.mxu0 0
      %1092 = vmatpush1.bf16.msra.mxu0 0
      %1093 = vmatprep.subr.bf16.mxu0 0
      %1094 = vmatpush1.bf16.msra.mxu0 0
      %1095 = vmatprep.mubr.bf16.mxu0 0
      %1096 = vmatmul.mubr.bf16.gmra.mrb[0].mxu0 %v890
      %v1097 = vpop.f32.mrb[0].mxu0
      %v1098 = vadd.f32 %v999, %v1097
      %v1099 = vpop.f32.mrb[0].mxu0
      %v1100 = vpop.f32.mrb[0].mxu0
      %v1101 = vadd.f32 %v1002, %v1100
      %v1102 = vpop.f32.mrb[0].mxu0
      %1103 = vmatprep.mubr.bf16.mxu0 0
      %1104 = vmatmul.mubr.bf16.gmra.mrb[0].mxu0 %v891
      %v1105 = vpop.f32.mrb[0].mxu0
      %v1106 = vadd.f32 %v1007, %v1105
      %v1107 = vpop.f32.mrb[0].mxu0
      %v1108 = vpop.f32.mrb[0].mxu0
      %v1109 = vadd.f32 %v1010, %v1108
      %v1110 = vpop.f32.mrb[0].mxu0
      %1111 = vdwg.mxu0
      %v1112 = vld [vmem:[#allocation2] sm:$0xe]
      %s1113 = scalar_lea.vmem %s3, 128
      %v1114 = vld [vmem:[%s1113] sm:$0xf]
      %v1115 = vld [vmem:[%s1113 + $0x4] sm:$0xf]
      %v1116 = vld [vmem:[%s1113 + $0x8] sm:$0xf]
      %v1117 = vld [vmem:[%s1113 + $0xc] sm:$0xf]
      %v1118 = vld [vmem:[%s1113 + $0x10] sm:$0xf]
      %v1119 = vld [vmem:[%s1113 + $0x14] sm:$0xf]
      %v1120 = vld [vmem:[%s1113 + $0x18] sm:$0xf]
      %v1121 = vld [vmem:[%s1113 + $0x1c] sm:$0xf]
      %v1122 = vld [vmem:[%s1113 + $0x20] sm:$0xf]
      %v1123 = vld [vmem:[%s1113 + $0x24] sm:$0xf]
      %v1124 = vld [vmem:[%s1113 + $0x28] sm:$0xf]
      %v1125 = vld [vmem:[%s1113 + $0x2c] sm:$0xf]
      %v1126 = vld [vmem:[%s1113 + $0x30] sm:$0xf]
      %v1127 = vld [vmem:[%s1113 + $0x34] sm:$0xf]
      %v1128 = vld [vmem:[%s1113 + $0x38] sm:$0xf]
      %v1129 = vld [vmem:[%s1113 + $0x3c] sm:$0xf]
      %v1131 = vunpack.c.l.b16 %v1112
      %v1132 = vpack.c.b16 %v886, %v1131
      %vm1133 = vcmask 1046528
      %v1134 = vrot.slane %v1132, 1
      %v1135 = vrot.slane %v891, 1
      %v1136 = vsel %vm1133, %v1134, %v1135
      %v1137 = vrot.slane %v892, 1
      %v1138 = vsel %vm1133, %v1135, %v1137
      %v1157 = vunpack.c.l.b16 %v1114
      %v1158 = vunpack.c.l.b16 %v1115
      %v1159 = vunpack.c.l.b16 %v1116
      %v1160 = vunpack.c.l.b16 %v1117
      %v1161 = vunpack.c.l.b16 %v1118
      %v1162 = vunpack.c.l.b16 %v1119
      %v1163 = vunpack.c.l.b16 %v1120
      %v1164 = vunpack.c.l.b16 %v1121
      %v1165 = vunpack.c.l.b16 %v1122
      %v1166 = vunpack.c.l.b16 %v1123
      %v1167 = vunpack.c.l.b16 %v1124
      %v1168 = vunpack.c.l.b16 %v1125
      %v1169 = vunpack.c.l.b16 %v1126
      %v1170 = vunpack.c.l.b16 %v1127
      %v1171 = vunpack.c.l.b16 %v1128
      %v1172 = vunpack.c.l.b16 %v1129
      %v1173 = vpack.c.b16 %v1158, %v1157
      %v1174 = vpack.c.b16 %v1160, %v1159
      %v1175 = vpack.c.b16 %v1162, %v1161
      %v1176 = vpack.c.b16 %v1164, %v1163
      %v1177 = vpack.c.b16 %v1166, %v1165
      %v1178 = vpack.c.b16 %v1168, %v1167
      %v1179 = vpack.c.b16 %v1170, %v1169
      %v1180 = vpack.c.b16 %v1172, %v1171
      %1189 = vmatprep.subr.bf16.mxu0 0
      %1190 = vmatpush1.bf16.msra.mxu0 %v1173
      %1191 = vmatprep.subr.bf16.mxu0 0
      %1192 = vmatpush1.bf16.msra.mxu0 %v1174
      %1193 = vmatprep.subr.bf16.mxu0 0
      %1194 = vmatpush1.bf16.msra.mxu0 %v1175
      %1195 = vmatprep.subr.bf16.mxu0 0
      %1196 = vmatpush1.bf16.msra.mxu0 %v1176
      %1197 = vmatprep.subr.bf16.mxu0 0
      %1198 = vmatpush1.bf16.msra.mxu0 %v1177
      %1199 = vmatprep.subr.bf16.mxu0 0
      %1200 = vmatpush1.bf16.msra.mxu0 %v1178
      %1201 = vmatprep.subr.bf16.mxu0 0
      %1202 = vmatpush1.bf16.msra.mxu0 %v1179
      %1203 = vmatprep.subr.bf16.mxu0 0
      %1204 = vmatpush1.bf16.msra.mxu0 %v1180
      %1205 = vmatprep.subr.bf16.mxu0 0
      %1206 = vmatpush1.bf16.msra.mxu0 0
      %1207 = vmatprep.subr.bf16.mxu0 0
      %1208 = vmatpush1.bf16.msra.mxu0 0
      %1209 = vmatprep.subr.bf16.mxu0 0
      %1210 = vmatpush1.bf16.msra.mxu0 0
      %1211 = vmatprep.subr.bf16.mxu0 0
      %1212 = vmatpush1.bf16.msra.mxu0 0
      %1213 = vmatprep.subr.bf16.mxu0 0
      %1214 = vmatpush1.bf16.msra.mxu0 0
      %1215 = vmatprep.subr.bf16.mxu0 0
      %1216 = vmatpush1.bf16.msra.mxu0 0
      %1217 = vmatprep.subr.bf16.mxu0 0
      %1218 = vmatpush1.bf16.msra.mxu0 0
      %1219 = vmatprep.subr.bf16.mxu0 0
      %1220 = vmatpush1.bf16.msra.mxu0 0
      %1221 = vmatprep.mubr.bf16.mxu0 0
      %1222 = vmatmul.mubr.bf16.gmra.mrb[0].mxu0 %v1136
      %v1223 = vpop.f32.mrb[0].mxu0
      %v1224 = vadd.f32 0.0, %v1223
      %v1225 = vpop.f32.mrb[0].mxu0
      %v1226 = vpop.f32.mrb[0].mxu0
      %v1227 = vadd.f32 0.0, %v1226
      %v1228 = vpop.f32.mrb[0].mxu0
      %1229 = vmatprep.mubr.bf16.mxu0 0
      %1230 = vmatmul.mubr.bf16.gmra.mrb[0].mxu0 %v1138
      %v1231 = vpop.f32.mrb[0].mxu0
      %v1232 = vadd.f32 0.0, %v1231
      %v1233 = vpop.f32.mrb[0].mxu0
      %v1234 = vpop.f32.mrb[0].mxu0
      %v1235 = vadd.f32 0.0, %v1234
      %v1236 = vpop.f32.mrb[0].mxu0
      %1237 = vdwg.mxu0
      %v1238 = vadd.f32 %v1098, %v1224
      %v1239 = vadd.f32 %v1101, %v1227
      %v1240 = vadd.f32 %v1106, %v1232
      %v1241 = vadd.f32 %v1109, %v1235
      %v1242 = vld [vmem:[#allocation2 + $0x10] sm:$0xf]
      %s1243 = scalar_lea.vmem %s3, 192
      %v1244 = vld [vmem:[%s1243] sm:$0xf]
      %v1245 = vld [vmem:[%s1243 + $0x4] sm:$0xf]
      %v1246 = vld [vmem:[%s1243 + $0x8] sm:$0xf]
      %v1247 = vld [vmem:[%s1243 + $0xc] sm:$0xf]
      %v1248 = vld [vmem:[%s1243 + $0x10] sm:$0xf]
      %v1249 = vld [vmem:[%s1243 + $0x14] sm:$0xf]
      %v1250 = vld [vmem:[%s1243 + $0x18] sm:$0xf]
      %v1251 = vld [vmem:[%s1243 + $0x1c] sm:$0xf]
      %v1252 = vld [vmem:[%s1243 + $0x20] sm:$0xf]
      %v1253 = vld [vmem:[%s1243 + $0x24] sm:$0xf]
      %v1254 = vld [vmem:[%s1243 + $0x28] sm:$0xf]
      %v1255 = vld [vmem:[%s1243 + $0x2c] sm:$0xf]
      %v1256 = vld [vmem:[%s1243 + $0x30] sm:$0xf]
      %v1257 = vld [vmem:[%s1243 + $0x34] sm:$0xf]
      %v1258 = vld [vmem:[%s1243 + $0x38] sm:$0xf]
      %v1259 = vld [vmem:[%s1243 + $0x3c] sm:$0xf]
      %v1261 = vunpack.c.l.b16 %v1242
      %v1262 = vpack.c.b16 %v887, %v886
      %v1263 = vpack.c.b16 %v1261, %v888
      %v1282 = vunpack.c.l.b16 %v1244
      %v1283 = vunpack.c.l.b16 %v1245
      %v1284 = vunpack.c.l.b16 %v1246
      %v1285 = vunpack.c.l.b16 %v1247
      %v1286 = vunpack.c.l.b16 %v1248
      %v1287 = vunpack.c.l.b16 %v1249
      %v1288 = vunpack.c.l.b16 %v1250
      %v1289 = vunpack.c.l.b16 %v1251
      %v1290 = vunpack.c.l.b16 %v1252
      %v1291 = vunpack.c.l.b16 %v1253
      %v1292 = vunpack.c.l.b16 %v1254
      %v1293 = vunpack.c.l.b16 %v1255
      %v1294 = vunpack.c.l.b16 %v1256
      %v1295 = vunpack.c.l.b16 %v1257
      %v1296 = vunpack.c.l.b16 %v1258
      %v1297 = vunpack.c.l.b16 %v1259
      %v1298 = vpack.c.b16 %v1283, %v1282
      %v1299 = vpack.c.b16 %v1285, %v1284
      %v1300 = vpack.c.b16 %v1287, %v1286
      %v1301 = vpack.c.b16 %v1289, %v1288
      %v1302 = vpack.c.b16 %v1291, %v1290
      %v1303 = vpack.c.b16 %v1293, %v1292
      %v1304 = vpack.c.b16 %v1295, %v1294
      %v1305 = vpack.c.b16 %v1297, %v1296
      %1314 = vmatprep.subr.bf16.mxu0 0
      %1315 = vmatpush1.bf16.msra.mxu0 %v1298
      %1316 = vmatprep.subr.bf16.mxu0 0
      %1317 = vmatpush1.bf16.msra.mxu0 %v1299
      %1318 = vmatprep.subr.bf16.mxu0 0
      %1319 = vmatpush1.bf16.msra.mxu0 %v1300
      %1320 = vmatprep.subr.bf16.mxu0 0
      %1321 = vmatpush1.bf16.msra.mxu0 %v1301
      %1322 = vmatprep.subr.bf16.mxu0 0
      %1323 = vmatpush1.bf16.msra.mxu0 %v1302
      %1324 = vmatprep.subr.bf16.mxu0 0
      %1325 = vmatpush1.bf16.msra.mxu0 %v1303
      %1326 = vmatprep.subr.bf16.mxu0 0
      %1327 = vmatpush1.bf16.msra.mxu0 %v1304
      %1328 = vmatprep.subr.bf16.mxu0 0
      %1329 = vmatpush1.bf16.msra.mxu0 %v1305
      %1330 = vmatprep.subr.bf16.mxu0 0
      %1331 = vmatpush1.bf16.msra.mxu0 0
      %1332 = vmatprep.subr.bf16.mxu0 0
      %1333 = vmatpush1.bf16.msra.mxu0 0
      %1334 = vmatprep.subr.bf16.mxu0 0
      %1335 = vmatpush1.bf16.msra.mxu0 0
      %1336 = vmatprep.subr.bf16.mxu0 0
      %1337 = vmatpush1.bf16.msra.mxu0 0
      %1338 = vmatprep.subr.bf16.mxu0 0
      %1339 = vmatpush1.bf16.msra.mxu0 0
      %1340 = vmatprep.subr.bf16.mxu0 0
      %1341 = vmatpush1.bf16.msra.mxu0 0
      %1342 = vmatprep.subr.bf16.mxu0 0
      %1343 = vmatpush1.bf16.msra.mxu0 0
      %1344 = vmatprep.subr.bf16.mxu0 0
      %1345 = vmatpush1.bf16.msra.mxu0 0
      %1346 = vmatprep.mubr.bf16.mxu0 0
      %1347 = vmatmul.mubr.bf16.gmra.mrb[0].mxu0 %v1262
      %v1348 = vpop.f32.mrb[0].mxu0
      %v1349 = vadd.f32 0.0, %v1348
      %v1350 = vpop.f32.mrb[0].mxu0
      %v1351 = vpop.f32.mrb[0].mxu0
      %v1352 = vadd.f32 0.0, %v1351
      %v1353 = vpop.f32.mrb[0].mxu0
      %1354 = vmatprep.mubr.bf16.mxu0 0
      %1355 = vmatmul.mubr.bf16.gmra.mrb[0].mxu0 %v1263
      %v1356 = vpop.f32.mrb[0].mxu0
      %v1357 = vadd.f32 0.0, %v1356
      %v1358 = vpop.f32.mrb[0].mxu0
      %v1359 = vpop.f32.mrb[0].mxu0
      %v1360 = vadd.f32 0.0, %v1359
      %v1361 = vpop.f32.mrb[0].mxu0
      %1362 = vdwg.mxu0
      %v1363 = vadd.f32 %v1238, %v1349
      %v1364 = vadd.f32 %v1239, %v1352
      %v1365 = vadd.f32 %v1240, %v1357
      %v1366 = vadd.f32 %v1241, %v1360
      %v1367 = vld [vmem:[#allocation2 + $0x4] sm:$0xf]
      %v1368 = vld [vmem:[#allocation2 + $0x8] sm:$0xf]
      %v1369 = vld [vmem:[#allocation2 + $0xc] sm:$0xf]
      %v1370 = vld [vmem:[#allocation2 + $0x10] sm:$0xf]
      %v1371 = vld [vmem:[#allocation2 + $0x14] sm:$0x1]
      %s1372 = scalar_lea.vmem %s3, 256
      %v1373 = vld [vmem:[%s1372] sm:$0xf]
      %v1374 = vld [vmem:[%s1372 + $0x4] sm:$0xf]
      %v1375 = vld [vmem:[%s1372 + $0x8] sm:$0xf]
      %v1376 = vld [vmem:[%s1372 + $0xc] sm:$0xf]
      %v1377 = vld [vmem:[%s1372 + $0x10] sm:$0xf]
      %v1378 = vld [vmem:[%s1372 + $0x14] sm:$0xf]
      %v1379 = vld [vmem:[%s1372 + $0x18] sm:$0xf]
      %v1380 = vld [vmem:[%s1372 + $0x1c] sm:$0xf]
      %v1381 = vld [vmem:[%s1372 + $0x20] sm:$0xf]
      %v1382 = vld [vmem:[%s1372 + $0x24] sm:$0xf]
      %v1383 = vld [vmem:[%s1372 + $0x28] sm:$0xf]
      %v1384 = vld [vmem:[%s1372 + $0x2c] sm:$0xf]
      %v1385 = vld [vmem:[%s1372 + $0x30] sm:$0xf]
      %v1386 = vld [vmem:[%s1372 + $0x34] sm:$0xf]
      %v1387 = vld [vmem:[%s1372 + $0x38] sm:$0xf]
      %v1388 = vld [vmem:[%s1372 + $0x3c] sm:$0xf]
      %v1394 = vunpack.c.l.b16 %v1367
      %v1395 = vunpack.c.l.b16 %v1368
      %v1396 = vunpack.c.l.b16 %v1369
      %v1397 = vunpack.c.l.b16 %v1370
      %v1398 = vunpack.c.l.b16 %v1371
      %v1399 = vpack.c.b16 %v1395, %v1394
      %v1400 = vpack.c.b16 %v1397, %v1396
      %v1401 = vpack.c.b16 %v1398, %v1398
      %v1403 = vshrl.u32 %v1399, 16
      %v1405 = vshll.u32 %v1399, 16
      %v1407 = vrot.slane %v1405, 1
      %v1408 = vor.u32 %v1403, %v1407
      %v1410 = vshll.u32 %v1400, 16
      %v1412 = vrot.slane %v1410, 1
      %v1413 = vsel %vm893, %v1408, %v1412
      %v1414 = vshrl.u32 %v1400, 16
      %v1416 = vor.u32 %v1414, %v1412
      %v1418 = vshll.u32 %v1401, 16
      %v1420 = vrot.slane %v1418, 1
      %v1421 = vsel %vm893, %v1416, %v1420
      %v1440 = vunpack.c.l.b16 %v1373
      %v1441 = vunpack.c.l.b16 %v1374
      %v1442 = vunpack.c.l.b16 %v1375
      %v1443 = vunpack.c.l.b16 %v1376
      %v1444 = vunpack.c.l.b16 %v1377
      %v1445 = vunpack.c.l.b16 %v1378
      %v1446 = vunpack.c.l.b16 %v1379
      %v1447 = vunpack.c.l.b16 %v1380
      %v1448 = vunpack.c.l.b16 %v1381
      %v1449 = vunpack.c.l.b16 %v1382
      %v1450 = vunpack.c.l.b16 %v1383
      %v1451 = vunpack.c.l.b16 %v1384
      %v1452 = vunpack.c.l.b16 %v1385
      %v1453 = vunpack.c.l.b16 %v1386
      %v1454 = vunpack.c.l.b16 %v1387
      %v1455 = vunpack.c.l.b16 %v1388
      %v1456 = vpack.c.b16 %v1441, %v1440
      %v1457 = vpack.c.b16 %v1443, %v1442
      %v1458 = vpack.c.b16 %v1445, %v1444
      %v1459 = vpack.c.b16 %v1447, %v1446
      %v1460 = vpack.c.b16 %v1449, %v1448
      %v1461 = vpack.c.b16 %v1451, %v1450
      %v1462 = vpack.c.b16 %v1453, %v1452
      %v1463 = vpack.c.b16 %v1455, %v1454
      %1472 = vmatprep.subr.bf16.mxu0 0
      %1473 = vmatpush1.bf16.msra.mxu0 %v1456
      %1474 = vmatprep.subr.bf16.mxu0 0
      %1475 = vmatpush1.bf16.msra.mxu0 %v1457
      %1476 = vmatprep.subr.bf16.mxu0 0
      %1477 = vmatpush1.bf16.msra.mxu0 %v1458
      %1478 = vmatprep.subr.bf16.mxu0 0
      %1479 = vmatpush1.bf16.msra.mxu0 %v1459
      %1480 = vmatprep.subr.bf16.mxu0 0
      %1481 = vmatpush1.bf16.msra.mxu0 %v1460
      %1482 = vmatprep.subr.bf16.mxu0 0
      %1483 = vmatpush1.bf16.msra.mxu0 %v1461
      %1484 = vmatprep.subr.bf16.mxu0 0
      %1485 = vmatpush1.bf16.msra.mxu0 %v1462
      %1486 = vmatprep.subr.bf16.mxu0 0
      %1487 = vmatpush1.bf16.msra.mxu0 %v1463
      %1488 = vmatprep.subr.bf16.mxu0 0
      %1489 = vmatpush1.bf16.msra.mxu0 0
      %1490 = vmatprep.subr.bf16.mxu0 0
      %1491 = vmatpush1.bf16.msra.mxu0 0
      %1492 = vmatprep.subr.bf16.mxu0 0
      %1493 = vmatpush1.bf16.msra.mxu0 0
      %1494 = vmatprep.subr.bf16.mxu0 0
      %1495 = vmatpush1.bf16.msra.mxu0 0
      %1496 = vmatprep.subr.bf16.mxu0 0
      %1497 = vmatpush1.bf16.msra.mxu0 0
      %1498 = vmatprep.subr.bf16.mxu0 0
      %1499 = vmatpush1.bf16.msra.mxu0 0
      %1500 = vmatprep.subr.bf16.mxu0 0
      %1501 = vmatpush1.bf16.msra.mxu0 0
      %1502 = vmatprep.subr.bf16.mxu0 0
      %1503 = vmatpush1.bf16.msra.mxu0 0
      %1504 = vmatprep.mubr.bf16.mxu0 0
      %1505 = vmatmul.mubr.bf16.gmra.mrb[0].mxu0 %v1413
      %v1506 = vpop.f32.mrb[0].mxu0
      %v1507 = vadd.f32 0.0, %v1506
      %v1508 = vpop.f32.mrb[0].mxu0
      %v1509 = vpop.f32.mrb[0].mxu0
      %v1510 = vadd.f32 0.0, %v1509
      %v1511 = vpop.f32.mrb[0].mxu0
      %1512 = vmatprep.mubr.bf16.mxu0 0
      %1513 = vmatmul.mubr.bf16.gmra.mrb[0].mxu0 %v1421
      %v1514 = vpop.f32.mrb[0].mxu0
      %v1515 = vadd.f32 0.0, %v1514
      %v1516 = vpop.f32.mrb[0].mxu0
      %v1517 = vpop.f32.mrb[0].mxu0
      %v1518 = vadd.f32 0.0, %v1517
      %v1519 = vpop.f32.mrb[0].mxu0
      %1520 = vdwg.mxu0
      %v1521 = vadd.f32 %v1363, %v1507
      %v1522 = vadd.f32 %v1364, %v1510
      %v1523 = vadd.f32 %v1365, %v1515
      %v1524 = vadd.f32 %v1366, %v1518
      %v1525 = vld [vmem:[#allocation2 + $0x4] sm:$0xe]
      %s1526 = scalar_lea.vmem %s3, 320
      %v1527 = vld [vmem:[%s1526] sm:$0xf]
      %v1528 = vld [vmem:[%s1526 + $0x4] sm:$0xf]
      %v1529 = vld [vmem:[%s1526 + $0x8] sm:$0xf]
      %v1530 = vld [vmem:[%s1526 + $0xc] sm:$0xf]
      %v1531 = vld [vmem:[%s1526 + $0x10] sm:$0xf]
      %v1532 = vld [vmem:[%s1526 + $0x14] sm:$0xf]
      %v1533 = vld [vmem:[%s1526 + $0x18] sm:$0xf]
      %v1534 = vld [vmem:[%s1526 + $0x1c] sm:$0xf]
      %v1535 = vld [vmem:[%s1526 + $0x20] sm:$0xf]
      %v1536 = vld [vmem:[%s1526 + $0x24] sm:$0xf]
      %v1537 = vld [vmem:[%s1526 + $0x28] sm:$0xf]
      %v1538 = vld [vmem:[%s1526 + $0x2c] sm:$0xf]
      %v1539 = vld [vmem:[%s1526 + $0x30] sm:$0xf]
      %v1540 = vld [vmem:[%s1526 + $0x34] sm:$0xf]
      %v1541 = vld [vmem:[%s1526 + $0x38] sm:$0xf]
      %v1542 = vld [vmem:[%s1526 + $0x3c] sm:$0xf]
      %v1544 = vunpack.c.l.b16 %v1525
      %v1545 = vpack.c.b16 %v1395, %v1544
      %v1546 = vrot.slane %v1545, 1
      %v1547 = vrot.slane %v1400, 1
      %v1548 = vsel %vm1133, %v1546, %v1547
      %v1549 = vrot.slane %v1401, 1
      %v1550 = vsel %vm1133, %v1547, %v1549
      %v1569 = vunpack.c.l.b16 %v1527
      %v1570 = vunpack.c.l.b16 %v1528
      %v1571 = vunpack.c.l.b16 %v1529
      %v1572 = vunpack.c.l.b16 %v1530
      %v1573 = vunpack.c.l.b16 %v1531
      %v1574 = vunpack.c.l.b16 %v1532
      %v1575 = vunpack.c.l.b16 %v1533
      %v1576 = vunpack.c.l.b16 %v1534
      %v1577 = vunpack.c.l.b16 %v1535
      %v1578 = vunpack.c.l.b16 %v1536
      %v1579 = vunpack.c.l.b16 %v1537
      %v1580 = vunpack.c.l.b16 %v1538
      %v1581 = vunpack.c.l.b16 %v1539
      %v1582 = vunpack.c.l.b16 %v1540
      %v1583 = vunpack.c.l.b16 %v1541
      %v1584 = vunpack.c.l.b16 %v1542
      %v1585 = vpack.c.b16 %v1570, %v1569
      %v1586 = vpack.c.b16 %v1572, %v1571
      %v1587 = vpack.c.b16 %v1574, %v1573
      %v1588 = vpack.c.b16 %v1576, %v1575
      %v1589 = vpack.c.b16 %v1578, %v1577
      %v1590 = vpack.c.b16 %v1580, %v1579
      %v1591 = vpack.c.b16 %v1582, %v1581
      %v1592 = vpack.c.b16 %v1584, %v1583
      %1601 = vmatprep.subr.bf16.mxu0 0
      %1602 = vmatpush1.bf16.msra.mxu0 %v1585
      %1603 = vmatprep.subr.bf16.mxu0 0
      %1604 = vmatpush1.bf16.msra.mxu0 %v1586
      %1605 = vmatprep.subr.bf16.mxu0 0
      %1606 = vmatpush1.bf16.msra.mxu0 %v1587
      %1607 = vmatprep.subr.bf16.mxu0 0
      %1608 = vmatpush1.bf16.msra.mxu0 %v1588
      %1609 = vmatprep.subr.bf16.mxu0 0
      %1610 = vmatpush1.bf16.msra.mxu0 %v1589
      %1611 = vmatprep.subr.bf16.mxu0 0
      %1612 = vmatpush1.bf16.msra.mxu0 %v1590
      %1613 = vmatprep.subr.bf16.mxu0 0
      %1614 = vmatpush1.bf16.msra.mxu0 %v1591
      %1615 = vmatprep.subr.bf16.mxu0 0
      %1616 = vmatpush1.bf16.msra.mxu0 %v1592
      %1617 = vmatprep.subr.bf16.mxu0 0
      %1618 = vmatpush1.bf16.msra.mxu0 0
      %1619 = vmatprep.subr.bf16.mxu0 0
      %1620 = vmatpush1.bf16.msra.mxu0 0
      %1621 = vmatprep.subr.bf16.mxu0 0
      %1622 = vmatpush1.bf16.msra.mxu0 0
      %1623 = vmatprep.subr.bf16.mxu0 0
      %1624 = vmatpush1.bf16.msra.mxu0 0
      %1625 = vmatprep.subr.bf16.mxu0 0
      %1626 = vmatpush1.bf16.msra.mxu0 0
      %1627 = vmatprep.subr.bf16.mxu0 0
      %1628 = vmatpush1.bf16.msra.mxu0 0
      %1629 = vmatprep.subr.bf16.mxu0 0
      %1630 = vmatpush1.bf16.msra.mxu0 0
      %1631 = vmatprep.subr.bf16.mxu0 0
      %1632 = vmatpush1.bf16.msra.mxu0 0
      %1633 = vmatprep.mubr.bf16.mxu0 0
      %1634 = vmatmul.mubr.bf16.gmra.mrb[0].mxu0 %v1548
      %v1635 = vpop.f32.mrb[0].mxu0
      %v1636 = vadd.f32 0.0, %v1635
      %v1637 = vpop.f32.mrb[0].mxu0
      %v1638 = vpop.f32.mrb[0].mxu0
      %v1639 = vadd.f32 0.0, %v1638
      %v1640 = vpop.f32.mrb[0].mxu0
      %1641 = vmatprep.mubr.bf16.mxu0 0
      %1642 = vmatmul.mubr.bf16.gmra.mrb[0].mxu0 %v1550
      %v1643 = vpop.f32.mrb[0].mxu0
      %v1644 = vadd.f32 0.0, %v1643
      %v1645 = vpop.f32.mrb[0].mxu0
      %v1646 = vpop.f32.mrb[0].mxu0
      %v1647 = vadd.f32 0.0, %v1646
      %v1648 = vpop.f32.mrb[0].mxu0
      %1649 = vdwg.mxu0
      %v1650 = vadd.f32 %v1521, %v1636
      %v1651 = vadd.f32 %v1522, %v1639
      %v1652 = vadd.f32 %v1523, %v1644
      %v1653 = vadd.f32 %v1524, %v1647
      %v1654 = vld [vmem:[#allocation2 + $0x14] sm:$0xf]
      %s1655 = scalar_lea.vmem %s3, 384
      %v1656 = vld [vmem:[%s1655] sm:$0xf]
      %v1657 = vld [vmem:[%s1655 + $0x4] sm:$0xf]
      %v1658 = vld [vmem:[%s1655 + $0x8] sm:$0xf]
      %v1659 = vld [vmem:[%s1655 + $0xc] sm:$0xf]
      %v1660 = vld [vmem:[%s1655 + $0x10] sm:$0xf]
      %v1661 = vld [vmem:[%s1655 + $0x14] sm:$0xf]
      %v1662 = vld [vmem:[%s1655 + $0x18] sm:$0xf]
      %v1663 = vld [vmem:[%s1655 + $0x1c] sm:$0xf]
      %v1664 = vld [vmem:[%s1655 + $0x20] sm:$0xf]
      %v1665 = vld [vmem:[%s1655 + $0x24] sm:$0xf]
      %v1666 = vld [vmem:[%s1655 + $0x28] sm:$0xf]
      %v1667 = vld [vmem:[%s1655 + $0x2c] sm:$0xf]
      %v1668 = vld [vmem:[%s1655 + $0x30] sm:$0xf]
      %v1669 = vld [vmem:[%s1655 + $0x34] sm:$0xf]
      %v1670 = vld [vmem:[%s1655 + $0x38] sm:$0xf]
      %v1671 = vld [vmem:[%s1655 + $0x3c] sm:$0xf]
      %v1673 = vunpack.c.l.b16 %v1654
      %v1674 = vpack.c.b16 %v1396, %v1395
      %v1675 = vpack.c.b16 %v1673, %v1397
      %v1694 = vunpack.c.l.b16 %v1656
      %v1695 = vunpack.c.l.b16 %v1657
      %v1696 = vunpack.c.l.b16 %v1658
      %v1697 = vunpack.c.l.b16 %v1659
      %v1698 = vunpack.c.l.b16 %v1660
      %v1699 = vunpack.c.l.b16 %v1661
      %v1700 = vunpack.c.l.b16 %v1662
      %v1701 = vunpack.c.l.b16 %v1663
      %v1702 = vunpack.c.l.b16 %v1664
      %v1703 = vunpack.c.l.b16 %v1665
      %v1704 = vunpack.c.l.b16 %v1666
      %v1705 = vunpack.c.l.b16 %v1667
      %v1706 = vunpack.c.l.b16 %v1668
      %v1707 = vunpack.c.l.b16 %v1669
      %v1708 = vunpack.c.l.b16 %v1670
      %v1709 = vunpack.c.l.b16 %v1671
      %v1710 = vpack.c.b16 %v1695, %v1694
      %v1711 = vpack.c.b16 %v1697, %v1696
      %v1712 = vpack.c.b16 %v1699, %v1698
      %v1713 = vpack.c.b16 %v1701, %v1700
      %v1714 = vpack.c.b16 %v1703, %v1702
      %v1715 = vpack.c.b16 %v1705, %v1704
      %v1716 = vpack.c.b16 %v1707, %v1706
      %v1717 = vpack.c.b16 %v1709, %v1708
      %1726 = vmatprep.subr.bf16.mxu0 0
      %1727 = vmatpush1.bf16.msra.mxu0 %v1710
      %1728 = vmatprep.subr.bf16.mxu0 0
      %1729 = vmatpush1.bf16.msra.mxu0 %v1711
      %1730 = vmatprep.subr.bf16.mxu0 0
      %1731 = vmatpush1.bf16.msra.mxu0 %v1712
      %1732 = vmatprep.subr.bf16.mxu0 0
      %1733 = vmatpush1.bf16.msra.mxu0 %v1713
      %1734 = vmatprep.subr.bf16.mxu0 0
      %1735 = vmatpush1.bf16.msra.mxu0 %v1714
      %1736 = vmatprep.subr.bf16.mxu0 0
      %1737 = vmatpush1.bf16.msra.mxu0 %v1715
      %1738 = vmatprep.subr.bf16.mxu0 0
      %1739 = vmatpush1.bf16.msra.mxu0 %v1716
      %1740 = vmatprep.subr.bf16.mxu0 0
      %1741 = vmatpush1.bf16.msra.mxu0 %v1717
      %1742 = vmatprep.subr.bf16.mxu0 0
      %1743 = vmatpush1.bf16.msra.mxu0 0
      %1744 = vmatprep.subr.bf16.mxu0 0
      %1745 = vmatpush1.bf16.msra.mxu0 0
      %1746 = vmatprep.subr.bf16.mxu0 0
      %1747 = vmatpush1.bf16.msra.mxu0 0
      %1748 = vmatprep.subr.bf16.mxu0 0
      %1749 = vmatpush1.bf16.msra.mxu0 0
      %1750 = vmatprep.subr.bf16.mxu0 0
      %1751 = vmatpush1.bf16.msra.mxu0 0
      %1752 = vmatprep.subr.bf16.mxu0 0
      %1753 = vmatpush1.bf16.msra.mxu0 0
      %1754 = vmatprep.subr.bf16.mxu0 0
      %1755 = vmatpush1.bf16.msra.mxu0 0
      %1756 = vmatprep.subr.bf16.mxu0 0
      %1757 = vmatpush1.bf16.msra.mxu0 0
      %1758 = vmatprep.mubr.bf16.mxu0 0
      %1759 = vmatmul.mubr.bf16.gmra.mrb[0].mxu0 %v1674
      %v1760 = vpop.f32.mrb[0].mxu0
      %v1761 = vadd.f32 0.0, %v1760
      %v1762 = vpop.f32.mrb[0].mxu0
      %v1763 = vpop.f32.mrb[0].mxu0
      %v1764 = vadd.f32 0.0, %v1763
      %v1765 = vpop.f32.mrb[0].mxu0
      %1766 = vmatprep.mubr.bf16.mxu0 0
      %1767 = vmatmul.mubr.bf16.gmra.mrb[0].mxu0 %v1675
      %v1768 = vpop.f32.mrb[0].mxu0
      %v1769 = vadd.f32 0.0, %v1768
      %v1770 = vpop.f32.mrb[0].mxu0
      %v1771 = vpop.f32.mrb[0].mxu0
      %v1772 = vadd.f32 0.0, %v1771
      %v1773 = vpop.f32.mrb[0].mxu0
      %1774 = vdwg.mxu0
      %v1775 = vadd.f32 %v1650, %v1761
      %v1776 = vadd.f32 %v1651, %v1764
      %v1777 = vadd.f32 %v1652, %v1769
      %v1778 = vadd.f32 %v1653, %v1772
      %v1779 = vld [vmem:[#allocation2 + $0x8] sm:$0xf]
      %v1780 = vld [vmem:[#allocation2 + $0xc] sm:$0xf]
      %v1781 = vld [vmem:[#allocation2 + $0x10] sm:$0xf]
      %v1782 = vld [vmem:[#allocation2 + $0x14] sm:$0xf]
      %v1783 = vld [vmem:[#allocation2 + $0x18] sm:$0x1]
      %s1784 = scalar_lea.vmem %s3, 448
      %v1785 = vld [vmem:[%s1784] sm:$0xf]
      %v1786 = vld [vmem:[%s1784 + $0x4] sm:$0xf]
      %v1787 = vld [vmem:[%s1784 + $0x8] sm:$0xf]
      %v1788 = vld [vmem:[%s1784 + $0xc] sm:$0xf]
      %v1789 = vld [vmem:[%s1784 + $0x10] sm:$0xf]
      %v1790 = vld [vmem:[%s1784 + $0x14] sm:$0xf]
      %v1791 = vld [vmem:[%s1784 + $0x18] sm:$0xf]
      %v1792 = vld [vmem:[%s1784 + $0x1c] sm:$0xf]
      %v1793 = vld [vmem:[%s1784 + $0x20] sm:$0xf]
      %v1794 = vld [vmem:[%s1784 + $0x24] sm:$0xf]
      %v1795 = vld [vmem:[%s1784 + $0x28] sm:$0xf]
      %v1796 = vld [vmem:[%s1784 + $0x2c] sm:$0xf]
      %v1797 = vld [vmem:[%s1784 + $0x30] sm:$0xf]
      %v1798 = vld [vmem:[%s1784 + $0x34] sm:$0xf]
      %v1799 = vld [vmem:[%s1784 + $0x38] sm:$0xf]
      %v1800 = vld [vmem:[%s1784 + $0x3c] sm:$0xf]
      %v1806 = vunpack.c.l.b16 %v1779
      %v1807 = vunpack.c.l.b16 %v1780
      %v1808 = vunpack.c.l.b16 %v1781
      %v1809 = vunpack.c.l.b16 %v1782
      %v1810 = vunpack.c.l.b16 %v1783
      %v1811 = vpack.c.b16 %v1807, %v1806
      %v1812 = vpack.c.b16 %v1809, %v1808
      %v1813 = vpack.c.b16 %v1810, %v1810
      %v1815 = vshrl.u32 %v1811, 16
      %v1817 = vshll.u32 %v1811, 16
      %v1819 = vrot.slane %v1817, 1
      %v1820 = vor.u32 %v1815, %v1819
      %v1822 = vshll.u32 %v1812, 16
      %v1824 = vrot.slane %v1822, 1
      %v1825 = vsel %vm893, %v1820, %v1824
      %v1826 = vshrl.u32 %v1812, 16
      %v1828 = vor.u32 %v1826, %v1824
      %v1830 = vshll.u32 %v1813, 16
      %v1832 = vrot.slane %v1830, 1
      %v1833 = vsel %vm893, %v1828, %v1832
      %v1852 = vunpack.c.l.b16 %v1785
      %v1853 = vunpack.c.l.b16 %v1786
      %v1854 = vunpack.c.l.b16 %v1787
      %v1855 = vunpack.c.l.b16 %v1788
      %v1856 = vunpack.c.l.b16 %v1789
      %v1857 = vunpack.c.l.b16 %v1790
      %v1858 = vunpack.c.l.b16 %v1791
      %v1859 = vunpack.c.l.b16 %v1792
      %v1860 = vunpack.c.l.b16 %v1793
      %v1861 = vunpack.c.l.b16 %v1794
      %v1862 = vunpack.c.l.b16 %v1795
      %v1863 = vunpack.c.l.b16 %v1796
      %v1864 = vunpack.c.l.b16 %v1797
      %v1865 = vunpack.c.l.b16 %v1798
      %v1866 = vunpack.c.l.b16 %v1799
      %v1867 = vunpack.c.l.b16 %v1800
      %v1868 = vpack.c.b16 %v1853, %v1852
      %v1869 = vpack.c.b16 %v1855, %v1854
      %v1870 = vpack.c.b16 %v1857, %v1856
      %v1871 = vpack.c.b16 %v1859, %v1858
      %v1872 = vpack.c.b16 %v1861, %v1860
      %v1873 = vpack.c.b16 %v1863, %v1862
      %v1874 = vpack.c.b16 %v1865, %v1864
      %v1875 = vpack.c.b16 %v1867, %v1866
      %1884 = vmatprep.subr.bf16.mxu0 0
      %1885 = vmatpush1.bf16.msra.mxu0 %v1868
      %1886 = vmatprep.subr.bf16.mxu0 0
      %1887 = vmatpush1.bf16.msra.mxu0 %v1869
      %1888 = vmatprep.subr.bf16.mxu0 0
      %1889 = vmatpush1.bf16.msra.mxu0 %v1870
      %1890 = vmatprep.subr.bf16.mxu0 0
      %1891 = vmatpush1.bf16.msra.mxu0 %v1871
      %1892 = vmatprep.subr.bf16.mxu0 0
      %1893 = vmatpush1.bf16.msra.mxu0 %v1872
      %1894 = vmatprep.subr.bf16.mxu0 0
      %1895 = vmatpush1.bf16.msra.mxu0 %v1873
      %1896 = vmatprep.subr.bf16.mxu0 0
      %1897 = vmatpush1.bf16.msra.mxu0 %v1874
      %1898 = vmatprep.subr.bf16.mxu0 0
      %1899 = vmatpush1.bf16.msra.mxu0 %v1875
      %1900 = vmatprep.subr.bf16.mxu0 0
      %1901 = vmatpush1.bf16.msra.mxu0 0
      %1902 = vmatprep.subr.bf16.mxu0 0
      %1903 = vmatpush1.bf16.msra.mxu0 0
      %1904 = vmatprep.subr.bf16.mxu0 0
      %1905 = vmatpush1.bf16.msra.mxu0 0
      %1906 = vmatprep.subr.bf16.mxu0 0
      %1907 = vmatpush1.bf16.msra.mxu0 0
      %1908 = vmatprep.subr.bf16.mxu0 0
      %1909 = vmatpush1.bf16.msra.mxu0 0
      %1910 = vmatprep.subr.bf16.mxu0 0
      %1911 = vmatpush1.bf16.msra.mxu0 0
      %1912 = vmatprep.subr.bf16.mxu0 0
      %1913 = vmatpush1.bf16.msra.mxu0 0
      %1914 = vmatprep.subr.bf16.mxu0 0
      %1915 = vmatpush1.bf16.msra.mxu0 0
      %1916 = vmatprep.mubr.bf16.mxu0 0
      %1917 = vmatmul.mubr.bf16.gmra.mrb[0].mxu0 %v1825
      %v1918 = vpop.f32.mrb[0].mxu0
      %v1919 = vadd.f32 0.0, %v1918
      %v1920 = vpop.f32.mrb[0].mxu0
      %v1921 = vpop.f32.mrb[0].mxu0
      %v1922 = vadd.f32 0.0, %v1921
      %v1923 = vpop.f32.mrb[0].mxu0
      %1924 = vmatprep.mubr.bf16.mxu0 0
      %1925 = vmatmul.mubr.bf16.gmra.mrb[0].mxu0 %v1833
      %v1926 = vpop.f32.mrb[0].mxu0
      %v1927 = vadd.f32 0.0, %v1926
      %v1928 = vpop.f32.mrb[0].mxu0
      %v1929 = vpop.f32.mrb[0].mxu0
      %v1930 = vadd.f32 0.0, %v1929
      %v1931 = vpop.f32.mrb[0].mxu0
      %1932 = vdwg.mxu0
      %v1933 = vadd.f32 %v1775, %v1919
      %v1934 = vadd.f32 %v1776, %v1922
      %v1935 = vadd.f32 %v1777, %v1927
      %v1936 = vadd.f32 %v1778, %v1930
      %v1937 = vld [vmem:[#allocation2 + $0x8] sm:$0xe]
      %s1938 = scalar_lea.vmem %s3, 512
      %v1939 = vld [vmem:[%s1938] sm:$0xf]
      %v1940 = vld [vmem:[%s1938 + $0x4] sm:$0xf]
      %v1941 = vld [vmem:[%s1938 + $0x8] sm:$0xf]
      %v1942 = vld [vmem:[%s1938 + $0xc] sm:$0xf]
      %v1943 = vld [vmem:[%s1938 + $0x10] sm:$0xf]
      %v1944 = vld [vmem:[%s1938 + $0x14] sm:$0xf]
      %v1945 = vld [vmem:[%s1938 + $0x18] sm:$0xf]
      %v1946 = vld [vmem:[%s1938 + $0x1c] sm:$0xf]
      %v1947 = vld [vmem:[%s1938 + $0x20] sm:$0xf]
      %v1948 = vld [vmem:[%s1938 + $0x24] sm:$0xf]
      %v1949 = vld [vmem:[%s1938 + $0x28] sm:$0xf]
      %v1950 = vld [vmem:[%s1938 + $0x2c] sm:$0xf]
      %v1951 = vld [vmem:[%s1938 + $0x30] sm:$0xf]
      %v1952 = vld [vmem:[%s1938 + $0x34] sm:$0xf]
      %v1953 = vld [vmem:[%s1938 + $0x38] sm:$0xf]
      %v1954 = vld [vmem:[%s1938 + $0x3c] sm:$0xf]
      %v1956 = vunpack.c.l.b16 %v1937
      %v1957 = vpack.c.b16 %v1807, %v1956
      %v1958 = vrot.slane %v1957, 1
      %v1959 = vrot.slane %v1812, 1
      %v1960 = vsel %vm1133, %v1958, %v1959
      %v1961 = vrot.slane %v1813, 1
      %v1962 = vsel %vm1133, %v1959, %v1961
      %v1981 = vunpack.c.l.b16 %v1939
      %v1982 = vunpack.c.l.b16 %v1940
      %v1983 = vunpack.c.l.b16 %v1941
      %v1984 = vunpack.c.l.b16 %v1942
      %v1985 = vunpack.c.l.b16 %v1943
      %v1986 = vunpack.c.l.b16 %v1944
      %v1987 = vunpack.c.l.b16 %v1945
      %v1988 = vunpack.c.l.b16 %v1946
      %v1989 = vunpack.c.l.b16 %v1947
      %v1990 = vunpack.c.l.b16 %v1948
      %v1991 = vunpack.c.l.b16 %v1949
      %v1992 = vunpack.c.l.b16 %v1950
      %v1993 = vunpack.c.l.b16 %v1951
      %v1994 = vunpack.c.l.b16 %v1952
      %v1995 = vunpack.c.l.b16 %v1953
      %v1996 = vunpack.c.l.b16 %v1954
      %v1997 = vpack.c.b16 %v1982, %v1981
      %v1998 = vpack.c.b16 %v1984, %v1983
      %v1999 = vpack.c.b16 %v1986, %v1985
      %v2000 = vpack.c.b16 %v1988, %v1987
      %v2001 = vpack.c.b16 %v1990, %v1989
      %v2002 = vpack.c.b16 %v1992, %v1991
      %v2003 = vpack.c.b16 %v1994, %v1993
      %v2004 = vpack.c.b16 %v1996, %v1995
      %2013 = vmatprep.subr.bf16.mxu0 0
      %2014 = vmatpush1.bf16.msra.mxu0 %v1997
      %2015 = vmatprep.subr.bf16.mxu0 0
      %2016 = vmatpush1.bf16.msra.mxu0 %v1998
      %2017 = vmatprep.subr.bf16.mxu0 0
      %2018 = vmatpush1.bf16.msra.mxu0 %v1999
      %2019 = vmatprep.subr.bf16.mxu0 0
      %2020 = vmatpush1.bf16.msra.mxu0 %v2000
      %2021 = vmatprep.subr.bf16.mxu0 0
      %2022 = vmatpush1.bf16.msra.mxu0 %v2001
      %2023 = vmatprep.subr.bf16.mxu0 0
      %2024 = vmatpush1.bf16.msra.mxu0 %v2002
      %2025 = vmatprep.subr.bf16.mxu0 0
      %2026 = vmatpush1.bf16.msra.mxu0 %v2003
      %2027 = vmatprep.subr.bf16.mxu0 0
      %2028 = vmatpush1.bf16.msra.mxu0 %v2004
      %2029 = vmatprep.subr.bf16.mxu0 0
      %2030 = vmatpush1.bf16.msra.mxu0 0
      %2031 = vmatprep.subr.bf16.mxu0 0
      %2032 = vmatpush1.bf16.msra.mxu0 0
      %2033 = vmatprep.subr.bf16.mxu0 0
      %2034 = vmatpush1.bf16.msra.mxu0 0
      %2035 = vmatprep.subr.bf16.mxu0 0
      %2036 = vmatpush1.bf16.msra.mxu0 0
      %2037 = vmatprep.subr.bf16.mxu0 0
      %2038 = vmatpush1.bf16.msra.mxu0 0
      %2039 = vmatprep.subr.bf16.mxu0 0
      %2040 = vmatpush1.bf16.msra.mxu0 0
      %2041 = vmatprep.subr.bf16.mxu0 0
      %2042 = vmatpush1.bf16.msra.mxu0 0
      %2043 = vmatprep.subr.bf16.mxu0 0
      %2044 = vmatpush1.bf16.msra.mxu0 0
      %2045 = vmatprep.mubr.bf16.mxu0 0
      %2046 = vmatmul.mubr.bf16.gmra.mrb[0].mxu0 %v1960
      %v2047 = vpop.f32.mrb[0].mxu0
      %v2048 = vadd.f32 0.0, %v2047
      %v2049 = vpop.f32.mrb[0].mxu0
      %v2050 = vpop.f32.mrb[0].mxu0
      %v2051 = vadd.f32 0.0, %v2050
      %v2052 = vpop.f32.mrb[0].mxu0
      %2053 = vmatprep.mubr.bf16.mxu0 0
      %2054 = vmatmul.mubr.bf16.gmra.mrb[0].mxu0 %v1962
      %v2055 = vpop.f32.mrb[0].mxu0
      %v2056 = vadd.f32 0.0, %v2055
      %v2057 = vpop.f32.mrb[0].mxu0
      %v2058 = vpop.f32.mrb[0].mxu0
      %v2059 = vadd.f32 0.0, %v2058
      %v2060 = vpop.f32.mrb[0].mxu0
      %2061 = vdwg.mxu0
      %v2062 = vadd.f32 %v1933, %v2048
      %v2063 = vadd.f32 %v1934, %v2051
      %v2064 = vadd.f32 %v1935, %v2056
      %v2065 = vadd.f32 %v1936, %v2059
      %v2066 = vld [vmem:[%s4] sm:$0x1]
      %v2068 = vlaneseq
      %v2069 = vshrl.u32 %v2068, 7
      %v2070 = vsub.s32 0, %v2069
      %v2071 = vrot.slane %v2066, %v2070
      %v2073 = vadd.f32 %v2062, %v2071
      %v2074 = vadd.f32 %v2063, %v2071
      %v2075 = vadd.f32 %v2064, %v2071
      %v2076 = vadd.f32 %v2065, %v2071
      %v2077 = vmul.f32 %v2073, %v2073
      %v2078 = vmul.f32 %v2074, %v2074
      %v2079 = vmul.f32 %v2075, %v2075
      %v2080 = vmul.f32 %v2076, %v2076
      %2081 = vadd.xlane.f32.xlu0 %v2077
      %v2082 = vpop.xlane.xlu0 %2081
      %2083 = vadd.xlane.f32.xlu0 %v2078
      %v2084 = vpop.xlane.xlu0 %2083
      %2085 = vadd.xlane.f32.xlu0 %v2079
      %v2086 = vpop.xlane.xlu0 %2085
      %2087 = vadd.xlane.f32.xlu0 %v2080
      %v2088 = vpop.xlane.xlu0 %2087
      %v2089 = vmul.f32 %v2082, 0.03125
      %v2090 = vmul.f32 %v2084, 0.03125
      %v2091 = vmul.f32 %v2086, 0.03125
      %v2092 = vmul.f32 %v2088, 0.03125
      %v2093 = vadd.f32 %v2089, 1e-05
      %v2094 = vadd.f32 %v2090, 1e-05
      %v2095 = vadd.f32 %v2091, 1e-05
      %v2096 = vadd.f32 %v2092, 1e-05
      %v2097 = vrsqrt.pop %v2093
      %v2098 = vrsqrt.pop %v2094
      %v2099 = vrsqrt.pop %v2095
      %v2100 = vrsqrt.pop %v2096
      %v2101 = vmul.f32 %v2073, %v2097
      %v2102 = vmul.f32 %v2074, %v2098
      %v2103 = vmul.f32 %v2075, %v2099
      %v2104 = vmul.f32 %v2076, %v2100
      %v2105 = vld [vmem:[%s219 + $0x8] sm:$0xf]
      %v2106 = vld [vmem:[%s219 + $0x10] sm:$0xf]
      %v2107 = vld [vmem:[%s219 + $0x18] sm:$0xf]
      %v2108 = vld [vmem:[%s219 + $0x20] sm:$0xf]
      %v2109 = vld [vmem:[%s219 + $0x28] sm:$0x1]
      %v2110 = vunpack.c.l.bf16 %v2105
      %v2111 = vunpack.c.l.bf16 %v2106
      %v2112 = vunpack.c.l.bf16 %v2107
      %v2113 = vunpack.c.l.bf16 %v2108
      %v2114 = vunpack.c.l.bf16 %v2109
      %vm2115 = vcmp.lt.s32.totalorder %v841, 32
      %v2116 = vsel %vm2115, %v2110, 0.0
      %v2117 = vsel %vm2115, %v2111, 0.0
      %v2118 = vsel %vm2115, %v2112, 0.0
      %v2119 = vsel %vm2115, %v2113, 0.0
      %v2120 = vsel %vm2115, %v2114, 0.0
      %vm2126 = vcmask 1046528
      %v2127 = vrot.slane %v2116, 1
      %v2128 = vrot.slane %v2117, 1
      %v2129 = vsel %vm2126, %v2127, %v2128
      %v2130 = vrot.slane %v2118, 1
      %v2131 = vsel %vm2126, %v2128, %v2130
      %v2132 = vrot.slane %v2119, 1
      %v2133 = vsel %vm2126, %v2130, %v2132
      %v2134 = vrot.slane %v2120, 1
      %v2135 = vsel %vm2126, %v2132, %v2134
      %v2140 = vadd.f32 %v2101, %v2129
      %v2141 = vadd.f32 %v2102, %v2131
      %v2142 = vadd.f32 %v2103, %v2133
      %v2143 = vadd.f32 %v2104, %v2135
      %v2144 = vpack.c.bf16 %v2141, %v2140
      %v2145 = vpack.c.bf16 %v2143, %v2142
      %v2148 = vunpack.c.l.b16 %v2144
      %v2149 = vunpack.c.h.b16 %v2144
      %v2150 = vunpack.c.l.b16 %v2145
      %v2151 = vunpack.c.h.b16 %v2145
      %v2152 = vpack.c.b16 %v2148, %v2148
      %v2153 = vpack.c.b16 %v2149, %v2149
      %v2154 = vpack.c.b16 %v2150, %v2150
      %v2155 = vpack.c.b16 %v2151, %v2151
      %2160 = vst [vmem:[%s224] sm:$0xf] %v2152
      %2161 = vst [vmem:[%s224 + $0x4] sm:$0xf] %v2153
      %2162 = vst [vmem:[%s224 + $0x8] sm:$0xf] %v2154
      %2163 = vst [vmem:[%s224 + $0xc] sm:$0xf] %v2155
      %p2164 = scmp.lt.s32.totalorder %s16, 1
      %s2165 = scalar_select %p2164, %s16, 1
      %s2166 = smul.addr %s2165, 4
      %s2167 = smul.addr %s2166, 4
      %s2168 = scalar_lea.vmem %s5, %s2167
      // Predicated region
      $region41: #{gddc_encoder_forward.13} parent=39 // pred_check
        %p2169 = pneg %p144
      $region42: #{gddc_encoder_forward.13} parent=39 // pred_check_branch
        %2171 = sbr.rel (%p2169) target = $region44
      $region43: #{gddc_encoder_forward.13} parent=39 // pred_region
        _
      $region44: #{gddc_encoder_forward.13} parent=39 // pred_fallthru
        _
    $region40: #{gddc_encoder_forward.13} parent=5 // pred_fallthru
      _
    %p2172 = scmp.le.s32.totalorder 2, %s11
    // Predicated region
    $region45: #{gddc_encoder_forward.13} parent=5 // pred_check
      %p2173 = pneg %p2172
    $region46: #{gddc_encoder_forward.13} parent=5 // pred_check_branch
      %2175 = sbr.rel (%p2173) target = $region48
    $region47: #{gddc_encoder_forward.13} parent=5 // pred_region
      %s2176 = ssub.s32 %s11, 2
      // Predicated region
      $region49: #{gddc_encoder_forward.13} parent=47 // pred_check
        %p2177 = pneg %p150
      $region50: #{gddc_encoder_forward.13} parent=47 // pred_check_branch
        %2179 = sbr.rel (%p2177) target = $region52
      $region51: #{gddc_encoder_forward.13} parent=47 // pred_region
        %p2180 = scmp.lt.s32.totalorder %s17, 1
        %s2181 = scalar_select %p2180, %s17, 1
        %s2182 = smul.addr %s2181, 4
        %s2183 = smul.addr %s2182, 4
        %s2184 = scalar_lea.vmem %s5, %s2183
      $region52: #{gddc_encoder_forward.13} parent=47 // pred_fallthru
        _
    $region48: #{gddc_encoder_forward.13} parent=5 // pred_fallthru
      _
  $region6: #{gddc_encoder_forward.13} parent=0 // loop_footer
    %s15 = sadd.s32 1, %s11
  $region7: #{gddc_encoder_forward.13} parent=0 // loop_footer_branch
    %10 = sbr.rel target = $region3
  $region8: #{gddc_encoder_forward.13} parent=0 // loop_exit
    _

// kernel: gddc_encoder_forward.16
$region0: #{gddc_encoder_forward.16}
  #allocation0 [shape = 'u32[]', space=smem, size = 0x4, offset = 0x4, fixed_abs, tag = 'smem constant byte address 0x4 - core index']
  #allocation1 [shape = 'u32[144,128]{1,0:T(1,128)}', space=vmem, size = 0x12000, scoped, tag = 'internal scratch']
  %s0 = inlined_call_operand.vmem [shape: bf16[2,80,256], index: 0, kind: input, shape index: {}]
  %s1 = inlined_call_operand.vmem [shape: bf16[3,256,128], index: 1, kind: input, shape index: {}]
  %s2 = inlined_call_operand.vmem [shape: f32[1,128], index: 2, kind: input, shape index: {}]
  %s3 = inlined_call_operand.vmem [shape: bf16[2,16,128], index: 3, kind: output, shape index: {}]
  %s4 = sld [smem:[#allocation0]]
  $region45: #{gddc_encoder_forward.16} parent=0
    _
  %s6 = ssub.s32 1, %s4
  %s7 = scalar_select 0, %s6, %s4
  loop: start=0, step=1, limit=4
  $region2: #{gddc_encoder_forward.16} parent=0 // loop_pre_header
    _
  $region3: #{gddc_encoder_forward.16} parent=0 // loop_header
    %s9 = sphi 0, %s13
    %p10 = scmp.ge.s32.totalorder %s9, 4
    %s16 = sphi 0, %s28
    %s17 = sphi 0, %s24
    %s18 = sphi 0, %s16
    %s19 = sphi 0, %s17
    %s20 = sphi 0, %s18
    %s21 = sphi 0, %s19
    %s31 = sphi 0, %s33
    %s34 = sphi 0, %s31
    %s35 = sphi 0, %s34
    %s51 = sphi 0, %s35
    %s55 = sphi 0, %s55
    %s57 = sphi 0, %s55
    %s58 = sphi 0, %s57
    %s72 = sphi 0, %s58
    %s76 = sphi 0, %s76
    %s78 = sphi 0, %s76
    %s79 = sphi 0, %s78
    %s93 = sphi 0, %s79
    %s101 = sphi 0, %s103
    %s104 = sphi 0, %s101
    %s105 = sphi 0, %s104
    %s121 = sphi 0, %s105
  $region4: #{gddc_encoder_forward.16} parent=0 // loop_header_branch
    %12 = sbr.rel (%p10) target = $region8
  $region5: #{gddc_encoder_forward.16} parent=0 // loop_body
    %s14 = ssub.s32 %s9, 1
    %s15 = ssub.s32 %s9, 2
    %s22 = sadd.s32 1, %s17
    %p23 = scmp.ge.s32.totalorder %s22, 1
    %s24 = scalar_select %p23, 0, %s22
    %s25 = sadd.s32 1, %s16
    %s26 = scalar_select %p23, %s25, %s16
    %p27 = scmp.ge.s32.totalorder %s26, 2
    %s28 = scalar_select %p27, 0, %s26
    %s29 = ssub.s32 %s16, %s28
    %p30 = scmp.eq.s32.totalorder %s29, 0
    %s32 = sadd.s32 %s31, 1
    %s33 = scalar_select %p30, %s31, %s32
    %p36 = pneg %p30
    %p37 = scmp.eq.s32.totalorder %s9, 1
    %p38 = por %p36, %p37
    %p39 = scmp.ne.s32.totalorder %s31, %s34
    %p40 = scmp.eq.s32.totalorder %s9, 0
    %p41 = por %p39, %p40
    %p42 = scmp.ne.s32.totalorder %s31, %s34
    %p43 = scmp.eq.s32.totalorder %s14, 1
    %p44 = por %p42, %p43
    %p45 = scmp.ne.s32.totalorder %s34, %s35
    %p46 = scmp.eq.s32.totalorder %s14, 0
    %p47 = por %p45, %p46
    %p48 = scmp.ne.s32.totalorder %s34, %s35
    %p49 = scmp.eq.s32.totalorder %s15, 1
    %p50 = por %p48, %p49
    %p52 = scmp.ne.s32.totalorder %s35, %s51
    %p53 = scmp.eq.s32.totalorder %s15, 0
    %p54 = por %p52, %p53
    %s56 = sadd.s32 %s55, 1
    %p59 = scmp.eq.s32.totalorder %s9, 1
    %p60 = scmp.ne.s32.totalorder %s55, %s57
    %p61 = scmp.eq.s32.totalorder %s9, 0
    %p62 = por %p60, %p61
    %p63 = scmp.ne.s32.totalorder %s55, %s57
    %p64 = scmp.eq.s32.totalorder %s14, 1
    %p65 = por %p63, %p64
    %p66 = scmp.ne.s32.totalorder %s57, %s58
    %p67 = scmp.eq.s32.totalorder %s14, 0
    %p68 = por %p66, %p67
    %p69 = scmp.ne.s32.totalorder %s57, %s58
    %p70 = scmp.eq.s32.totalorder %s15, 1
    %p71 = por %p69, %p70
    %p73 = scmp.ne.s32.totalorder %s58, %s72
    %p74 = scmp.eq.s32.totalorder %s15, 0
    %p75 = por %p73, %p74
    %s77 = sadd.s32 %s76, 1
    %p80 = scmp.eq.s32.totalorder %s9, 1
    %p81 = scmp.ne.s32.totalorder %s76, %s78
    %p82 = scmp.eq.s32.totalorder %s9, 0
    %p83 = por %p81, %p82
    %p84 = scmp.ne.s32.totalorder %s76, %s78
    %p85 = scmp.eq.s32.totalorder %s14, 1
    %p86 = por %p84, %p85
    %p87 = scmp.ne.s32.totalorder %s78, %s79
    %p88 = scmp.eq.s32.totalorder %s14, 0
    %p89 = por %p87, %p88
    %p90 = scmp.ne.s32.totalorder %s78, %s79
    %p91 = scmp.eq.s32.totalorder %s15, 1
    %p92 = por %p90, %p91
    %p94 = scmp.ne.s32.totalorder %s79, %s93
    %p95 = scmp.eq.s32.totalorder %s15, 0
    %p96 = por %p94, %p95
    %s97 = ssub.s32 %s16, %s28
    %s98 = ssub.s32 %s17, %s24
    %s99 = sor.u32 %s97, %s98
    %p100 = scmp.eq.s32.totalorder %s99, 0
    %s102 = sadd.s32 %s101, 1
    %s103 = scalar_select %p100, %s101, %s102
    %p106 = pneg %p100
    %p107 = scmp.eq.s32.totalorder %s9, 1
    %p108 = por %p106, %p107
    %p109 = scmp.ne.s32.totalorder %s101, %s104
    %p110 = scmp.eq.s32.totalorder %s9, 0
    %p111 = por %p109, %p110
    %p112 = scmp.ne.s32.totalorder %s101, %s104
    %p113 = scmp.eq.s32.totalorder %s14, 1
    %p114 = por %p112, %p113
    %p115 = scmp.ne.s32.totalorder %s104, %s105
    %p116 = scmp.eq.s32.totalorder %s14, 0
    %p117 = por %p115, %p116
    %p118 = scmp.ne.s32.totalorder %s104, %s105
    %p119 = scmp.eq.s32.totalorder %s15, 1
    %p120 = por %p118, %p119
    %p122 = scmp.ne.s32.totalorder %s105, %s121
    %p123 = scmp.eq.s32.totalorder %s15, 0
    %p124 = por %p122, %p123
    %p125 = scmp.le.s32.totalorder 1, %s9
    %p126 = scmp.lt.s32.totalorder %s9, 3
    %p127 = pnand %p125, %p126
    %p128 = pneg %p127
    // Predicated region
    $region9: #{gddc_encoder_forward.16} parent=5 // pred_check
      _
    $region10: #{gddc_encoder_forward.16} parent=5 // pred_check_branch
      %130 = sbr.rel (%p127) target = $region12
    $region11: #{gddc_encoder_forward.16} parent=5 // pred_region
      %s131 = ssub.s32 %s9, 1
      // Predicated region
      $region13: #{gddc_encoder_forward.16} parent=11 // pred_check
        %p132 = pneg %p68
      $region14: #{gddc_encoder_forward.16} parent=11 // pred_check_branch
        %134 = sbr.rel (%p132) target = $region16
      $region15: #{gddc_encoder_forward.16} parent=11 // pred_region
        _
      $region16: #{gddc_encoder_forward.16} parent=11 // pred_fallthru
        _
      // Predicated region
      $region17: #{gddc_encoder_forward.16} parent=11 // pred_check
        %p135 = pneg %p89
      $region18: #{gddc_encoder_forward.16} parent=11 // pred_check_branch
        %137 = sbr.rel (%p135) target = $region20
      $region19: #{gddc_encoder_forward.16} parent=11 // pred_region
        _
      $region20: #{gddc_encoder_forward.16} parent=11 // pred_fallthru
        _
    $region12: #{gddc_encoder_forward.16} parent=5 // pred_fallthru
      _
    %p138 = scmp.lt.s32.totalorder %s9, 2
    // Predicated region
    $region21: #{gddc_encoder_forward.16} parent=5 // pred_check
      %p139 = pneg %p138
    $region22: #{gddc_encoder_forward.16} parent=5 // pred_check_branch
      %141 = sbr.rel (%p139) target = $region24
    $region23: #{gddc_encoder_forward.16} parent=5 // pred_region
      // Predicated region
      $region25: #{gddc_encoder_forward.16} parent=23 // pred_check
        %p142 = pneg %p41
      $region26: #{gddc_encoder_forward.16} parent=23 // pred_check_branch
        %144 = sbr.rel (%p142) target = $region28
      $region27: #{gddc_encoder_forward.16} parent=23 // pred_region
        %p145 = scmp.lt.s32.totalorder %s16, 1
        %s146 = scalar_select %p145, %s16, 1
        %s147 = smul.addr %s146, 20
        %s148 = smul.addr %s147, 4
        %s149 = scalar_lea.vmem %s0, %s148
      $region28: #{gddc_encoder_forward.16} parent=23 // pred_fallthru
        _
    $region24: #{gddc_encoder_forward.16} parent=5 // pred_fallthru
      _
    %p150 = scmp.le.s32.totalorder 1, %s9
    %p151 = scmp.lt.s32.totalorder %s9, 3
    %p152 = pnand %p150, %p151
    %p153 = pneg %p152
    // Predicated region
    $region29: #{gddc_encoder_forward.16} parent=5 // pred_check
      _
    $region30: #{gddc_encoder_forward.16} parent=5 // pred_check_branch
      %155 = sbr.rel (%p152) target = $region32
    $region31: #{gddc_encoder_forward.16} parent=5 // pred_region
      %s156 = ssub.s32 %s9, 1
      %p157 = scmp.lt.s32.totalorder %s18, 1
      %s158 = scalar_select %p157, %s18, 1
      %s159 = smul.addr %s158, 20
      %s160 = smul.addr %s159, 4
      %s161 = scalar_lea.vmem %s0, %s160
      %p162 = pneg %p47
      %p163 = pneg %p44
      %p164 = pneg %p68
      %p165 = pneg %p65
      %p166 = pneg %p89
      %p167 = pneg %p86
      %p168 = pneg %p117
      %p169 = pneg %p114
      %s170 = smul.u32 2, %s19
      %p171 = scmp.lt.s32.totalorder %s18, 1
      %s172 = scalar_select %p171, %s18, 1
      %p173 = scmp.lt.s32.totalorder %s170, 1
      %s174 = scalar_select %p173, %s170, 1
      %s175 = smul.addr %s172, 2
      %s176 = sadd.s32 %s174, %s175
      %s177 = smul.addr %s176, 4
      %s178 = scalar_lea.vmem %s3, %s177
      %p179 = scmp.lt.s32.totalorder %s18, 1
      %s180 = scalar_select %p179, %s18, 1
      %s181 = smul.addr %s180, 20
      %s182 = smul.addr %s181, 4
      %s183 = scalar_lea.vmem %s0, %s182
      %s184 = smul.u32 2, %s19
      %p185 = scmp.lt.s32.totalorder %s18, 1
      %s186 = scalar_select %p185, %s18, 1
      %p187 = scmp.lt.s32.totalorder %s184, 1
      %s188 = scalar_select %p187, %s184, 1
      %s189 = smul.addr %s186, 2
      %s190 = sadd.s32 %s188, %s189
      %s191 = smul.addr %s190, 4
      %s192 = scalar_lea.vmem %s3, %s191
      %s193 = smul.u32 2, %s19
      %v195 = vld [vmem:[%s183] sm:$0xff]
      %v196 = vld [vmem:[%s183 + $0x8] sm:$0xff]
      %v197 = vld [vmem:[%s1] sm:$0xf]
      %v198 = vld [vmem:[%s1 + $0x4] sm:$0xf]
      %v199 = vld [vmem:[%s1 + $0x8] sm:$0xf]
      %v200 = vld [vmem:[%s1 + $0xc] sm:$0xf]
      %v201 = vld [vmem:[%s1 + $0x10] sm:$0xf]
      %v202 = vld [vmem:[%s1 + $0x14] sm:$0xf]
      %v203 = vld [vmem:[%s1 + $0x18] sm:$0xf]
      %v204 = vld [vmem:[%s1 + $0x1c] sm:$0xf]
      %v205 = vld [vmem:[%s1 + $0x20] sm:$0xf]
      %v206 = vld [vmem:[%s1 + $0x24] sm:$0xf]
      %v207 = vld [vmem:[%s1 + $0x28] sm:$0xf]
      %v208 = vld [vmem:[%s1 + $0x2c] sm:$0xf]
      %v209 = vld [vmem:[%s1 + $0x30] sm:$0xf]
      %v210 = vld [vmem:[%s1 + $0x34] sm:$0xf]
      %v211 = vld [vmem:[%s1 + $0x38] sm:$0xf]
      %v212 = vld [vmem:[%s1 + $0x3c] sm:$0xf]
      %v213 = vld [vmem:[%s1 + $0x40] sm:$0xf]
      %v214 = vld [vmem:[%s1 + $0x44] sm:$0xf]
      %v215 = vld [vmem:[%s1 + $0x48] sm:$0xf]
      %v216 = vld [vmem:[%s1 + $0x4c] sm:$0xf]
      %v217 = vld [vmem:[%s1 + $0x50] sm:$0xf]
      %v218 = vld [vmem:[%s1 + $0x54] sm:$0xf]
      %v219 = vld [vmem:[%s1 + $0x58] sm:$0xf]
      %v220 = vld [vmem:[%s1 + $0x5c] sm:$0xf]
      %v221 = vld [vmem:[%s1 + $0x60] sm:$0xf]
      %v222 = vld [vmem:[%s1 + $0x64] sm:$0xf]
      %v223 = vld [vmem:[%s1 + $0x68] sm:$0xf]
      %v224 = vld [vmem:[%s1 + $0x6c] sm:$0xf]
      %v225 = vld [vmem:[%s1 + $0x70] sm:$0xf]
      %v226 = vld [vmem:[%s1 + $0x74] sm:$0xf]
      %v227 = vld [vmem:[%s1 + $0x78] sm:$0xf]
      %v228 = vld [vmem:[%s1 + $0x7c] sm:$0xf]
      %v229 = vld [vmem:[%s183 + $0x28] sm:$0xff]
      %v230 = vld [vmem:[%s183 + $0x30] sm:$0xff]
      %s231 = scalar_lea.vmem %s1, 128
      %v232 = vld [vmem:[%s231] sm:$0xf]
      %v233 = vld [vmem:[%s231 + $0x4] sm:$0xf]
      %v234 = vld [vmem:[%s231 + $0x8] sm:$0xf]
      %v235 = vld [vmem:[%s231 + $0xc] sm:$0xf]
      %v236 = vld [vmem:[%s231 + $0x10] sm:$0xf]
      %v237 = vld [vmem:[%s231 + $0x14] sm:$0xf]
      %v238 = vld [vmem:[%s231 + $0x18] sm:$0xf]
      %v239 = vld [vmem:[%s231 + $0x1c] sm:$0xf]
      %v240 = vld [vmem:[%s231 + $0x20] sm:$0xf]
      %v241 = vld [vmem:[%s231 + $0x24] sm:$0xf]
      %v242 = vld [vmem:[%s231 + $0x28] sm:$0xf]
      %v243 = vld [vmem:[%s231 + $0x2c] sm:$0xf]
      %v244 = vld [vmem:[%s231 + $0x30] sm:$0xf]
      %v245 = vld [vmem:[%s231 + $0x34] sm:$0xf]
      %v246 = vld [vmem:[%s231 + $0x38] sm:$0xf]
      %v247 = vld [vmem:[%s231 + $0x3c] sm:$0xf]
      %v248 = vld [vmem:[%s231 + $0x40] sm:$0xf]
      %v249 = vld [vmem:[%s231 + $0x44] sm:$0xf]
      %v250 = vld [vmem:[%s231 + $0x48] sm:$0xf]
      %v251 = vld [vmem:[%s231 + $0x4c] sm:$0xf]
      %v252 = vld [vmem:[%s231 + $0x50] sm:$0xf]
      %v253 = vld [vmem:[%s231 + $0x54] sm:$0xf]
      %v254 = vld [vmem:[%s231 + $0x58] sm:$0xf]
      %v255 = vld [vmem:[%s231 + $0x5c] sm:$0xf]
      %v256 = vld [vmem:[%s231 + $0x60] sm:$0xf]
      %v257 = vld [vmem:[%s231 + $0x64] sm:$0xf]
      %v258 = vld [vmem:[%s231 + $0x68] sm:$0xf]
      %v259 = vld [vmem:[%s231 + $0x6c] sm:$0xf]
      %v260 = vld [vmem:[%s231 + $0x70] sm:$0xf]
      %v261 = vld [vmem:[%s231 + $0x74] sm:$0xf]
      %v262 = vld [vmem:[%s231 + $0x78] sm:$0xf]
      %v263 = vld [vmem:[%s231 + $0x7c] sm:$0xf]
      %v266 = vunpack.c.l.b16 %v229
      %v267 = vunpack.c.h.b16 %v229
      %v268 = vunpack.c.l.b16 %v230
      %v269 = vunpack.c.h.b16 %v230
      %v270 = vpack.c.b16 %v268, %v266
      %v271 = vpack.c.b16 %v269, %v267
      %v306 = vunpack.c.l.b16 %v232
      %v307 = vunpack.c.l.b16 %v233
      %v308 = vunpack.c.l.b16 %v234
      %v309 = vunpack.c.l.b16 %v235
      %v310 = vunpack.c.l.b16 %v236
      %v311 = vunpack.c.l.b16 %v237
      %v312 = vunpack.c.l.b16 %v238
      %v313 = vunpack.c.l.b16 %v239
      %v314 = vunpack.c.l.b16 %v240
      %v315 = vunpack.c.l.b16 %v241
      %v316 = vunpack.c.l.b16 %v242
      %v317 = vunpack.c.l.b16 %v243
      %v318 = vunpack.c.l.b16 %v244
      %v319 = vunpack.c.l.b16 %v245
      %v320 = vunpack.c.l.b16 %v246
      %v321 = vunpack.c.l.b16 %v247
      %v322 = vunpack.c.l.b16 %v248
      %v323 = vunpack.c.l.b16 %v249
      %v324 = vunpack.c.l.b16 %v250
      %v325 = vunpack.c.l.b16 %v251
      %v326 = vunpack.c.l.b16 %v252
      %v327 = vunpack.c.l.b16 %v253
      %v328 = vunpack.c.l.b16 %v254
      %v329 = vunpack.c.l.b16 %v255
      %v330 = vunpack.c.l.b16 %v256
      %v331 = vunpack.c.l.b16 %v257
      %v332 = vunpack.c.l.b16 %v258
      %v333 = vunpack.c.l.b16 %v259
      %v334 = vunpack.c.l.b16 %v260
      %v335 = vunpack.c.l.b16 %v261
      %v336 = vunpack.c.l.b16 %v262
      %v337 = vunpack.c.l.b16 %v263
      %v338 = vpack.c.b16 %v307, %v306
      %v339 = vpack.c.b16 %v309, %v308
      %v340 = vpack.c.b16 %v311, %v310
      %v341 = vpack.c.b16 %v313, %v312
      %v342 = vpack.c.b16 %v315, %v314
      %v343 = vpack.c.b16 %v317, %v316
      %v344 = vpack.c.b16 %v319, %v318
      %v345 = vpack.c.b16 %v321, %v320
      %v346 = vpack.c.b16 %v323, %v322
      %v347 = vpack.c.b16 %v325, %v324
      %v348 = vpack.c.b16 %v327, %v326
      %v349 = vpack.c.b16 %v329, %v328
      %v350 = vpack.c.b16 %v331, %v330
      %v351 = vpack.c.b16 %v333, %v332
      %v352 = vpack.c.b16 %v335, %v334
      %v353 = vpack.c.b16 %v337, %v336
      %370 = vmatprep.subr.bf16.mxu0 0
      %371 = vmatpush1.bf16.msra.mxu0 %v338
      %372 = vmatprep.subr.bf16.mxu0 0
      %373 = vmatpush1.bf16.msra.mxu0 %v339
      %374 = vmatprep.subr.bf16.mxu0 0
      %375 = vmatpush1.bf16.msra.mxu0 %v340
      %376 = vmatprep.subr.bf16.mxu0 0
      %377 = vmatpush1.bf16.msra.mxu0 %v341
      %378 = vmatprep.subr.bf16.mxu0 0
      %379 = vmatpush1.bf16.msra.mxu0 %v342
      %380 = vmatprep.subr.bf16.mxu0 0
      %381 = vmatpush1.bf16.msra.mxu0 %v343
      %382 = vmatprep.subr.bf16.mxu0 0
      %383 = vmatpush1.bf16.msra.mxu0 %v344
      %384 = vmatprep.subr.bf16.mxu0 0
      %385 = vmatpush1.bf16.msra.mxu0 %v345
      %386 = vmatprep.subr.bf16.mxu0 0
      %387 = vmatpush1.bf16.msra.mxu0 %v346
      %388 = vmatprep.subr.bf16.mxu0 0
      %389 = vmatpush1.bf16.msra.mxu0 %v347
      %390 = vmatprep.subr.bf16.mxu0 0
      %391 = vmatpush1.bf16.msra.mxu0 %v348
      %392 = vmatprep.subr.bf16.mxu0 0
      %393 = vmatpush1.bf16.msra.mxu0 %v349
      %394 = vmatprep.subr.bf16.mxu0 0
      %395 = vmatpush1.bf16.msra.mxu0 %v350
      %396 = vmatprep.subr.bf16.mxu0 0
      %397 = vmatpush1.bf16.msra.mxu0 %v351
      %398 = vmatprep.subr.bf16.mxu0 0
      %399 = vmatpush1.bf16.msra.mxu0 %v352
      %400 = vmatprep.subr.bf16.mxu0 0
      %401 = vmatpush1.bf16.msra.mxu0 %v353
      %402 = vmatprep.mubr.bf16.mxu0 %v271
      %403 = vmatmul.mubr.bf16.gmra.mrb[0].mxu0 %v270
      %v404 = vpop.f32.mrb[0].mxu0
      %v405 = vadd.f32 0.0, %v404
      %v406 = vpop.f32.mrb[0].mxu0
      %v407 = vpop.f32.mrb[0].mxu0
      %v408 = vadd.f32 0.0, %v407
      %v409 = vpop.f32.mrb[0].mxu0
      %410 = vdwg.mxu0
      %v413 = vunpack.c.l.b16 %v195
      %v414 = vunpack.c.h.b16 %v195
      %v415 = vunpack.c.l.b16 %v196
      %v416 = vunpack.c.h.b16 %v196
      %v417 = vpack.c.b16 %v415, %v413
      %v418 = vpack.c.b16 %v416, %v414
      %v453 = vunpack.c.l.b16 %v197
      %v454 = vunpack.c.l.b16 %v198
      %v455 = vunpack.c.l.b16 %v199
      %v456 = vunpack.c.l.b16 %v200
      %v457 = vunpack.c.l.b16 %v201
      %v458 = vunpack.c.l.b16 %v202
      %v459 = vunpack.c.l.b16 %v203
      %v460 = vunpack.c.l.b16 %v204
      %v461 = vunpack.c.l.b16 %v205
      %v462 = vunpack.c.l.b16 %v206
      %v463 = vunpack.c.l.b16 %v207
      %v464 = vunpack.c.l.b16 %v208
      %v465 = vunpack.c.l.b16 %v209
      %v466 = vunpack.c.l.b16 %v210
      %v467 = vunpack.c.l.b16 %v211
      %v468 = vunpack.c.l.b16 %v212
      %v469 = vunpack.c.l.b16 %v213
      %v470 = vunpack.c.l.b16 %v214
      %v471 = vunpack.c.l.b16 %v215
      %v472 = vunpack.c.l.b16 %v216
      %v473 = vunpack.c.l.b16 %v217
      %v474 = vunpack.c.l.b16 %v218
      %v475 = vunpack.c.l.b16 %v219
      %v476 = vunpack.c.l.b16 %v220
      %v477 = vunpack.c.l.b16 %v221
      %v478 = vunpack.c.l.b16 %v222
      %v479 = vunpack.c.l.b16 %v223
      %v480 = vunpack.c.l.b16 %v224
      %v481 = vunpack.c.l.b16 %v225
      %v482 = vunpack.c.l.b16 %v226
      %v483 = vunpack.c.l.b16 %v227
      %v484 = vunpack.c.l.b16 %v228
      %v485 = vpack.c.b16 %v454, %v453
      %v486 = vpack.c.b16 %v456, %v455
      %v487 = vpack.c.b16 %v458, %v457
      %v488 = vpack.c.b16 %v460, %v459
      %v489 = vpack.c.b16 %v462, %v461
      %v490 = vpack.c.b16 %v464, %v463
      %v491 = vpack.c.b16 %v466, %v465
      %v492 = vpack.c.b16 %v468, %v467
      %v493 = vpack.c.b16 %v470, %v469
      %v494 = vpack.c.b16 %v472, %v471
      %v495 = vpack.c.b16 %v474, %v473
      %v496 = vpack.c.b16 %v476, %v475
      %v497 = vpack.c.b16 %v478, %v477
      %v498 = vpack.c.b16 %v480, %v479
      %v499 = vpack.c.b16 %v482, %v481
      %v500 = vpack.c.b16 %v484, %v483
      %517 = vmatprep.subr.bf16.mxu0 0
      %518 = vmatpush1.bf16.msra.mxu0 %v485
      %519 = vmatprep.subr.bf16.mxu0 0
      %520 = vmatpush1.bf16.msra.mxu0 %v486
      %521 = vmatprep.subr.bf16.mxu0 0
      %522 = vmatpush1.bf16.msra.mxu0 %v487
      %523 = vmatprep.subr.bf16.mxu0 0
      %524 = vmatpush1.bf16.msra.mxu0 %v488
      %525 = vmatprep.subr.bf16.mxu0 0
      %526 = vmatpush1.bf16.msra.mxu0 %v489
      %527 = vmatprep.subr.bf16.mxu0 0
      %528 = vmatpush1.bf16.msra.mxu0 %v490
      %529 = vmatprep.subr.bf16.mxu0 0
      %530 = vmatpush1.bf16.msra.mxu0 %v491
      %531 = vmatprep.subr.bf16.mxu0 0
      %532 = vmatpush1.bf16.msra.mxu0 %v492
      %533 = vmatprep.subr.bf16.mxu0 0
      %534 = vmatpush1.bf16.msra.mxu0 %v493
      %535 = vmatprep.subr.bf16.mxu0 0
      %536 = vmatpush1.bf16.msra.mxu0 %v494
      %537 = vmatprep.subr.bf16.mxu0 0
      %538 = vmatpush1.bf16.msra.mxu0 %v495
      %539 = vmatprep.subr.bf16.mxu0 0
      %540 = vmatpush1.bf16.msra.mxu0 %v496
      %541 = vmatprep.subr.bf16.mxu0 0
      %542 = vmatpush1.bf16.msra.mxu0 %v497
      %543 = vmatprep.subr.bf16.mxu0 0
      %544 = vmatpush1.bf16.msra.mxu0 %v498
      %545 = vmatprep.subr.bf16.mxu0 0
      %546 = vmatpush1.bf16.msra.mxu0 %v499
      %547 = vmatprep.subr.bf16.mxu0 0
      %548 = vmatpush1.bf16.msra.mxu0 %v500
      %549 = vmatprep.mubr.bf16.mxu0 %v418
      %550 = vmatmul.mubr.bf16.gmra.mrb[0].mxu0 %v417
      %v551 = vpop.f32.mrb[0].mxu0
      %v552 = vadd.f32 %v405, %v551
      %v553 = vpop.f32.mrb[0].mxu0
      %v554 = vpop.f32.mrb[0].mxu0
      %v555 = vadd.f32 %v408, %v554
      %v556 = vpop.f32.mrb[0].mxu0
      %557 = vdwg.mxu0
      %v558 = vld [vmem:[%s183 + $0x8] sm:$0xff]
      %v559 = vld [vmem:[%s183 + $0x10] sm:$0xff]
      %s560 = scalar_lea.vmem %s1, 256
      %v561 = vld [vmem:[%s560] sm:$0xf]
      %v562 = vld [vmem:[%s560 + $0x4] sm:$0xf]
      %v563 = vld [vmem:[%s560 + $0x8] sm:$0xf]
      %v564 = vld [vmem:[%s560 + $0xc] sm:$0xf]
      %v565 = vld [vmem:[%s560 + $0x10] sm:$0xf]
      %v566 = vld [vmem:[%s560 + $0x14] sm:$0xf]
      %v567 = vld [vmem:[%s560 + $0x18] sm:$0xf]
      %v568 = vld [vmem:[%s560 + $0x1c] sm:$0xf]
      %v569 = vld [vmem:[%s560 + $0x20] sm:$0xf]
      %v570 = vld [vmem:[%s560 + $0x24] sm:$0xf]
      %v571 = vld [vmem:[%s560 + $0x28] sm:$0xf]
      %v572 = vld [vmem:[%s560 + $0x2c] sm:$0xf]
      %v573 = vld [vmem:[%s560 + $0x30] sm:$0xf]
      %v574 = vld [vmem:[%s560 + $0x34] sm:$0xf]
      %v575 = vld [vmem:[%s560 + $0x38] sm:$0xf]
      %v576 = vld [vmem:[%s560 + $0x3c] sm:$0xf]
      %v577 = vld [vmem:[%s560 + $0x40] sm:$0xf]
      %v578 = vld [vmem:[%s560 + $0x44] sm:$0xf]
      %v579 = vld [vmem:[%s560 + $0x48] sm:$0xf]
      %v580 = vld [vmem:[%s560 + $0x4c] sm:$0xf]
      %v581 = vld [vmem:[%s560 + $0x50] sm:$0xf]
      %v582 = vld [vmem:[%s560 + $0x54] sm:$0xf]
      %v583 = vld [vmem:[%s560 + $0x58] sm:$0xf]
      %v584 = vld [vmem:[%s560 + $0x5c] sm:$0xf]
      %v585 = vld [vmem:[%s560 + $0x60] sm:$0xf]
      %v586 = vld [vmem:[%s560 + $0x64] sm:$0xf]
      %v587 = vld [vmem:[%s560 + $0x68] sm:$0xf]
      %v588 = vld [vmem:[%s560 + $0x6c] sm:$0xf]
      %v589 = vld [vmem:[%s560 + $0x70] sm:$0xf]
      %v590 = vld [vmem:[%s560 + $0x74] sm:$0xf]
      %v591 = vld [vmem:[%s560 + $0x78] sm:$0xf]
      %v592 = vld [vmem:[%s560 + $0x7c] sm:$0xf]
      %v595 = vunpack.c.l.b16 %v558
      %v596 = vunpack.c.h.b16 %v558
      %v597 = vunpack.c.l.b16 %v559
      %v598 = vunpack.c.h.b16 %v559
      %v599 = vpack.c.b16 %v597, %v595
      %v600 = vpack.c.b16 %v598, %v596
      %v635 = vunpack.c.l.b16 %v561
      %v636 = vunpack.c.l.b16 %v562
      %v637 = vunpack.c.l.b16 %v563
      %v638 = vunpack.c.l.b16 %v564
      %v639 = vunpack.c.l.b16 %v565
      %v640 = vunpack.c.l.b16 %v566
      %v641 = vunpack.c.l.b16 %v567
      %v642 = vunpack.c.l.b16 %v568
      %v643 = vunpack.c.l.b16 %v569
      %v644 = vunpack.c.l.b16 %v570
      %v645 = vunpack.c.l.b16 %v571
      %v646 = vunpack.c.l.b16 %v572
      %v647 = vunpack.c.l.b16 %v573
      %v648 = vunpack.c.l.b16 %v574
      %v649 = vunpack.c.l.b16 %v575
      %v650 = vunpack.c.l.b16 %v576
      %v651 = vunpack.c.l.b16 %v577
      %v652 = vunpack.c.l.b16 %v578
      %v653 = vunpack.c.l.b16 %v579
      %v654 = vunpack.c.l.b16 %v580
      %v655 = vunpack.c.l.b16 %v581
      %v656 = vunpack.c.l.b16 %v582
      %v657 = vunpack.c.l.b16 %v583
      %v658 = vunpack.c.l.b16 %v584
      %v659 = vunpack.c.l.b16 %v585
      %v660 = vunpack.c.l.b16 %v586
      %v661 = vunpack.c.l.b16 %v587
      %v662 = vunpack.c.l.b16 %v588
      %v663 = vunpack.c.l.b16 %v589
      %v664 = vunpack.c.l.b16 %v590
      %v665 = vunpack.c.l.b16 %v591
      %v666 = vunpack.c.l.b16 %v592
      %v667 = vpack.c.b16 %v636, %v635
      %v668 = vpack.c.b16 %v638, %v637
      %v669 = vpack.c.b16 %v640, %v639
      %v670 = vpack.c.b16 %v642, %v641
      %v671 = vpack.c.b16 %v644, %v643
      %v672 = vpack.c.b16 %v646, %v645
      %v673 = vpack.c.b16 %v648, %v647
      %v674 = vpack.c.b16 %v650, %v649
      %v675 = vpack.c.b16 %v652, %v651
      %v676 = vpack.c.b16 %v654, %v653
      %v677 = vpack.c.b16 %v656, %v655
      %v678 = vpack.c.b16 %v658, %v657
      %v679 = vpack.c.b16 %v660, %v659
      %v680 = vpack.c.b16 %v662, %v661
      %v681 = vpack.c.b16 %v664, %v663
      %v682 = vpack.c.b16 %v666, %v665
      %699 = vmatprep.subr.bf16.mxu0 0
      %700 = vmatpush1.bf16.msra.mxu0 %v667
      %701 = vmatprep.subr.bf16.mxu0 0
      %702 = vmatpush1.bf16.msra.mxu0 %v668
      %703 = vmatprep.subr.bf16.mxu0 0
      %704 = vmatpush1.bf16.msra.mxu0 %v669
      %705 = vmatprep.subr.bf16.mxu0 0
      %706 = vmatpush1.bf16.msra.mxu0 %v670
      %707 = vmatprep.subr.bf16.mxu0 0
      %708 = vmatpush1.bf16.msra.mxu0 %v671
      %709 = vmatprep.subr.bf16.mxu0 0
      %710 = vmatpush1.bf16.msra.mxu0 %v672
      %711 = vmatprep.subr.bf16.mxu0 0
      %712 = vmatpush1.bf16.msra.mxu0 %v673
      %713 = vmatprep.subr.bf16.mxu0 0
      %714 = vmatpush1.bf16.msra.mxu0 %v674
      %715 = vmatprep.subr.bf16.mxu0 0
      %716 = vmatpush1.bf16.msra.mxu0 %v675
      %717 = vmatprep.subr.bf16.mxu0 0
      %718 = vmatpush1.bf16.msra.mxu0 %v676
      %719 = vmatprep.subr.bf16.mxu0 0
      %720 = vmatpush1.bf16.msra.mxu0 %v677
      %721 = vmatprep.subr.bf16.mxu0 0
      %722 = vmatpush1.bf16.msra.mxu0 %v678
      %723 = vmatprep.subr.bf16.mxu0 0
      %724 = vmatpush1.bf16.msra.mxu0 %v679
      %725 = vmatprep.subr.bf16.mxu0 0
      %726 = vmatpush1.bf16.msra.mxu0 %v680
      %727 = vmatprep.subr.bf16.mxu0 0
      %728 = vmatpush1.bf16.msra.mxu0 %v681
      %729 = vmatprep.subr.bf16.mxu0 0
      %730 = vmatpush1.bf16.msra.mxu0 %v682
      %731 = vmatprep.mubr.bf16.mxu0 %v600
      %732 = vmatmul.mubr.bf16.gmra.mrb[0].mxu0 %v599
      %v733 = vpop.f32.mrb[0].mxu0
      %v734 = vadd.f32 0.0, %v733
      %v735 = vpop.f32.mrb[0].mxu0
      %v736 = vpop.f32.mrb[0].mxu0
      %v737 = vadd.f32 0.0, %v736
      %v738 = vpop.f32.mrb[0].mxu0
      %739 = vdwg.mxu0
      %v740 = vadd.f32 %v552, %v734
      %v741 = vadd.f32 %v555, %v737
      %v742 = vld [vmem:[%s2] sm:$0x1]
      %v744 = vlaneseq
      %v745 = vshrl.u32 %v744, 7
      %v746 = vsub.s32 0, %v745
      %v747 = vrot.slane %v742, %v746
      %v749 = vadd.f32 %v740, %v747
      %v750 = vadd.f32 %v741, %v747
      %v751 = vmul.f32 %v749, %v749
      %v752 = vmul.f32 %v750, %v750
      %753 = vadd.xlane.f32.xlu0 %v751
      %v754 = vpop.xlane.xlu0 %753
      %755 = vadd.xlane.f32.xlu0 %v752
      %v756 = vpop.xlane.xlu0 %755
      %v757 = vmul.f32 %v754, 0.0078125
      %v758 = vmul.f32 %v756, 0.0078125
      %v759 = vadd.f32 %v757, 1e-05
      %v760 = vadd.f32 %v758, 1e-05
      %v761 = vrsqrt.pop %v759
      %v762 = vrsqrt.pop %v760
      %v763 = vmul.f32 %v749, %v761
      %v764 = vmul.f32 %v750, %v762
      %v765 = vmax.f32 %v763, 0.0
      %v766 = vmax.f32 %v764, 0.0
      %v767 = vpack.c.bf16 %v766, %v765
      %v769 = vunpack.c.l.b16 %v767
      %v770 = vunpack.c.h.b16 %v767
      %v771 = vpack.c.b16 %v769, %v769
      %v772 = vpack.c.b16 %v770, %v770
      %775 = vst [vmem:[%s192] sm:$0xf] %v771
      %776 = vst [vmem:[%s192 + $0x4] sm:$0xf] %v772
      %s777 = smul.u32 2, %s19
      %p778 = scmp.lt.s32.totalorder %s18, 1
      %s779 = scalar_select %p778, %s18, 1
      %p780 = scmp.lt.s32.totalorder %s777, 1
      %s781 = scalar_select %p780, %s777, 1
      %s782 = smul.addr %s779, 2
      %s783 = sadd.s32 %s781, %s782
      %s784 = smul.addr %s783, 4
      %s785 = scalar_lea.vmem %s3, %s784
      // Predicated region
      $region33: #{gddc_encoder_forward.16} parent=31 // pred_check
        %p786 = pneg %p114
      $region34: #{gddc_encoder_forward.16} parent=31 // pred_check_branch
        %788 = sbr.rel (%p786) target = $region36
      $region35: #{gddc_encoder_forward.16} parent=31 // pred_region
        %s789 = smul.u32 2, %s19
      $region36: #{gddc_encoder_forward.16} parent=31 // pred_fallthru
        _
    $region32: #{gddc_encoder_forward.16} parent=5 // pred_fallthru
      _
    %p790 = scmp.le.s32.totalorder 2, %s9
    // Predicated region
    $region37: #{gddc_encoder_forward.16} parent=5 // pred_check
      %p791 = pneg %p790
    $region38: #{gddc_encoder_forward.16} parent=5 // pred_check_branch
      %793 = sbr.rel (%p791) target = $region40
    $region39: #{gddc_encoder_forward.16} parent=5 // pred_region
      %s794 = ssub.s32 %s9, 2
      // Predicated region
      $region41: #{gddc_encoder_forward.16} parent=39 // pred_check
        %p795 = pneg %p120
      $region42: #{gddc_encoder_forward.16} parent=39 // pred_check_branch
        %797 = sbr.rel (%p795) target = $region44
      $region43: #{gddc_encoder_forward.16} parent=39 // pred_region
        %s798 = smul.u32 2, %s21
        %p799 = scmp.lt.s32.totalorder %s20, 1
        %s800 = scalar_select %p799, %s20, 1
        %p801 = scmp.lt.s32.totalorder %s798, 1
        %s802 = scalar_select %p801, %s798, 1
        %s803 = smul.addr %s800, 2
        %s804 = sadd.s32 %s802, %s803
        %s805 = smul.addr %s804, 4
        %s806 = scalar_lea.vmem %s3, %s805
      $region44: #{gddc_encoder_forward.16} parent=39 // pred_fallthru
        _
    $region40: #{gddc_encoder_forward.16} parent=5 // pred_fallthru
      _
  $region6: #{gddc_encoder_forward.16} parent=0 // loop_footer
    %s13 = sadd.s32 1, %s9
  $region7: #{gddc_encoder_forward.16} parent=0 // loop_footer_branch
    %8 = sbr.rel target = $region3
  $region8: #{gddc_encoder_forward.16} parent=0 // loop_exit
    _

</llo_original>
